<compile_context>
chip_gen: v7x
topology: tpu7x:2x2x1
jax: 0.10.0
libtpu: 0.0.40
codegen_flags: <defaults>
</compile_context>

<pallas_src>
import jax
import jax.numpy as jnp
from jax.experimental import pallas as pl
from jax.experimental.pallas import tpu as pltpu

INPUT_DIM = 48 * 48      # 2304
LAYER_DIM = 1024
OUTPUT_DIM = 7
OUT_PAD = 128            # lane-dense padded output width inside the kernel


def mlp_kernel(x_ref, w1_ref, b1_ref, w2_ref, b2_ref, w3_ref, b3_ref, o_ref):
    # fc1 + relu  (bf16 operands, f32 accumulation on the MXU)
    h1 = jnp.dot(x_ref[...], w1_ref[...], preferred_element_type=jnp.float32)
    h1 = jnp.maximum(h1 + b1_ref[...], 0.0)
    # fc2 + relu
    h2 = jnp.dot(h1.astype(jnp.bfloat16), w2_ref[...],
                 preferred_element_type=jnp.float32)
    h2 = jnp.maximum(h2 + b2_ref[...], 0.0)
    # output layer (no activation), padded to 128 columns
    out = jnp.dot(h2.astype(jnp.bfloat16), w3_ref[...],
                  preferred_element_type=jnp.float32)
    o_ref[...] = (out + b3_ref[...]).astype(o_ref.dtype)


def init_params(key):
    """Deterministic init mimicking PyTorch nn.Linear defaults (f32 master params)."""
    ks = jax.random.split(key, 6)

    def linear(kw, kb, fan_in, fan_out):
        bound = 1.0 / jnp.sqrt(jnp.float32(fan_in))
        w = jax.random.uniform(kw, (fan_in, fan_out), jnp.float32, -bound, bound)
        b = jax.random.uniform(kb, (fan_out,), jnp.float32, -bound, bound)
        return w, b

    w1, b1 = linear(ks[0], ks[1], INPUT_DIM, LAYER_DIM)
    w2, b2 = linear(ks[2], ks[3], LAYER_DIM, LAYER_DIM)
    w3, b3 = linear(ks[4], ks[5], LAYER_DIM, OUTPUT_DIM)
    return (w1, b1, w2, b2, w3, b3)


def prepare_params(params):
    """One-time kernel-layout prep: bf16 weights, f32 (1,·) biases, w3/b3 padded to 128."""
    w1, b1, w2, b2, w3, b3 = params
    pad = OUT_PAD - OUTPUT_DIM
    return (
        w1.astype(jnp.bfloat16),                                    # (2304, 1024) bf16
        b1.reshape(1, LAYER_DIM).astype(jnp.float32),               # (1, 1024)    f32
        w2.astype(jnp.bfloat16),                                    # (1024, 1024) bf16
        b2.reshape(1, LAYER_DIM).astype(jnp.float32),               # (1, 1024)    f32
        jnp.pad(w3.astype(jnp.bfloat16), ((0, 0), (0, pad))),       # (1024, 128)  bf16
        jnp.pad(b3.reshape(1, OUTPUT_DIM).astype(jnp.float32),
                ((0, 0), (0, pad))),                                # (1, 128)     f32
    )


@jax.jit
def net_forward(x, prepped):
    """x: (B, 1, 48, 48) float32 -> (B, 7) float32 logits."""
    w1, b1, w2, b2, w3, b3 = prepped
    B = x.shape[0]
    x_flat = x.reshape(B, INPUT_DIM).astype(jnp.bfloat16)   # matches torch.flatten
    Bp = max(8, ((B + 7) // 8) * 8)                          # sublane-friendly batch pad
    x_pad = jnp.pad(x_flat, ((0, Bp - B), (0, 0)))           # single pad op, no scatter

    flops = 2 * Bp * (INPUT_DIM * LAYER_DIM + LAYER_DIM * LAYER_DIM
                      + LAYER_DIM * OUT_PAD)
    bytes_accessed = (
        x_pad.size * 2                                       # bf16 activations in
        + (w1.size + w2.size + w3.size) * 2                  # bf16 weights
        + (b1.size + b2.size + b3.size) * 4                  # f32 biases
        + Bp * OUT_PAD * 4                                   # f32 output
    )

    # No grid: single kernel invocation, every operand resident whole-array in
    # VMEM and single-buffered (no double-buffer waste for data read once).
    out_pad = pl.pallas_call(
        mlp_kernel,
        out_shape=jax.ShapeDtypeStruct((Bp, OUT_PAD), jnp.float32),
        compiler_params=pltpu.CompilerParams(
            vmem_limit_bytes=32 << 20,   # legal on v7x (64 MiB phys); need ~8 MiB
        ),
        cost_estimate=pl.CostEstimate(
            flops=flops, transcendentals=0, bytes_accessed=bytes_accessed),
    )(x_pad, w1, b1, w2, b2, w3, b3)

    return out_pad[:B, :OUTPUT_DIM]


def reference_forward_f32(x, params):
    """Pure-JAX f32 reference (exactly the PyTorch forward semantics)."""
    w1, b1, w2, b2, w3, b3 = params
    h = x.reshape(x.shape[0], -1)
    h = jnp.maximum(h @ w1 + b1, 0.0)
    h = jnp.maximum(h @ w2 + b2, 0.0)
    return h @ w3 + b3


def reference_forward_bf16(x, prepped):
    """Pure-JAX reference matching the kernel's bf16-operand / f32-accum math."""
    w1, b1, w2, b2, w3, b3 = prepped
    h = x.reshape(x.shape[0], -1).astype(jnp.bfloat16)
    h = jnp.maximum(jnp.dot(h, w1, preferred_element_type=jnp.float32) + b1, 0.0)
    h = jnp.maximum(
        jnp.dot(h.astype(jnp.bfloat16), w2, preferred_element_type=jnp.float32) + b2, 0.0)
    out = jnp.dot(h.astype(jnp.bfloat16), w3, preferred_element_type=jnp.float32) + b3
    return out[:, :OUTPUT_DIM]


if __name__ == "__main__":
    key = jax.random.PRNGKey(0)
    k_params, k_x = jax.random.split(key)
    params = init_params(k_params)          # f32 master params (PyTorch-like init)
    prepped = prepare_params(params)        # one-time bf16 / padded kernel params

    # Small batch of grayscale 48x48 images (input_dim = 48*48, C=1).
    x = jax.random.normal(k_x, (2, 1, 48, 48), jnp.float32)

    out = net_forward(x, prepped)
    out = jax.block_until_ready(out)

    assert out.shape == (2, OUTPUT_DIM)

    # Tight check vs a JAX reference using the same bf16 params / f32 accumulation.
    ref_bf16 = reference_forward_bf16(x, prepped)
    assert jnp.allclose(out, ref_bf16, atol=1e-2, rtol=1e-2)

    # Loose check vs the full-f32 reference (bf16 weights -> ~1e-2 level error).
    ref_f32 = reference_forward_f32(x, params)
    assert jnp.allclose(out, ref_f32, atol=5e-2, rtol=5e-2)

    print("KERNEL_OK")
</pallas_src>

<mosaic_0001>
module attributes {stable_mosaic.version = 11 : i64} {
  func.func @mlp_kernel(%arg0: memref<8x2304xbf16, #tpu.memory_space<vmem>>, %arg1: memref<2304x1024xbf16, #tpu.memory_space<vmem>>, %arg2: memref<1x1024xf32, #tpu.memory_space<vmem>>, %arg3: memref<1024x1024xbf16, #tpu.memory_space<vmem>>, %arg4: memref<1x1024xf32, #tpu.memory_space<vmem>>, %arg5: memref<1024x128xbf16, #tpu.memory_space<vmem>>, %arg6: memref<1x128xf32, #tpu.memory_space<vmem>>, %arg7: memref<8x128xf32, #tpu.memory_space<vmem>>) attributes {dimension_semantics = [], scalar_prefetch = 0 : i64, scratch_operands = 0 : i64, tpu.core_type = #tpu.core_type<tc>} {
    %c0 = arith.constant 0 : index
    %c0_0 = arith.constant 0 : index
    %0 = vector.load %arg0[%c0, %c0_0] : memref<8x2304xbf16, #tpu.memory_space<vmem>>, vector<8x2304xbf16>
    %c0_1 = arith.constant 0 : index
    %c0_2 = arith.constant 0 : index
    %1 = vector.load %arg1[%c0_1, %c0_2] : memref<2304x1024xbf16, #tpu.memory_space<vmem>>, vector<2304x1024xbf16>
    %cst = arith.constant dense<0.000000e+00> : vector<8x1024xf32>
    %2 = tpu.matmul %0, %1, %cst {dimension_numbers = #tpu.dot_dimension_numbers<[1], [0], [0], [1], [0, 0, 1, 1], [], []>} : vector<8x2304xbf16>, vector<2304x1024xbf16>, vector<8x1024xf32> -> vector<8x1024xf32>
    %c0_3 = arith.constant 0 : index
    %c0_4 = arith.constant 0 : index
    %3 = vector.load %arg2[%c0_3, %c0_4] : memref<1x1024xf32, #tpu.memory_space<vmem>>, vector<1x1024xf32>
    %4 = vector.broadcast %3 : vector<1x1024xf32> to vector<8x1024xf32>
    %5 = arith.addf %2, %4 : vector<8x1024xf32>
    %cst_5 = arith.constant 0.000000e+00 : f32
    %6 = vector.broadcast %cst_5 : f32 to vector<8x1024xf32>
    %7 = arith.maximumf %5, %6 : vector<8x1024xf32>
    %8 = arith.truncf %7 : vector<8x1024xf32> to vector<8x1024xbf16>
    %c0_6 = arith.constant 0 : index
    %c0_7 = arith.constant 0 : index
    %9 = vector.load %arg3[%c0_6, %c0_7] : memref<1024x1024xbf16, #tpu.memory_space<vmem>>, vector<1024x1024xbf16>
    %cst_8 = arith.constant dense<0.000000e+00> : vector<8x1024xf32>
    %10 = tpu.matmul %8, %9, %cst_8 {dimension_numbers = #tpu.dot_dimension_numbers<[1], [0], [0], [1], [0, 0, 1, 1], [], []>} : vector<8x1024xbf16>, vector<1024x1024xbf16>, vector<8x1024xf32> -> vector<8x1024xf32>
    %c0_9 = arith.constant 0 : index
    %c0_10 = arith.constant 0 : index
    %11 = vector.load %arg4[%c0_9, %c0_10] : memref<1x1024xf32, #tpu.memory_space<vmem>>, vector<1x1024xf32>
    %12 = vector.broadcast %11 : vector<1x1024xf32> to vector<8x1024xf32>
    %13 = arith.addf %10, %12 : vector<8x1024xf32>
    %cst_11 = arith.constant 0.000000e+00 : f32
    %14 = vector.broadcast %cst_11 : f32 to vector<8x1024xf32>
    %15 = arith.maximumf %13, %14 : vector<8x1024xf32>
    %16 = arith.truncf %15 : vector<8x1024xf32> to vector<8x1024xbf16>
    %c0_12 = arith.constant 0 : index
    %c0_13 = arith.constant 0 : index
    %17 = vector.load %arg5[%c0_12, %c0_13] : memref<1024x128xbf16, #tpu.memory_space<vmem>>, vector<1024x128xbf16>
    %cst_14 = arith.constant dense<0.000000e+00> : vector<8x128xf32>
    %18 = tpu.matmul %16, %17, %cst_14 {dimension_numbers = #tpu.dot_dimension_numbers<[1], [0], [0], [1], [0, 0, 1, 1], [], []>} : vector<8x1024xbf16>, vector<1024x128xbf16>, vector<8x128xf32> -> vector<8x128xf32>
    %c0_15 = arith.constant 0 : index
    %c0_16 = arith.constant 0 : index
    %19 = vector.load %arg6[%c0_15, %c0_16] : memref<1x128xf32, #tpu.memory_space<vmem>>, vector<1x128xf32>
    %20 = vector.broadcast %19 : vector<1x128xf32> to vector<8x128xf32>
    %21 = arith.addf %18, %20 : vector<8x128xf32>
    %c0_17 = arith.constant 0 : index
    %c0_18 = arith.constant 0 : index
    %22 = vector.load %arg7[%c0_17, %c0_18] : memref<8x128xf32, #tpu.memory_space<vmem>>, vector<8x128xf32>
    tpu.vector_store %arg7[%c0_17, %c0_18], %21 {strides = array<i32>} : memref<8x128xf32, #tpu.memory_space<vmem>>, vector<8x128xf32>,
    return
  }
}

</mosaic_0001>

<llo_original>
// kernel: net_forward.1
$region0: #{net_forward.1}
  #allocation0 [shape = 'u32[]', space=smem, size = 0x4, offset = 0x4, fixed_abs, tag = 'smem constant byte address 0x4 - core index']
  #allocation1 [shape = 'u32[144,128]{1,0:T(1,128)}', space=vmem, size = 0x12000, scoped, tag = 'internal scratch']
  %s0 = inlined_call_operand.vmem [shape: bf16[8,2304], index: 0, kind: input, shape index: {}]
  %s1 = inlined_call_operand.hbm [shape: bf16[2304,1024], index: 1, kind: input, shape index: {}]
  %s2 = inlined_call_operand.hbm [shape: f32[1,1024], index: 2, kind: input, shape index: {}]
  %s3 = inlined_call_operand.hbm [shape: bf16[1024,1024], index: 3, kind: input, shape index: {}]
  %s4 = inlined_call_operand.hbm [shape: f32[1,1024], index: 4, kind: input, shape index: {}]
  %s5 = inlined_call_operand.hbm [shape: bf16[1024,128], index: 5, kind: input, shape index: {}]
  %s6 = inlined_call_operand.hbm [shape: f32[1,128], index: 6, kind: input, shape index: {}]
  %s7 = inlined_call_operand.vmem [shape: f32[8,128], index: 7, kind: output, shape index: {}]
  %s8 = sld [smem:[#allocation0]]
  $region62: #{net_forward.1} parent=0
    _
  %s10 = ssub.s32 1, %s8
  %s11 = scalar_select 0, %s10, %s8
  $region1: #{net_forward.1} parent=0
    #allocation2 [shape = 'u8[4718592]{0}', space=vmem, size = 0x480000, scoped, tag = 'input window, operand 1, single buffered']
    #allocation3 [shape = 's32[1]{0}', space=sflag, size = 0x4, scoped, tag = 'scoped memory for net_forward.1']
    #allocation4 [shape = 'u8[4096]{0}', space=vmem, size = 0x1000, scoped, tag = 'input window, operand 2, single buffered']
    #allocation5 [shape = 's32[1]{0}', space=sflag, size = 0x4, scoped, tag = 'scoped memory for net_forward.1']
    #allocation6 [shape = 'u8[2097152]{0}', space=vmem, size = 0x200000, scoped, tag = 'input window, operand 3, single buffered']
    #allocation7 [shape = 'u8[4096]{0}', space=vmem, size = 0x1000, scoped, tag = 'input window, operand 4, single buffered']
    #allocation8 [shape = 's32[1]{0}', space=sflag, size = 0x4, scoped, tag = 'scoped memory for net_forward.1']
    #allocation9 [shape = 'u8[262144]{0}', space=vmem, size = 0x40000, scoped, tag = 'input window, operand 5, single buffered']
    #allocation10 [shape = 'u8[512]{0}', space=vmem, size = 0x400, scoped, tag = 'input window, operand 6, single buffered']
    #allocation11 [shape = 's32[1]{0}', space=sflag, size = 0x4, scoped, tag = 'scoped memory for net_forward.1']
    %12 = vsyncpa [#allocation3], 0
    %13 = vsyncpa [#allocation5], 0
    %14 = vsyncpa [#allocation8], 0
    %15 = vsyncpa [#allocation11], 0
    // Predicated region
    $region2: #{net_forward.1} parent=1 // pred_check
      _
    $region3: #{net_forward.1} parent=1 // pred_check_branch
      %17 = sbr.rel (0) target = $region5
    $region4: #{net_forward.1} parent=1 // pred_region
      _
    $region5: #{net_forward.1} parent=1 // pred_fallthru
      _
    // Predicated region
    $region6: #{net_forward.1} parent=1 // pred_check
      _
    $region7: #{net_forward.1} parent=1 // pred_check_branch
      %19 = sbr.rel (0) target = $region9
    $region8: #{net_forward.1} parent=1 // pred_region
      %s21 = ssub.s32 147456, 147456
      %22 = vsyncadd [#allocation3], %s21
      %s23 = sshll.u32 [#allocation2], 4
      %s24 = int_to_ptr.vmem [resolvable:$true] %s23
      %29 = dma.hbm_to_vmem [thread:$0]  %s1, 147456, %s24, [#allocation3], 512, 512, 32
    $region9: #{net_forward.1} parent=1 // pred_fallthru
      _
    // Predicated region
    $region10: #{net_forward.1} parent=1 // pred_check
      _
    $region11: #{net_forward.1} parent=1 // pred_check_branch
      %31 = sbr.rel (0) target = $region13
    $region12: #{net_forward.1} parent=1 // pred_region
      %s33 = ssub.s32 128, 128
      %34 = vsyncadd [#allocation5], %s33
      %s36 = sshll.u32 [#allocation4], 4
      %s37 = int_to_ptr.vmem [resolvable:$true] %s36
      %39 = dma.hbm_to_vmem [thread:$0]  %s2, 128, %s37, [#allocation5]
    $region13: #{net_forward.1} parent=1 // pred_fallthru
      _
    // Predicated region
    $region14: #{net_forward.1} parent=1 // pred_check
      _
    $region15: #{net_forward.1} parent=1 // pred_check_branch
      %41 = sbr.rel (0) target = $region17
    $region16: #{net_forward.1} parent=1 // pred_region
      %s43 = ssub.s32 65536, 65536
      %44 = vsyncadd [#allocation5], %s43
      %s45 = sshll.u32 [#allocation6], 4
      %s46 = int_to_ptr.vmem [resolvable:$true] %s45
      %51 = dma.hbm_to_vmem [thread:$0]  %s3, 65536, %s46, [#allocation5], 512, 512, 32
    $region17: #{net_forward.1} parent=1 // pred_fallthru
      _
    // Predicated region
    $region18: #{net_forward.1} parent=1 // pred_check
      _
    $region19: #{net_forward.1} parent=1 // pred_check_branch
      %53 = sbr.rel (0) target = $region21
    $region20: #{net_forward.1} parent=1 // pred_region
      %s55 = ssub.s32 128, 128
      %56 = vsyncadd [#allocation8], %s55
      %s58 = sshll.u32 [#allocation7], 4
      %s59 = int_to_ptr.vmem [resolvable:$true] %s58
      %61 = dma.hbm_to_vmem [thread:$0]  %s4, 128, %s59, [#allocation8]
    $region21: #{net_forward.1} parent=1 // pred_fallthru
      _
    // Predicated region
    $region22: #{net_forward.1} parent=1 // pred_check
      _
    $region23: #{net_forward.1} parent=1 // pred_check_branch
      %63 = sbr.rel (0) target = $region25
    $region24: #{net_forward.1} parent=1 // pred_region
      %s65 = ssub.s32 8192, 8192
      %66 = vsyncadd [#allocation8], %s65
      %s67 = sshll.u32 [#allocation9], 4
      %s68 = int_to_ptr.vmem [resolvable:$true] %s67
      %73 = dma.hbm_to_vmem [thread:$0]  %s5, 8192, %s68, [#allocation8], 64, 64, 4
    $region25: #{net_forward.1} parent=1 // pred_fallthru
      _
    // Predicated region
    $region26: #{net_forward.1} parent=1 // pred_check
      _
    $region27: #{net_forward.1} parent=1 // pred_check_branch
      %75 = sbr.rel (0) target = $region29
    $region28: #{net_forward.1} parent=1 // pred_region
      %s77 = ssub.s32 16, 16
      %78 = vsyncadd [#allocation11], %s77
      %s80 = sshll.u32 [#allocation10], 4
      %s81 = int_to_ptr.vmem [resolvable:$true] %s80
      %83 = dma.hbm_to_vmem [thread:$0]  %s6, 16, %s81, [#allocation11]
    $region29: #{net_forward.1} parent=1 // pred_fallthru
      _
    // Predicated region
    $region30: #{net_forward.1} parent=1 // pred_check
      _
    $region31: #{net_forward.1} parent=1 // pred_check_branch
      %85 = sbr.rel (0) target = $region33
    $region32: #{net_forward.1} parent=1 // pred_region
      %86 = dma.done [#allocation3], 147456
    $region33: #{net_forward.1} parent=1 // pred_fallthru
      _
    // Predicated region
    $region34: #{net_forward.1} parent=1 // pred_check
      _
    $region35: #{net_forward.1} parent=1 // pred_check_branch
      %88 = sbr.rel (0) target = $region37
    $region36: #{net_forward.1} parent=1 // pred_region
      %89 = dma.done [#allocation5], 128
    $region37: #{net_forward.1} parent=1 // pred_fallthru
      _
    // Predicated region
    $region38: #{net_forward.1} parent=1 // pred_check
      _
    $region39: #{net_forward.1} parent=1 // pred_check_branch
      %91 = sbr.rel (0) target = $region41
    $region40: #{net_forward.1} parent=1 // pred_region
      %92 = dma.done [#allocation5], 65536
    $region41: #{net_forward.1} parent=1 // pred_fallthru
      _
    // Predicated region
    $region42: #{net_forward.1} parent=1 // pred_check
      _
    $region43: #{net_forward.1} parent=1 // pred_check_branch
      %94 = sbr.rel (0) target = $region45
    $region44: #{net_forward.1} parent=1 // pred_region
      %95 = dma.done [#allocation8], 128
    $region45: #{net_forward.1} parent=1 // pred_fallthru
      _
    // Predicated region
    $region46: #{net_forward.1} parent=1 // pred_check
      _
    $region47: #{net_forward.1} parent=1 // pred_check_branch
      %97 = sbr.rel (0) target = $region49
    $region48: #{net_forward.1} parent=1 // pred_region
      %98 = dma.done [#allocation8], 8192
    $region49: #{net_forward.1} parent=1 // pred_fallthru
      _
    // Predicated region
    $region50: #{net_forward.1} parent=1 // pred_check
      _
    $region51: #{net_forward.1} parent=1 // pred_check_branch
      %100 = sbr.rel (0) target = $region53
    $region52: #{net_forward.1} parent=1 // pred_region
      %101 = dma.done [#allocation11], 16
    $region53: #{net_forward.1} parent=1 // pred_fallthru
      _
    %v103 = vld [vmem:[%s0] sm:$0xff]
    %v104 = vld [vmem:[%s0 + $0x8] sm:$0xff]
    %v105 = vld [vmem:[%s0 + $0x10] sm:$0xff]
    %v106 = vld [vmem:[%s0 + $0x18] sm:$0xff]
    %v107 = vld [vmem:[%s0 + $0x20] sm:$0xff]
    %v108 = vld [vmem:[%s0 + $0x28] sm:$0xff]
    %v109 = vld [vmem:[%s0 + $0x30] sm:$0xff]
    %v110 = vld [vmem:[%s0 + $0x38] sm:$0xff]
    %v111 = vld [vmem:[%s0 + $0x40] sm:$0xff]
    %v112 = vld [vmem:[#allocation2] sm:$0xff]
    %v113 = vld [vmem:[#allocation2 + $0x8] sm:$0xff]
    %v114 = vld [vmem:[#allocation2 + $0x10] sm:$0xff]
    %v115 = vld [vmem:[#allocation2 + $0x18] sm:$0xff]
    %v116 = vld [vmem:[#allocation2 + $0x20] sm:$0xff]
    %v117 = vld [vmem:[#allocation2 + $0x28] sm:$0xff]
    %v118 = vld [vmem:[#allocation2 + $0x30] sm:$0xff]
    %v119 = vld [vmem:[#allocation2 + $0x38] sm:$0xff]
    %v120 = vld [vmem:[#allocation2 + $0x40] sm:$0xff]
    %v121 = vld [vmem:[#allocation2 + $0x48] sm:$0xff]
    %v122 = vld [vmem:[#allocation2 + $0x50] sm:$0xff]
    %v123 = vld [vmem:[#allocation2 + $0x58] sm:$0xff]
    %v124 = vld [vmem:[#allocation2 + $0x60] sm:$0xff]
    %v125 = vld [vmem:[#allocation2 + $0x68] sm:$0xff]
    %v126 = vld [vmem:[#allocation2 + $0x70] sm:$0xff]
    %v127 = vld [vmem:[#allocation2 + $0x78] sm:$0xff]
    %v128 = vld [vmem:[#allocation2 + $0x80] sm:$0xff]
    %v129 = vld [vmem:[#allocation2 + $0x88] sm:$0xff]
    %v130 = vld [vmem:[#allocation2 + $0x90] sm:$0xff]
    %v131 = vld [vmem:[#allocation2 + $0x98] sm:$0xff]
    %v132 = vld [vmem:[#allocation2 + $0xa0] sm:$0xff]
    %v133 = vld [vmem:[#allocation2 + $0xa8] sm:$0xff]
    %v134 = vld [vmem:[#allocation2 + $0xb0] sm:$0xff]
    %v135 = vld [vmem:[#allocation2 + $0xb8] sm:$0xff]
    %v136 = vld [vmem:[#allocation2 + $0xc0] sm:$0xff]
    %v137 = vld [vmem:[#allocation2 + $0xc8] sm:$0xff]
    %v138 = vld [vmem:[#allocation2 + $0xd0] sm:$0xff]
    %v139 = vld [vmem:[#allocation2 + $0xd8] sm:$0xff]
    %v140 = vld [vmem:[#allocation2 + $0xe0] sm:$0xff]
    %v141 = vld [vmem:[#allocation2 + $0xe8] sm:$0xff]
    %v142 = vld [vmem:[#allocation2 + $0xf0] sm:$0xff]
    %v143 = vld [vmem:[#allocation2 + $0xf8] sm:$0xff]
    %v144 = vld [vmem:[#allocation2 + $0x100] sm:$0xff]
    %v145 = vld [vmem:[#allocation2 + $0x108] sm:$0xff]
    %v146 = vld [vmem:[#allocation2 + $0x110] sm:$0xff]
    %v147 = vld [vmem:[#allocation2 + $0x118] sm:$0xff]
    %v148 = vld [vmem:[#allocation2 + $0x120] sm:$0xff]
    %v149 = vld [vmem:[#allocation2 + $0x128] sm:$0xff]
    %v150 = vld [vmem:[#allocation2 + $0x130] sm:$0xff]
    %v151 = vld [vmem:[#allocation2 + $0x138] sm:$0xff]
    %v152 = vld [vmem:[#allocation2 + $0x140] sm:$0xff]
    %v153 = vld [vmem:[#allocation2 + $0x148] sm:$0xff]
    %v154 = vld [vmem:[#allocation2 + $0x150] sm:$0xff]
    %v155 = vld [vmem:[#allocation2 + $0x158] sm:$0xff]
    %v156 = vld [vmem:[#allocation2 + $0x160] sm:$0xff]
    %v157 = vld [vmem:[#allocation2 + $0x168] sm:$0xff]
    %v158 = vld [vmem:[#allocation2 + $0x170] sm:$0xff]
    %v159 = vld [vmem:[#allocation2 + $0x178] sm:$0xff]
    %v160 = vld [vmem:[#allocation2 + $0x180] sm:$0xff]
    %v161 = vld [vmem:[#allocation2 + $0x188] sm:$0xff]
    %v162 = vld [vmem:[#allocation2 + $0x190] sm:$0xff]
    %v163 = vld [vmem:[#allocation2 + $0x198] sm:$0xff]
    %v164 = vld [vmem:[#allocation2 + $0x1a0] sm:$0xff]
    %v165 = vld [vmem:[#allocation2 + $0x1a8] sm:$0xff]
    %v166 = vld [vmem:[#allocation2 + $0x1b0] sm:$0xff]
    %v167 = vld [vmem:[#allocation2 + $0x1b8] sm:$0xff]
    %v168 = vld [vmem:[#allocation2 + $0x1c0] sm:$0xff]
    %v169 = vld [vmem:[#allocation2 + $0x1c8] sm:$0xff]
    %v170 = vld [vmem:[#allocation2 + $0x1d0] sm:$0xff]
    %v171 = vld [vmem:[#allocation2 + $0x1d8] sm:$0xff]
    %v172 = vld [vmem:[#allocation2 + $0x1e0] sm:$0xff]
    %v173 = vld [vmem:[#allocation2 + $0x1e8] sm:$0xff]
    %v174 = vld [vmem:[#allocation2 + $0x1f0] sm:$0xff]
    %v175 = vld [vmem:[#allocation2 + $0x1f8] sm:$0xff]
    %v176 = vld [vmem:[#allocation2 + $0x200] sm:$0xff]
    %v177 = vld [vmem:[#allocation2 + $0x208] sm:$0xff]
    %v178 = vld [vmem:[#allocation2 + $0x210] sm:$0xff]
    %v179 = vld [vmem:[#allocation2 + $0x218] sm:$0xff]
    %v180 = vld [vmem:[#allocation2 + $0x220] sm:$0xff]
    %v181 = vld [vmem:[#allocation2 + $0x228] sm:$0xff]
    %v182 = vld [vmem:[#allocation2 + $0x230] sm:$0xff]
    %v183 = vld [vmem:[#allocation2 + $0x238] sm:$0xff]
    %v184 = vld [vmem:[#allocation2 + $0x240] sm:$0xff]
    %v185 = vld [vmem:[#allocation2 + $0x248] sm:$0xff]
    %v186 = vld [vmem:[#allocation2 + $0x250] sm:$0xff]
    %v187 = vld [vmem:[#allocation2 + $0x258] sm:$0xff]
    %v188 = vld [vmem:[#allocation2 + $0x260] sm:$0xff]
    %v189 = vld [vmem:[#allocation2 + $0x268] sm:$0xff]
    %v190 = vld [vmem:[#allocation2 + $0x270] sm:$0xff]
    %v191 = vld [vmem:[#allocation2 + $0x278] sm:$0xff]
    %v192 = vld [vmem:[#allocation2 + $0x280] sm:$0xff]
    %v193 = vld [vmem:[#allocation2 + $0x288] sm:$0xff]
    %v194 = vld [vmem:[#allocation2 + $0x290] sm:$0xff]
    %v195 = vld [vmem:[#allocation2 + $0x298] sm:$0xff]
    %v196 = vld [vmem:[#allocation2 + $0x2a0] sm:$0xff]
    %v197 = vld [vmem:[#allocation2 + $0x2a8] sm:$0xff]
    %v198 = vld [vmem:[#allocation2 + $0x2b0] sm:$0xff]
    %v199 = vld [vmem:[#allocation2 + $0x2b8] sm:$0xff]
    %v200 = vld [vmem:[#allocation2 + $0x2c0] sm:$0xff]
    %v201 = vld [vmem:[#allocation2 + $0x2c8] sm:$0xff]
    %v202 = vld [vmem:[#allocation2 + $0x2d0] sm:$0xff]
    %v203 = vld [vmem:[#allocation2 + $0x2d8] sm:$0xff]
    %v204 = vld [vmem:[#allocation2 + $0x2e0] sm:$0xff]
    %v205 = vld [vmem:[#allocation2 + $0x2e8] sm:$0xff]
    %v206 = vld [vmem:[#allocation2 + $0x2f0] sm:$0xff]
    %v207 = vld [vmem:[#allocation2 + $0x2f8] sm:$0xff]
    %v208 = vld [vmem:[#allocation2 + $0x300] sm:$0xff]
    %v209 = vld [vmem:[#allocation2 + $0x308] sm:$0xff]
    %v210 = vld [vmem:[#allocation2 + $0x310] sm:$0xff]
    %v211 = vld [vmem:[#allocation2 + $0x318] sm:$0xff]
    %v212 = vld [vmem:[#allocation2 + $0x320] sm:$0xff]
    %v213 = vld [vmem:[#allocation2 + $0x328] sm:$0xff]
    %v214 = vld [vmem:[#allocation2 + $0x330] sm:$0xff]
    %v215 = vld [vmem:[#allocation2 + $0x338] sm:$0xff]
    %v216 = vld [vmem:[#allocation2 + $0x340] sm:$0xff]
    %v217 = vld [vmem:[#allocation2 + $0x348] sm:$0xff]
    %v218 = vld [vmem:[#allocation2 + $0x350] sm:$0xff]
    %v219 = vld [vmem:[#allocation2 + $0x358] sm:$0xff]
    %v220 = vld [vmem:[#allocation2 + $0x360] sm:$0xff]
    %v221 = vld [vmem:[#allocation2 + $0x368] sm:$0xff]
    %v222 = vld [vmem:[#allocation2 + $0x370] sm:$0xff]
    %v223 = vld [vmem:[#allocation2 + $0x378] sm:$0xff]
    %v224 = vld [vmem:[#allocation2 + $0x380] sm:$0xff]
    %v225 = vld [vmem:[#allocation2 + $0x388] sm:$0xff]
    %v226 = vld [vmem:[#allocation2 + $0x390] sm:$0xff]
    %v227 = vld [vmem:[#allocation2 + $0x398] sm:$0xff]
    %v228 = vld [vmem:[#allocation2 + $0x3a0] sm:$0xff]
    %v229 = vld [vmem:[#allocation2 + $0x3a8] sm:$0xff]
    %v230 = vld [vmem:[#allocation2 + $0x3b0] sm:$0xff]
    %v231 = vld [vmem:[#allocation2 + $0x3b8] sm:$0xff]
    %v232 = vld [vmem:[#allocation2 + $0x3c0] sm:$0xff]
    %v233 = vld [vmem:[#allocation2 + $0x3c8] sm:$0xff]
    %v234 = vld [vmem:[#allocation2 + $0x3d0] sm:$0xff]
    %v235 = vld [vmem:[#allocation2 + $0x3d8] sm:$0xff]
    %v236 = vld [vmem:[#allocation2 + $0x3e0] sm:$0xff]
    %v237 = vld [vmem:[#allocation2 + $0x3e8] sm:$0xff]
    %v238 = vld [vmem:[#allocation2 + $0x3f0] sm:$0xff]
    %v239 = vld [vmem:[#allocation2 + $0x3f8] sm:$0xff]
    %v240 = vld [vmem:[#allocation2 + $0x400] sm:$0xff]
    %v241 = vld [vmem:[#allocation2 + $0x408] sm:$0xff]
    %v242 = vld [vmem:[#allocation2 + $0x410] sm:$0xff]
    %v243 = vld [vmem:[#allocation2 + $0x418] sm:$0xff]
    %v244 = vld [vmem:[#allocation2 + $0x420] sm:$0xff]
    %v245 = vld [vmem:[#allocation2 + $0x428] sm:$0xff]
    %v246 = vld [vmem:[#allocation2 + $0x430] sm:$0xff]
    %v247 = vld [vmem:[#allocation2 + $0x438] sm:$0xff]
    %v248 = vld [vmem:[#allocation2 + $0x440] sm:$0xff]
    %v249 = vld [vmem:[#allocation2 + $0x448] sm:$0xff]
    %v250 = vld [vmem:[#allocation2 + $0x450] sm:$0xff]
    %v251 = vld [vmem:[#allocation2 + $0x458] sm:$0xff]
    %v252 = vld [vmem:[#allocation2 + $0x460] sm:$0xff]
    %v253 = vld [vmem:[#allocation2 + $0x468] sm:$0xff]
    %v254 = vld [vmem:[#allocation2 + $0x470] sm:$0xff]
    %v255 = vld [vmem:[#allocation2 + $0x478] sm:$0xff]
    %v256 = vld [vmem:[#allocation2 + $0x480] sm:$0xff]
    %v257 = vld [vmem:[#allocation2 + $0x488] sm:$0xff]
    %v258 = vld [vmem:[#allocation2 + $0x490] sm:$0xff]
    %v259 = vld [vmem:[#allocation2 + $0x498] sm:$0xff]
    %v260 = vld [vmem:[#allocation2 + $0x4a0] sm:$0xff]
    %v261 = vld [vmem:[#allocation2 + $0x4a8] sm:$0xff]
    %v262 = vld [vmem:[#allocation2 + $0x4b0] sm:$0xff]
    %v263 = vld [vmem:[#allocation2 + $0x4b8] sm:$0xff]
    %v264 = vld [vmem:[#allocation2 + $0x4c0] sm:$0xff]
    %v265 = vld [vmem:[#allocation2 + $0x4c8] sm:$0xff]
    %v266 = vld [vmem:[#allocation2 + $0x4d0] sm:$0xff]
    %v267 = vld [vmem:[#allocation2 + $0x4d8] sm:$0xff]
    %v268 = vld [vmem:[#allocation2 + $0x4e0] sm:$0xff]
    %v269 = vld [vmem:[#allocation2 + $0x4e8] sm:$0xff]
    %v270 = vld [vmem:[#allocation2 + $0x4f0] sm:$0xff]
    %v271 = vld [vmem:[#allocation2 + $0x4f8] sm:$0xff]
    %v272 = vld [vmem:[#allocation2 + $0x500] sm:$0xff]
    %v273 = vld [vmem:[#allocation2 + $0x508] sm:$0xff]
    %v274 = vld [vmem:[#allocation2 + $0x510] sm:$0xff]
    %v275 = vld [vmem:[#allocation2 + $0x518] sm:$0xff]
    %v276 = vld [vmem:[#allocation2 + $0x520] sm:$0xff]
    %v277 = vld [vmem:[#allocation2 + $0x528] sm:$0xff]
    %v278 = vld [vmem:[#allocation2 + $0x530] sm:$0xff]
    %v279 = vld [vmem:[#allocation2 + $0x538] sm:$0xff]
    %v280 = vld [vmem:[#allocation2 + $0x540] sm:$0xff]
    %v281 = vld [vmem:[#allocation2 + $0x548] sm:$0xff]
    %v282 = vld [vmem:[#allocation2 + $0x550] sm:$0xff]
    %v283 = vld [vmem:[#allocation2 + $0x558] sm:$0xff]
    %v284 = vld [vmem:[#allocation2 + $0x560] sm:$0xff]
    %v285 = vld [vmem:[#allocation2 + $0x568] sm:$0xff]
    %v286 = vld [vmem:[#allocation2 + $0x570] sm:$0xff]
    %v287 = vld [vmem:[#allocation2 + $0x578] sm:$0xff]
    %v288 = vld [vmem:[#allocation2 + $0x580] sm:$0xff]
    %v289 = vld [vmem:[#allocation2 + $0x588] sm:$0xff]
    %v290 = vld [vmem:[#allocation2 + $0x590] sm:$0xff]
    %v291 = vld [vmem:[#allocation2 + $0x598] sm:$0xff]
    %v292 = vld [vmem:[#allocation2 + $0x5a0] sm:$0xff]
    %v293 = vld [vmem:[#allocation2 + $0x5a8] sm:$0xff]
    %v294 = vld [vmem:[#allocation2 + $0x5b0] sm:$0xff]
    %v295 = vld [vmem:[#allocation2 + $0x5b8] sm:$0xff]
    %v296 = vld [vmem:[#allocation2 + $0x5c0] sm:$0xff]
    %v297 = vld [vmem:[#allocation2 + $0x5c8] sm:$0xff]
    %v298 = vld [vmem:[#allocation2 + $0x5d0] sm:$0xff]
    %v299 = vld [vmem:[#allocation2 + $0x5d8] sm:$0xff]
    %v300 = vld [vmem:[#allocation2 + $0x5e0] sm:$0xff]
    %v301 = vld [vmem:[#allocation2 + $0x5e8] sm:$0xff]
    %v302 = vld [vmem:[#allocation2 + $0x5f0] sm:$0xff]
    %v303 = vld [vmem:[#allocation2 + $0x5f8] sm:$0xff]
    %v304 = vld [vmem:[#allocation2 + $0x600] sm:$0xff]
    %v305 = vld [vmem:[#allocation2 + $0x608] sm:$0xff]
    %v306 = vld [vmem:[#allocation2 + $0x610] sm:$0xff]
    %v307 = vld [vmem:[#allocation2 + $0x618] sm:$0xff]
    %v308 = vld [vmem:[#allocation2 + $0x620] sm:$0xff]
    %v309 = vld [vmem:[#allocation2 + $0x628] sm:$0xff]
    %v310 = vld [vmem:[#allocation2 + $0x630] sm:$0xff]
    %v311 = vld [vmem:[#allocation2 + $0x638] sm:$0xff]
    %v312 = vld [vmem:[#allocation2 + $0x640] sm:$0xff]
    %v313 = vld [vmem:[#allocation2 + $0x648] sm:$0xff]
    %v314 = vld [vmem:[#allocation2 + $0x650] sm:$0xff]
    %v315 = vld [vmem:[#allocation2 + $0x658] sm:$0xff]
    %v316 = vld [vmem:[#allocation2 + $0x660] sm:$0xff]
    %v317 = vld [vmem:[#allocation2 + $0x668] sm:$0xff]
    %v318 = vld [vmem:[#allocation2 + $0x670] sm:$0xff]
    %v319 = vld [vmem:[#allocation2 + $0x678] sm:$0xff]
    %v320 = vld [vmem:[#allocation2 + $0x680] sm:$0xff]
    %v321 = vld [vmem:[#allocation2 + $0x688] sm:$0xff]
    %v322 = vld [vmem:[#allocation2 + $0x690] sm:$0xff]
    %v323 = vld [vmem:[#allocation2 + $0x698] sm:$0xff]
    %v324 = vld [vmem:[#allocation2 + $0x6a0] sm:$0xff]
    %v325 = vld [vmem:[#allocation2 + $0x6a8] sm:$0xff]
    %v326 = vld [vmem:[#allocation2 + $0x6b0] sm:$0xff]
    %v327 = vld [vmem:[#allocation2 + $0x6b8] sm:$0xff]
    %v328 = vld [vmem:[#allocation2 + $0x6c0] sm:$0xff]
    %v329 = vld [vmem:[#allocation2 + $0x6c8] sm:$0xff]
    %v330 = vld [vmem:[#allocation2 + $0x6d0] sm:$0xff]
    %v331 = vld [vmem:[#allocation2 + $0x6d8] sm:$0xff]
    %v332 = vld [vmem:[#allocation2 + $0x6e0] sm:$0xff]
    %v333 = vld [vmem:[#allocation2 + $0x6e8] sm:$0xff]
    %v334 = vld [vmem:[#allocation2 + $0x6f0] sm:$0xff]
    %v335 = vld [vmem:[#allocation2 + $0x6f8] sm:$0xff]
    %v336 = vld [vmem:[#allocation2 + $0x700] sm:$0xff]
    %v337 = vld [vmem:[#allocation2 + $0x708] sm:$0xff]
    %v338 = vld [vmem:[#allocation2 + $0x710] sm:$0xff]
    %v339 = vld [vmem:[#allocation2 + $0x718] sm:$0xff]
    %v340 = vld [vmem:[#allocation2 + $0x720] sm:$0xff]
    %v341 = vld [vmem:[#allocation2 + $0x728] sm:$0xff]
    %v342 = vld [vmem:[#allocation2 + $0x730] sm:$0xff]
    %v343 = vld [vmem:[#allocation2 + $0x738] sm:$0xff]
    %v344 = vld [vmem:[#allocation2 + $0x740] sm:$0xff]
    %v345 = vld [vmem:[#allocation2 + $0x748] sm:$0xff]
    %v346 = vld [vmem:[#allocation2 + $0x750] sm:$0xff]
    %v347 = vld [vmem:[#allocation2 + $0x758] sm:$0xff]
    %v348 = vld [vmem:[#allocation2 + $0x760] sm:$0xff]
    %v349 = vld [vmem:[#allocation2 + $0x768] sm:$0xff]
    %v350 = vld [vmem:[#allocation2 + $0x770] sm:$0xff]
    %v351 = vld [vmem:[#allocation2 + $0x778] sm:$0xff]
    %v352 = vld [vmem:[#allocation2 + $0x780] sm:$0xff]
    %v353 = vld [vmem:[#allocation2 + $0x788] sm:$0xff]
    %v354 = vld [vmem:[#allocation2 + $0x790] sm:$0xff]
    %v355 = vld [vmem:[#allocation2 + $0x798] sm:$0xff]
    %v356 = vld [vmem:[#allocation2 + $0x7a0] sm:$0xff]
    %v357 = vld [vmem:[#allocation2 + $0x7a8] sm:$0xff]
    %v358 = vld [vmem:[#allocation2 + $0x7b0] sm:$0xff]
    %v359 = vld [vmem:[#allocation2 + $0x7b8] sm:$0xff]
    %v360 = vld [vmem:[#allocation2 + $0x7c0] sm:$0xff]
    %v361 = vld [vmem:[#allocation2 + $0x7c8] sm:$0xff]
    %v362 = vld [vmem:[#allocation2 + $0x7d0] sm:$0xff]
    %v363 = vld [vmem:[#allocation2 + $0x7d8] sm:$0xff]
    %v364 = vld [vmem:[#allocation2 + $0x7e0] sm:$0xff]
    %v365 = vld [vmem:[#allocation2 + $0x7e8] sm:$0xff]
    %v366 = vld [vmem:[#allocation2 + $0x7f0] sm:$0xff]
    %v367 = vld [vmem:[#allocation2 + $0x7f8] sm:$0xff]
    %v368 = vld [vmem:[#allocation2 + $0x800] sm:$0xff]
    %v369 = vld [vmem:[#allocation2 + $0x808] sm:$0xff]
    %v370 = vld [vmem:[#allocation2 + $0x810] sm:$0xff]
    %v371 = vld [vmem:[#allocation2 + $0x818] sm:$0xff]
    %v372 = vld [vmem:[#allocation2 + $0x820] sm:$0xff]
    %v373 = vld [vmem:[#allocation2 + $0x828] sm:$0xff]
    %v374 = vld [vmem:[#allocation2 + $0x830] sm:$0xff]
    %v375 = vld [vmem:[#allocation2 + $0x838] sm:$0xff]
    %v376 = vld [vmem:[#allocation2 + $0x840] sm:$0xff]
    %v377 = vld [vmem:[#allocation2 + $0x848] sm:$0xff]
    %v378 = vld [vmem:[#allocation2 + $0x850] sm:$0xff]
    %v379 = vld [vmem:[#allocation2 + $0x858] sm:$0xff]
    %v380 = vld [vmem:[#allocation2 + $0x860] sm:$0xff]
    %v381 = vld [vmem:[#allocation2 + $0x868] sm:$0xff]
    %v382 = vld [vmem:[#allocation2 + $0x870] sm:$0xff]
    %v383 = vld [vmem:[#allocation2 + $0x878] sm:$0xff]
    %v384 = vld [vmem:[#allocation2 + $0x880] sm:$0xff]
    %v385 = vld [vmem:[#allocation2 + $0x888] sm:$0xff]
    %v386 = vld [vmem:[#allocation2 + $0x890] sm:$0xff]
    %v387 = vld [vmem:[#allocation2 + $0x898] sm:$0xff]
    %v388 = vld [vmem:[#allocation2 + $0x8a0] sm:$0xff]
    %v389 = vld [vmem:[#allocation2 + $0x8a8] sm:$0xff]
    %v390 = vld [vmem:[#allocation2 + $0x8b0] sm:$0xff]
    %v391 = vld [vmem:[#allocation2 + $0x8b8] sm:$0xff]
    %v392 = vld [vmem:[#allocation2 + $0x8c0] sm:$0xff]
    %v393 = vld [vmem:[#allocation2 + $0x8c8] sm:$0xff]
    %v394 = vld [vmem:[#allocation2 + $0x8d0] sm:$0xff]
    %v395 = vld [vmem:[#allocation2 + $0x8d8] sm:$0xff]
    %v396 = vld [vmem:[#allocation2 + $0x8e0] sm:$0xff]
    %v397 = vld [vmem:[#allocation2 + $0x8e8] sm:$0xff]
    %v398 = vld [vmem:[#allocation2 + $0x8f0] sm:$0xff]
    %v399 = vld [vmem:[#allocation2 + $0x8f8] sm:$0xff]
    %v400 = vld [vmem:[#allocation2 + $0x900] sm:$0xff]
    %v401 = vld [vmem:[#allocation2 + $0x908] sm:$0xff]
    %v402 = vld [vmem:[#allocation2 + $0x910] sm:$0xff]
    %v403 = vld [vmem:[#allocation2 + $0x918] sm:$0xff]
    %v404 = vld [vmem:[#allocation2 + $0x920] sm:$0xff]
    %v405 = vld [vmem:[#allocation2 + $0x928] sm:$0xff]
    %v406 = vld [vmem:[#allocation2 + $0x930] sm:$0xff]
    %v407 = vld [vmem:[#allocation2 + $0x938] sm:$0xff]
    %v408 = vld [vmem:[#allocation2 + $0x940] sm:$0xff]
    %v409 = vld [vmem:[#allocation2 + $0x948] sm:$0xff]
    %v410 = vld [vmem:[#allocation2 + $0x950] sm:$0xff]
    %v411 = vld [vmem:[#allocation2 + $0x958] sm:$0xff]
    %v412 = vld [vmem:[#allocation2 + $0x960] sm:$0xff]
    %v413 = vld [vmem:[#allocation2 + $0x968] sm:$0xff]
    %v414 = vld [vmem:[#allocation2 + $0x970] sm:$0xff]
    %v415 = vld [vmem:[#allocation2 + $0x978] sm:$0xff]
    %v416 = vld [vmem:[#allocation2 + $0x980] sm:$0xff]
    %v417 = vld [vmem:[#allocation2 + $0x988] sm:$0xff]
    %v418 = vld [vmem:[#allocation2 + $0x990] sm:$0xff]
    %v419 = vld [vmem:[#allocation2 + $0x998] sm:$0xff]
    %v420 = vld [vmem:[#allocation2 + $0x9a0] sm:$0xff]
    %v421 = vld [vmem:[#allocation2 + $0x9a8] sm:$0xff]
    %v422 = vld [vmem:[#allocation2 + $0x9b0] sm:$0xff]
    %v423 = vld [vmem:[#allocation2 + $0x9b8] sm:$0xff]
    %v424 = vld [vmem:[#allocation2 + $0x9c0] sm:$0xff]
    %v425 = vld [vmem:[#allocation2 + $0x9c8] sm:$0xff]
    %v426 = vld [vmem:[#allocation2 + $0x9d0] sm:$0xff]
    %v427 = vld [vmem:[#allocation2 + $0x9d8] sm:$0xff]
    %v428 = vld [vmem:[#allocation2 + $0x9e0] sm:$0xff]
    %v429 = vld [vmem:[#allocation2 + $0x9e8] sm:$0xff]
    %v430 = vld [vmem:[#allocation2 + $0x9f0] sm:$0xff]
    %v431 = vld [vmem:[#allocation2 + $0x9f8] sm:$0xff]
    %v432 = vld [vmem:[#allocation2 + $0xa00] sm:$0xff]
    %v433 = vld [vmem:[#allocation2 + $0xa08] sm:$0xff]
    %v434 = vld [vmem:[#allocation2 + $0xa10] sm:$0xff]
    %v435 = vld [vmem:[#allocation2 + $0xa18] sm:$0xff]
    %v436 = vld [vmem:[#allocation2 + $0xa20] sm:$0xff]
    %v437 = vld [vmem:[#allocation2 + $0xa28] sm:$0xff]
    %v438 = vld [vmem:[#allocation2 + $0xa30] sm:$0xff]
    %v439 = vld [vmem:[#allocation2 + $0xa38] sm:$0xff]
    %v440 = vld [vmem:[#allocation2 + $0xa40] sm:$0xff]
    %v441 = vld [vmem:[#allocation2 + $0xa48] sm:$0xff]
    %v442 = vld [vmem:[#allocation2 + $0xa50] sm:$0xff]
    %v443 = vld [vmem:[#allocation2 + $0xa58] sm:$0xff]
    %v444 = vld [vmem:[#allocation2 + $0xa60] sm:$0xff]
    %v445 = vld [vmem:[#allocation2 + $0xa68] sm:$0xff]
    %v446 = vld [vmem:[#allocation2 + $0xa70] sm:$0xff]
    %v447 = vld [vmem:[#allocation2 + $0xa78] sm:$0xff]
    %v448 = vld [vmem:[#allocation2 + $0xa80] sm:$0xff]
    %v449 = vld [vmem:[#allocation2 + $0xa88] sm:$0xff]
    %v450 = vld [vmem:[#allocation2 + $0xa90] sm:$0xff]
    %v451 = vld [vmem:[#allocation2 + $0xa98] sm:$0xff]
    %v452 = vld [vmem:[#allocation2 + $0xaa0] sm:$0xff]
    %v453 = vld [vmem:[#allocation2 + $0xaa8] sm:$0xff]
    %v454 = vld [vmem:[#allocation2 + $0xab0] sm:$0xff]
    %v455 = vld [vmem:[#allocation2 + $0xab8] sm:$0xff]
    %v456 = vld [vmem:[#allocation2 + $0xac0] sm:$0xff]
    %v457 = vld [vmem:[#allocation2 + $0xac8] sm:$0xff]
    %v458 = vld [vmem:[#allocation2 + $0xad0] sm:$0xff]
    %v459 = vld [vmem:[#allocation2 + $0xad8] sm:$0xff]
    %v460 = vld [vmem:[#allocation2 + $0xae0] sm:$0xff]
    %v461 = vld [vmem:[#allocation2 + $0xae8] sm:$0xff]
    %v462 = vld [vmem:[#allocation2 + $0xaf0] sm:$0xff]
    %v463 = vld [vmem:[#allocation2 + $0xaf8] sm:$0xff]
    %v464 = vld [vmem:[#allocation2 + $0xb00] sm:$0xff]
    %v465 = vld [vmem:[#allocation2 + $0xb08] sm:$0xff]
    %v466 = vld [vmem:[#allocation2 + $0xb10] sm:$0xff]
    %v467 = vld [vmem:[#allocation2 + $0xb18] sm:$0xff]
    %v468 = vld [vmem:[#allocation2 + $0xb20] sm:$0xff]
    %v469 = vld [vmem:[#allocation2 + $0xb28] sm:$0xff]
    %v470 = vld [vmem:[#allocation2 + $0xb30] sm:$0xff]
    %v471 = vld [vmem:[#allocation2 + $0xb38] sm:$0xff]
    %v472 = vld [vmem:[#allocation2 + $0xb40] sm:$0xff]
    %v473 = vld [vmem:[#allocation2 + $0xb48] sm:$0xff]
    %v474 = vld [vmem:[#allocation2 + $0xb50] sm:$0xff]
    %v475 = vld [vmem:[#allocation2 + $0xb58] sm:$0xff]
    %v476 = vld [vmem:[#allocation2 + $0xb60] sm:$0xff]
    %v477 = vld [vmem:[#allocation2 + $0xb68] sm:$0xff]
    %v478 = vld [vmem:[#allocation2 + $0xb70] sm:$0xff]
    %v479 = vld [vmem:[#allocation2 + $0xb78] sm:$0xff]
    %v480 = vld [vmem:[#allocation2 + $0xb80] sm:$0xff]
    %v481 = vld [vmem:[#allocation2 + $0xb88] sm:$0xff]
    %v482 = vld [vmem:[#allocation2 + $0xb90] sm:$0xff]
    %v483 = vld [vmem:[#allocation2 + $0xb98] sm:$0xff]
    %v484 = vld [vmem:[#allocation2 + $0xba0] sm:$0xff]
    %v485 = vld [vmem:[#allocation2 + $0xba8] sm:$0xff]
    %v486 = vld [vmem:[#allocation2 + $0xbb0] sm:$0xff]
    %v487 = vld [vmem:[#allocation2 + $0xbb8] sm:$0xff]
    %v488 = vld [vmem:[#allocation2 + $0xbc0] sm:$0xff]
    %v489 = vld [vmem:[#allocation2 + $0xbc8] sm:$0xff]
    %v490 = vld [vmem:[#allocation2 + $0xbd0] sm:$0xff]
    %v491 = vld [vmem:[#allocation2 + $0xbd8] sm:$0xff]
    %v492 = vld [vmem:[#allocation2 + $0xbe0] sm:$0xff]
    %v493 = vld [vmem:[#allocation2 + $0xbe8] sm:$0xff]
    %v494 = vld [vmem:[#allocation2 + $0xbf0] sm:$0xff]
    %v495 = vld [vmem:[#allocation2 + $0xbf8] sm:$0xff]
    %v496 = vld [vmem:[#allocation2 + $0xc00] sm:$0xff]
    %v497 = vld [vmem:[#allocation2 + $0xc08] sm:$0xff]
    %v498 = vld [vmem:[#allocation2 + $0xc10] sm:$0xff]
    %v499 = vld [vmem:[#allocation2 + $0xc18] sm:$0xff]
    %v500 = vld [vmem:[#allocation2 + $0xc20] sm:$0xff]
    %v501 = vld [vmem:[#allocation2 + $0xc28] sm:$0xff]
    %v502 = vld [vmem:[#allocation2 + $0xc30] sm:$0xff]
    %v503 = vld [vmem:[#allocation2 + $0xc38] sm:$0xff]
    %v504 = vld [vmem:[#allocation2 + $0xc40] sm:$0xff]
    %v505 = vld [vmem:[#allocation2 + $0xc48] sm:$0xff]
    %v506 = vld [vmem:[#allocation2 + $0xc50] sm:$0xff]
    %v507 = vld [vmem:[#allocation2 + $0xc58] sm:$0xff]
    %v508 = vld [vmem:[#allocation2 + $0xc60] sm:$0xff]
    %v509 = vld [vmem:[#allocation2 + $0xc68] sm:$0xff]
    %v510 = vld [vmem:[#allocation2 + $0xc70] sm:$0xff]
    %v511 = vld [vmem:[#allocation2 + $0xc78] sm:$0xff]
    %v512 = vld [vmem:[#allocation2 + $0xc80] sm:$0xff]
    %v513 = vld [vmem:[#allocation2 + $0xc88] sm:$0xff]
    %v514 = vld [vmem:[#allocation2 + $0xc90] sm:$0xff]
    %v515 = vld [vmem:[#allocation2 + $0xc98] sm:$0xff]
    %v516 = vld [vmem:[#allocation2 + $0xca0] sm:$0xff]
    %v517 = vld [vmem:[#allocation2 + $0xca8] sm:$0xff]
    %v518 = vld [vmem:[#allocation2 + $0xcb0] sm:$0xff]
    %v519 = vld [vmem:[#allocation2 + $0xcb8] sm:$0xff]
    %v520 = vld [vmem:[#allocation2 + $0xcc0] sm:$0xff]
    %v521 = vld [vmem:[#allocation2 + $0xcc8] sm:$0xff]
    %v522 = vld [vmem:[#allocation2 + $0xcd0] sm:$0xff]
    %v523 = vld [vmem:[#allocation2 + $0xcd8] sm:$0xff]
    %v524 = vld [vmem:[#allocation2 + $0xce0] sm:$0xff]
    %v525 = vld [vmem:[#allocation2 + $0xce8] sm:$0xff]
    %v526 = vld [vmem:[#allocation2 + $0xcf0] sm:$0xff]
    %v527 = vld [vmem:[#allocation2 + $0xcf8] sm:$0xff]
    %v528 = vld [vmem:[#allocation2 + $0xd00] sm:$0xff]
    %v529 = vld [vmem:[#allocation2 + $0xd08] sm:$0xff]
    %v530 = vld [vmem:[#allocation2 + $0xd10] sm:$0xff]
    %v531 = vld [vmem:[#allocation2 + $0xd18] sm:$0xff]
    %v532 = vld [vmem:[#allocation2 + $0xd20] sm:$0xff]
    %v533 = vld [vmem:[#allocation2 + $0xd28] sm:$0xff]
    %v534 = vld [vmem:[#allocation2 + $0xd30] sm:$0xff]
    %v535 = vld [vmem:[#allocation2 + $0xd38] sm:$0xff]
    %v536 = vld [vmem:[#allocation2 + $0xd40] sm:$0xff]
    %v537 = vld [vmem:[#allocation2 + $0xd48] sm:$0xff]
    %v538 = vld [vmem:[#allocation2 + $0xd50] sm:$0xff]
    %v539 = vld [vmem:[#allocation2 + $0xd58] sm:$0xff]
    %v540 = vld [vmem:[#allocation2 + $0xd60] sm:$0xff]
    %v541 = vld [vmem:[#allocation2 + $0xd68] sm:$0xff]
    %v542 = vld [vmem:[#allocation2 + $0xd70] sm:$0xff]
    %v543 = vld [vmem:[#allocation2 + $0xd78] sm:$0xff]
    %v544 = vld [vmem:[#allocation2 + $0xd80] sm:$0xff]
    %v545 = vld [vmem:[#allocation2 + $0xd88] sm:$0xff]
    %v546 = vld [vmem:[#allocation2 + $0xd90] sm:$0xff]
    %v547 = vld [vmem:[#allocation2 + $0xd98] sm:$0xff]
    %v548 = vld [vmem:[#allocation2 + $0xda0] sm:$0xff]
    %v549 = vld [vmem:[#allocation2 + $0xda8] sm:$0xff]
    %v550 = vld [vmem:[#allocation2 + $0xdb0] sm:$0xff]
    %v551 = vld [vmem:[#allocation2 + $0xdb8] sm:$0xff]
    %v552 = vld [vmem:[#allocation2 + $0xdc0] sm:$0xff]
    %v553 = vld [vmem:[#allocation2 + $0xdc8] sm:$0xff]
    %v554 = vld [vmem:[#allocation2 + $0xdd0] sm:$0xff]
    %v555 = vld [vmem:[#allocation2 + $0xdd8] sm:$0xff]
    %v556 = vld [vmem:[#allocation2 + $0xde0] sm:$0xff]
    %v557 = vld [vmem:[#allocation2 + $0xde8] sm:$0xff]
    %v558 = vld [vmem:[#allocation2 + $0xdf0] sm:$0xff]
    %v559 = vld [vmem:[#allocation2 + $0xdf8] sm:$0xff]
    %v560 = vld [vmem:[#allocation2 + $0xe00] sm:$0xff]
    %v561 = vld [vmem:[#allocation2 + $0xe08] sm:$0xff]
    %v562 = vld [vmem:[#allocation2 + $0xe10] sm:$0xff]
    %v563 = vld [vmem:[#allocation2 + $0xe18] sm:$0xff]
    %v564 = vld [vmem:[#allocation2 + $0xe20] sm:$0xff]
    %v565 = vld [vmem:[#allocation2 + $0xe28] sm:$0xff]
    %v566 = vld [vmem:[#allocation2 + $0xe30] sm:$0xff]
    %v567 = vld [vmem:[#allocation2 + $0xe38] sm:$0xff]
    %v568 = vld [vmem:[#allocation2 + $0xe40] sm:$0xff]
    %v569 = vld [vmem:[#allocation2 + $0xe48] sm:$0xff]
    %v570 = vld [vmem:[#allocation2 + $0xe50] sm:$0xff]
    %v571 = vld [vmem:[#allocation2 + $0xe58] sm:$0xff]
    %v572 = vld [vmem:[#allocation2 + $0xe60] sm:$0xff]
    %v573 = vld [vmem:[#allocation2 + $0xe68] sm:$0xff]
    %v574 = vld [vmem:[#allocation2 + $0xe70] sm:$0xff]
    %v575 = vld [vmem:[#allocation2 + $0xe78] sm:$0xff]
    %v576 = vld [vmem:[#allocation2 + $0xe80] sm:$0xff]
    %v577 = vld [vmem:[#allocation2 + $0xe88] sm:$0xff]
    %v578 = vld [vmem:[#allocation2 + $0xe90] sm:$0xff]
    %v579 = vld [vmem:[#allocation2 + $0xe98] sm:$0xff]
    %v580 = vld [vmem:[#allocation2 + $0xea0] sm:$0xff]
    %v581 = vld [vmem:[#allocation2 + $0xea8] sm:$0xff]
    %v582 = vld [vmem:[#allocation2 + $0xeb0] sm:$0xff]
    %v583 = vld [vmem:[#allocation2 + $0xeb8] sm:$0xff]
    %v584 = vld [vmem:[#allocation2 + $0xec0] sm:$0xff]
    %v585 = vld [vmem:[#allocation2 + $0xec8] sm:$0xff]
    %v586 = vld [vmem:[#allocation2 + $0xed0] sm:$0xff]
    %v587 = vld [vmem:[#allocation2 + $0xed8] sm:$0xff]
    %v588 = vld [vmem:[#allocation2 + $0xee0] sm:$0xff]
    %v589 = vld [vmem:[#allocation2 + $0xee8] sm:$0xff]
    %v590 = vld [vmem:[#allocation2 + $0xef0] sm:$0xff]
    %v591 = vld [vmem:[#allocation2 + $0xef8] sm:$0xff]
    %v592 = vld [vmem:[#allocation2 + $0xf00] sm:$0xff]
    %v593 = vld [vmem:[#allocation2 + $0xf08] sm:$0xff]
    %v594 = vld [vmem:[#allocation2 + $0xf10] sm:$0xff]
    %v595 = vld [vmem:[#allocation2 + $0xf18] sm:$0xff]
    %v596 = vld [vmem:[#allocation2 + $0xf20] sm:$0xff]
    %v597 = vld [vmem:[#allocation2 + $0xf28] sm:$0xff]
    %v598 = vld [vmem:[#allocation2 + $0xf30] sm:$0xff]
    %v599 = vld [vmem:[#allocation2 + $0xf38] sm:$0xff]
    %v600 = vld [vmem:[#allocation2 + $0xf40] sm:$0xff]
    %v601 = vld [vmem:[#allocation2 + $0xf48] sm:$0xff]
    %v602 = vld [vmem:[#allocation2 + $0xf50] sm:$0xff]
    %v603 = vld [vmem:[#allocation2 + $0xf58] sm:$0xff]
    %v604 = vld [vmem:[#allocation2 + $0xf60] sm:$0xff]
    %v605 = vld [vmem:[#allocation2 + $0xf68] sm:$0xff]
    %v606 = vld [vmem:[#allocation2 + $0xf70] sm:$0xff]
    %v607 = vld [vmem:[#allocation2 + $0xf78] sm:$0xff]
    %v608 = vld [vmem:[#allocation2 + $0xf80] sm:$0xff]
    %v609 = vld [vmem:[#allocation2 + $0xf88] sm:$0xff]
    %v610 = vld [vmem:[#allocation2 + $0xf90] sm:$0xff]
    %v611 = vld [vmem:[#allocation2 + $0xf98] sm:$0xff]
    %v612 = vld [vmem:[#allocation2 + $0xfa0] sm:$0xff]
    %v613 = vld [vmem:[#allocation2 + $0xfa8] sm:$0xff]
    %v614 = vld [vmem:[#allocation2 + $0xfb0] sm:$0xff]
    %v615 = vld [vmem:[#allocation2 + $0xfb8] sm:$0xff]
    %v616 = vld [vmem:[#allocation2 + $0xfc0] sm:$0xff]
    %v617 = vld [vmem:[#allocation2 + $0xfc8] sm:$0xff]
    %v618 = vld [vmem:[#allocation2 + $0xfd0] sm:$0xff]
    %v619 = vld [vmem:[#allocation2 + $0xfd8] sm:$0xff]
    %v620 = vld [vmem:[#allocation2 + $0xfe0] sm:$0xff]
    %v621 = vld [vmem:[#allocation2 + $0xfe8] sm:$0xff]
    %v622 = vld [vmem:[#allocation2 + $0xff0] sm:$0xff]
    %v623 = vld [vmem:[#allocation2 + $0xff8] sm:$0xff]
    %v624 = vld [vmem:[#allocation2 + $0x1000] sm:$0xff]
    %v625 = vld [vmem:[#allocation2 + $0x1008] sm:$0xff]
    %v626 = vld [vmem:[#allocation2 + $0x1010] sm:$0xff]
    %v627 = vld [vmem:[#allocation2 + $0x1018] sm:$0xff]
    %v628 = vld [vmem:[#allocation2 + $0x1020] sm:$0xff]
    %v629 = vld [vmem:[#allocation2 + $0x1028] sm:$0xff]
    %v630 = vld [vmem:[#allocation2 + $0x1030] sm:$0xff]
    %v631 = vld [vmem:[#allocation2 + $0x1038] sm:$0xff]
    %v632 = vld [vmem:[#allocation2 + $0x1040] sm:$0xff]
    %v633 = vld [vmem:[#allocation2 + $0x1048] sm:$0xff]
    %v634 = vld [vmem:[#allocation2 + $0x1050] sm:$0xff]
    %v635 = vld [vmem:[#allocation2 + $0x1058] sm:$0xff]
    %v636 = vld [vmem:[#allocation2 + $0x1060] sm:$0xff]
    %v637 = vld [vmem:[#allocation2 + $0x1068] sm:$0xff]
    %v638 = vld [vmem:[#allocation2 + $0x1070] sm:$0xff]
    %v639 = vld [vmem:[#allocation2 + $0x1078] sm:$0xff]
    %v640 = vld [vmem:[#allocation2 + $0x1080] sm:$0xff]
    %v641 = vld [vmem:[#allocation2 + $0x1088] sm:$0xff]
    %v642 = vld [vmem:[#allocation2 + $0x1090] sm:$0xff]
    %v643 = vld [vmem:[#allocation2 + $0x1098] sm:$0xff]
    %v644 = vld [vmem:[#allocation2 + $0x10a0] sm:$0xff]
    %v645 = vld [vmem:[#allocation2 + $0x10a8] sm:$0xff]
    %v646 = vld [vmem:[#allocation2 + $0x10b0] sm:$0xff]
    %v647 = vld [vmem:[#allocation2 + $0x10b8] sm:$0xff]
    %v648 = vld [vmem:[#allocation2 + $0x10c0] sm:$0xff]
    %v649 = vld [vmem:[#allocation2 + $0x10c8] sm:$0xff]
    %v650 = vld [vmem:[#allocation2 + $0x10d0] sm:$0xff]
    %v651 = vld [vmem:[#allocation2 + $0x10d8] sm:$0xff]
    %v652 = vld [vmem:[#allocation2 + $0x10e0] sm:$0xff]
    %v653 = vld [vmem:[#allocation2 + $0x10e8] sm:$0xff]
    %v654 = vld [vmem:[#allocation2 + $0x10f0] sm:$0xff]
    %v655 = vld [vmem:[#allocation2 + $0x10f8] sm:$0xff]
    %v656 = vld [vmem:[#allocation2 + $0x1100] sm:$0xff]
    %v657 = vld [vmem:[#allocation2 + $0x1108] sm:$0xff]
    %v658 = vld [vmem:[#allocation2 + $0x1110] sm:$0xff]
    %v659 = vld [vmem:[#allocation2 + $0x1118] sm:$0xff]
    %v660 = vld [vmem:[#allocation2 + $0x1120] sm:$0xff]
    %v661 = vld [vmem:[#allocation2 + $0x1128] sm:$0xff]
    %v662 = vld [vmem:[#allocation2 + $0x1130] sm:$0xff]
    %v663 = vld [vmem:[#allocation2 + $0x1138] sm:$0xff]
    %v664 = vld [vmem:[#allocation2 + $0x1140] sm:$0xff]
    %v665 = vld [vmem:[#allocation2 + $0x1148] sm:$0xff]
    %v666 = vld [vmem:[#allocation2 + $0x1150] sm:$0xff]
    %v667 = vld [vmem:[#allocation2 + $0x1158] sm:$0xff]
    %v668 = vld [vmem:[#allocation2 + $0x1160] sm:$0xff]
    %v669 = vld [vmem:[#allocation2 + $0x1168] sm:$0xff]
    %v670 = vld [vmem:[#allocation2 + $0x1170] sm:$0xff]
    %v671 = vld [vmem:[#allocation2 + $0x1178] sm:$0xff]
    %v672 = vld [vmem:[#allocation2 + $0x1180] sm:$0xff]
    %v673 = vld [vmem:[#allocation2 + $0x1188] sm:$0xff]
    %v674 = vld [vmem:[#allocation2 + $0x1190] sm:$0xff]
    %v675 = vld [vmem:[#allocation2 + $0x1198] sm:$0xff]
    %v676 = vld [vmem:[#allocation2 + $0x11a0] sm:$0xff]
    %v677 = vld [vmem:[#allocation2 + $0x11a8] sm:$0xff]
    %v678 = vld [vmem:[#allocation2 + $0x11b0] sm:$0xff]
    %v679 = vld [vmem:[#allocation2 + $0x11b8] sm:$0xff]
    %v680 = vld [vmem:[#allocation2 + $0x11c0] sm:$0xff]
    %v681 = vld [vmem:[#allocation2 + $0x11c8] sm:$0xff]
    %v682 = vld [vmem:[#allocation2 + $0x11d0] sm:$0xff]
    %v683 = vld [vmem:[#allocation2 + $0x11d8] sm:$0xff]
    %v684 = vld [vmem:[#allocation2 + $0x11e0] sm:$0xff]
    %v685 = vld [vmem:[#allocation2 + $0x11e8] sm:$0xff]
    %v686 = vld [vmem:[#allocation2 + $0x11f0] sm:$0xff]
    %v687 = vld [vmem:[#allocation2 + $0x11f8] sm:$0xff]
    %v688 = vld [vmem:[#allocation2 + $0x1200] sm:$0xff]
    %v689 = vld [vmem:[#allocation2 + $0x1208] sm:$0xff]
    %v690 = vld [vmem:[#allocation2 + $0x1210] sm:$0xff]
    %v691 = vld [vmem:[#allocation2 + $0x1218] sm:$0xff]
    %v692 = vld [vmem:[#allocation2 + $0x1220] sm:$0xff]
    %v693 = vld [vmem:[#allocation2 + $0x1228] sm:$0xff]
    %v694 = vld [vmem:[#allocation2 + $0x1230] sm:$0xff]
    %v695 = vld [vmem:[#allocation2 + $0x1238] sm:$0xff]
    %v696 = vld [vmem:[#allocation2 + $0x1240] sm:$0xff]
    %v697 = vld [vmem:[#allocation2 + $0x1248] sm:$0xff]
    %v698 = vld [vmem:[#allocation2 + $0x1250] sm:$0xff]
    %v699 = vld [vmem:[#allocation2 + $0x1258] sm:$0xff]
    %v700 = vld [vmem:[#allocation2 + $0x1260] sm:$0xff]
    %v701 = vld [vmem:[#allocation2 + $0x1268] sm:$0xff]
    %v702 = vld [vmem:[#allocation2 + $0x1270] sm:$0xff]
    %v703 = vld [vmem:[#allocation2 + $0x1278] sm:$0xff]
    %v704 = vld [vmem:[#allocation2 + $0x1280] sm:$0xff]
    %v705 = vld [vmem:[#allocation2 + $0x1288] sm:$0xff]
    %v706 = vld [vmem:[#allocation2 + $0x1290] sm:$0xff]
    %v707 = vld [vmem:[#allocation2 + $0x1298] sm:$0xff]
    %v708 = vld [vmem:[#allocation2 + $0x12a0] sm:$0xff]
    %v709 = vld [vmem:[#allocation2 + $0x12a8] sm:$0xff]
    %v710 = vld [vmem:[#allocation2 + $0x12b0] sm:$0xff]
    %v711 = vld [vmem:[#allocation2 + $0x12b8] sm:$0xff]
    %v712 = vld [vmem:[#allocation2 + $0x12c0] sm:$0xff]
    %v713 = vld [vmem:[#allocation2 + $0x12c8] sm:$0xff]
    %v714 = vld [vmem:[#allocation2 + $0x12d0] sm:$0xff]
    %v715 = vld [vmem:[#allocation2 + $0x12d8] sm:$0xff]
    %v716 = vld [vmem:[#allocation2 + $0x12e0] sm:$0xff]
    %v717 = vld [vmem:[#allocation2 + $0x12e8] sm:$0xff]
    %v718 = vld [vmem:[#allocation2 + $0x12f0] sm:$0xff]
    %v719 = vld [vmem:[#allocation2 + $0x12f8] sm:$0xff]
    %v720 = vld [vmem:[#allocation2 + $0x1300] sm:$0xff]
    %v721 = vld [vmem:[#allocation2 + $0x1308] sm:$0xff]
    %v722 = vld [vmem:[#allocation2 + $0x1310] sm:$0xff]
    %v723 = vld [vmem:[#allocation2 + $0x1318] sm:$0xff]
    %v724 = vld [vmem:[#allocation2 + $0x1320] sm:$0xff]
    %v725 = vld [vmem:[#allocation2 + $0x1328] sm:$0xff]
    %v726 = vld [vmem:[#allocation2 + $0x1330] sm:$0xff]
    %v727 = vld [vmem:[#allocation2 + $0x1338] sm:$0xff]
    %v728 = vld [vmem:[#allocation2 + $0x1340] sm:$0xff]
    %v729 = vld [vmem:[#allocation2 + $0x1348] sm:$0xff]
    %v730 = vld [vmem:[#allocation2 + $0x1350] sm:$0xff]
    %v731 = vld [vmem:[#allocation2 + $0x1358] sm:$0xff]
    %v732 = vld [vmem:[#allocation2 + $0x1360] sm:$0xff]
    %v733 = vld [vmem:[#allocation2 + $0x1368] sm:$0xff]
    %v734 = vld [vmem:[#allocation2 + $0x1370] sm:$0xff]
    %v735 = vld [vmem:[#allocation2 + $0x1378] sm:$0xff]
    %v736 = vld [vmem:[#allocation2 + $0x1380] sm:$0xff]
    %v737 = vld [vmem:[#allocation2 + $0x1388] sm:$0xff]
    %v738 = vld [vmem:[#allocation2 + $0x1390] sm:$0xff]
    %v739 = vld [vmem:[#allocation2 + $0x1398] sm:$0xff]
    %v740 = vld [vmem:[#allocation2 + $0x13a0] sm:$0xff]
    %v741 = vld [vmem:[#allocation2 + $0x13a8] sm:$0xff]
    %v742 = vld [vmem:[#allocation2 + $0x13b0] sm:$0xff]
    %v743 = vld [vmem:[#allocation2 + $0x13b8] sm:$0xff]
    %v744 = vld [vmem:[#allocation2 + $0x13c0] sm:$0xff]
    %v745 = vld [vmem:[#allocation2 + $0x13c8] sm:$0xff]
    %v746 = vld [vmem:[#allocation2 + $0x13d0] sm:$0xff]
    %v747 = vld [vmem:[#allocation2 + $0x13d8] sm:$0xff]
    %v748 = vld [vmem:[#allocation2 + $0x13e0] sm:$0xff]
    %v749 = vld [vmem:[#allocation2 + $0x13e8] sm:$0xff]
    %v750 = vld [vmem:[#allocation2 + $0x13f0] sm:$0xff]
    %v751 = vld [vmem:[#allocation2 + $0x13f8] sm:$0xff]
    %v752 = vld [vmem:[#allocation2 + $0x1400] sm:$0xff]
    %v753 = vld [vmem:[#allocation2 + $0x1408] sm:$0xff]
    %v754 = vld [vmem:[#allocation2 + $0x1410] sm:$0xff]
    %v755 = vld [vmem:[#allocation2 + $0x1418] sm:$0xff]
    %v756 = vld [vmem:[#allocation2 + $0x1420] sm:$0xff]
    %v757 = vld [vmem:[#allocation2 + $0x1428] sm:$0xff]
    %v758 = vld [vmem:[#allocation2 + $0x1430] sm:$0xff]
    %v759 = vld [vmem:[#allocation2 + $0x1438] sm:$0xff]
    %v760 = vld [vmem:[#allocation2 + $0x1440] sm:$0xff]
    %v761 = vld [vmem:[#allocation2 + $0x1448] sm:$0xff]
    %v762 = vld [vmem:[#allocation2 + $0x1450] sm:$0xff]
    %v763 = vld [vmem:[#allocation2 + $0x1458] sm:$0xff]
    %v764 = vld [vmem:[#allocation2 + $0x1460] sm:$0xff]
    %v765 = vld [vmem:[#allocation2 + $0x1468] sm:$0xff]
    %v766 = vld [vmem:[#allocation2 + $0x1470] sm:$0xff]
    %v767 = vld [vmem:[#allocation2 + $0x1478] sm:$0xff]
    %v768 = vld [vmem:[#allocation2 + $0x1480] sm:$0xff]
    %v769 = vld [vmem:[#allocation2 + $0x1488] sm:$0xff]
    %v770 = vld [vmem:[#allocation2 + $0x1490] sm:$0xff]
    %v771 = vld [vmem:[#allocation2 + $0x1498] sm:$0xff]
    %v772 = vld [vmem:[#allocation2 + $0x14a0] sm:$0xff]
    %v773 = vld [vmem:[#allocation2 + $0x14a8] sm:$0xff]
    %v774 = vld [vmem:[#allocation2 + $0x14b0] sm:$0xff]
    %v775 = vld [vmem:[#allocation2 + $0x14b8] sm:$0xff]
    %v776 = vld [vmem:[#allocation2 + $0x14c0] sm:$0xff]
    %v777 = vld [vmem:[#allocation2 + $0x14c8] sm:$0xff]
    %v778 = vld [vmem:[#allocation2 + $0x14d0] sm:$0xff]
    %v779 = vld [vmem:[#allocation2 + $0x14d8] sm:$0xff]
    %v780 = vld [vmem:[#allocation2 + $0x14e0] sm:$0xff]
    %v781 = vld [vmem:[#allocation2 + $0x14e8] sm:$0xff]
    %v782 = vld [vmem:[#allocation2 + $0x14f0] sm:$0xff]
    %v783 = vld [vmem:[#allocation2 + $0x14f8] sm:$0xff]
    %v784 = vld [vmem:[#allocation2 + $0x1500] sm:$0xff]
    %v785 = vld [vmem:[#allocation2 + $0x1508] sm:$0xff]
    %v786 = vld [vmem:[#allocation2 + $0x1510] sm:$0xff]
    %v787 = vld [vmem:[#allocation2 + $0x1518] sm:$0xff]
    %v788 = vld [vmem:[#allocation2 + $0x1520] sm:$0xff]
    %v789 = vld [vmem:[#allocation2 + $0x1528] sm:$0xff]
    %v790 = vld [vmem:[#allocation2 + $0x1530] sm:$0xff]
    %v791 = vld [vmem:[#allocation2 + $0x1538] sm:$0xff]
    %v792 = vld [vmem:[#allocation2 + $0x1540] sm:$0xff]
    %v793 = vld [vmem:[#allocation2 + $0x1548] sm:$0xff]
    %v794 = vld [vmem:[#allocation2 + $0x1550] sm:$0xff]
    %v795 = vld [vmem:[#allocation2 + $0x1558] sm:$0xff]
    %v796 = vld [vmem:[#allocation2 + $0x1560] sm:$0xff]
    %v797 = vld [vmem:[#allocation2 + $0x1568] sm:$0xff]
    %v798 = vld [vmem:[#allocation2 + $0x1570] sm:$0xff]
    %v799 = vld [vmem:[#allocation2 + $0x1578] sm:$0xff]
    %v800 = vld [vmem:[#allocation2 + $0x1580] sm:$0xff]
    %v801 = vld [vmem:[#allocation2 + $0x1588] sm:$0xff]
    %v802 = vld [vmem:[#allocation2 + $0x1590] sm:$0xff]
    %v803 = vld [vmem:[#allocation2 + $0x1598] sm:$0xff]
    %v804 = vld [vmem:[#allocation2 + $0x15a0] sm:$0xff]
    %v805 = vld [vmem:[#allocation2 + $0x15a8] sm:$0xff]
    %v806 = vld [vmem:[#allocation2 + $0x15b0] sm:$0xff]
    %v807 = vld [vmem:[#allocation2 + $0x15b8] sm:$0xff]
    %v808 = vld [vmem:[#allocation2 + $0x15c0] sm:$0xff]
    %v809 = vld [vmem:[#allocation2 + $0x15c8] sm:$0xff]
    %v810 = vld [vmem:[#allocation2 + $0x15d0] sm:$0xff]
    %v811 = vld [vmem:[#allocation2 + $0x15d8] sm:$0xff]
    %v812 = vld [vmem:[#allocation2 + $0x15e0] sm:$0xff]
    %v813 = vld [vmem:[#allocation2 + $0x15e8] sm:$0xff]
    %v814 = vld [vmem:[#allocation2 + $0x15f0] sm:$0xff]
    %v815 = vld [vmem:[#allocation2 + $0x15f8] sm:$0xff]
    %v816 = vld [vmem:[#allocation2 + $0x1600] sm:$0xff]
    %v817 = vld [vmem:[#allocation2 + $0x1608] sm:$0xff]
    %v818 = vld [vmem:[#allocation2 + $0x1610] sm:$0xff]
    %v819 = vld [vmem:[#allocation2 + $0x1618] sm:$0xff]
    %v820 = vld [vmem:[#allocation2 + $0x1620] sm:$0xff]
    %v821 = vld [vmem:[#allocation2 + $0x1628] sm:$0xff]
    %v822 = vld [vmem:[#allocation2 + $0x1630] sm:$0xff]
    %v823 = vld [vmem:[#allocation2 + $0x1638] sm:$0xff]
    %v824 = vld [vmem:[#allocation2 + $0x1640] sm:$0xff]
    %v825 = vld [vmem:[#allocation2 + $0x1648] sm:$0xff]
    %v826 = vld [vmem:[#allocation2 + $0x1650] sm:$0xff]
    %v827 = vld [vmem:[#allocation2 + $0x1658] sm:$0xff]
    %v828 = vld [vmem:[#allocation2 + $0x1660] sm:$0xff]
    %v829 = vld [vmem:[#allocation2 + $0x1668] sm:$0xff]
    %v830 = vld [vmem:[#allocation2 + $0x1670] sm:$0xff]
    %v831 = vld [vmem:[#allocation2 + $0x1678] sm:$0xff]
    %v832 = vld [vmem:[#allocation2 + $0x1680] sm:$0xff]
    %v833 = vld [vmem:[#allocation2 + $0x1688] sm:$0xff]
    %v834 = vld [vmem:[#allocation2 + $0x1690] sm:$0xff]
    %v835 = vld [vmem:[#allocation2 + $0x1698] sm:$0xff]
    %v836 = vld [vmem:[#allocation2 + $0x16a0] sm:$0xff]
    %v837 = vld [vmem:[#allocation2 + $0x16a8] sm:$0xff]
    %v838 = vld [vmem:[#allocation2 + $0x16b0] sm:$0xff]
    %v839 = vld [vmem:[#allocation2 + $0x16b8] sm:$0xff]
    %v840 = vld [vmem:[#allocation2 + $0x16c0] sm:$0xff]
    %v841 = vld [vmem:[#allocation2 + $0x16c8] sm:$0xff]
    %v842 = vld [vmem:[#allocation2 + $0x16d0] sm:$0xff]
    %v843 = vld [vmem:[#allocation2 + $0x16d8] sm:$0xff]
    %v844 = vld [vmem:[#allocation2 + $0x16e0] sm:$0xff]
    %v845 = vld [vmem:[#allocation2 + $0x16e8] sm:$0xff]
    %v846 = vld [vmem:[#allocation2 + $0x16f0] sm:$0xff]
    %v847 = vld [vmem:[#allocation2 + $0x16f8] sm:$0xff]
    %v848 = vld [vmem:[#allocation2 + $0x1700] sm:$0xff]
    %v849 = vld [vmem:[#allocation2 + $0x1708] sm:$0xff]
    %v850 = vld [vmem:[#allocation2 + $0x1710] sm:$0xff]
    %v851 = vld [vmem:[#allocation2 + $0x1718] sm:$0xff]
    %v852 = vld [vmem:[#allocation2 + $0x1720] sm:$0xff]
    %v853 = vld [vmem:[#allocation2 + $0x1728] sm:$0xff]
    %v854 = vld [vmem:[#allocation2 + $0x1730] sm:$0xff]
    %v855 = vld [vmem:[#allocation2 + $0x1738] sm:$0xff]
    %v856 = vld [vmem:[#allocation2 + $0x1740] sm:$0xff]
    %v857 = vld [vmem:[#allocation2 + $0x1748] sm:$0xff]
    %v858 = vld [vmem:[#allocation2 + $0x1750] sm:$0xff]
    %v859 = vld [vmem:[#allocation2 + $0x1758] sm:$0xff]
    %v860 = vld [vmem:[#allocation2 + $0x1760] sm:$0xff]
    %v861 = vld [vmem:[#allocation2 + $0x1768] sm:$0xff]
    %v862 = vld [vmem:[#allocation2 + $0x1770] sm:$0xff]
    %v863 = vld [vmem:[#allocation2 + $0x1778] sm:$0xff]
    %v864 = vld [vmem:[#allocation2 + $0x1780] sm:$0xff]
    %v865 = vld [vmem:[#allocation2 + $0x1788] sm:$0xff]
    %v866 = vld [vmem:[#allocation2 + $0x1790] sm:$0xff]
    %v867 = vld [vmem:[#allocation2 + $0x1798] sm:$0xff]
    %v868 = vld [vmem:[#allocation2 + $0x17a0] sm:$0xff]
    %v869 = vld [vmem:[#allocation2 + $0x17a8] sm:$0xff]
    %v870 = vld [vmem:[#allocation2 + $0x17b0] sm:$0xff]
    %v871 = vld [vmem:[#allocation2 + $0x17b8] sm:$0xff]
    %v872 = vld [vmem:[#allocation2 + $0x17c0] sm:$0xff]
    %v873 = vld [vmem:[#allocation2 + $0x17c8] sm:$0xff]
    %v874 = vld [vmem:[#allocation2 + $0x17d0] sm:$0xff]
    %v875 = vld [vmem:[#allocation2 + $0x17d8] sm:$0xff]
    %v876 = vld [vmem:[#allocation2 + $0x17e0] sm:$0xff]
    %v877 = vld [vmem:[#allocation2 + $0x17e8] sm:$0xff]
    %v878 = vld [vmem:[#allocation2 + $0x17f0] sm:$0xff]
    %v879 = vld [vmem:[#allocation2 + $0x17f8] sm:$0xff]
    %v880 = vld [vmem:[#allocation2 + $0x1800] sm:$0xff]
    %v881 = vld [vmem:[#allocation2 + $0x1808] sm:$0xff]
    %v882 = vld [vmem:[#allocation2 + $0x1810] sm:$0xff]
    %v883 = vld [vmem:[#allocation2 + $0x1818] sm:$0xff]
    %v884 = vld [vmem:[#allocation2 + $0x1820] sm:$0xff]
    %v885 = vld [vmem:[#allocation2 + $0x1828] sm:$0xff]
    %v886 = vld [vmem:[#allocation2 + $0x1830] sm:$0xff]
    %v887 = vld [vmem:[#allocation2 + $0x1838] sm:$0xff]
    %v888 = vld [vmem:[#allocation2 + $0x1840] sm:$0xff]
    %v889 = vld [vmem:[#allocation2 + $0x1848] sm:$0xff]
    %v890 = vld [vmem:[#allocation2 + $0x1850] sm:$0xff]
    %v891 = vld [vmem:[#allocation2 + $0x1858] sm:$0xff]
    %v892 = vld [vmem:[#allocation2 + $0x1860] sm:$0xff]
    %v893 = vld [vmem:[#allocation2 + $0x1868] sm:$0xff]
    %v894 = vld [vmem:[#allocation2 + $0x1870] sm:$0xff]
    %v895 = vld [vmem:[#allocation2 + $0x1878] sm:$0xff]
    %v896 = vld [vmem:[#allocation2 + $0x1880] sm:$0xff]
    %v897 = vld [vmem:[#allocation2 + $0x1888] sm:$0xff]
    %v898 = vld [vmem:[#allocation2 + $0x1890] sm:$0xff]
    %v899 = vld [vmem:[#allocation2 + $0x1898] sm:$0xff]
    %v900 = vld [vmem:[#allocation2 + $0x18a0] sm:$0xff]
    %v901 = vld [vmem:[#allocation2 + $0x18a8] sm:$0xff]
    %v902 = vld [vmem:[#allocation2 + $0x18b0] sm:$0xff]
    %v903 = vld [vmem:[#allocation2 + $0x18b8] sm:$0xff]
    %v904 = vld [vmem:[#allocation2 + $0x18c0] sm:$0xff]
    %v905 = vld [vmem:[#allocation2 + $0x18c8] sm:$0xff]
    %v906 = vld [vmem:[#allocation2 + $0x18d0] sm:$0xff]
    %v907 = vld [vmem:[#allocation2 + $0x18d8] sm:$0xff]
    %v908 = vld [vmem:[#allocation2 + $0x18e0] sm:$0xff]
    %v909 = vld [vmem:[#allocation2 + $0x18e8] sm:$0xff]
    %v910 = vld [vmem:[#allocation2 + $0x18f0] sm:$0xff]
    %v911 = vld [vmem:[#allocation2 + $0x18f8] sm:$0xff]
    %v912 = vld [vmem:[#allocation2 + $0x1900] sm:$0xff]
    %v913 = vld [vmem:[#allocation2 + $0x1908] sm:$0xff]
    %v914 = vld [vmem:[#allocation2 + $0x1910] sm:$0xff]
    %v915 = vld [vmem:[#allocation2 + $0x1918] sm:$0xff]
    %v916 = vld [vmem:[#allocation2 + $0x1920] sm:$0xff]
    %v917 = vld [vmem:[#allocation2 + $0x1928] sm:$0xff]
    %v918 = vld [vmem:[#allocation2 + $0x1930] sm:$0xff]
    %v919 = vld [vmem:[#allocation2 + $0x1938] sm:$0xff]
    %v920 = vld [vmem:[#allocation2 + $0x1940] sm:$0xff]
    %v921 = vld [vmem:[#allocation2 + $0x1948] sm:$0xff]
    %v922 = vld [vmem:[#allocation2 + $0x1950] sm:$0xff]
    %v923 = vld [vmem:[#allocation2 + $0x1958] sm:$0xff]
    %v924 = vld [vmem:[#allocation2 + $0x1960] sm:$0xff]
    %v925 = vld [vmem:[#allocation2 + $0x1968] sm:$0xff]
    %v926 = vld [vmem:[#allocation2 + $0x1970] sm:$0xff]
    %v927 = vld [vmem:[#allocation2 + $0x1978] sm:$0xff]
    %v928 = vld [vmem:[#allocation2 + $0x1980] sm:$0xff]
    %v929 = vld [vmem:[#allocation2 + $0x1988] sm:$0xff]
    %v930 = vld [vmem:[#allocation2 + $0x1990] sm:$0xff]
    %v931 = vld [vmem:[#allocation2 + $0x1998] sm:$0xff]
    %v932 = vld [vmem:[#allocation2 + $0x19a0] sm:$0xff]
    %v933 = vld [vmem:[#allocation2 + $0x19a8] sm:$0xff]
    %v934 = vld [vmem:[#allocation2 + $0x19b0] sm:$0xff]
    %v935 = vld [vmem:[#allocation2 + $0x19b8] sm:$0xff]
    %v936 = vld [vmem:[#allocation2 + $0x19c0] sm:$0xff]
    %v937 = vld [vmem:[#allocation2 + $0x19c8] sm:$0xff]
    %v938 = vld [vmem:[#allocation2 + $0x19d0] sm:$0xff]
    %v939 = vld [vmem:[#allocation2 + $0x19d8] sm:$0xff]
    %v940 = vld [vmem:[#allocation2 + $0x19e0] sm:$0xff]
    %v941 = vld [vmem:[#allocation2 + $0x19e8] sm:$0xff]
    %v942 = vld [vmem:[#allocation2 + $0x19f0] sm:$0xff]
    %v943 = vld [vmem:[#allocation2 + $0x19f8] sm:$0xff]
    %v944 = vld [vmem:[#allocation2 + $0x1a00] sm:$0xff]
    %v945 = vld [vmem:[#allocation2 + $0x1a08] sm:$0xff]
    %v946 = vld [vmem:[#allocation2 + $0x1a10] sm:$0xff]
    %v947 = vld [vmem:[#allocation2 + $0x1a18] sm:$0xff]
    %v948 = vld [vmem:[#allocation2 + $0x1a20] sm:$0xff]
    %v949 = vld [vmem:[#allocation2 + $0x1a28] sm:$0xff]
    %v950 = vld [vmem:[#allocation2 + $0x1a30] sm:$0xff]
    %v951 = vld [vmem:[#allocation2 + $0x1a38] sm:$0xff]
    %v952 = vld [vmem:[#allocation2 + $0x1a40] sm:$0xff]
    %v953 = vld [vmem:[#allocation2 + $0x1a48] sm:$0xff]
    %v954 = vld [vmem:[#allocation2 + $0x1a50] sm:$0xff]
    %v955 = vld [vmem:[#allocation2 + $0x1a58] sm:$0xff]
    %v956 = vld [vmem:[#allocation2 + $0x1a60] sm:$0xff]
    %v957 = vld [vmem:[#allocation2 + $0x1a68] sm:$0xff]
    %v958 = vld [vmem:[#allocation2 + $0x1a70] sm:$0xff]
    %v959 = vld [vmem:[#allocation2 + $0x1a78] sm:$0xff]
    %v960 = vld [vmem:[#allocation2 + $0x1a80] sm:$0xff]
    %v961 = vld [vmem:[#allocation2 + $0x1a88] sm:$0xff]
    %v962 = vld [vmem:[#allocation2 + $0x1a90] sm:$0xff]
    %v963 = vld [vmem:[#allocation2 + $0x1a98] sm:$0xff]
    %v964 = vld [vmem:[#allocation2 + $0x1aa0] sm:$0xff]
    %v965 = vld [vmem:[#allocation2 + $0x1aa8] sm:$0xff]
    %v966 = vld [vmem:[#allocation2 + $0x1ab0] sm:$0xff]
    %v967 = vld [vmem:[#allocation2 + $0x1ab8] sm:$0xff]
    %v968 = vld [vmem:[#allocation2 + $0x1ac0] sm:$0xff]
    %v969 = vld [vmem:[#allocation2 + $0x1ac8] sm:$0xff]
    %v970 = vld [vmem:[#allocation2 + $0x1ad0] sm:$0xff]
    %v971 = vld [vmem:[#allocation2 + $0x1ad8] sm:$0xff]
    %v972 = vld [vmem:[#allocation2 + $0x1ae0] sm:$0xff]
    %v973 = vld [vmem:[#allocation2 + $0x1ae8] sm:$0xff]
    %v974 = vld [vmem:[#allocation2 + $0x1af0] sm:$0xff]
    %v975 = vld [vmem:[#allocation2 + $0x1af8] sm:$0xff]
    %v976 = vld [vmem:[#allocation2 + $0x1b00] sm:$0xff]
    %v977 = vld [vmem:[#allocation2 + $0x1b08] sm:$0xff]
    %v978 = vld [vmem:[#allocation2 + $0x1b10] sm:$0xff]
    %v979 = vld [vmem:[#allocation2 + $0x1b18] sm:$0xff]
    %v980 = vld [vmem:[#allocation2 + $0x1b20] sm:$0xff]
    %v981 = vld [vmem:[#allocation2 + $0x1b28] sm:$0xff]
    %v982 = vld [vmem:[#allocation2 + $0x1b30] sm:$0xff]
    %v983 = vld [vmem:[#allocation2 + $0x1b38] sm:$0xff]
    %v984 = vld [vmem:[#allocation2 + $0x1b40] sm:$0xff]
    %v985 = vld [vmem:[#allocation2 + $0x1b48] sm:$0xff]
    %v986 = vld [vmem:[#allocation2 + $0x1b50] sm:$0xff]
    %v987 = vld [vmem:[#allocation2 + $0x1b58] sm:$0xff]
    %v988 = vld [vmem:[#allocation2 + $0x1b60] sm:$0xff]
    %v989 = vld [vmem:[#allocation2 + $0x1b68] sm:$0xff]
    %v990 = vld [vmem:[#allocation2 + $0x1b70] sm:$0xff]
    %v991 = vld [vmem:[#allocation2 + $0x1b78] sm:$0xff]
    %v992 = vld [vmem:[#allocation2 + $0x1b80] sm:$0xff]
    %v993 = vld [vmem:[#allocation2 + $0x1b88] sm:$0xff]
    %v994 = vld [vmem:[#allocation2 + $0x1b90] sm:$0xff]
    %v995 = vld [vmem:[#allocation2 + $0x1b98] sm:$0xff]
    %v996 = vld [vmem:[#allocation2 + $0x1ba0] sm:$0xff]
    %v997 = vld [vmem:[#allocation2 + $0x1ba8] sm:$0xff]
    %v998 = vld [vmem:[#allocation2 + $0x1bb0] sm:$0xff]
    %v999 = vld [vmem:[#allocation2 + $0x1bb8] sm:$0xff]
    %v1000 = vld [vmem:[#allocation2 + $0x1bc0] sm:$0xff]
    %v1001 = vld [vmem:[#allocation2 + $0x1bc8] sm:$0xff]
    %v1002 = vld [vmem:[#allocation2 + $0x1bd0] sm:$0xff]
    %v1003 = vld [vmem:[#allocation2 + $0x1bd8] sm:$0xff]
    %v1004 = vld [vmem:[#allocation2 + $0x1be0] sm:$0xff]
    %v1005 = vld [vmem:[#allocation2 + $0x1be8] sm:$0xff]
    %v1006 = vld [vmem:[#allocation2 + $0x1bf0] sm:$0xff]
    %v1007 = vld [vmem:[#allocation2 + $0x1bf8] sm:$0xff]
    %v1008 = vld [vmem:[#allocation2 + $0x1c00] sm:$0xff]
    %v1009 = vld [vmem:[#allocation2 + $0x1c08] sm:$0xff]
    %v1010 = vld [vmem:[#allocation2 + $0x1c10] sm:$0xff]
    %v1011 = vld [vmem:[#allocation2 + $0x1c18] sm:$0xff]
    %v1012 = vld [vmem:[#allocation2 + $0x1c20] sm:$0xff]
    %v1013 = vld [vmem:[#allocation2 + $0x1c28] sm:$0xff]
    %v1014 = vld [vmem:[#allocation2 + $0x1c30] sm:$0xff]
    %v1015 = vld [vmem:[#allocation2 + $0x1c38] sm:$0xff]
    %v1016 = vld [vmem:[#allocation2 + $0x1c40] sm:$0xff]
    %v1017 = vld [vmem:[#allocation2 + $0x1c48] sm:$0xff]
    %v1018 = vld [vmem:[#allocation2 + $0x1c50] sm:$0xff]
    %v1019 = vld [vmem:[#allocation2 + $0x1c58] sm:$0xff]
    %v1020 = vld [vmem:[#allocation2 + $0x1c60] sm:$0xff]
    %v1021 = vld [vmem:[#allocation2 + $0x1c68] sm:$0xff]
    %v1022 = vld [vmem:[#allocation2 + $0x1c70] sm:$0xff]
    %v1023 = vld [vmem:[#allocation2 + $0x1c78] sm:$0xff]
    %v1024 = vld [vmem:[#allocation2 + $0x1c80] sm:$0xff]
    %v1025 = vld [vmem:[#allocation2 + $0x1c88] sm:$0xff]
    %v1026 = vld [vmem:[#allocation2 + $0x1c90] sm:$0xff]
    %v1027 = vld [vmem:[#allocation2 + $0x1c98] sm:$0xff]
    %v1028 = vld [vmem:[#allocation2 + $0x1ca0] sm:$0xff]
    %v1029 = vld [vmem:[#allocation2 + $0x1ca8] sm:$0xff]
    %v1030 = vld [vmem:[#allocation2 + $0x1cb0] sm:$0xff]
    %v1031 = vld [vmem:[#allocation2 + $0x1cb8] sm:$0xff]
    %v1032 = vld [vmem:[#allocation2 + $0x1cc0] sm:$0xff]
    %v1033 = vld [vmem:[#allocation2 + $0x1cc8] sm:$0xff]
    %v1034 = vld [vmem:[#allocation2 + $0x1cd0] sm:$0xff]
    %v1035 = vld [vmem:[#allocation2 + $0x1cd8] sm:$0xff]
    %v1036 = vld [vmem:[#allocation2 + $0x1ce0] sm:$0xff]
    %v1037 = vld [vmem:[#allocation2 + $0x1ce8] sm:$0xff]
    %v1038 = vld [vmem:[#allocation2 + $0x1cf0] sm:$0xff]
    %v1039 = vld [vmem:[#allocation2 + $0x1cf8] sm:$0xff]
    %v1040 = vld [vmem:[#allocation2 + $0x1d00] sm:$0xff]
    %v1041 = vld [vmem:[#allocation2 + $0x1d08] sm:$0xff]
    %v1042 = vld [vmem:[#allocation2 + $0x1d10] sm:$0xff]
    %v1043 = vld [vmem:[#allocation2 + $0x1d18] sm:$0xff]
    %v1044 = vld [vmem:[#allocation2 + $0x1d20] sm:$0xff]
    %v1045 = vld [vmem:[#allocation2 + $0x1d28] sm:$0xff]
    %v1046 = vld [vmem:[#allocation2 + $0x1d30] sm:$0xff]
    %v1047 = vld [vmem:[#allocation2 + $0x1d38] sm:$0xff]
    %v1048 = vld [vmem:[#allocation2 + $0x1d40] sm:$0xff]
    %v1049 = vld [vmem:[#allocation2 + $0x1d48] sm:$0xff]
    %v1050 = vld [vmem:[#allocation2 + $0x1d50] sm:$0xff]
    %v1051 = vld [vmem:[#allocation2 + $0x1d58] sm:$0xff]
    %v1052 = vld [vmem:[#allocation2 + $0x1d60] sm:$0xff]
    %v1053 = vld [vmem:[#allocation2 + $0x1d68] sm:$0xff]
    %v1054 = vld [vmem:[#allocation2 + $0x1d70] sm:$0xff]
    %v1055 = vld [vmem:[#allocation2 + $0x1d78] sm:$0xff]
    %v1056 = vld [vmem:[#allocation2 + $0x1d80] sm:$0xff]
    %v1057 = vld [vmem:[#allocation2 + $0x1d88] sm:$0xff]
    %v1058 = vld [vmem:[#allocation2 + $0x1d90] sm:$0xff]
    %v1059 = vld [vmem:[#allocation2 + $0x1d98] sm:$0xff]
    %v1060 = vld [vmem:[#allocation2 + $0x1da0] sm:$0xff]
    %v1061 = vld [vmem:[#allocation2 + $0x1da8] sm:$0xff]
    %v1062 = vld [vmem:[#allocation2 + $0x1db0] sm:$0xff]
    %v1063 = vld [vmem:[#allocation2 + $0x1db8] sm:$0xff]
    %v1064 = vld [vmem:[#allocation2 + $0x1dc0] sm:$0xff]
    %v1065 = vld [vmem:[#allocation2 + $0x1dc8] sm:$0xff]
    %v1066 = vld [vmem:[#allocation2 + $0x1dd0] sm:$0xff]
    %v1067 = vld [vmem:[#allocation2 + $0x1dd8] sm:$0xff]
    %v1068 = vld [vmem:[#allocation2 + $0x1de0] sm:$0xff]
    %v1069 = vld [vmem:[#allocation2 + $0x1de8] sm:$0xff]
    %v1070 = vld [vmem:[#allocation2 + $0x1df0] sm:$0xff]
    %v1071 = vld [vmem:[#allocation2 + $0x1df8] sm:$0xff]
    %v1072 = vld [vmem:[#allocation2 + $0x1e00] sm:$0xff]
    %v1073 = vld [vmem:[#allocation2 + $0x1e08] sm:$0xff]
    %v1074 = vld [vmem:[#allocation2 + $0x1e10] sm:$0xff]
    %v1075 = vld [vmem:[#allocation2 + $0x1e18] sm:$0xff]
    %v1076 = vld [vmem:[#allocation2 + $0x1e20] sm:$0xff]
    %v1077 = vld [vmem:[#allocation2 + $0x1e28] sm:$0xff]
    %v1078 = vld [vmem:[#allocation2 + $0x1e30] sm:$0xff]
    %v1079 = vld [vmem:[#allocation2 + $0x1e38] sm:$0xff]
    %v1080 = vld [vmem:[#allocation2 + $0x1e40] sm:$0xff]
    %v1081 = vld [vmem:[#allocation2 + $0x1e48] sm:$0xff]
    %v1082 = vld [vmem:[#allocation2 + $0x1e50] sm:$0xff]
    %v1083 = vld [vmem:[#allocation2 + $0x1e58] sm:$0xff]
    %v1084 = vld [vmem:[#allocation2 + $0x1e60] sm:$0xff]
    %v1085 = vld [vmem:[#allocation2 + $0x1e68] sm:$0xff]
    %v1086 = vld [vmem:[#allocation2 + $0x1e70] sm:$0xff]
    %v1087 = vld [vmem:[#allocation2 + $0x1e78] sm:$0xff]
    %v1088 = vld [vmem:[#allocation2 + $0x1e80] sm:$0xff]
    %v1089 = vld [vmem:[#allocation2 + $0x1e88] sm:$0xff]
    %v1090 = vld [vmem:[#allocation2 + $0x1e90] sm:$0xff]
    %v1091 = vld [vmem:[#allocation2 + $0x1e98] sm:$0xff]
    %v1092 = vld [vmem:[#allocation2 + $0x1ea0] sm:$0xff]
    %v1093 = vld [vmem:[#allocation2 + $0x1ea8] sm:$0xff]
    %v1094 = vld [vmem:[#allocation2 + $0x1eb0] sm:$0xff]
    %v1095 = vld [vmem:[#allocation2 + $0x1eb8] sm:$0xff]
    %v1096 = vld [vmem:[#allocation2 + $0x1ec0] sm:$0xff]
    %v1097 = vld [vmem:[#allocation2 + $0x1ec8] sm:$0xff]
    %v1098 = vld [vmem:[#allocation2 + $0x1ed0] sm:$0xff]
    %v1099 = vld [vmem:[#allocation2 + $0x1ed8] sm:$0xff]
    %v1100 = vld [vmem:[#allocation2 + $0x1ee0] sm:$0xff]
    %v1101 = vld [vmem:[#allocation2 + $0x1ee8] sm:$0xff]
    %v1102 = vld [vmem:[#allocation2 + $0x1ef0] sm:$0xff]
    %v1103 = vld [vmem:[#allocation2 + $0x1ef8] sm:$0xff]
    %v1104 = vld [vmem:[#allocation2 + $0x1f00] sm:$0xff]
    %v1105 = vld [vmem:[#allocation2 + $0x1f08] sm:$0xff]
    %v1106 = vld [vmem:[#allocation2 + $0x1f10] sm:$0xff]
    %v1107 = vld [vmem:[#allocation2 + $0x1f18] sm:$0xff]
    %v1108 = vld [vmem:[#allocation2 + $0x1f20] sm:$0xff]
    %v1109 = vld [vmem:[#allocation2 + $0x1f28] sm:$0xff]
    %v1110 = vld [vmem:[#allocation2 + $0x1f30] sm:$0xff]
    %v1111 = vld [vmem:[#allocation2 + $0x1f38] sm:$0xff]
    %v1112 = vld [vmem:[#allocation2 + $0x1f40] sm:$0xff]
    %v1113 = vld [vmem:[#allocation2 + $0x1f48] sm:$0xff]
    %v1114 = vld [vmem:[#allocation2 + $0x1f50] sm:$0xff]
    %v1115 = vld [vmem:[#allocation2 + $0x1f58] sm:$0xff]
    %v1116 = vld [vmem:[#allocation2 + $0x1f60] sm:$0xff]
    %v1117 = vld [vmem:[#allocation2 + $0x1f68] sm:$0xff]
    %v1118 = vld [vmem:[#allocation2 + $0x1f70] sm:$0xff]
    %v1119 = vld [vmem:[#allocation2 + $0x1f78] sm:$0xff]
    %v1120 = vld [vmem:[#allocation2 + $0x1f80] sm:$0xff]
    %v1121 = vld [vmem:[#allocation2 + $0x1f88] sm:$0xff]
    %v1122 = vld [vmem:[#allocation2 + $0x1f90] sm:$0xff]
    %v1123 = vld [vmem:[#allocation2 + $0x1f98] sm:$0xff]
    %v1124 = vld [vmem:[#allocation2 + $0x1fa0] sm:$0xff]
    %v1125 = vld [vmem:[#allocation2 + $0x1fa8] sm:$0xff]
    %v1126 = vld [vmem:[#allocation2 + $0x1fb0] sm:$0xff]
    %v1127 = vld [vmem:[#allocation2 + $0x1fb8] sm:$0xff]
    %v1128 = vld [vmem:[#allocation2 + $0x1fc0] sm:$0xff]
    %v1129 = vld [vmem:[#allocation2 + $0x1fc8] sm:$0xff]
    %v1130 = vld [vmem:[#allocation2 + $0x1fd0] sm:$0xff]
    %v1131 = vld [vmem:[#allocation2 + $0x1fd8] sm:$0xff]
    %v1132 = vld [vmem:[#allocation2 + $0x1fe0] sm:$0xff]
    %v1133 = vld [vmem:[#allocation2 + $0x1fe8] sm:$0xff]
    %v1134 = vld [vmem:[#allocation2 + $0x1ff0] sm:$0xff]
    %v1135 = vld [vmem:[#allocation2 + $0x1ff8] sm:$0xff]
    %v1136 = vld [vmem:[#allocation2 + $0x2000] sm:$0xff]
    %v1137 = vld [vmem:[#allocation2 + $0x2008] sm:$0xff]
    %v1138 = vld [vmem:[#allocation2 + $0x2010] sm:$0xff]
    %v1139 = vld [vmem:[#allocation2 + $0x2018] sm:$0xff]
    %v1140 = vld [vmem:[#allocation2 + $0x2020] sm:$0xff]
    %v1141 = vld [vmem:[#allocation2 + $0x2028] sm:$0xff]
    %v1142 = vld [vmem:[#allocation2 + $0x2030] sm:$0xff]
    %v1143 = vld [vmem:[#allocation2 + $0x2038] sm:$0xff]
    %v1144 = vld [vmem:[#allocation2 + $0x2040] sm:$0xff]
    %v1145 = vld [vmem:[#allocation2 + $0x2048] sm:$0xff]
    %v1146 = vld [vmem:[#allocation2 + $0x2050] sm:$0xff]
    %v1147 = vld [vmem:[#allocation2 + $0x2058] sm:$0xff]
    %v1148 = vld [vmem:[#allocation2 + $0x2060] sm:$0xff]
    %v1149 = vld [vmem:[#allocation2 + $0x2068] sm:$0xff]
    %v1150 = vld [vmem:[#allocation2 + $0x2070] sm:$0xff]
    %v1151 = vld [vmem:[#allocation2 + $0x2078] sm:$0xff]
    %v1152 = vld [vmem:[#allocation2 + $0x2080] sm:$0xff]
    %v1153 = vld [vmem:[#allocation2 + $0x2088] sm:$0xff]
    %v1154 = vld [vmem:[#allocation2 + $0x2090] sm:$0xff]
    %v1155 = vld [vmem:[#allocation2 + $0x2098] sm:$0xff]
    %v1156 = vld [vmem:[#allocation2 + $0x20a0] sm:$0xff]
    %v1157 = vld [vmem:[#allocation2 + $0x20a8] sm:$0xff]
    %v1158 = vld [vmem:[#allocation2 + $0x20b0] sm:$0xff]
    %v1159 = vld [vmem:[#allocation2 + $0x20b8] sm:$0xff]
    %v1160 = vld [vmem:[#allocation2 + $0x20c0] sm:$0xff]
    %v1161 = vld [vmem:[#allocation2 + $0x20c8] sm:$0xff]
    %v1162 = vld [vmem:[#allocation2 + $0x20d0] sm:$0xff]
    %v1163 = vld [vmem:[#allocation2 + $0x20d8] sm:$0xff]
    %v1164 = vld [vmem:[#allocation2 + $0x20e0] sm:$0xff]
    %v1165 = vld [vmem:[#allocation2 + $0x20e8] sm:$0xff]
    %v1166 = vld [vmem:[#allocation2 + $0x20f0] sm:$0xff]
    %v1167 = vld [vmem:[#allocation2 + $0x20f8] sm:$0xff]
    %v1168 = vld [vmem:[#allocation2 + $0x2100] sm:$0xff]
    %v1169 = vld [vmem:[#allocation2 + $0x2108] sm:$0xff]
    %v1170 = vld [vmem:[#allocation2 + $0x2110] sm:$0xff]
    %v1171 = vld [vmem:[#allocation2 + $0x2118] sm:$0xff]
    %v1172 = vld [vmem:[#allocation2 + $0x2120] sm:$0xff]
    %v1173 = vld [vmem:[#allocation2 + $0x2128] sm:$0xff]
    %v1174 = vld [vmem:[#allocation2 + $0x2130] sm:$0xff]
    %v1175 = vld [vmem:[#allocation2 + $0x2138] sm:$0xff]
    %v1176 = vld [vmem:[#allocation2 + $0x2140] sm:$0xff]
    %v1177 = vld [vmem:[#allocation2 + $0x2148] sm:$0xff]
    %v1178 = vld [vmem:[#allocation2 + $0x2150] sm:$0xff]
    %v1179 = vld [vmem:[#allocation2 + $0x2158] sm:$0xff]
    %v1180 = vld [vmem:[#allocation2 + $0x2160] sm:$0xff]
    %v1181 = vld [vmem:[#allocation2 + $0x2168] sm:$0xff]
    %v1182 = vld [vmem:[#allocation2 + $0x2170] sm:$0xff]
    %v1183 = vld [vmem:[#allocation2 + $0x2178] sm:$0xff]
    %v1184 = vld [vmem:[#allocation2 + $0x2180] sm:$0xff]
    %v1185 = vld [vmem:[#allocation2 + $0x2188] sm:$0xff]
    %v1186 = vld [vmem:[#allocation2 + $0x2190] sm:$0xff]
    %v1187 = vld [vmem:[#allocation2 + $0x2198] sm:$0xff]
    %v1188 = vld [vmem:[#allocation2 + $0x21a0] sm:$0xff]
    %v1189 = vld [vmem:[#allocation2 + $0x21a8] sm:$0xff]
    %v1190 = vld [vmem:[#allocation2 + $0x21b0] sm:$0xff]
    %v1191 = vld [vmem:[#allocation2 + $0x21b8] sm:$0xff]
    %v1192 = vld [vmem:[#allocation2 + $0x21c0] sm:$0xff]
    %v1193 = vld [vmem:[#allocation2 + $0x21c8] sm:$0xff]
    %v1194 = vld [vmem:[#allocation2 + $0x21d0] sm:$0xff]
    %v1195 = vld [vmem:[#allocation2 + $0x21d8] sm:$0xff]
    %v1196 = vld [vmem:[#allocation2 + $0x21e0] sm:$0xff]
    %v1197 = vld [vmem:[#allocation2 + $0x21e8] sm:$0xff]
    %v1198 = vld [vmem:[#allocation2 + $0x21f0] sm:$0xff]
    %v1199 = vld [vmem:[#allocation2 + $0x21f8] sm:$0xff]
    %v1200 = vld [vmem:[#allocation2 + $0x2200] sm:$0xff]
    %v1201 = vld [vmem:[#allocation2 + $0x2208] sm:$0xff]
    %v1202 = vld [vmem:[#allocation2 + $0x2210] sm:$0xff]
    %v1203 = vld [vmem:[#allocation2 + $0x2218] sm:$0xff]
    %v1204 = vld [vmem:[#allocation2 + $0x2220] sm:$0xff]
    %v1205 = vld [vmem:[#allocation2 + $0x2228] sm:$0xff]
    %v1206 = vld [vmem:[#allocation2 + $0x2230] sm:$0xff]
    %v1207 = vld [vmem:[#allocation2 + $0x2238] sm:$0xff]
    %v1208 = vld [vmem:[#allocation2 + $0x2240] sm:$0xff]
    %v1209 = vld [vmem:[#allocation2 + $0x2248] sm:$0xff]
    %v1210 = vld [vmem:[#allocation2 + $0x2250] sm:$0xff]
    %v1211 = vld [vmem:[#allocation2 + $0x2258] sm:$0xff]
    %v1212 = vld [vmem:[#allocation2 + $0x2260] sm:$0xff]
    %v1213 = vld [vmem:[#allocation2 + $0x2268] sm:$0xff]
    %v1214 = vld [vmem:[#allocation2 + $0x2270] sm:$0xff]
    %v1215 = vld [vmem:[#allocation2 + $0x2278] sm:$0xff]
    %v1216 = vld [vmem:[#allocation2 + $0x2280] sm:$0xff]
    %v1217 = vld [vmem:[#allocation2 + $0x2288] sm:$0xff]
    %v1218 = vld [vmem:[#allocation2 + $0x2290] sm:$0xff]
    %v1219 = vld [vmem:[#allocation2 + $0x2298] sm:$0xff]
    %v1220 = vld [vmem:[#allocation2 + $0x22a0] sm:$0xff]
    %v1221 = vld [vmem:[#allocation2 + $0x22a8] sm:$0xff]
    %v1222 = vld [vmem:[#allocation2 + $0x22b0] sm:$0xff]
    %v1223 = vld [vmem:[#allocation2 + $0x22b8] sm:$0xff]
    %v1224 = vld [vmem:[#allocation2 + $0x22c0] sm:$0xff]
    %v1225 = vld [vmem:[#allocation2 + $0x22c8] sm:$0xff]
    %v1226 = vld [vmem:[#allocation2 + $0x22d0] sm:$0xff]
    %v1227 = vld [vmem:[#allocation2 + $0x22d8] sm:$0xff]
    %v1228 = vld [vmem:[#allocation2 + $0x22e0] sm:$0xff]
    %v1229 = vld [vmem:[#allocation2 + $0x22e8] sm:$0xff]
    %v1230 = vld [vmem:[#allocation2 + $0x22f0] sm:$0xff]
    %v1231 = vld [vmem:[#allocation2 + $0x22f8] sm:$0xff]
    %v1232 = vld [vmem:[#allocation2 + $0x2300] sm:$0xff]
    %v1233 = vld [vmem:[#allocation2 + $0x2308] sm:$0xff]
    %v1234 = vld [vmem:[#allocation2 + $0x2310] sm:$0xff]
    %v1235 = vld [vmem:[#allocation2 + $0x2318] sm:$0xff]
    %v1236 = vld [vmem:[#allocation2 + $0x2320] sm:$0xff]
    %v1237 = vld [vmem:[#allocation2 + $0x2328] sm:$0xff]
    %v1238 = vld [vmem:[#allocation2 + $0x2330] sm:$0xff]
    %v1239 = vld [vmem:[#allocation2 + $0x2338] sm:$0xff]
    %v1240 = vld [vmem:[#allocation2 + $0x2340] sm:$0xff]
    %v1241 = vld [vmem:[#allocation2 + $0x2348] sm:$0xff]
    %v1242 = vld [vmem:[#allocation2 + $0x2350] sm:$0xff]
    %v1243 = vld [vmem:[#allocation2 + $0x2358] sm:$0xff]
    %v1244 = vld [vmem:[#allocation2 + $0x2360] sm:$0xff]
    %v1245 = vld [vmem:[#allocation2 + $0x2368] sm:$0xff]
    %v1246 = vld [vmem:[#allocation2 + $0x2370] sm:$0xff]
    %v1247 = vld [vmem:[#allocation2 + $0x2378] sm:$0xff]
    %v1248 = vld [vmem:[#allocation2 + $0x2380] sm:$0xff]
    %v1249 = vld [vmem:[#allocation2 + $0x2388] sm:$0xff]
    %v1250 = vld [vmem:[#allocation2 + $0x2390] sm:$0xff]
    %v1251 = vld [vmem:[#allocation2 + $0x2398] sm:$0xff]
    %v1252 = vld [vmem:[#allocation2 + $0x23a0] sm:$0xff]
    %v1253 = vld [vmem:[#allocation2 + $0x23a8] sm:$0xff]
    %v1254 = vld [vmem:[#allocation2 + $0x23b0] sm:$0xff]
    %v1255 = vld [vmem:[#allocation2 + $0x23b8] sm:$0xff]
    %v1256 = vld [vmem:[#allocation2 + $0x23c0] sm:$0xff]
    %v1257 = vld [vmem:[#allocation2 + $0x23c8] sm:$0xff]
    %v1258 = vld [vmem:[#allocation2 + $0x23d0] sm:$0xff]
    %v1259 = vld [vmem:[#allocation2 + $0x23d8] sm:$0xff]
    %v1260 = vld [vmem:[#allocation2 + $0x23e0] sm:$0xff]
    %v1261 = vld [vmem:[#allocation2 + $0x23e8] sm:$0xff]
    %v1262 = vld [vmem:[#allocation2 + $0x23f0] sm:$0xff]
    %v1263 = vld [vmem:[#allocation2 + $0x23f8] sm:$0xff]
    %v1264 = vld [vmem:[#allocation4] sm:$0xff]
    %v1266 = vlaneseq
    %v1267 = vshrl.u32 %v1266, 7
    %v1268 = vsub.s32 0, %v1267
    %v1269 = vrot.slane %v1264, %v1268
    %v1270 = vlaneseq
    %v1271 = vshrl.u32 %v1270, 7
    %v1272 = vsub.s32 1, %v1271
    %v1273 = vrot.slane %v1264, %v1272
    %v1274 = vlaneseq
    %v1275 = vshrl.u32 %v1274, 7
    %v1276 = vsub.s32 2, %v1275
    %v1277 = vrot.slane %v1264, %v1276
    %v1278 = vlaneseq
    %v1279 = vshrl.u32 %v1278, 7
    %v1280 = vsub.s32 3, %v1279
    %v1281 = vrot.slane %v1264, %v1280
    %v1282 = vlaneseq
    %v1283 = vshrl.u32 %v1282, 7
    %v1284 = vsub.s32 4, %v1283
    %v1285 = vrot.slane %v1264, %v1284
    %v1286 = vlaneseq
    %v1287 = vshrl.u32 %v1286, 7
    %v1288 = vsub.s32 5, %v1287
    %v1289 = vrot.slane %v1264, %v1288
    %v1290 = vlaneseq
    %v1291 = vshrl.u32 %v1290, 7
    %v1292 = vsub.s32 6, %v1291
    %v1293 = vrot.slane %v1264, %v1292
    %v1294 = vlaneseq
    %v1295 = vshrl.u32 %v1294, 7
    %v1296 = vsub.s32 7, %v1295
    %v1297 = vrot.slane %v1264, %v1296
    %v1315 = vunpack.c.l.b16 %v103
    %v1316 = vunpack.c.h.b16 %v103
    %v1317 = vunpack.c.l.b16 %v104
    %v1318 = vunpack.c.h.b16 %v104
    %v1319 = vunpack.c.l.b16 %v105
    %v1320 = vunpack.c.h.b16 %v105
    %v1321 = vunpack.c.l.b16 %v106
    %v1322 = vunpack.c.h.b16 %v106
    %v1323 = vunpack.c.l.b16 %v107
    %v1324 = vunpack.c.h.b16 %v107
    %v1325 = vunpack.c.l.b16 %v108
    %v1326 = vunpack.c.h.b16 %v108
    %v1327 = vunpack.c.l.b16 %v109
    %v1328 = vunpack.c.h.b16 %v109
    %v1329 = vunpack.c.l.b16 %v110
    %v1330 = vunpack.c.h.b16 %v110
    %v1331 = vunpack.c.l.b16 %v111
    %v1332 = vunpack.c.h.b16 %v111
    %v1333 = vpack.c.b16 %v1315, %v1315
    %v1334 = vpack.c.b16 %v1316, %v1316
    %v1335 = vpack.c.b16 %v1317, %v1317
    %v1336 = vpack.c.b16 %v1318, %v1318
    %v1337 = vpack.c.b16 %v1319, %v1319
    %v1338 = vpack.c.b16 %v1320, %v1320
    %v1339 = vpack.c.b16 %v1321, %v1321
    %v1340 = vpack.c.b16 %v1322, %v1322
    %v1341 = vpack.c.b16 %v1323, %v1323
    %v1342 = vpack.c.b16 %v1324, %v1324
    %v1343 = vpack.c.b16 %v1325, %v1325
    %v1344 = vpack.c.b16 %v1326, %v1326
    %v1345 = vpack.c.b16 %v1327, %v1327
    %v1346 = vpack.c.b16 %v1328, %v1328
    %v1347 = vpack.c.b16 %v1329, %v1329
    %v1348 = vpack.c.b16 %v1330, %v1330
    %v1349 = vpack.c.b16 %v1331, %v1331
    %v1350 = vpack.c.b16 %v1332, %v1332
    %v2521 = vunpack.c.l.b16 %v112
    %v2522 = vunpack.c.h.b16 %v112
    %v2523 = vunpack.c.l.b16 %v113
    %v2524 = vunpack.c.h.b16 %v113
    %v2525 = vunpack.c.l.b16 %v114
    %v2526 = vunpack.c.h.b16 %v114
    %v2527 = vunpack.c.l.b16 %v115
    %v2528 = vunpack.c.h.b16 %v115
    %v2529 = vunpack.c.l.b16 %v116
    %v2530 = vunpack.c.h.b16 %v116
    %v2531 = vunpack.c.l.b16 %v117
    %v2532 = vunpack.c.h.b16 %v117
    %v2533 = vunpack.c.l.b16 %v118
    %v2534 = vunpack.c.h.b16 %v118
    %v2535 = vunpack.c.l.b16 %v119
    %v2536 = vunpack.c.h.b16 %v119
    %v2537 = vunpack.c.l.b16 %v120
    %v2538 = vunpack.c.h.b16 %v120
    %v2539 = vunpack.c.l.b16 %v121
    %v2540 = vunpack.c.h.b16 %v121
    %v2541 = vunpack.c.l.b16 %v122
    %v2542 = vunpack.c.h.b16 %v122
    %v2543 = vunpack.c.l.b16 %v123
    %v2544 = vunpack.c.h.b16 %v123
    %v2545 = vunpack.c.l.b16 %v124
    %v2546 = vunpack.c.h.b16 %v124
    %v2547 = vunpack.c.l.b16 %v125
    %v2548 = vunpack.c.h.b16 %v125
    %v2549 = vunpack.c.l.b16 %v126
    %v2550 = vunpack.c.h.b16 %v126
    %v2551 = vunpack.c.l.b16 %v127
    %v2552 = vunpack.c.h.b16 %v127
    %v2553 = vunpack.c.l.b16 %v128
    %v2554 = vunpack.c.h.b16 %v128
    %v2555 = vunpack.c.l.b16 %v129
    %v2556 = vunpack.c.h.b16 %v129
    %v2557 = vunpack.c.l.b16 %v130
    %v2558 = vunpack.c.h.b16 %v130
    %v2559 = vunpack.c.l.b16 %v131
    %v2560 = vunpack.c.h.b16 %v131
    %v2561 = vunpack.c.l.b16 %v132
    %v2562 = vunpack.c.h.b16 %v132
    %v2563 = vunpack.c.l.b16 %v133
    %v2564 = vunpack.c.h.b16 %v133
    %v2565 = vunpack.c.l.b16 %v134
    %v2566 = vunpack.c.h.b16 %v134
    %v2567 = vunpack.c.l.b16 %v135
    %v2568 = vunpack.c.h.b16 %v135
    %v2569 = vunpack.c.l.b16 %v136
    %v2570 = vunpack.c.h.b16 %v136
    %v2571 = vunpack.c.l.b16 %v137
    %v2572 = vunpack.c.h.b16 %v137
    %v2573 = vunpack.c.l.b16 %v138
    %v2574 = vunpack.c.h.b16 %v138
    %v2575 = vunpack.c.l.b16 %v139
    %v2576 = vunpack.c.h.b16 %v139
    %v2577 = vunpack.c.l.b16 %v140
    %v2578 = vunpack.c.h.b16 %v140
    %v2579 = vunpack.c.l.b16 %v141
    %v2580 = vunpack.c.h.b16 %v141
    %v2581 = vunpack.c.l.b16 %v142
    %v2582 = vunpack.c.h.b16 %v142
    %v2583 = vunpack.c.l.b16 %v143
    %v2584 = vunpack.c.h.b16 %v143
    %v2585 = vunpack.c.l.b16 %v144
    %v2586 = vunpack.c.h.b16 %v144
    %v2587 = vunpack.c.l.b16 %v145
    %v2588 = vunpack.c.h.b16 %v145
    %v2589 = vunpack.c.l.b16 %v146
    %v2590 = vunpack.c.h.b16 %v146
    %v2591 = vunpack.c.l.b16 %v147
    %v2592 = vunpack.c.h.b16 %v147
    %v2593 = vunpack.c.l.b16 %v148
    %v2594 = vunpack.c.h.b16 %v148
    %v2595 = vunpack.c.l.b16 %v149
    %v2596 = vunpack.c.h.b16 %v149
    %v2597 = vunpack.c.l.b16 %v150
    %v2598 = vunpack.c.h.b16 %v150
    %v2599 = vunpack.c.l.b16 %v151
    %v2600 = vunpack.c.h.b16 %v151
    %v2601 = vunpack.c.l.b16 %v152
    %v2602 = vunpack.c.h.b16 %v152
    %v2603 = vunpack.c.l.b16 %v153
    %v2604 = vunpack.c.h.b16 %v153
    %v2605 = vunpack.c.l.b16 %v154
    %v2606 = vunpack.c.h.b16 %v154
    %v2607 = vunpack.c.l.b16 %v155
    %v2608 = vunpack.c.h.b16 %v155
    %v2609 = vunpack.c.l.b16 %v156
    %v2610 = vunpack.c.h.b16 %v156
    %v2611 = vunpack.c.l.b16 %v157
    %v2612 = vunpack.c.h.b16 %v157
    %v2613 = vunpack.c.l.b16 %v158
    %v2614 = vunpack.c.h.b16 %v158
    %v2615 = vunpack.c.l.b16 %v159
    %v2616 = vunpack.c.h.b16 %v159
    %v2617 = vunpack.c.l.b16 %v160
    %v2618 = vunpack.c.h.b16 %v160
    %v2619 = vunpack.c.l.b16 %v161
    %v2620 = vunpack.c.h.b16 %v161
    %v2621 = vunpack.c.l.b16 %v162
    %v2622 = vunpack.c.h.b16 %v162
    %v2623 = vunpack.c.l.b16 %v163
    %v2624 = vunpack.c.h.b16 %v163
    %v2625 = vunpack.c.l.b16 %v164
    %v2626 = vunpack.c.h.b16 %v164
    %v2627 = vunpack.c.l.b16 %v165
    %v2628 = vunpack.c.h.b16 %v165
    %v2629 = vunpack.c.l.b16 %v166
    %v2630 = vunpack.c.h.b16 %v166
    %v2631 = vunpack.c.l.b16 %v167
    %v2632 = vunpack.c.h.b16 %v167
    %v2633 = vunpack.c.l.b16 %v168
    %v2634 = vunpack.c.h.b16 %v168
    %v2635 = vunpack.c.l.b16 %v169
    %v2636 = vunpack.c.h.b16 %v169
    %v2637 = vunpack.c.l.b16 %v170
    %v2638 = vunpack.c.h.b16 %v170
    %v2639 = vunpack.c.l.b16 %v171
    %v2640 = vunpack.c.h.b16 %v171
    %v2641 = vunpack.c.l.b16 %v172
    %v2642 = vunpack.c.h.b16 %v172
    %v2643 = vunpack.c.l.b16 %v173
    %v2644 = vunpack.c.h.b16 %v173
    %v2645 = vunpack.c.l.b16 %v174
    %v2646 = vunpack.c.h.b16 %v174
    %v2647 = vunpack.c.l.b16 %v175
    %v2648 = vunpack.c.h.b16 %v175
    %v2649 = vunpack.c.l.b16 %v176
    %v2650 = vunpack.c.h.b16 %v176
    %v2651 = vunpack.c.l.b16 %v177
    %v2652 = vunpack.c.h.b16 %v177
    %v2653 = vunpack.c.l.b16 %v178
    %v2654 = vunpack.c.h.b16 %v178
    %v2655 = vunpack.c.l.b16 %v179
    %v2656 = vunpack.c.h.b16 %v179
    %v2657 = vunpack.c.l.b16 %v180
    %v2658 = vunpack.c.h.b16 %v180
    %v2659 = vunpack.c.l.b16 %v181
    %v2660 = vunpack.c.h.b16 %v181
    %v2661 = vunpack.c.l.b16 %v182
    %v2662 = vunpack.c.h.b16 %v182
    %v2663 = vunpack.c.l.b16 %v183
    %v2664 = vunpack.c.h.b16 %v183
    %v2665 = vunpack.c.l.b16 %v184
    %v2666 = vunpack.c.h.b16 %v184
    %v2667 = vunpack.c.l.b16 %v185
    %v2668 = vunpack.c.h.b16 %v185
    %v2669 = vunpack.c.l.b16 %v186
    %v2670 = vunpack.c.h.b16 %v186
    %v2671 = vunpack.c.l.b16 %v187
    %v2672 = vunpack.c.h.b16 %v187
    %v2673 = vunpack.c.l.b16 %v188
    %v2674 = vunpack.c.h.b16 %v188
    %v2675 = vunpack.c.l.b16 %v189
    %v2676 = vunpack.c.h.b16 %v189
    %v2677 = vunpack.c.l.b16 %v190
    %v2678 = vunpack.c.h.b16 %v190
    %v2679 = vunpack.c.l.b16 %v191
    %v2680 = vunpack.c.h.b16 %v191
    %v2681 = vunpack.c.l.b16 %v192
    %v2682 = vunpack.c.h.b16 %v192
    %v2683 = vunpack.c.l.b16 %v193
    %v2684 = vunpack.c.h.b16 %v193
    %v2685 = vunpack.c.l.b16 %v194
    %v2686 = vunpack.c.h.b16 %v194
    %v2687 = vunpack.c.l.b16 %v195
    %v2688 = vunpack.c.h.b16 %v195
    %v2689 = vunpack.c.l.b16 %v196
    %v2690 = vunpack.c.h.b16 %v196
    %v2691 = vunpack.c.l.b16 %v197
    %v2692 = vunpack.c.h.b16 %v197
    %v2693 = vunpack.c.l.b16 %v198
    %v2694 = vunpack.c.h.b16 %v198
    %v2695 = vunpack.c.l.b16 %v199
    %v2696 = vunpack.c.h.b16 %v199
    %v2697 = vunpack.c.l.b16 %v200
    %v2698 = vunpack.c.h.b16 %v200
    %v2699 = vunpack.c.l.b16 %v201
    %v2700 = vunpack.c.h.b16 %v201
    %v2701 = vunpack.c.l.b16 %v202
    %v2702 = vunpack.c.h.b16 %v202
    %v2703 = vunpack.c.l.b16 %v203
    %v2704 = vunpack.c.h.b16 %v203
    %v2705 = vunpack.c.l.b16 %v204
    %v2706 = vunpack.c.h.b16 %v204
    %v2707 = vunpack.c.l.b16 %v205
    %v2708 = vunpack.c.h.b16 %v205
    %v2709 = vunpack.c.l.b16 %v206
    %v2710 = vunpack.c.h.b16 %v206
    %v2711 = vunpack.c.l.b16 %v207
    %v2712 = vunpack.c.h.b16 %v207
    %v2713 = vunpack.c.l.b16 %v208
    %v2714 = vunpack.c.h.b16 %v208
    %v2715 = vunpack.c.l.b16 %v209
    %v2716 = vunpack.c.h.b16 %v209
    %v2717 = vunpack.c.l.b16 %v210
    %v2718 = vunpack.c.h.b16 %v210
    %v2719 = vunpack.c.l.b16 %v211
    %v2720 = vunpack.c.h.b16 %v211
    %v2721 = vunpack.c.l.b16 %v212
    %v2722 = vunpack.c.h.b16 %v212
    %v2723 = vunpack.c.l.b16 %v213
    %v2724 = vunpack.c.h.b16 %v213
    %v2725 = vunpack.c.l.b16 %v214
    %v2726 = vunpack.c.h.b16 %v214
    %v2727 = vunpack.c.l.b16 %v215
    %v2728 = vunpack.c.h.b16 %v215
    %v2729 = vunpack.c.l.b16 %v216
    %v2730 = vunpack.c.h.b16 %v216
    %v2731 = vunpack.c.l.b16 %v217
    %v2732 = vunpack.c.h.b16 %v217
    %v2733 = vunpack.c.l.b16 %v218
    %v2734 = vunpack.c.h.b16 %v218
    %v2735 = vunpack.c.l.b16 %v219
    %v2736 = vunpack.c.h.b16 %v219
    %v2737 = vunpack.c.l.b16 %v220
    %v2738 = vunpack.c.h.b16 %v220
    %v2739 = vunpack.c.l.b16 %v221
    %v2740 = vunpack.c.h.b16 %v221
    %v2741 = vunpack.c.l.b16 %v222
    %v2742 = vunpack.c.h.b16 %v222
    %v2743 = vunpack.c.l.b16 %v223
    %v2744 = vunpack.c.h.b16 %v223
    %v2745 = vunpack.c.l.b16 %v224
    %v2746 = vunpack.c.h.b16 %v224
    %v2747 = vunpack.c.l.b16 %v225
    %v2748 = vunpack.c.h.b16 %v225
    %v2749 = vunpack.c.l.b16 %v226
    %v2750 = vunpack.c.h.b16 %v226
    %v2751 = vunpack.c.l.b16 %v227
    %v2752 = vunpack.c.h.b16 %v227
    %v2753 = vunpack.c.l.b16 %v228
    %v2754 = vunpack.c.h.b16 %v228
    %v2755 = vunpack.c.l.b16 %v229
    %v2756 = vunpack.c.h.b16 %v229
    %v2757 = vunpack.c.l.b16 %v230
    %v2758 = vunpack.c.h.b16 %v230
    %v2759 = vunpack.c.l.b16 %v231
    %v2760 = vunpack.c.h.b16 %v231
    %v2761 = vunpack.c.l.b16 %v232
    %v2762 = vunpack.c.h.b16 %v232
    %v2763 = vunpack.c.l.b16 %v233
    %v2764 = vunpack.c.h.b16 %v233
    %v2765 = vunpack.c.l.b16 %v234
    %v2766 = vunpack.c.h.b16 %v234
    %v2767 = vunpack.c.l.b16 %v235
    %v2768 = vunpack.c.h.b16 %v235
    %v2769 = vunpack.c.l.b16 %v236
    %v2770 = vunpack.c.h.b16 %v236
    %v2771 = vunpack.c.l.b16 %v237
    %v2772 = vunpack.c.h.b16 %v237
    %v2773 = vunpack.c.l.b16 %v238
    %v2774 = vunpack.c.h.b16 %v238
    %v2775 = vunpack.c.l.b16 %v239
    %v2776 = vunpack.c.h.b16 %v239
    %v2777 = vunpack.c.l.b16 %v240
    %v2778 = vunpack.c.h.b16 %v240
    %v2779 = vunpack.c.l.b16 %v241
    %v2780 = vunpack.c.h.b16 %v241
    %v2781 = vunpack.c.l.b16 %v242
    %v2782 = vunpack.c.h.b16 %v242
    %v2783 = vunpack.c.l.b16 %v243
    %v2784 = vunpack.c.h.b16 %v243
    %v2785 = vunpack.c.l.b16 %v244
    %v2786 = vunpack.c.h.b16 %v244
    %v2787 = vunpack.c.l.b16 %v245
    %v2788 = vunpack.c.h.b16 %v245
    %v2789 = vunpack.c.l.b16 %v246
    %v2790 = vunpack.c.h.b16 %v246
    %v2791 = vunpack.c.l.b16 %v247
    %v2792 = vunpack.c.h.b16 %v247
    %v2793 = vunpack.c.l.b16 %v248
    %v2794 = vunpack.c.h.b16 %v248
    %v2795 = vunpack.c.l.b16 %v249
    %v2796 = vunpack.c.h.b16 %v249
    %v2797 = vunpack.c.l.b16 %v250
    %v2798 = vunpack.c.h.b16 %v250
    %v2799 = vunpack.c.l.b16 %v251
    %v2800 = vunpack.c.h.b16 %v251
    %v2801 = vunpack.c.l.b16 %v252
    %v2802 = vunpack.c.h.b16 %v252
    %v2803 = vunpack.c.l.b16 %v253
    %v2804 = vunpack.c.h.b16 %v253
    %v2805 = vunpack.c.l.b16 %v254
    %v2806 = vunpack.c.h.b16 %v254
    %v2807 = vunpack.c.l.b16 %v255
    %v2808 = vunpack.c.h.b16 %v255
    %v2809 = vunpack.c.l.b16 %v256
    %v2810 = vunpack.c.h.b16 %v256
    %v2811 = vunpack.c.l.b16 %v257
    %v2812 = vunpack.c.h.b16 %v257
    %v2813 = vunpack.c.l.b16 %v258
    %v2814 = vunpack.c.h.b16 %v258
    %v2815 = vunpack.c.l.b16 %v259
    %v2816 = vunpack.c.h.b16 %v259
    %v2817 = vunpack.c.l.b16 %v260
    %v2818 = vunpack.c.h.b16 %v260
    %v2819 = vunpack.c.l.b16 %v261
    %v2820 = vunpack.c.h.b16 %v261
    %v2821 = vunpack.c.l.b16 %v262
    %v2822 = vunpack.c.h.b16 %v262
    %v2823 = vunpack.c.l.b16 %v263
    %v2824 = vunpack.c.h.b16 %v263
    %v2825 = vunpack.c.l.b16 %v264
    %v2826 = vunpack.c.h.b16 %v264
    %v2827 = vunpack.c.l.b16 %v265
    %v2828 = vunpack.c.h.b16 %v265
    %v2829 = vunpack.c.l.b16 %v266
    %v2830 = vunpack.c.h.b16 %v266
    %v2831 = vunpack.c.l.b16 %v267
    %v2832 = vunpack.c.h.b16 %v267
    %v2833 = vunpack.c.l.b16 %v268
    %v2834 = vunpack.c.h.b16 %v268
    %v2835 = vunpack.c.l.b16 %v269
    %v2836 = vunpack.c.h.b16 %v269
    %v2837 = vunpack.c.l.b16 %v270
    %v2838 = vunpack.c.h.b16 %v270
    %v2839 = vunpack.c.l.b16 %v271
    %v2840 = vunpack.c.h.b16 %v271
    %v2841 = vunpack.c.l.b16 %v272
    %v2842 = vunpack.c.h.b16 %v272
    %v2843 = vunpack.c.l.b16 %v273
    %v2844 = vunpack.c.h.b16 %v273
    %v2845 = vunpack.c.l.b16 %v274
    %v2846 = vunpack.c.h.b16 %v274
    %v2847 = vunpack.c.l.b16 %v275
    %v2848 = vunpack.c.h.b16 %v275
    %v2849 = vunpack.c.l.b16 %v276
    %v2850 = vunpack.c.h.b16 %v276
    %v2851 = vunpack.c.l.b16 %v277
    %v2852 = vunpack.c.h.b16 %v277
    %v2853 = vunpack.c.l.b16 %v278
    %v2854 = vunpack.c.h.b16 %v278
    %v2855 = vunpack.c.l.b16 %v279
    %v2856 = vunpack.c.h.b16 %v279
    %v2857 = vunpack.c.l.b16 %v280
    %v2858 = vunpack.c.h.b16 %v280
    %v2859 = vunpack.c.l.b16 %v281
    %v2860 = vunpack.c.h.b16 %v281
    %v2861 = vunpack.c.l.b16 %v282
    %v2862 = vunpack.c.h.b16 %v282
    %v2863 = vunpack.c.l.b16 %v283
    %v2864 = vunpack.c.h.b16 %v283
    %v2865 = vunpack.c.l.b16 %v284
    %v2866 = vunpack.c.h.b16 %v284
    %v2867 = vunpack.c.l.b16 %v285
    %v2868 = vunpack.c.h.b16 %v285
    %v2869 = vunpack.c.l.b16 %v286
    %v2870 = vunpack.c.h.b16 %v286
    %v2871 = vunpack.c.l.b16 %v287
    %v2872 = vunpack.c.h.b16 %v287
    %v2873 = vunpack.c.l.b16 %v288
    %v2874 = vunpack.c.h.b16 %v288
    %v2875 = vunpack.c.l.b16 %v289
    %v2876 = vunpack.c.h.b16 %v289
    %v2877 = vunpack.c.l.b16 %v290
    %v2878 = vunpack.c.h.b16 %v290
    %v2879 = vunpack.c.l.b16 %v291
    %v2880 = vunpack.c.h.b16 %v291
    %v2881 = vunpack.c.l.b16 %v292
    %v2882 = vunpack.c.h.b16 %v292
    %v2883 = vunpack.c.l.b16 %v293
    %v2884 = vunpack.c.h.b16 %v293
    %v2885 = vunpack.c.l.b16 %v294
    %v2886 = vunpack.c.h.b16 %v294
    %v2887 = vunpack.c.l.b16 %v295
    %v2888 = vunpack.c.h.b16 %v295
    %v2889 = vunpack.c.l.b16 %v296
    %v2890 = vunpack.c.h.b16 %v296
    %v2891 = vunpack.c.l.b16 %v297
    %v2892 = vunpack.c.h.b16 %v297
    %v2893 = vunpack.c.l.b16 %v298
    %v2894 = vunpack.c.h.b16 %v298
    %v2895 = vunpack.c.l.b16 %v299
    %v2896 = vunpack.c.h.b16 %v299
    %v2897 = vunpack.c.l.b16 %v300
    %v2898 = vunpack.c.h.b16 %v300
    %v2899 = vunpack.c.l.b16 %v301
    %v2900 = vunpack.c.h.b16 %v301
    %v2901 = vunpack.c.l.b16 %v302
    %v2902 = vunpack.c.h.b16 %v302
    %v2903 = vunpack.c.l.b16 %v303
    %v2904 = vunpack.c.h.b16 %v303
    %v2905 = vunpack.c.l.b16 %v304
    %v2906 = vunpack.c.h.b16 %v304
    %v2907 = vunpack.c.l.b16 %v305
    %v2908 = vunpack.c.h.b16 %v305
    %v2909 = vunpack.c.l.b16 %v306
    %v2910 = vunpack.c.h.b16 %v306
    %v2911 = vunpack.c.l.b16 %v307
    %v2912 = vunpack.c.h.b16 %v307
    %v2913 = vunpack.c.l.b16 %v308
    %v2914 = vunpack.c.h.b16 %v308
    %v2915 = vunpack.c.l.b16 %v309
    %v2916 = vunpack.c.h.b16 %v309
    %v2917 = vunpack.c.l.b16 %v310
    %v2918 = vunpack.c.h.b16 %v310
    %v2919 = vunpack.c.l.b16 %v311
    %v2920 = vunpack.c.h.b16 %v311
    %v2921 = vunpack.c.l.b16 %v312
    %v2922 = vunpack.c.h.b16 %v312
    %v2923 = vunpack.c.l.b16 %v313
    %v2924 = vunpack.c.h.b16 %v313
    %v2925 = vunpack.c.l.b16 %v314
    %v2926 = vunpack.c.h.b16 %v314
    %v2927 = vunpack.c.l.b16 %v315
    %v2928 = vunpack.c.h.b16 %v315
    %v2929 = vunpack.c.l.b16 %v316
    %v2930 = vunpack.c.h.b16 %v316
    %v2931 = vunpack.c.l.b16 %v317
    %v2932 = vunpack.c.h.b16 %v317
    %v2933 = vunpack.c.l.b16 %v318
    %v2934 = vunpack.c.h.b16 %v318
    %v2935 = vunpack.c.l.b16 %v319
    %v2936 = vunpack.c.h.b16 %v319
    %v2937 = vunpack.c.l.b16 %v320
    %v2938 = vunpack.c.h.b16 %v320
    %v2939 = vunpack.c.l.b16 %v321
    %v2940 = vunpack.c.h.b16 %v321
    %v2941 = vunpack.c.l.b16 %v322
    %v2942 = vunpack.c.h.b16 %v322
    %v2943 = vunpack.c.l.b16 %v323
    %v2944 = vunpack.c.h.b16 %v323
    %v2945 = vunpack.c.l.b16 %v324
    %v2946 = vunpack.c.h.b16 %v324
    %v2947 = vunpack.c.l.b16 %v325
    %v2948 = vunpack.c.h.b16 %v325
    %v2949 = vunpack.c.l.b16 %v326
    %v2950 = vunpack.c.h.b16 %v326
    %v2951 = vunpack.c.l.b16 %v327
    %v2952 = vunpack.c.h.b16 %v327
    %v2953 = vunpack.c.l.b16 %v328
    %v2954 = vunpack.c.h.b16 %v328
    %v2955 = vunpack.c.l.b16 %v329
    %v2956 = vunpack.c.h.b16 %v329
    %v2957 = vunpack.c.l.b16 %v330
    %v2958 = vunpack.c.h.b16 %v330
    %v2959 = vunpack.c.l.b16 %v331
    %v2960 = vunpack.c.h.b16 %v331
    %v2961 = vunpack.c.l.b16 %v332
    %v2962 = vunpack.c.h.b16 %v332
    %v2963 = vunpack.c.l.b16 %v333
    %v2964 = vunpack.c.h.b16 %v333
    %v2965 = vunpack.c.l.b16 %v334
    %v2966 = vunpack.c.h.b16 %v334
    %v2967 = vunpack.c.l.b16 %v335
    %v2968 = vunpack.c.h.b16 %v335
    %v2969 = vunpack.c.l.b16 %v336
    %v2970 = vunpack.c.h.b16 %v336
    %v2971 = vunpack.c.l.b16 %v337
    %v2972 = vunpack.c.h.b16 %v337
    %v2973 = vunpack.c.l.b16 %v338
    %v2974 = vunpack.c.h.b16 %v338
    %v2975 = vunpack.c.l.b16 %v339
    %v2976 = vunpack.c.h.b16 %v339
    %v2977 = vunpack.c.l.b16 %v340
    %v2978 = vunpack.c.h.b16 %v340
    %v2979 = vunpack.c.l.b16 %v341
    %v2980 = vunpack.c.h.b16 %v341
    %v2981 = vunpack.c.l.b16 %v342
    %v2982 = vunpack.c.h.b16 %v342
    %v2983 = vunpack.c.l.b16 %v343
    %v2984 = vunpack.c.h.b16 %v343
    %v2985 = vunpack.c.l.b16 %v344
    %v2986 = vunpack.c.h.b16 %v344
    %v2987 = vunpack.c.l.b16 %v345
    %v2988 = vunpack.c.h.b16 %v345
    %v2989 = vunpack.c.l.b16 %v346
    %v2990 = vunpack.c.h.b16 %v346
    %v2991 = vunpack.c.l.b16 %v347
    %v2992 = vunpack.c.h.b16 %v347
    %v2993 = vunpack.c.l.b16 %v348
    %v2994 = vunpack.c.h.b16 %v348
    %v2995 = vunpack.c.l.b16 %v349
    %v2996 = vunpack.c.h.b16 %v349
    %v2997 = vunpack.c.l.b16 %v350
    %v2998 = vunpack.c.h.b16 %v350
    %v2999 = vunpack.c.l.b16 %v351
    %v3000 = vunpack.c.h.b16 %v351
    %v3001 = vunpack.c.l.b16 %v352
    %v3002 = vunpack.c.h.b16 %v352
    %v3003 = vunpack.c.l.b16 %v353
    %v3004 = vunpack.c.h.b16 %v353
    %v3005 = vunpack.c.l.b16 %v354
    %v3006 = vunpack.c.h.b16 %v354
    %v3007 = vunpack.c.l.b16 %v355
    %v3008 = vunpack.c.h.b16 %v355
    %v3009 = vunpack.c.l.b16 %v356
    %v3010 = vunpack.c.h.b16 %v356
    %v3011 = vunpack.c.l.b16 %v357
    %v3012 = vunpack.c.h.b16 %v357
    %v3013 = vunpack.c.l.b16 %v358
    %v3014 = vunpack.c.h.b16 %v358
    %v3015 = vunpack.c.l.b16 %v359
    %v3016 = vunpack.c.h.b16 %v359
    %v3017 = vunpack.c.l.b16 %v360
    %v3018 = vunpack.c.h.b16 %v360
    %v3019 = vunpack.c.l.b16 %v361
    %v3020 = vunpack.c.h.b16 %v361
    %v3021 = vunpack.c.l.b16 %v362
    %v3022 = vunpack.c.h.b16 %v362
    %v3023 = vunpack.c.l.b16 %v363
    %v3024 = vunpack.c.h.b16 %v363
    %v3025 = vunpack.c.l.b16 %v364
    %v3026 = vunpack.c.h.b16 %v364
    %v3027 = vunpack.c.l.b16 %v365
    %v3028 = vunpack.c.h.b16 %v365
    %v3029 = vunpack.c.l.b16 %v366
    %v3030 = vunpack.c.h.b16 %v366
    %v3031 = vunpack.c.l.b16 %v367
    %v3032 = vunpack.c.h.b16 %v367
    %v3033 = vunpack.c.l.b16 %v368
    %v3034 = vunpack.c.h.b16 %v368
    %v3035 = vunpack.c.l.b16 %v369
    %v3036 = vunpack.c.h.b16 %v369
    %v3037 = vunpack.c.l.b16 %v370
    %v3038 = vunpack.c.h.b16 %v370
    %v3039 = vunpack.c.l.b16 %v371
    %v3040 = vunpack.c.h.b16 %v371
    %v3041 = vunpack.c.l.b16 %v372
    %v3042 = vunpack.c.h.b16 %v372
    %v3043 = vunpack.c.l.b16 %v373
    %v3044 = vunpack.c.h.b16 %v373
    %v3045 = vunpack.c.l.b16 %v374
    %v3046 = vunpack.c.h.b16 %v374
    %v3047 = vunpack.c.l.b16 %v375
    %v3048 = vunpack.c.h.b16 %v375
    %v3049 = vunpack.c.l.b16 %v376
    %v3050 = vunpack.c.h.b16 %v376
    %v3051 = vunpack.c.l.b16 %v377
    %v3052 = vunpack.c.h.b16 %v377
    %v3053 = vunpack.c.l.b16 %v378
    %v3054 = vunpack.c.h.b16 %v378
    %v3055 = vunpack.c.l.b16 %v379
    %v3056 = vunpack.c.h.b16 %v379
    %v3057 = vunpack.c.l.b16 %v380
    %v3058 = vunpack.c.h.b16 %v380
    %v3059 = vunpack.c.l.b16 %v381
    %v3060 = vunpack.c.h.b16 %v381
    %v3061 = vunpack.c.l.b16 %v382
    %v3062 = vunpack.c.h.b16 %v382
    %v3063 = vunpack.c.l.b16 %v383
    %v3064 = vunpack.c.h.b16 %v383
    %v3065 = vunpack.c.l.b16 %v384
    %v3066 = vunpack.c.h.b16 %v384
    %v3067 = vunpack.c.l.b16 %v385
    %v3068 = vunpack.c.h.b16 %v385
    %v3069 = vunpack.c.l.b16 %v386
    %v3070 = vunpack.c.h.b16 %v386
    %v3071 = vunpack.c.l.b16 %v387
    %v3072 = vunpack.c.h.b16 %v387
    %v3073 = vunpack.c.l.b16 %v388
    %v3074 = vunpack.c.h.b16 %v388
    %v3075 = vunpack.c.l.b16 %v389
    %v3076 = vunpack.c.h.b16 %v389
    %v3077 = vunpack.c.l.b16 %v390
    %v3078 = vunpack.c.h.b16 %v390
    %v3079 = vunpack.c.l.b16 %v391
    %v3080 = vunpack.c.h.b16 %v391
    %v3081 = vunpack.c.l.b16 %v392
    %v3082 = vunpack.c.h.b16 %v392
    %v3083 = vunpack.c.l.b16 %v393
    %v3084 = vunpack.c.h.b16 %v393
    %v3085 = vunpack.c.l.b16 %v394
    %v3086 = vunpack.c.h.b16 %v394
    %v3087 = vunpack.c.l.b16 %v395
    %v3088 = vunpack.c.h.b16 %v395
    %v3089 = vunpack.c.l.b16 %v396
    %v3090 = vunpack.c.h.b16 %v396
    %v3091 = vunpack.c.l.b16 %v397
    %v3092 = vunpack.c.h.b16 %v397
    %v3093 = vunpack.c.l.b16 %v398
    %v3094 = vunpack.c.h.b16 %v398
    %v3095 = vunpack.c.l.b16 %v399
    %v3096 = vunpack.c.h.b16 %v399
    %v3097 = vunpack.c.l.b16 %v400
    %v3098 = vunpack.c.h.b16 %v400
    %v3099 = vunpack.c.l.b16 %v401
    %v3100 = vunpack.c.h.b16 %v401
    %v3101 = vunpack.c.l.b16 %v402
    %v3102 = vunpack.c.h.b16 %v402
    %v3103 = vunpack.c.l.b16 %v403
    %v3104 = vunpack.c.h.b16 %v403
    %v3105 = vunpack.c.l.b16 %v404
    %v3106 = vunpack.c.h.b16 %v404
    %v3107 = vunpack.c.l.b16 %v405
    %v3108 = vunpack.c.h.b16 %v405
    %v3109 = vunpack.c.l.b16 %v406
    %v3110 = vunpack.c.h.b16 %v406
    %v3111 = vunpack.c.l.b16 %v407
    %v3112 = vunpack.c.h.b16 %v407
    %v3113 = vunpack.c.l.b16 %v408
    %v3114 = vunpack.c.h.b16 %v408
    %v3115 = vunpack.c.l.b16 %v409
    %v3116 = vunpack.c.h.b16 %v409
    %v3117 = vunpack.c.l.b16 %v410
    %v3118 = vunpack.c.h.b16 %v410
    %v3119 = vunpack.c.l.b16 %v411
    %v3120 = vunpack.c.h.b16 %v411
    %v3121 = vunpack.c.l.b16 %v412
    %v3122 = vunpack.c.h.b16 %v412
    %v3123 = vunpack.c.l.b16 %v413
    %v3124 = vunpack.c.h.b16 %v413
    %v3125 = vunpack.c.l.b16 %v414
    %v3126 = vunpack.c.h.b16 %v414
    %v3127 = vunpack.c.l.b16 %v415
    %v3128 = vunpack.c.h.b16 %v415
    %v3129 = vunpack.c.l.b16 %v416
    %v3130 = vunpack.c.h.b16 %v416
    %v3131 = vunpack.c.l.b16 %v417
    %v3132 = vunpack.c.h.b16 %v417
    %v3133 = vunpack.c.l.b16 %v418
    %v3134 = vunpack.c.h.b16 %v418
    %v3135 = vunpack.c.l.b16 %v419
    %v3136 = vunpack.c.h.b16 %v419
    %v3137 = vunpack.c.l.b16 %v420
    %v3138 = vunpack.c.h.b16 %v420
    %v3139 = vunpack.c.l.b16 %v421
    %v3140 = vunpack.c.h.b16 %v421
    %v3141 = vunpack.c.l.b16 %v422
    %v3142 = vunpack.c.h.b16 %v422
    %v3143 = vunpack.c.l.b16 %v423
    %v3144 = vunpack.c.h.b16 %v423
    %v3145 = vunpack.c.l.b16 %v424
    %v3146 = vunpack.c.h.b16 %v424
    %v3147 = vunpack.c.l.b16 %v425
    %v3148 = vunpack.c.h.b16 %v425
    %v3149 = vunpack.c.l.b16 %v426
    %v3150 = vunpack.c.h.b16 %v426
    %v3151 = vunpack.c.l.b16 %v427
    %v3152 = vunpack.c.h.b16 %v427
    %v3153 = vunpack.c.l.b16 %v428
    %v3154 = vunpack.c.h.b16 %v428
    %v3155 = vunpack.c.l.b16 %v429
    %v3156 = vunpack.c.h.b16 %v429
    %v3157 = vunpack.c.l.b16 %v430
    %v3158 = vunpack.c.h.b16 %v430
    %v3159 = vunpack.c.l.b16 %v431
    %v3160 = vunpack.c.h.b16 %v431
    %v3161 = vunpack.c.l.b16 %v432
    %v3162 = vunpack.c.h.b16 %v432
    %v3163 = vunpack.c.l.b16 %v433
    %v3164 = vunpack.c.h.b16 %v433
    %v3165 = vunpack.c.l.b16 %v434
    %v3166 = vunpack.c.h.b16 %v434
    %v3167 = vunpack.c.l.b16 %v435
    %v3168 = vunpack.c.h.b16 %v435
    %v3169 = vunpack.c.l.b16 %v436
    %v3170 = vunpack.c.h.b16 %v436
    %v3171 = vunpack.c.l.b16 %v437
    %v3172 = vunpack.c.h.b16 %v437
    %v3173 = vunpack.c.l.b16 %v438
    %v3174 = vunpack.c.h.b16 %v438
    %v3175 = vunpack.c.l.b16 %v439
    %v3176 = vunpack.c.h.b16 %v439
    %v3177 = vunpack.c.l.b16 %v440
    %v3178 = vunpack.c.h.b16 %v440
    %v3179 = vunpack.c.l.b16 %v441
    %v3180 = vunpack.c.h.b16 %v441
    %v3181 = vunpack.c.l.b16 %v442
    %v3182 = vunpack.c.h.b16 %v442
    %v3183 = vunpack.c.l.b16 %v443
    %v3184 = vunpack.c.h.b16 %v443
    %v3185 = vunpack.c.l.b16 %v444
    %v3186 = vunpack.c.h.b16 %v444
    %v3187 = vunpack.c.l.b16 %v445
    %v3188 = vunpack.c.h.b16 %v445
    %v3189 = vunpack.c.l.b16 %v446
    %v3190 = vunpack.c.h.b16 %v446
    %v3191 = vunpack.c.l.b16 %v447
    %v3192 = vunpack.c.h.b16 %v447
    %v3193 = vunpack.c.l.b16 %v448
    %v3194 = vunpack.c.h.b16 %v448
    %v3195 = vunpack.c.l.b16 %v449
    %v3196 = vunpack.c.h.b16 %v449
    %v3197 = vunpack.c.l.b16 %v450
    %v3198 = vunpack.c.h.b16 %v450
    %v3199 = vunpack.c.l.b16 %v451
    %v3200 = vunpack.c.h.b16 %v451
    %v3201 = vunpack.c.l.b16 %v452
    %v3202 = vunpack.c.h.b16 %v452
    %v3203 = vunpack.c.l.b16 %v453
    %v3204 = vunpack.c.h.b16 %v453
    %v3205 = vunpack.c.l.b16 %v454
    %v3206 = vunpack.c.h.b16 %v454
    %v3207 = vunpack.c.l.b16 %v455
    %v3208 = vunpack.c.h.b16 %v455
    %v3209 = vunpack.c.l.b16 %v456
    %v3210 = vunpack.c.h.b16 %v456
    %v3211 = vunpack.c.l.b16 %v457
    %v3212 = vunpack.c.h.b16 %v457
    %v3213 = vunpack.c.l.b16 %v458
    %v3214 = vunpack.c.h.b16 %v458
    %v3215 = vunpack.c.l.b16 %v459
    %v3216 = vunpack.c.h.b16 %v459
    %v3217 = vunpack.c.l.b16 %v460
    %v3218 = vunpack.c.h.b16 %v460
    %v3219 = vunpack.c.l.b16 %v461
    %v3220 = vunpack.c.h.b16 %v461
    %v3221 = vunpack.c.l.b16 %v462
    %v3222 = vunpack.c.h.b16 %v462
    %v3223 = vunpack.c.l.b16 %v463
    %v3224 = vunpack.c.h.b16 %v463
    %v3225 = vunpack.c.l.b16 %v464
    %v3226 = vunpack.c.h.b16 %v464
    %v3227 = vunpack.c.l.b16 %v465
    %v3228 = vunpack.c.h.b16 %v465
    %v3229 = vunpack.c.l.b16 %v466
    %v3230 = vunpack.c.h.b16 %v466
    %v3231 = vunpack.c.l.b16 %v467
    %v3232 = vunpack.c.h.b16 %v467
    %v3233 = vunpack.c.l.b16 %v468
    %v3234 = vunpack.c.h.b16 %v468
    %v3235 = vunpack.c.l.b16 %v469
    %v3236 = vunpack.c.h.b16 %v469
    %v3237 = vunpack.c.l.b16 %v470
    %v3238 = vunpack.c.h.b16 %v470
    %v3239 = vunpack.c.l.b16 %v471
    %v3240 = vunpack.c.h.b16 %v471
    %v3241 = vunpack.c.l.b16 %v472
    %v3242 = vunpack.c.h.b16 %v472
    %v3243 = vunpack.c.l.b16 %v473
    %v3244 = vunpack.c.h.b16 %v473
    %v3245 = vunpack.c.l.b16 %v474
    %v3246 = vunpack.c.h.b16 %v474
    %v3247 = vunpack.c.l.b16 %v475
    %v3248 = vunpack.c.h.b16 %v475
    %v3249 = vunpack.c.l.b16 %v476
    %v3250 = vunpack.c.h.b16 %v476
    %v3251 = vunpack.c.l.b16 %v477
    %v3252 = vunpack.c.h.b16 %v477
    %v3253 = vunpack.c.l.b16 %v478
    %v3254 = vunpack.c.h.b16 %v478
    %v3255 = vunpack.c.l.b16 %v479
    %v3256 = vunpack.c.h.b16 %v479
    %v3257 = vunpack.c.l.b16 %v480
    %v3258 = vunpack.c.h.b16 %v480
    %v3259 = vunpack.c.l.b16 %v481
    %v3260 = vunpack.c.h.b16 %v481
    %v3261 = vunpack.c.l.b16 %v482
    %v3262 = vunpack.c.h.b16 %v482
    %v3263 = vunpack.c.l.b16 %v483
    %v3264 = vunpack.c.h.b16 %v483
    %v3265 = vunpack.c.l.b16 %v484
    %v3266 = vunpack.c.h.b16 %v484
    %v3267 = vunpack.c.l.b16 %v485
    %v3268 = vunpack.c.h.b16 %v485
    %v3269 = vunpack.c.l.b16 %v486
    %v3270 = vunpack.c.h.b16 %v486
    %v3271 = vunpack.c.l.b16 %v487
    %v3272 = vunpack.c.h.b16 %v487
    %v3273 = vunpack.c.l.b16 %v488
    %v3274 = vunpack.c.h.b16 %v488
    %v3275 = vunpack.c.l.b16 %v489
    %v3276 = vunpack.c.h.b16 %v489
    %v3277 = vunpack.c.l.b16 %v490
    %v3278 = vunpack.c.h.b16 %v490
    %v3279 = vunpack.c.l.b16 %v491
    %v3280 = vunpack.c.h.b16 %v491
    %v3281 = vunpack.c.l.b16 %v492
    %v3282 = vunpack.c.h.b16 %v492
    %v3283 = vunpack.c.l.b16 %v493
    %v3284 = vunpack.c.h.b16 %v493
    %v3285 = vunpack.c.l.b16 %v494
    %v3286 = vunpack.c.h.b16 %v494
    %v3287 = vunpack.c.l.b16 %v495
    %v3288 = vunpack.c.h.b16 %v495
    %v3289 = vunpack.c.l.b16 %v496
    %v3290 = vunpack.c.h.b16 %v496
    %v3291 = vunpack.c.l.b16 %v497
    %v3292 = vunpack.c.h.b16 %v497
    %v3293 = vunpack.c.l.b16 %v498
    %v3294 = vunpack.c.h.b16 %v498
    %v3295 = vunpack.c.l.b16 %v499
    %v3296 = vunpack.c.h.b16 %v499
    %v3297 = vunpack.c.l.b16 %v500
    %v3298 = vunpack.c.h.b16 %v500
    %v3299 = vunpack.c.l.b16 %v501
    %v3300 = vunpack.c.h.b16 %v501
    %v3301 = vunpack.c.l.b16 %v502
    %v3302 = vunpack.c.h.b16 %v502
    %v3303 = vunpack.c.l.b16 %v503
    %v3304 = vunpack.c.h.b16 %v503
    %v3305 = vunpack.c.l.b16 %v504
    %v3306 = vunpack.c.h.b16 %v504
    %v3307 = vunpack.c.l.b16 %v505
    %v3308 = vunpack.c.h.b16 %v505
    %v3309 = vunpack.c.l.b16 %v506
    %v3310 = vunpack.c.h.b16 %v506
    %v3311 = vunpack.c.l.b16 %v507
    %v3312 = vunpack.c.h.b16 %v507
    %v3313 = vunpack.c.l.b16 %v508
    %v3314 = vunpack.c.h.b16 %v508
    %v3315 = vunpack.c.l.b16 %v509
    %v3316 = vunpack.c.h.b16 %v509
    %v3317 = vunpack.c.l.b16 %v510
    %v3318 = vunpack.c.h.b16 %v510
    %v3319 = vunpack.c.l.b16 %v511
    %v3320 = vunpack.c.h.b16 %v511
    %v3321 = vunpack.c.l.b16 %v512
    %v3322 = vunpack.c.h.b16 %v512
    %v3323 = vunpack.c.l.b16 %v513
    %v3324 = vunpack.c.h.b16 %v513
    %v3325 = vunpack.c.l.b16 %v514
    %v3326 = vunpack.c.h.b16 %v514
    %v3327 = vunpack.c.l.b16 %v515
    %v3328 = vunpack.c.h.b16 %v515
    %v3329 = vunpack.c.l.b16 %v516
    %v3330 = vunpack.c.h.b16 %v516
    %v3331 = vunpack.c.l.b16 %v517
    %v3332 = vunpack.c.h.b16 %v517
    %v3333 = vunpack.c.l.b16 %v518
    %v3334 = vunpack.c.h.b16 %v518
    %v3335 = vunpack.c.l.b16 %v519
    %v3336 = vunpack.c.h.b16 %v519
    %v3337 = vunpack.c.l.b16 %v520
    %v3338 = vunpack.c.h.b16 %v520
    %v3339 = vunpack.c.l.b16 %v521
    %v3340 = vunpack.c.h.b16 %v521
    %v3341 = vunpack.c.l.b16 %v522
    %v3342 = vunpack.c.h.b16 %v522
    %v3343 = vunpack.c.l.b16 %v523
    %v3344 = vunpack.c.h.b16 %v523
    %v3345 = vunpack.c.l.b16 %v524
    %v3346 = vunpack.c.h.b16 %v524
    %v3347 = vunpack.c.l.b16 %v525
    %v3348 = vunpack.c.h.b16 %v525
    %v3349 = vunpack.c.l.b16 %v526
    %v3350 = vunpack.c.h.b16 %v526
    %v3351 = vunpack.c.l.b16 %v527
    %v3352 = vunpack.c.h.b16 %v527
    %v3353 = vunpack.c.l.b16 %v528
    %v3354 = vunpack.c.h.b16 %v528
    %v3355 = vunpack.c.l.b16 %v529
    %v3356 = vunpack.c.h.b16 %v529
    %v3357 = vunpack.c.l.b16 %v530
    %v3358 = vunpack.c.h.b16 %v530
    %v3359 = vunpack.c.l.b16 %v531
    %v3360 = vunpack.c.h.b16 %v531
    %v3361 = vunpack.c.l.b16 %v532
    %v3362 = vunpack.c.h.b16 %v532
    %v3363 = vunpack.c.l.b16 %v533
    %v3364 = vunpack.c.h.b16 %v533
    %v3365 = vunpack.c.l.b16 %v534
    %v3366 = vunpack.c.h.b16 %v534
    %v3367 = vunpack.c.l.b16 %v535
    %v3368 = vunpack.c.h.b16 %v535
    %v3369 = vunpack.c.l.b16 %v536
    %v3370 = vunpack.c.h.b16 %v536
    %v3371 = vunpack.c.l.b16 %v537
    %v3372 = vunpack.c.h.b16 %v537
    %v3373 = vunpack.c.l.b16 %v538
    %v3374 = vunpack.c.h.b16 %v538
    %v3375 = vunpack.c.l.b16 %v539
    %v3376 = vunpack.c.h.b16 %v539
    %v3377 = vunpack.c.l.b16 %v540
    %v3378 = vunpack.c.h.b16 %v540
    %v3379 = vunpack.c.l.b16 %v541
    %v3380 = vunpack.c.h.b16 %v541
    %v3381 = vunpack.c.l.b16 %v542
    %v3382 = vunpack.c.h.b16 %v542
    %v3383 = vunpack.c.l.b16 %v543
    %v3384 = vunpack.c.h.b16 %v543
    %v3385 = vunpack.c.l.b16 %v544
    %v3386 = vunpack.c.h.b16 %v544
    %v3387 = vunpack.c.l.b16 %v545
    %v3388 = vunpack.c.h.b16 %v545
    %v3389 = vunpack.c.l.b16 %v546
    %v3390 = vunpack.c.h.b16 %v546
    %v3391 = vunpack.c.l.b16 %v547
    %v3392 = vunpack.c.h.b16 %v547
    %v3393 = vunpack.c.l.b16 %v548
    %v3394 = vunpack.c.h.b16 %v548
    %v3395 = vunpack.c.l.b16 %v549
    %v3396 = vunpack.c.h.b16 %v549
    %v3397 = vunpack.c.l.b16 %v550
    %v3398 = vunpack.c.h.b16 %v550
    %v3399 = vunpack.c.l.b16 %v551
    %v3400 = vunpack.c.h.b16 %v551
    %v3401 = vunpack.c.l.b16 %v552
    %v3402 = vunpack.c.h.b16 %v552
    %v3403 = vunpack.c.l.b16 %v553
    %v3404 = vunpack.c.h.b16 %v553
    %v3405 = vunpack.c.l.b16 %v554
    %v3406 = vunpack.c.h.b16 %v554
    %v3407 = vunpack.c.l.b16 %v555
    %v3408 = vunpack.c.h.b16 %v555
    %v3409 = vunpack.c.l.b16 %v556
    %v3410 = vunpack.c.h.b16 %v556
    %v3411 = vunpack.c.l.b16 %v557
    %v3412 = vunpack.c.h.b16 %v557
    %v3413 = vunpack.c.l.b16 %v558
    %v3414 = vunpack.c.h.b16 %v558
    %v3415 = vunpack.c.l.b16 %v559
    %v3416 = vunpack.c.h.b16 %v559
    %v3417 = vunpack.c.l.b16 %v560
    %v3418 = vunpack.c.h.b16 %v560
    %v3419 = vunpack.c.l.b16 %v561
    %v3420 = vunpack.c.h.b16 %v561
    %v3421 = vunpack.c.l.b16 %v562
    %v3422 = vunpack.c.h.b16 %v562
    %v3423 = vunpack.c.l.b16 %v563
    %v3424 = vunpack.c.h.b16 %v563
    %v3425 = vunpack.c.l.b16 %v564
    %v3426 = vunpack.c.h.b16 %v564
    %v3427 = vunpack.c.l.b16 %v565
    %v3428 = vunpack.c.h.b16 %v565
    %v3429 = vunpack.c.l.b16 %v566
    %v3430 = vunpack.c.h.b16 %v566
    %v3431 = vunpack.c.l.b16 %v567
    %v3432 = vunpack.c.h.b16 %v567
    %v3433 = vunpack.c.l.b16 %v568
    %v3434 = vunpack.c.h.b16 %v568
    %v3435 = vunpack.c.l.b16 %v569
    %v3436 = vunpack.c.h.b16 %v569
    %v3437 = vunpack.c.l.b16 %v570
    %v3438 = vunpack.c.h.b16 %v570
    %v3439 = vunpack.c.l.b16 %v571
    %v3440 = vunpack.c.h.b16 %v571
    %v3441 = vunpack.c.l.b16 %v572
    %v3442 = vunpack.c.h.b16 %v572
    %v3443 = vunpack.c.l.b16 %v573
    %v3444 = vunpack.c.h.b16 %v573
    %v3445 = vunpack.c.l.b16 %v574
    %v3446 = vunpack.c.h.b16 %v574
    %v3447 = vunpack.c.l.b16 %v575
    %v3448 = vunpack.c.h.b16 %v575
    %v3449 = vunpack.c.l.b16 %v576
    %v3450 = vunpack.c.h.b16 %v576
    %v3451 = vunpack.c.l.b16 %v577
    %v3452 = vunpack.c.h.b16 %v577
    %v3453 = vunpack.c.l.b16 %v578
    %v3454 = vunpack.c.h.b16 %v578
    %v3455 = vunpack.c.l.b16 %v579
    %v3456 = vunpack.c.h.b16 %v579
    %v3457 = vunpack.c.l.b16 %v580
    %v3458 = vunpack.c.h.b16 %v580
    %v3459 = vunpack.c.l.b16 %v581
    %v3460 = vunpack.c.h.b16 %v581
    %v3461 = vunpack.c.l.b16 %v582
    %v3462 = vunpack.c.h.b16 %v582
    %v3463 = vunpack.c.l.b16 %v583
    %v3464 = vunpack.c.h.b16 %v583
    %v3465 = vunpack.c.l.b16 %v584
    %v3466 = vunpack.c.h.b16 %v584
    %v3467 = vunpack.c.l.b16 %v585
    %v3468 = vunpack.c.h.b16 %v585
    %v3469 = vunpack.c.l.b16 %v586
    %v3470 = vunpack.c.h.b16 %v586
    %v3471 = vunpack.c.l.b16 %v587
    %v3472 = vunpack.c.h.b16 %v587
    %v3473 = vunpack.c.l.b16 %v588
    %v3474 = vunpack.c.h.b16 %v588
    %v3475 = vunpack.c.l.b16 %v589
    %v3476 = vunpack.c.h.b16 %v589
    %v3477 = vunpack.c.l.b16 %v590
    %v3478 = vunpack.c.h.b16 %v590
    %v3479 = vunpack.c.l.b16 %v591
    %v3480 = vunpack.c.h.b16 %v591
    %v3481 = vunpack.c.l.b16 %v592
    %v3482 = vunpack.c.h.b16 %v592
    %v3483 = vunpack.c.l.b16 %v593
    %v3484 = vunpack.c.h.b16 %v593
    %v3485 = vunpack.c.l.b16 %v594
    %v3486 = vunpack.c.h.b16 %v594
    %v3487 = vunpack.c.l.b16 %v595
    %v3488 = vunpack.c.h.b16 %v595
    %v3489 = vunpack.c.l.b16 %v596
    %v3490 = vunpack.c.h.b16 %v596
    %v3491 = vunpack.c.l.b16 %v597
    %v3492 = vunpack.c.h.b16 %v597
    %v3493 = vunpack.c.l.b16 %v598
    %v3494 = vunpack.c.h.b16 %v598
    %v3495 = vunpack.c.l.b16 %v599
    %v3496 = vunpack.c.h.b16 %v599
    %v3497 = vunpack.c.l.b16 %v600
    %v3498 = vunpack.c.h.b16 %v600
    %v3499 = vunpack.c.l.b16 %v601
    %v3500 = vunpack.c.h.b16 %v601
    %v3501 = vunpack.c.l.b16 %v602
    %v3502 = vunpack.c.h.b16 %v602
    %v3503 = vunpack.c.l.b16 %v603
    %v3504 = vunpack.c.h.b16 %v603
    %v3505 = vunpack.c.l.b16 %v604
    %v3506 = vunpack.c.h.b16 %v604
    %v3507 = vunpack.c.l.b16 %v605
    %v3508 = vunpack.c.h.b16 %v605
    %v3509 = vunpack.c.l.b16 %v606
    %v3510 = vunpack.c.h.b16 %v606
    %v3511 = vunpack.c.l.b16 %v607
    %v3512 = vunpack.c.h.b16 %v607
    %v3513 = vunpack.c.l.b16 %v608
    %v3514 = vunpack.c.h.b16 %v608
    %v3515 = vunpack.c.l.b16 %v609
    %v3516 = vunpack.c.h.b16 %v609
    %v3517 = vunpack.c.l.b16 %v610
    %v3518 = vunpack.c.h.b16 %v610
    %v3519 = vunpack.c.l.b16 %v611
    %v3520 = vunpack.c.h.b16 %v611
    %v3521 = vunpack.c.l.b16 %v612
    %v3522 = vunpack.c.h.b16 %v612
    %v3523 = vunpack.c.l.b16 %v613
    %v3524 = vunpack.c.h.b16 %v613
    %v3525 = vunpack.c.l.b16 %v614
    %v3526 = vunpack.c.h.b16 %v614
    %v3527 = vunpack.c.l.b16 %v615
    %v3528 = vunpack.c.h.b16 %v615
    %v3529 = vunpack.c.l.b16 %v616
    %v3530 = vunpack.c.h.b16 %v616
    %v3531 = vunpack.c.l.b16 %v617
    %v3532 = vunpack.c.h.b16 %v617
    %v3533 = vunpack.c.l.b16 %v618
    %v3534 = vunpack.c.h.b16 %v618
    %v3535 = vunpack.c.l.b16 %v619
    %v3536 = vunpack.c.h.b16 %v619
    %v3537 = vunpack.c.l.b16 %v620
    %v3538 = vunpack.c.h.b16 %v620
    %v3539 = vunpack.c.l.b16 %v621
    %v3540 = vunpack.c.h.b16 %v621
    %v3541 = vunpack.c.l.b16 %v622
    %v3542 = vunpack.c.h.b16 %v622
    %v3543 = vunpack.c.l.b16 %v623
    %v3544 = vunpack.c.h.b16 %v623
    %v3545 = vunpack.c.l.b16 %v624
    %v3546 = vunpack.c.h.b16 %v624
    %v3547 = vunpack.c.l.b16 %v625
    %v3548 = vunpack.c.h.b16 %v625
    %v3549 = vunpack.c.l.b16 %v626
    %v3550 = vunpack.c.h.b16 %v626
    %v3551 = vunpack.c.l.b16 %v627
    %v3552 = vunpack.c.h.b16 %v627
    %v3553 = vunpack.c.l.b16 %v628
    %v3554 = vunpack.c.h.b16 %v628
    %v3555 = vunpack.c.l.b16 %v629
    %v3556 = vunpack.c.h.b16 %v629
    %v3557 = vunpack.c.l.b16 %v630
    %v3558 = vunpack.c.h.b16 %v630
    %v3559 = vunpack.c.l.b16 %v631
    %v3560 = vunpack.c.h.b16 %v631
    %v3561 = vunpack.c.l.b16 %v632
    %v3562 = vunpack.c.h.b16 %v632
    %v3563 = vunpack.c.l.b16 %v633
    %v3564 = vunpack.c.h.b16 %v633
    %v3565 = vunpack.c.l.b16 %v634
    %v3566 = vunpack.c.h.b16 %v634
    %v3567 = vunpack.c.l.b16 %v635
    %v3568 = vunpack.c.h.b16 %v635
    %v3569 = vunpack.c.l.b16 %v636
    %v3570 = vunpack.c.h.b16 %v636
    %v3571 = vunpack.c.l.b16 %v637
    %v3572 = vunpack.c.h.b16 %v637
    %v3573 = vunpack.c.l.b16 %v638
    %v3574 = vunpack.c.h.b16 %v638
    %v3575 = vunpack.c.l.b16 %v639
    %v3576 = vunpack.c.h.b16 %v639
    %v3577 = vunpack.c.l.b16 %v640
    %v3578 = vunpack.c.h.b16 %v640
    %v3579 = vunpack.c.l.b16 %v641
    %v3580 = vunpack.c.h.b16 %v641
    %v3581 = vunpack.c.l.b16 %v642
    %v3582 = vunpack.c.h.b16 %v642
    %v3583 = vunpack.c.l.b16 %v643
    %v3584 = vunpack.c.h.b16 %v643
    %v3585 = vunpack.c.l.b16 %v644
    %v3586 = vunpack.c.h.b16 %v644
    %v3587 = vunpack.c.l.b16 %v645
    %v3588 = vunpack.c.h.b16 %v645
    %v3589 = vunpack.c.l.b16 %v646
    %v3590 = vunpack.c.h.b16 %v646
    %v3591 = vunpack.c.l.b16 %v647
    %v3592 = vunpack.c.h.b16 %v647
    %v3593 = vunpack.c.l.b16 %v648
    %v3594 = vunpack.c.h.b16 %v648
    %v3595 = vunpack.c.l.b16 %v649
    %v3596 = vunpack.c.h.b16 %v649
    %v3597 = vunpack.c.l.b16 %v650
    %v3598 = vunpack.c.h.b16 %v650
    %v3599 = vunpack.c.l.b16 %v651
    %v3600 = vunpack.c.h.b16 %v651
    %v3601 = vunpack.c.l.b16 %v652
    %v3602 = vunpack.c.h.b16 %v652
    %v3603 = vunpack.c.l.b16 %v653
    %v3604 = vunpack.c.h.b16 %v653
    %v3605 = vunpack.c.l.b16 %v654
    %v3606 = vunpack.c.h.b16 %v654
    %v3607 = vunpack.c.l.b16 %v655
    %v3608 = vunpack.c.h.b16 %v655
    %v3609 = vunpack.c.l.b16 %v656
    %v3610 = vunpack.c.h.b16 %v656
    %v3611 = vunpack.c.l.b16 %v657
    %v3612 = vunpack.c.h.b16 %v657
    %v3613 = vunpack.c.l.b16 %v658
    %v3614 = vunpack.c.h.b16 %v658
    %v3615 = vunpack.c.l.b16 %v659
    %v3616 = vunpack.c.h.b16 %v659
    %v3617 = vunpack.c.l.b16 %v660
    %v3618 = vunpack.c.h.b16 %v660
    %v3619 = vunpack.c.l.b16 %v661
    %v3620 = vunpack.c.h.b16 %v661
    %v3621 = vunpack.c.l.b16 %v662
    %v3622 = vunpack.c.h.b16 %v662
    %v3623 = vunpack.c.l.b16 %v663
    %v3624 = vunpack.c.h.b16 %v663
    %v3625 = vunpack.c.l.b16 %v664
    %v3626 = vunpack.c.h.b16 %v664
    %v3627 = vunpack.c.l.b16 %v665
    %v3628 = vunpack.c.h.b16 %v665
    %v3629 = vunpack.c.l.b16 %v666
    %v3630 = vunpack.c.h.b16 %v666
    %v3631 = vunpack.c.l.b16 %v667
    %v3632 = vunpack.c.h.b16 %v667
    %v3633 = vunpack.c.l.b16 %v668
    %v3634 = vunpack.c.h.b16 %v668
    %v3635 = vunpack.c.l.b16 %v669
    %v3636 = vunpack.c.h.b16 %v669
    %v3637 = vunpack.c.l.b16 %v670
    %v3638 = vunpack.c.h.b16 %v670
    %v3639 = vunpack.c.l.b16 %v671
    %v3640 = vunpack.c.h.b16 %v671
    %v3641 = vunpack.c.l.b16 %v672
    %v3642 = vunpack.c.h.b16 %v672
    %v3643 = vunpack.c.l.b16 %v673
    %v3644 = vunpack.c.h.b16 %v673
    %v3645 = vunpack.c.l.b16 %v674
    %v3646 = vunpack.c.h.b16 %v674
    %v3647 = vunpack.c.l.b16 %v675
    %v3648 = vunpack.c.h.b16 %v675
    %v3649 = vunpack.c.l.b16 %v676
    %v3650 = vunpack.c.h.b16 %v676
    %v3651 = vunpack.c.l.b16 %v677
    %v3652 = vunpack.c.h.b16 %v677
    %v3653 = vunpack.c.l.b16 %v678
    %v3654 = vunpack.c.h.b16 %v678
    %v3655 = vunpack.c.l.b16 %v679
    %v3656 = vunpack.c.h.b16 %v679
    %v3657 = vunpack.c.l.b16 %v680
    %v3658 = vunpack.c.h.b16 %v680
    %v3659 = vunpack.c.l.b16 %v681
    %v3660 = vunpack.c.h.b16 %v681
    %v3661 = vunpack.c.l.b16 %v682
    %v3662 = vunpack.c.h.b16 %v682
    %v3663 = vunpack.c.l.b16 %v683
    %v3664 = vunpack.c.h.b16 %v683
    %v3665 = vunpack.c.l.b16 %v684
    %v3666 = vunpack.c.h.b16 %v684
    %v3667 = vunpack.c.l.b16 %v685
    %v3668 = vunpack.c.h.b16 %v685
    %v3669 = vunpack.c.l.b16 %v686
    %v3670 = vunpack.c.h.b16 %v686
    %v3671 = vunpack.c.l.b16 %v687
    %v3672 = vunpack.c.h.b16 %v687
    %v3673 = vunpack.c.l.b16 %v688
    %v3674 = vunpack.c.h.b16 %v688
    %v3675 = vunpack.c.l.b16 %v689
    %v3676 = vunpack.c.h.b16 %v689
    %v3677 = vunpack.c.l.b16 %v690
    %v3678 = vunpack.c.h.b16 %v690
    %v3679 = vunpack.c.l.b16 %v691
    %v3680 = vunpack.c.h.b16 %v691
    %v3681 = vunpack.c.l.b16 %v692
    %v3682 = vunpack.c.h.b16 %v692
    %v3683 = vunpack.c.l.b16 %v693
    %v3684 = vunpack.c.h.b16 %v693
    %v3685 = vunpack.c.l.b16 %v694
    %v3686 = vunpack.c.h.b16 %v694
    %v3687 = vunpack.c.l.b16 %v695
    %v3688 = vunpack.c.h.b16 %v695
    %v3689 = vunpack.c.l.b16 %v696
    %v3690 = vunpack.c.h.b16 %v696
    %v3691 = vunpack.c.l.b16 %v697
    %v3692 = vunpack.c.h.b16 %v697
    %v3693 = vunpack.c.l.b16 %v698
    %v3694 = vunpack.c.h.b16 %v698
    %v3695 = vunpack.c.l.b16 %v699
    %v3696 = vunpack.c.h.b16 %v699
    %v3697 = vunpack.c.l.b16 %v700
    %v3698 = vunpack.c.h.b16 %v700
    %v3699 = vunpack.c.l.b16 %v701
    %v3700 = vunpack.c.h.b16 %v701
    %v3701 = vunpack.c.l.b16 %v702
    %v3702 = vunpack.c.h.b16 %v702
    %v3703 = vunpack.c.l.b16 %v703
    %v3704 = vunpack.c.h.b16 %v703
    %v3705 = vunpack.c.l.b16 %v704
    %v3706 = vunpack.c.h.b16 %v704
    %v3707 = vunpack.c.l.b16 %v705
    %v3708 = vunpack.c.h.b16 %v705
    %v3709 = vunpack.c.l.b16 %v706
    %v3710 = vunpack.c.h.b16 %v706
    %v3711 = vunpack.c.l.b16 %v707
    %v3712 = vunpack.c.h.b16 %v707
    %v3713 = vunpack.c.l.b16 %v708
    %v3714 = vunpack.c.h.b16 %v708
    %v3715 = vunpack.c.l.b16 %v709
    %v3716 = vunpack.c.h.b16 %v709
    %v3717 = vunpack.c.l.b16 %v710
    %v3718 = vunpack.c.h.b16 %v710
    %v3719 = vunpack.c.l.b16 %v711
    %v3720 = vunpack.c.h.b16 %v711
    %v3721 = vunpack.c.l.b16 %v712
    %v3722 = vunpack.c.h.b16 %v712
    %v3723 = vunpack.c.l.b16 %v713
    %v3724 = vunpack.c.h.b16 %v713
    %v3725 = vunpack.c.l.b16 %v714
    %v3726 = vunpack.c.h.b16 %v714
    %v3727 = vunpack.c.l.b16 %v715
    %v3728 = vunpack.c.h.b16 %v715
    %v3729 = vunpack.c.l.b16 %v716
    %v3730 = vunpack.c.h.b16 %v716
    %v3731 = vunpack.c.l.b16 %v717
    %v3732 = vunpack.c.h.b16 %v717
    %v3733 = vunpack.c.l.b16 %v718
    %v3734 = vunpack.c.h.b16 %v718
    %v3735 = vunpack.c.l.b16 %v719
    %v3736 = vunpack.c.h.b16 %v719
    %v3737 = vunpack.c.l.b16 %v720
    %v3738 = vunpack.c.h.b16 %v720
    %v3739 = vunpack.c.l.b16 %v721
    %v3740 = vunpack.c.h.b16 %v721
    %v3741 = vunpack.c.l.b16 %v722
    %v3742 = vunpack.c.h.b16 %v722
    %v3743 = vunpack.c.l.b16 %v723
    %v3744 = vunpack.c.h.b16 %v723
    %v3745 = vunpack.c.l.b16 %v724
    %v3746 = vunpack.c.h.b16 %v724
    %v3747 = vunpack.c.l.b16 %v725
    %v3748 = vunpack.c.h.b16 %v725
    %v3749 = vunpack.c.l.b16 %v726
    %v3750 = vunpack.c.h.b16 %v726
    %v3751 = vunpack.c.l.b16 %v727
    %v3752 = vunpack.c.h.b16 %v727
    %v3753 = vunpack.c.l.b16 %v728
    %v3754 = vunpack.c.h.b16 %v728
    %v3755 = vunpack.c.l.b16 %v729
    %v3756 = vunpack.c.h.b16 %v729
    %v3757 = vunpack.c.l.b16 %v730
    %v3758 = vunpack.c.h.b16 %v730
    %v3759 = vunpack.c.l.b16 %v731
    %v3760 = vunpack.c.h.b16 %v731
    %v3761 = vunpack.c.l.b16 %v732
    %v3762 = vunpack.c.h.b16 %v732
    %v3763 = vunpack.c.l.b16 %v733
    %v3764 = vunpack.c.h.b16 %v733
    %v3765 = vunpack.c.l.b16 %v734
    %v3766 = vunpack.c.h.b16 %v734
    %v3767 = vunpack.c.l.b16 %v735
    %v3768 = vunpack.c.h.b16 %v735
    %v3769 = vunpack.c.l.b16 %v736
    %v3770 = vunpack.c.h.b16 %v736
    %v3771 = vunpack.c.l.b16 %v737
    %v3772 = vunpack.c.h.b16 %v737
    %v3773 = vunpack.c.l.b16 %v738
    %v3774 = vunpack.c.h.b16 %v738
    %v3775 = vunpack.c.l.b16 %v739
    %v3776 = vunpack.c.h.b16 %v739
    %v3777 = vunpack.c.l.b16 %v740
    %v3778 = vunpack.c.h.b16 %v740
    %v3779 = vunpack.c.l.b16 %v741
    %v3780 = vunpack.c.h.b16 %v741
    %v3781 = vunpack.c.l.b16 %v742
    %v3782 = vunpack.c.h.b16 %v742
    %v3783 = vunpack.c.l.b16 %v743
    %v3784 = vunpack.c.h.b16 %v743
    %v3785 = vunpack.c.l.b16 %v744
    %v3786 = vunpack.c.h.b16 %v744
    %v3787 = vunpack.c.l.b16 %v745
    %v3788 = vunpack.c.h.b16 %v745
    %v3789 = vunpack.c.l.b16 %v746
    %v3790 = vunpack.c.h.b16 %v746
    %v3791 = vunpack.c.l.b16 %v747
    %v3792 = vunpack.c.h.b16 %v747
    %v3793 = vunpack.c.l.b16 %v748
    %v3794 = vunpack.c.h.b16 %v748
    %v3795 = vunpack.c.l.b16 %v749
    %v3796 = vunpack.c.h.b16 %v749
    %v3797 = vunpack.c.l.b16 %v750
    %v3798 = vunpack.c.h.b16 %v750
    %v3799 = vunpack.c.l.b16 %v751
    %v3800 = vunpack.c.h.b16 %v751
    %v3801 = vunpack.c.l.b16 %v752
    %v3802 = vunpack.c.h.b16 %v752
    %v3803 = vunpack.c.l.b16 %v753
    %v3804 = vunpack.c.h.b16 %v753
    %v3805 = vunpack.c.l.b16 %v754
    %v3806 = vunpack.c.h.b16 %v754
    %v3807 = vunpack.c.l.b16 %v755
    %v3808 = vunpack.c.h.b16 %v755
    %v3809 = vunpack.c.l.b16 %v756
    %v3810 = vunpack.c.h.b16 %v756
    %v3811 = vunpack.c.l.b16 %v757
    %v3812 = vunpack.c.h.b16 %v757
    %v3813 = vunpack.c.l.b16 %v758
    %v3814 = vunpack.c.h.b16 %v758
    %v3815 = vunpack.c.l.b16 %v759
    %v3816 = vunpack.c.h.b16 %v759
    %v3817 = vunpack.c.l.b16 %v760
    %v3818 = vunpack.c.h.b16 %v760
    %v3819 = vunpack.c.l.b16 %v761
    %v3820 = vunpack.c.h.b16 %v761
    %v3821 = vunpack.c.l.b16 %v762
    %v3822 = vunpack.c.h.b16 %v762
    %v3823 = vunpack.c.l.b16 %v763
    %v3824 = vunpack.c.h.b16 %v763
    %v3825 = vunpack.c.l.b16 %v764
    %v3826 = vunpack.c.h.b16 %v764
    %v3827 = vunpack.c.l.b16 %v765
    %v3828 = vunpack.c.h.b16 %v765
    %v3829 = vunpack.c.l.b16 %v766
    %v3830 = vunpack.c.h.b16 %v766
    %v3831 = vunpack.c.l.b16 %v767
    %v3832 = vunpack.c.h.b16 %v767
    %v3833 = vunpack.c.l.b16 %v768
    %v3834 = vunpack.c.h.b16 %v768
    %v3835 = vunpack.c.l.b16 %v769
    %v3836 = vunpack.c.h.b16 %v769
    %v3837 = vunpack.c.l.b16 %v770
    %v3838 = vunpack.c.h.b16 %v770
    %v3839 = vunpack.c.l.b16 %v771
    %v3840 = vunpack.c.h.b16 %v771
    %v3841 = vunpack.c.l.b16 %v772
    %v3842 = vunpack.c.h.b16 %v772
    %v3843 = vunpack.c.l.b16 %v773
    %v3844 = vunpack.c.h.b16 %v773
    %v3845 = vunpack.c.l.b16 %v774
    %v3846 = vunpack.c.h.b16 %v774
    %v3847 = vunpack.c.l.b16 %v775
    %v3848 = vunpack.c.h.b16 %v775
    %v3849 = vunpack.c.l.b16 %v776
    %v3850 = vunpack.c.h.b16 %v776
    %v3851 = vunpack.c.l.b16 %v777
    %v3852 = vunpack.c.h.b16 %v777
    %v3853 = vunpack.c.l.b16 %v778
    %v3854 = vunpack.c.h.b16 %v778
    %v3855 = vunpack.c.l.b16 %v779
    %v3856 = vunpack.c.h.b16 %v779
    %v3857 = vunpack.c.l.b16 %v780
    %v3858 = vunpack.c.h.b16 %v780
    %v3859 = vunpack.c.l.b16 %v781
    %v3860 = vunpack.c.h.b16 %v781
    %v3861 = vunpack.c.l.b16 %v782
    %v3862 = vunpack.c.h.b16 %v782
    %v3863 = vunpack.c.l.b16 %v783
    %v3864 = vunpack.c.h.b16 %v783
    %v3865 = vunpack.c.l.b16 %v784
    %v3866 = vunpack.c.h.b16 %v784
    %v3867 = vunpack.c.l.b16 %v785
    %v3868 = vunpack.c.h.b16 %v785
    %v3869 = vunpack.c.l.b16 %v786
    %v3870 = vunpack.c.h.b16 %v786
    %v3871 = vunpack.c.l.b16 %v787
    %v3872 = vunpack.c.h.b16 %v787
    %v3873 = vunpack.c.l.b16 %v788
    %v3874 = vunpack.c.h.b16 %v788
    %v3875 = vunpack.c.l.b16 %v789
    %v3876 = vunpack.c.h.b16 %v789
    %v3877 = vunpack.c.l.b16 %v790
    %v3878 = vunpack.c.h.b16 %v790
    %v3879 = vunpack.c.l.b16 %v791
    %v3880 = vunpack.c.h.b16 %v791
    %v3881 = vunpack.c.l.b16 %v792
    %v3882 = vunpack.c.h.b16 %v792
    %v3883 = vunpack.c.l.b16 %v793
    %v3884 = vunpack.c.h.b16 %v793
    %v3885 = vunpack.c.l.b16 %v794
    %v3886 = vunpack.c.h.b16 %v794
    %v3887 = vunpack.c.l.b16 %v795
    %v3888 = vunpack.c.h.b16 %v795
    %v3889 = vunpack.c.l.b16 %v796
    %v3890 = vunpack.c.h.b16 %v796
    %v3891 = vunpack.c.l.b16 %v797
    %v3892 = vunpack.c.h.b16 %v797
    %v3893 = vunpack.c.l.b16 %v798
    %v3894 = vunpack.c.h.b16 %v798
    %v3895 = vunpack.c.l.b16 %v799
    %v3896 = vunpack.c.h.b16 %v799
    %v3897 = vunpack.c.l.b16 %v800
    %v3898 = vunpack.c.h.b16 %v800
    %v3899 = vunpack.c.l.b16 %v801
    %v3900 = vunpack.c.h.b16 %v801
    %v3901 = vunpack.c.l.b16 %v802
    %v3902 = vunpack.c.h.b16 %v802
    %v3903 = vunpack.c.l.b16 %v803
    %v3904 = vunpack.c.h.b16 %v803
    %v3905 = vunpack.c.l.b16 %v804
    %v3906 = vunpack.c.h.b16 %v804
    %v3907 = vunpack.c.l.b16 %v805
    %v3908 = vunpack.c.h.b16 %v805
    %v3909 = vunpack.c.l.b16 %v806
    %v3910 = vunpack.c.h.b16 %v806
    %v3911 = vunpack.c.l.b16 %v807
    %v3912 = vunpack.c.h.b16 %v807
    %v3913 = vunpack.c.l.b16 %v808
    %v3914 = vunpack.c.h.b16 %v808
    %v3915 = vunpack.c.l.b16 %v809
    %v3916 = vunpack.c.h.b16 %v809
    %v3917 = vunpack.c.l.b16 %v810
    %v3918 = vunpack.c.h.b16 %v810
    %v3919 = vunpack.c.l.b16 %v811
    %v3920 = vunpack.c.h.b16 %v811
    %v3921 = vunpack.c.l.b16 %v812
    %v3922 = vunpack.c.h.b16 %v812
    %v3923 = vunpack.c.l.b16 %v813
    %v3924 = vunpack.c.h.b16 %v813
    %v3925 = vunpack.c.l.b16 %v814
    %v3926 = vunpack.c.h.b16 %v814
    %v3927 = vunpack.c.l.b16 %v815
    %v3928 = vunpack.c.h.b16 %v815
    %v3929 = vunpack.c.l.b16 %v816
    %v3930 = vunpack.c.h.b16 %v816
    %v3931 = vunpack.c.l.b16 %v817
    %v3932 = vunpack.c.h.b16 %v817
    %v3933 = vunpack.c.l.b16 %v818
    %v3934 = vunpack.c.h.b16 %v818
    %v3935 = vunpack.c.l.b16 %v819
    %v3936 = vunpack.c.h.b16 %v819
    %v3937 = vunpack.c.l.b16 %v820
    %v3938 = vunpack.c.h.b16 %v820
    %v3939 = vunpack.c.l.b16 %v821
    %v3940 = vunpack.c.h.b16 %v821
    %v3941 = vunpack.c.l.b16 %v822
    %v3942 = vunpack.c.h.b16 %v822
    %v3943 = vunpack.c.l.b16 %v823
    %v3944 = vunpack.c.h.b16 %v823
    %v3945 = vunpack.c.l.b16 %v824
    %v3946 = vunpack.c.h.b16 %v824
    %v3947 = vunpack.c.l.b16 %v825
    %v3948 = vunpack.c.h.b16 %v825
    %v3949 = vunpack.c.l.b16 %v826
    %v3950 = vunpack.c.h.b16 %v826
    %v3951 = vunpack.c.l.b16 %v827
    %v3952 = vunpack.c.h.b16 %v827
    %v3953 = vunpack.c.l.b16 %v828
    %v3954 = vunpack.c.h.b16 %v828
    %v3955 = vunpack.c.l.b16 %v829
    %v3956 = vunpack.c.h.b16 %v829
    %v3957 = vunpack.c.l.b16 %v830
    %v3958 = vunpack.c.h.b16 %v830
    %v3959 = vunpack.c.l.b16 %v831
    %v3960 = vunpack.c.h.b16 %v831
    %v3961 = vunpack.c.l.b16 %v832
    %v3962 = vunpack.c.h.b16 %v832
    %v3963 = vunpack.c.l.b16 %v833
    %v3964 = vunpack.c.h.b16 %v833
    %v3965 = vunpack.c.l.b16 %v834
    %v3966 = vunpack.c.h.b16 %v834
    %v3967 = vunpack.c.l.b16 %v835
    %v3968 = vunpack.c.h.b16 %v835
    %v3969 = vunpack.c.l.b16 %v836
    %v3970 = vunpack.c.h.b16 %v836
    %v3971 = vunpack.c.l.b16 %v837
    %v3972 = vunpack.c.h.b16 %v837
    %v3973 = vunpack.c.l.b16 %v838
    %v3974 = vunpack.c.h.b16 %v838
    %v3975 = vunpack.c.l.b16 %v839
    %v3976 = vunpack.c.h.b16 %v839
    %v3977 = vunpack.c.l.b16 %v840
    %v3978 = vunpack.c.h.b16 %v840
    %v3979 = vunpack.c.l.b16 %v841
    %v3980 = vunpack.c.h.b16 %v841
    %v3981 = vunpack.c.l.b16 %v842
    %v3982 = vunpack.c.h.b16 %v842
    %v3983 = vunpack.c.l.b16 %v843
    %v3984 = vunpack.c.h.b16 %v843
    %v3985 = vunpack.c.l.b16 %v844
    %v3986 = vunpack.c.h.b16 %v844
    %v3987 = vunpack.c.l.b16 %v845
    %v3988 = vunpack.c.h.b16 %v845
    %v3989 = vunpack.c.l.b16 %v846
    %v3990 = vunpack.c.h.b16 %v846
    %v3991 = vunpack.c.l.b16 %v847
    %v3992 = vunpack.c.h.b16 %v847
    %v3993 = vunpack.c.l.b16 %v848
    %v3994 = vunpack.c.h.b16 %v848
    %v3995 = vunpack.c.l.b16 %v849
    %v3996 = vunpack.c.h.b16 %v849
    %v3997 = vunpack.c.l.b16 %v850
    %v3998 = vunpack.c.h.b16 %v850
    %v3999 = vunpack.c.l.b16 %v851
    %v4000 = vunpack.c.h.b16 %v851
    %v4001 = vunpack.c.l.b16 %v852
    %v4002 = vunpack.c.h.b16 %v852
    %v4003 = vunpack.c.l.b16 %v853
    %v4004 = vunpack.c.h.b16 %v853
    %v4005 = vunpack.c.l.b16 %v854
    %v4006 = vunpack.c.h.b16 %v854
    %v4007 = vunpack.c.l.b16 %v855
    %v4008 = vunpack.c.h.b16 %v855
    %v4009 = vunpack.c.l.b16 %v856
    %v4010 = vunpack.c.h.b16 %v856
    %v4011 = vunpack.c.l.b16 %v857
    %v4012 = vunpack.c.h.b16 %v857
    %v4013 = vunpack.c.l.b16 %v858
    %v4014 = vunpack.c.h.b16 %v858
    %v4015 = vunpack.c.l.b16 %v859
    %v4016 = vunpack.c.h.b16 %v859
    %v4017 = vunpack.c.l.b16 %v860
    %v4018 = vunpack.c.h.b16 %v860
    %v4019 = vunpack.c.l.b16 %v861
    %v4020 = vunpack.c.h.b16 %v861
    %v4021 = vunpack.c.l.b16 %v862
    %v4022 = vunpack.c.h.b16 %v862
    %v4023 = vunpack.c.l.b16 %v863
    %v4024 = vunpack.c.h.b16 %v863
    %v4025 = vunpack.c.l.b16 %v864
    %v4026 = vunpack.c.h.b16 %v864
    %v4027 = vunpack.c.l.b16 %v865
    %v4028 = vunpack.c.h.b16 %v865
    %v4029 = vunpack.c.l.b16 %v866
    %v4030 = vunpack.c.h.b16 %v866
    %v4031 = vunpack.c.l.b16 %v867
    %v4032 = vunpack.c.h.b16 %v867
    %v4033 = vunpack.c.l.b16 %v868
    %v4034 = vunpack.c.h.b16 %v868
    %v4035 = vunpack.c.l.b16 %v869
    %v4036 = vunpack.c.h.b16 %v869
    %v4037 = vunpack.c.l.b16 %v870
    %v4038 = vunpack.c.h.b16 %v870
    %v4039 = vunpack.c.l.b16 %v871
    %v4040 = vunpack.c.h.b16 %v871
    %v4041 = vunpack.c.l.b16 %v872
    %v4042 = vunpack.c.h.b16 %v872
    %v4043 = vunpack.c.l.b16 %v873
    %v4044 = vunpack.c.h.b16 %v873
    %v4045 = vunpack.c.l.b16 %v874
    %v4046 = vunpack.c.h.b16 %v874
    %v4047 = vunpack.c.l.b16 %v875
    %v4048 = vunpack.c.h.b16 %v875
    %v4049 = vunpack.c.l.b16 %v876
    %v4050 = vunpack.c.h.b16 %v876
    %v4051 = vunpack.c.l.b16 %v877
    %v4052 = vunpack.c.h.b16 %v877
    %v4053 = vunpack.c.l.b16 %v878
    %v4054 = vunpack.c.h.b16 %v878
    %v4055 = vunpack.c.l.b16 %v879
    %v4056 = vunpack.c.h.b16 %v879
    %v4057 = vunpack.c.l.b16 %v880
    %v4058 = vunpack.c.h.b16 %v880
    %v4059 = vunpack.c.l.b16 %v881
    %v4060 = vunpack.c.h.b16 %v881
    %v4061 = vunpack.c.l.b16 %v882
    %v4062 = vunpack.c.h.b16 %v882
    %v4063 = vunpack.c.l.b16 %v883
    %v4064 = vunpack.c.h.b16 %v883
    %v4065 = vunpack.c.l.b16 %v884
    %v4066 = vunpack.c.h.b16 %v884
    %v4067 = vunpack.c.l.b16 %v885
    %v4068 = vunpack.c.h.b16 %v885
    %v4069 = vunpack.c.l.b16 %v886
    %v4070 = vunpack.c.h.b16 %v886
    %v4071 = vunpack.c.l.b16 %v887
    %v4072 = vunpack.c.h.b16 %v887
    %v4073 = vunpack.c.l.b16 %v888
    %v4074 = vunpack.c.h.b16 %v888
    %v4075 = vunpack.c.l.b16 %v889
    %v4076 = vunpack.c.h.b16 %v889
    %v4077 = vunpack.c.l.b16 %v890
    %v4078 = vunpack.c.h.b16 %v890
    %v4079 = vunpack.c.l.b16 %v891
    %v4080 = vunpack.c.h.b16 %v891
    %v4081 = vunpack.c.l.b16 %v892
    %v4082 = vunpack.c.h.b16 %v892
    %v4083 = vunpack.c.l.b16 %v893
    %v4084 = vunpack.c.h.b16 %v893
    %v4085 = vunpack.c.l.b16 %v894
    %v4086 = vunpack.c.h.b16 %v894
    %v4087 = vunpack.c.l.b16 %v895
    %v4088 = vunpack.c.h.b16 %v895
    %v4089 = vunpack.c.l.b16 %v896
    %v4090 = vunpack.c.h.b16 %v896
    %v4091 = vunpack.c.l.b16 %v897
    %v4092 = vunpack.c.h.b16 %v897
    %v4093 = vunpack.c.l.b16 %v898
    %v4094 = vunpack.c.h.b16 %v898
    %v4095 = vunpack.c.l.b16 %v899
    %v4096 = vunpack.c.h.b16 %v899
    %v4097 = vunpack.c.l.b16 %v900
    %v4098 = vunpack.c.h.b16 %v900
    %v4099 = vunpack.c.l.b16 %v901
    %v4100 = vunpack.c.h.b16 %v901
    %v4101 = vunpack.c.l.b16 %v902
    %v4102 = vunpack.c.h.b16 %v902
    %v4103 = vunpack.c.l.b16 %v903
    %v4104 = vunpack.c.h.b16 %v903
    %v4105 = vunpack.c.l.b16 %v904
    %v4106 = vunpack.c.h.b16 %v904
    %v4107 = vunpack.c.l.b16 %v905
    %v4108 = vunpack.c.h.b16 %v905
    %v4109 = vunpack.c.l.b16 %v906
    %v4110 = vunpack.c.h.b16 %v906
    %v4111 = vunpack.c.l.b16 %v907
    %v4112 = vunpack.c.h.b16 %v907
    %v4113 = vunpack.c.l.b16 %v908
    %v4114 = vunpack.c.h.b16 %v908
    %v4115 = vunpack.c.l.b16 %v909
    %v4116 = vunpack.c.h.b16 %v909
    %v4117 = vunpack.c.l.b16 %v910
    %v4118 = vunpack.c.h.b16 %v910
    %v4119 = vunpack.c.l.b16 %v911
    %v4120 = vunpack.c.h.b16 %v911
    %v4121 = vunpack.c.l.b16 %v912
    %v4122 = vunpack.c.h.b16 %v912
    %v4123 = vunpack.c.l.b16 %v913
    %v4124 = vunpack.c.h.b16 %v913
    %v4125 = vunpack.c.l.b16 %v914
    %v4126 = vunpack.c.h.b16 %v914
    %v4127 = vunpack.c.l.b16 %v915
    %v4128 = vunpack.c.h.b16 %v915
    %v4129 = vunpack.c.l.b16 %v916
    %v4130 = vunpack.c.h.b16 %v916
    %v4131 = vunpack.c.l.b16 %v917
    %v4132 = vunpack.c.h.b16 %v917
    %v4133 = vunpack.c.l.b16 %v918
    %v4134 = vunpack.c.h.b16 %v918
    %v4135 = vunpack.c.l.b16 %v919
    %v4136 = vunpack.c.h.b16 %v919
    %v4137 = vunpack.c.l.b16 %v920
    %v4138 = vunpack.c.h.b16 %v920
    %v4139 = vunpack.c.l.b16 %v921
    %v4140 = vunpack.c.h.b16 %v921
    %v4141 = vunpack.c.l.b16 %v922
    %v4142 = vunpack.c.h.b16 %v922
    %v4143 = vunpack.c.l.b16 %v923
    %v4144 = vunpack.c.h.b16 %v923
    %v4145 = vunpack.c.l.b16 %v924
    %v4146 = vunpack.c.h.b16 %v924
    %v4147 = vunpack.c.l.b16 %v925
    %v4148 = vunpack.c.h.b16 %v925
    %v4149 = vunpack.c.l.b16 %v926
    %v4150 = vunpack.c.h.b16 %v926
    %v4151 = vunpack.c.l.b16 %v927
    %v4152 = vunpack.c.h.b16 %v927
    %v4153 = vunpack.c.l.b16 %v928
    %v4154 = vunpack.c.h.b16 %v928
    %v4155 = vunpack.c.l.b16 %v929
    %v4156 = vunpack.c.h.b16 %v929
    %v4157 = vunpack.c.l.b16 %v930
    %v4158 = vunpack.c.h.b16 %v930
    %v4159 = vunpack.c.l.b16 %v931
    %v4160 = vunpack.c.h.b16 %v931
    %v4161 = vunpack.c.l.b16 %v932
    %v4162 = vunpack.c.h.b16 %v932
    %v4163 = vunpack.c.l.b16 %v933
    %v4164 = vunpack.c.h.b16 %v933
    %v4165 = vunpack.c.l.b16 %v934
    %v4166 = vunpack.c.h.b16 %v934
    %v4167 = vunpack.c.l.b16 %v935
    %v4168 = vunpack.c.h.b16 %v935
    %v4169 = vunpack.c.l.b16 %v936
    %v4170 = vunpack.c.h.b16 %v936
    %v4171 = vunpack.c.l.b16 %v937
    %v4172 = vunpack.c.h.b16 %v937
    %v4173 = vunpack.c.l.b16 %v938
    %v4174 = vunpack.c.h.b16 %v938
    %v4175 = vunpack.c.l.b16 %v939
    %v4176 = vunpack.c.h.b16 %v939
    %v4177 = vunpack.c.l.b16 %v940
    %v4178 = vunpack.c.h.b16 %v940
    %v4179 = vunpack.c.l.b16 %v941
    %v4180 = vunpack.c.h.b16 %v941
    %v4181 = vunpack.c.l.b16 %v942
    %v4182 = vunpack.c.h.b16 %v942
    %v4183 = vunpack.c.l.b16 %v943
    %v4184 = vunpack.c.h.b16 %v943
    %v4185 = vunpack.c.l.b16 %v944
    %v4186 = vunpack.c.h.b16 %v944
    %v4187 = vunpack.c.l.b16 %v945
    %v4188 = vunpack.c.h.b16 %v945
    %v4189 = vunpack.c.l.b16 %v946
    %v4190 = vunpack.c.h.b16 %v946
    %v4191 = vunpack.c.l.b16 %v947
    %v4192 = vunpack.c.h.b16 %v947
    %v4193 = vunpack.c.l.b16 %v948
    %v4194 = vunpack.c.h.b16 %v948
    %v4195 = vunpack.c.l.b16 %v949
    %v4196 = vunpack.c.h.b16 %v949
    %v4197 = vunpack.c.l.b16 %v950
    %v4198 = vunpack.c.h.b16 %v950
    %v4199 = vunpack.c.l.b16 %v951
    %v4200 = vunpack.c.h.b16 %v951
    %v4201 = vunpack.c.l.b16 %v952
    %v4202 = vunpack.c.h.b16 %v952
    %v4203 = vunpack.c.l.b16 %v953
    %v4204 = vunpack.c.h.b16 %v953
    %v4205 = vunpack.c.l.b16 %v954
    %v4206 = vunpack.c.h.b16 %v954
    %v4207 = vunpack.c.l.b16 %v955
    %v4208 = vunpack.c.h.b16 %v955
    %v4209 = vunpack.c.l.b16 %v956
    %v4210 = vunpack.c.h.b16 %v956
    %v4211 = vunpack.c.l.b16 %v957
    %v4212 = vunpack.c.h.b16 %v957
    %v4213 = vunpack.c.l.b16 %v958
    %v4214 = vunpack.c.h.b16 %v958
    %v4215 = vunpack.c.l.b16 %v959
    %v4216 = vunpack.c.h.b16 %v959
    %v4217 = vunpack.c.l.b16 %v960
    %v4218 = vunpack.c.h.b16 %v960
    %v4219 = vunpack.c.l.b16 %v961
    %v4220 = vunpack.c.h.b16 %v961
    %v4221 = vunpack.c.l.b16 %v962
    %v4222 = vunpack.c.h.b16 %v962
    %v4223 = vunpack.c.l.b16 %v963
    %v4224 = vunpack.c.h.b16 %v963
    %v4225 = vunpack.c.l.b16 %v964
    %v4226 = vunpack.c.h.b16 %v964
    %v4227 = vunpack.c.l.b16 %v965
    %v4228 = vunpack.c.h.b16 %v965
    %v4229 = vunpack.c.l.b16 %v966
    %v4230 = vunpack.c.h.b16 %v966
    %v4231 = vunpack.c.l.b16 %v967
    %v4232 = vunpack.c.h.b16 %v967
    %v4233 = vunpack.c.l.b16 %v968
    %v4234 = vunpack.c.h.b16 %v968
    %v4235 = vunpack.c.l.b16 %v969
    %v4236 = vunpack.c.h.b16 %v969
    %v4237 = vunpack.c.l.b16 %v970
    %v4238 = vunpack.c.h.b16 %v970
    %v4239 = vunpack.c.l.b16 %v971
    %v4240 = vunpack.c.h.b16 %v971
    %v4241 = vunpack.c.l.b16 %v972
    %v4242 = vunpack.c.h.b16 %v972
    %v4243 = vunpack.c.l.b16 %v973
    %v4244 = vunpack.c.h.b16 %v973
    %v4245 = vunpack.c.l.b16 %v974
    %v4246 = vunpack.c.h.b16 %v974
    %v4247 = vunpack.c.l.b16 %v975
    %v4248 = vunpack.c.h.b16 %v975
    %v4249 = vunpack.c.l.b16 %v976
    %v4250 = vunpack.c.h.b16 %v976
    %v4251 = vunpack.c.l.b16 %v977
    %v4252 = vunpack.c.h.b16 %v977
    %v4253 = vunpack.c.l.b16 %v978
    %v4254 = vunpack.c.h.b16 %v978
    %v4255 = vunpack.c.l.b16 %v979
    %v4256 = vunpack.c.h.b16 %v979
    %v4257 = vunpack.c.l.b16 %v980
    %v4258 = vunpack.c.h.b16 %v980
    %v4259 = vunpack.c.l.b16 %v981
    %v4260 = vunpack.c.h.b16 %v981
    %v4261 = vunpack.c.l.b16 %v982
    %v4262 = vunpack.c.h.b16 %v982
    %v4263 = vunpack.c.l.b16 %v983
    %v4264 = vunpack.c.h.b16 %v983
    %v4265 = vunpack.c.l.b16 %v984
    %v4266 = vunpack.c.h.b16 %v984
    %v4267 = vunpack.c.l.b16 %v985
    %v4268 = vunpack.c.h.b16 %v985
    %v4269 = vunpack.c.l.b16 %v986
    %v4270 = vunpack.c.h.b16 %v986
    %v4271 = vunpack.c.l.b16 %v987
    %v4272 = vunpack.c.h.b16 %v987
    %v4273 = vunpack.c.l.b16 %v988
    %v4274 = vunpack.c.h.b16 %v988
    %v4275 = vunpack.c.l.b16 %v989
    %v4276 = vunpack.c.h.b16 %v989
    %v4277 = vunpack.c.l.b16 %v990
    %v4278 = vunpack.c.h.b16 %v990
    %v4279 = vunpack.c.l.b16 %v991
    %v4280 = vunpack.c.h.b16 %v991
    %v4281 = vunpack.c.l.b16 %v992
    %v4282 = vunpack.c.h.b16 %v992
    %v4283 = vunpack.c.l.b16 %v993
    %v4284 = vunpack.c.h.b16 %v993
    %v4285 = vunpack.c.l.b16 %v994
    %v4286 = vunpack.c.h.b16 %v994
    %v4287 = vunpack.c.l.b16 %v995
    %v4288 = vunpack.c.h.b16 %v995
    %v4289 = vunpack.c.l.b16 %v996
    %v4290 = vunpack.c.h.b16 %v996
    %v4291 = vunpack.c.l.b16 %v997
    %v4292 = vunpack.c.h.b16 %v997
    %v4293 = vunpack.c.l.b16 %v998
    %v4294 = vunpack.c.h.b16 %v998
    %v4295 = vunpack.c.l.b16 %v999
    %v4296 = vunpack.c.h.b16 %v999
    %v4297 = vunpack.c.l.b16 %v1000
    %v4298 = vunpack.c.h.b16 %v1000
    %v4299 = vunpack.c.l.b16 %v1001
    %v4300 = vunpack.c.h.b16 %v1001
    %v4301 = vunpack.c.l.b16 %v1002
    %v4302 = vunpack.c.h.b16 %v1002
    %v4303 = vunpack.c.l.b16 %v1003
    %v4304 = vunpack.c.h.b16 %v1003
    %v4305 = vunpack.c.l.b16 %v1004
    %v4306 = vunpack.c.h.b16 %v1004
    %v4307 = vunpack.c.l.b16 %v1005
    %v4308 = vunpack.c.h.b16 %v1005
    %v4309 = vunpack.c.l.b16 %v1006
    %v4310 = vunpack.c.h.b16 %v1006
    %v4311 = vunpack.c.l.b16 %v1007
    %v4312 = vunpack.c.h.b16 %v1007
    %v4313 = vunpack.c.l.b16 %v1008
    %v4314 = vunpack.c.h.b16 %v1008
    %v4315 = vunpack.c.l.b16 %v1009
    %v4316 = vunpack.c.h.b16 %v1009
    %v4317 = vunpack.c.l.b16 %v1010
    %v4318 = vunpack.c.h.b16 %v1010
    %v4319 = vunpack.c.l.b16 %v1011
    %v4320 = vunpack.c.h.b16 %v1011
    %v4321 = vunpack.c.l.b16 %v1012
    %v4322 = vunpack.c.h.b16 %v1012
    %v4323 = vunpack.c.l.b16 %v1013
    %v4324 = vunpack.c.h.b16 %v1013
    %v4325 = vunpack.c.l.b16 %v1014
    %v4326 = vunpack.c.h.b16 %v1014
    %v4327 = vunpack.c.l.b16 %v1015
    %v4328 = vunpack.c.h.b16 %v1015
    %v4329 = vunpack.c.l.b16 %v1016
    %v4330 = vunpack.c.h.b16 %v1016
    %v4331 = vunpack.c.l.b16 %v1017
    %v4332 = vunpack.c.h.b16 %v1017
    %v4333 = vunpack.c.l.b16 %v1018
    %v4334 = vunpack.c.h.b16 %v1018
    %v4335 = vunpack.c.l.b16 %v1019
    %v4336 = vunpack.c.h.b16 %v1019
    %v4337 = vunpack.c.l.b16 %v1020
    %v4338 = vunpack.c.h.b16 %v1020
    %v4339 = vunpack.c.l.b16 %v1021
    %v4340 = vunpack.c.h.b16 %v1021
    %v4341 = vunpack.c.l.b16 %v1022
    %v4342 = vunpack.c.h.b16 %v1022
    %v4343 = vunpack.c.l.b16 %v1023
    %v4344 = vunpack.c.h.b16 %v1023
    %v4345 = vunpack.c.l.b16 %v1024
    %v4346 = vunpack.c.h.b16 %v1024
    %v4347 = vunpack.c.l.b16 %v1025
    %v4348 = vunpack.c.h.b16 %v1025
    %v4349 = vunpack.c.l.b16 %v1026
    %v4350 = vunpack.c.h.b16 %v1026
    %v4351 = vunpack.c.l.b16 %v1027
    %v4352 = vunpack.c.h.b16 %v1027
    %v4353 = vunpack.c.l.b16 %v1028
    %v4354 = vunpack.c.h.b16 %v1028
    %v4355 = vunpack.c.l.b16 %v1029
    %v4356 = vunpack.c.h.b16 %v1029
    %v4357 = vunpack.c.l.b16 %v1030
    %v4358 = vunpack.c.h.b16 %v1030
    %v4359 = vunpack.c.l.b16 %v1031
    %v4360 = vunpack.c.h.b16 %v1031
    %v4361 = vunpack.c.l.b16 %v1032
    %v4362 = vunpack.c.h.b16 %v1032
    %v4363 = vunpack.c.l.b16 %v1033
    %v4364 = vunpack.c.h.b16 %v1033
    %v4365 = vunpack.c.l.b16 %v1034
    %v4366 = vunpack.c.h.b16 %v1034
    %v4367 = vunpack.c.l.b16 %v1035
    %v4368 = vunpack.c.h.b16 %v1035
    %v4369 = vunpack.c.l.b16 %v1036
    %v4370 = vunpack.c.h.b16 %v1036
    %v4371 = vunpack.c.l.b16 %v1037
    %v4372 = vunpack.c.h.b16 %v1037
    %v4373 = vunpack.c.l.b16 %v1038
    %v4374 = vunpack.c.h.b16 %v1038
    %v4375 = vunpack.c.l.b16 %v1039
    %v4376 = vunpack.c.h.b16 %v1039
    %v4377 = vunpack.c.l.b16 %v1040
    %v4378 = vunpack.c.h.b16 %v1040
    %v4379 = vunpack.c.l.b16 %v1041
    %v4380 = vunpack.c.h.b16 %v1041
    %v4381 = vunpack.c.l.b16 %v1042
    %v4382 = vunpack.c.h.b16 %v1042
    %v4383 = vunpack.c.l.b16 %v1043
    %v4384 = vunpack.c.h.b16 %v1043
    %v4385 = vunpack.c.l.b16 %v1044
    %v4386 = vunpack.c.h.b16 %v1044
    %v4387 = vunpack.c.l.b16 %v1045
    %v4388 = vunpack.c.h.b16 %v1045
    %v4389 = vunpack.c.l.b16 %v1046
    %v4390 = vunpack.c.h.b16 %v1046
    %v4391 = vunpack.c.l.b16 %v1047
    %v4392 = vunpack.c.h.b16 %v1047
    %v4393 = vunpack.c.l.b16 %v1048
    %v4394 = vunpack.c.h.b16 %v1048
    %v4395 = vunpack.c.l.b16 %v1049
    %v4396 = vunpack.c.h.b16 %v1049
    %v4397 = vunpack.c.l.b16 %v1050
    %v4398 = vunpack.c.h.b16 %v1050
    %v4399 = vunpack.c.l.b16 %v1051
    %v4400 = vunpack.c.h.b16 %v1051
    %v4401 = vunpack.c.l.b16 %v1052
    %v4402 = vunpack.c.h.b16 %v1052
    %v4403 = vunpack.c.l.b16 %v1053
    %v4404 = vunpack.c.h.b16 %v1053
    %v4405 = vunpack.c.l.b16 %v1054
    %v4406 = vunpack.c.h.b16 %v1054
    %v4407 = vunpack.c.l.b16 %v1055
    %v4408 = vunpack.c.h.b16 %v1055
    %v4409 = vunpack.c.l.b16 %v1056
    %v4410 = vunpack.c.h.b16 %v1056
    %v4411 = vunpack.c.l.b16 %v1057
    %v4412 = vunpack.c.h.b16 %v1057
    %v4413 = vunpack.c.l.b16 %v1058
    %v4414 = vunpack.c.h.b16 %v1058
    %v4415 = vunpack.c.l.b16 %v1059
    %v4416 = vunpack.c.h.b16 %v1059
    %v4417 = vunpack.c.l.b16 %v1060
    %v4418 = vunpack.c.h.b16 %v1060
    %v4419 = vunpack.c.l.b16 %v1061
    %v4420 = vunpack.c.h.b16 %v1061
    %v4421 = vunpack.c.l.b16 %v1062
    %v4422 = vunpack.c.h.b16 %v1062
    %v4423 = vunpack.c.l.b16 %v1063
    %v4424 = vunpack.c.h.b16 %v1063
    %v4425 = vunpack.c.l.b16 %v1064
    %v4426 = vunpack.c.h.b16 %v1064
    %v4427 = vunpack.c.l.b16 %v1065
    %v4428 = vunpack.c.h.b16 %v1065
    %v4429 = vunpack.c.l.b16 %v1066
    %v4430 = vunpack.c.h.b16 %v1066
    %v4431 = vunpack.c.l.b16 %v1067
    %v4432 = vunpack.c.h.b16 %v1067
    %v4433 = vunpack.c.l.b16 %v1068
    %v4434 = vunpack.c.h.b16 %v1068
    %v4435 = vunpack.c.l.b16 %v1069
    %v4436 = vunpack.c.h.b16 %v1069
    %v4437 = vunpack.c.l.b16 %v1070
    %v4438 = vunpack.c.h.b16 %v1070
    %v4439 = vunpack.c.l.b16 %v1071
    %v4440 = vunpack.c.h.b16 %v1071
    %v4441 = vunpack.c.l.b16 %v1072
    %v4442 = vunpack.c.h.b16 %v1072
    %v4443 = vunpack.c.l.b16 %v1073
    %v4444 = vunpack.c.h.b16 %v1073
    %v4445 = vunpack.c.l.b16 %v1074
    %v4446 = vunpack.c.h.b16 %v1074
    %v4447 = vunpack.c.l.b16 %v1075
    %v4448 = vunpack.c.h.b16 %v1075
    %v4449 = vunpack.c.l.b16 %v1076
    %v4450 = vunpack.c.h.b16 %v1076
    %v4451 = vunpack.c.l.b16 %v1077
    %v4452 = vunpack.c.h.b16 %v1077
    %v4453 = vunpack.c.l.b16 %v1078
    %v4454 = vunpack.c.h.b16 %v1078
    %v4455 = vunpack.c.l.b16 %v1079
    %v4456 = vunpack.c.h.b16 %v1079
    %v4457 = vunpack.c.l.b16 %v1080
    %v4458 = vunpack.c.h.b16 %v1080
    %v4459 = vunpack.c.l.b16 %v1081
    %v4460 = vunpack.c.h.b16 %v1081
    %v4461 = vunpack.c.l.b16 %v1082
    %v4462 = vunpack.c.h.b16 %v1082
    %v4463 = vunpack.c.l.b16 %v1083
    %v4464 = vunpack.c.h.b16 %v1083
    %v4465 = vunpack.c.l.b16 %v1084
    %v4466 = vunpack.c.h.b16 %v1084
    %v4467 = vunpack.c.l.b16 %v1085
    %v4468 = vunpack.c.h.b16 %v1085
    %v4469 = vunpack.c.l.b16 %v1086
    %v4470 = vunpack.c.h.b16 %v1086
    %v4471 = vunpack.c.l.b16 %v1087
    %v4472 = vunpack.c.h.b16 %v1087
    %v4473 = vunpack.c.l.b16 %v1088
    %v4474 = vunpack.c.h.b16 %v1088
    %v4475 = vunpack.c.l.b16 %v1089
    %v4476 = vunpack.c.h.b16 %v1089
    %v4477 = vunpack.c.l.b16 %v1090
    %v4478 = vunpack.c.h.b16 %v1090
    %v4479 = vunpack.c.l.b16 %v1091
    %v4480 = vunpack.c.h.b16 %v1091
    %v4481 = vunpack.c.l.b16 %v1092
    %v4482 = vunpack.c.h.b16 %v1092
    %v4483 = vunpack.c.l.b16 %v1093
    %v4484 = vunpack.c.h.b16 %v1093
    %v4485 = vunpack.c.l.b16 %v1094
    %v4486 = vunpack.c.h.b16 %v1094
    %v4487 = vunpack.c.l.b16 %v1095
    %v4488 = vunpack.c.h.b16 %v1095
    %v4489 = vunpack.c.l.b16 %v1096
    %v4490 = vunpack.c.h.b16 %v1096
    %v4491 = vunpack.c.l.b16 %v1097
    %v4492 = vunpack.c.h.b16 %v1097
    %v4493 = vunpack.c.l.b16 %v1098
    %v4494 = vunpack.c.h.b16 %v1098
    %v4495 = vunpack.c.l.b16 %v1099
    %v4496 = vunpack.c.h.b16 %v1099
    %v4497 = vunpack.c.l.b16 %v1100
    %v4498 = vunpack.c.h.b16 %v1100
    %v4499 = vunpack.c.l.b16 %v1101
    %v4500 = vunpack.c.h.b16 %v1101
    %v4501 = vunpack.c.l.b16 %v1102
    %v4502 = vunpack.c.h.b16 %v1102
    %v4503 = vunpack.c.l.b16 %v1103
    %v4504 = vunpack.c.h.b16 %v1103
    %v4505 = vunpack.c.l.b16 %v1104
    %v4506 = vunpack.c.h.b16 %v1104
    %v4507 = vunpack.c.l.b16 %v1105
    %v4508 = vunpack.c.h.b16 %v1105
    %v4509 = vunpack.c.l.b16 %v1106
    %v4510 = vunpack.c.h.b16 %v1106
    %v4511 = vunpack.c.l.b16 %v1107
    %v4512 = vunpack.c.h.b16 %v1107
    %v4513 = vunpack.c.l.b16 %v1108
    %v4514 = vunpack.c.h.b16 %v1108
    %v4515 = vunpack.c.l.b16 %v1109
    %v4516 = vunpack.c.h.b16 %v1109
    %v4517 = vunpack.c.l.b16 %v1110
    %v4518 = vunpack.c.h.b16 %v1110
    %v4519 = vunpack.c.l.b16 %v1111
    %v4520 = vunpack.c.h.b16 %v1111
    %v4521 = vunpack.c.l.b16 %v1112
    %v4522 = vunpack.c.h.b16 %v1112
    %v4523 = vunpack.c.l.b16 %v1113
    %v4524 = vunpack.c.h.b16 %v1113
    %v4525 = vunpack.c.l.b16 %v1114
    %v4526 = vunpack.c.h.b16 %v1114
    %v4527 = vunpack.c.l.b16 %v1115
    %v4528 = vunpack.c.h.b16 %v1115
    %v4529 = vunpack.c.l.b16 %v1116
    %v4530 = vunpack.c.h.b16 %v1116
    %v4531 = vunpack.c.l.b16 %v1117
    %v4532 = vunpack.c.h.b16 %v1117
    %v4533 = vunpack.c.l.b16 %v1118
    %v4534 = vunpack.c.h.b16 %v1118
    %v4535 = vunpack.c.l.b16 %v1119
    %v4536 = vunpack.c.h.b16 %v1119
    %v4537 = vunpack.c.l.b16 %v1120
    %v4538 = vunpack.c.h.b16 %v1120
    %v4539 = vunpack.c.l.b16 %v1121
    %v4540 = vunpack.c.h.b16 %v1121
    %v4541 = vunpack.c.l.b16 %v1122
    %v4542 = vunpack.c.h.b16 %v1122
    %v4543 = vunpack.c.l.b16 %v1123
    %v4544 = vunpack.c.h.b16 %v1123
    %v4545 = vunpack.c.l.b16 %v1124
    %v4546 = vunpack.c.h.b16 %v1124
    %v4547 = vunpack.c.l.b16 %v1125
    %v4548 = vunpack.c.h.b16 %v1125
    %v4549 = vunpack.c.l.b16 %v1126
    %v4550 = vunpack.c.h.b16 %v1126
    %v4551 = vunpack.c.l.b16 %v1127
    %v4552 = vunpack.c.h.b16 %v1127
    %v4553 = vunpack.c.l.b16 %v1128
    %v4554 = vunpack.c.h.b16 %v1128
    %v4555 = vunpack.c.l.b16 %v1129
    %v4556 = vunpack.c.h.b16 %v1129
    %v4557 = vunpack.c.l.b16 %v1130
    %v4558 = vunpack.c.h.b16 %v1130
    %v4559 = vunpack.c.l.b16 %v1131
    %v4560 = vunpack.c.h.b16 %v1131
    %v4561 = vunpack.c.l.b16 %v1132
    %v4562 = vunpack.c.h.b16 %v1132
    %v4563 = vunpack.c.l.b16 %v1133
    %v4564 = vunpack.c.h.b16 %v1133
    %v4565 = vunpack.c.l.b16 %v1134
    %v4566 = vunpack.c.h.b16 %v1134
    %v4567 = vunpack.c.l.b16 %v1135
    %v4568 = vunpack.c.h.b16 %v1135
    %v4569 = vunpack.c.l.b16 %v1136
    %v4570 = vunpack.c.h.b16 %v1136
    %v4571 = vunpack.c.l.b16 %v1137
    %v4572 = vunpack.c.h.b16 %v1137
    %v4573 = vunpack.c.l.b16 %v1138
    %v4574 = vunpack.c.h.b16 %v1138
    %v4575 = vunpack.c.l.b16 %v1139
    %v4576 = vunpack.c.h.b16 %v1139
    %v4577 = vunpack.c.l.b16 %v1140
    %v4578 = vunpack.c.h.b16 %v1140
    %v4579 = vunpack.c.l.b16 %v1141
    %v4580 = vunpack.c.h.b16 %v1141
    %v4581 = vunpack.c.l.b16 %v1142
    %v4582 = vunpack.c.h.b16 %v1142
    %v4583 = vunpack.c.l.b16 %v1143
    %v4584 = vunpack.c.h.b16 %v1143
    %v4585 = vunpack.c.l.b16 %v1144
    %v4586 = vunpack.c.h.b16 %v1144
    %v4587 = vunpack.c.l.b16 %v1145
    %v4588 = vunpack.c.h.b16 %v1145
    %v4589 = vunpack.c.l.b16 %v1146
    %v4590 = vunpack.c.h.b16 %v1146
    %v4591 = vunpack.c.l.b16 %v1147
    %v4592 = vunpack.c.h.b16 %v1147
    %v4593 = vunpack.c.l.b16 %v1148
    %v4594 = vunpack.c.h.b16 %v1148
    %v4595 = vunpack.c.l.b16 %v1149
    %v4596 = vunpack.c.h.b16 %v1149
    %v4597 = vunpack.c.l.b16 %v1150
    %v4598 = vunpack.c.h.b16 %v1150
    %v4599 = vunpack.c.l.b16 %v1151
    %v4600 = vunpack.c.h.b16 %v1151
    %v4601 = vunpack.c.l.b16 %v1152
    %v4602 = vunpack.c.h.b16 %v1152
    %v4603 = vunpack.c.l.b16 %v1153
    %v4604 = vunpack.c.h.b16 %v1153
    %v4605 = vunpack.c.l.b16 %v1154
    %v4606 = vunpack.c.h.b16 %v1154
    %v4607 = vunpack.c.l.b16 %v1155
    %v4608 = vunpack.c.h.b16 %v1155
    %v4609 = vunpack.c.l.b16 %v1156
    %v4610 = vunpack.c.h.b16 %v1156
    %v4611 = vunpack.c.l.b16 %v1157
    %v4612 = vunpack.c.h.b16 %v1157
    %v4613 = vunpack.c.l.b16 %v1158
    %v4614 = vunpack.c.h.b16 %v1158
    %v4615 = vunpack.c.l.b16 %v1159
    %v4616 = vunpack.c.h.b16 %v1159
    %v4617 = vunpack.c.l.b16 %v1160
    %v4618 = vunpack.c.h.b16 %v1160
    %v4619 = vunpack.c.l.b16 %v1161
    %v4620 = vunpack.c.h.b16 %v1161
    %v4621 = vunpack.c.l.b16 %v1162
    %v4622 = vunpack.c.h.b16 %v1162
    %v4623 = vunpack.c.l.b16 %v1163
    %v4624 = vunpack.c.h.b16 %v1163
    %v4625 = vunpack.c.l.b16 %v1164
    %v4626 = vunpack.c.h.b16 %v1164
    %v4627 = vunpack.c.l.b16 %v1165
    %v4628 = vunpack.c.h.b16 %v1165
    %v4629 = vunpack.c.l.b16 %v1166
    %v4630 = vunpack.c.h.b16 %v1166
    %v4631 = vunpack.c.l.b16 %v1167
    %v4632 = vunpack.c.h.b16 %v1167
    %v4633 = vunpack.c.l.b16 %v1168
    %v4634 = vunpack.c.h.b16 %v1168
    %v4635 = vunpack.c.l.b16 %v1169
    %v4636 = vunpack.c.h.b16 %v1169
    %v4637 = vunpack.c.l.b16 %v1170
    %v4638 = vunpack.c.h.b16 %v1170
    %v4639 = vunpack.c.l.b16 %v1171
    %v4640 = vunpack.c.h.b16 %v1171
    %v4641 = vunpack.c.l.b16 %v1172
    %v4642 = vunpack.c.h.b16 %v1172
    %v4643 = vunpack.c.l.b16 %v1173
    %v4644 = vunpack.c.h.b16 %v1173
    %v4645 = vunpack.c.l.b16 %v1174
    %v4646 = vunpack.c.h.b16 %v1174
    %v4647 = vunpack.c.l.b16 %v1175
    %v4648 = vunpack.c.h.b16 %v1175
    %v4649 = vunpack.c.l.b16 %v1176
    %v4650 = vunpack.c.h.b16 %v1176
    %v4651 = vunpack.c.l.b16 %v1177
    %v4652 = vunpack.c.h.b16 %v1177
    %v4653 = vunpack.c.l.b16 %v1178
    %v4654 = vunpack.c.h.b16 %v1178
    %v4655 = vunpack.c.l.b16 %v1179
    %v4656 = vunpack.c.h.b16 %v1179
    %v4657 = vunpack.c.l.b16 %v1180
    %v4658 = vunpack.c.h.b16 %v1180
    %v4659 = vunpack.c.l.b16 %v1181
    %v4660 = vunpack.c.h.b16 %v1181
    %v4661 = vunpack.c.l.b16 %v1182
    %v4662 = vunpack.c.h.b16 %v1182
    %v4663 = vunpack.c.l.b16 %v1183
    %v4664 = vunpack.c.h.b16 %v1183
    %v4665 = vunpack.c.l.b16 %v1184
    %v4666 = vunpack.c.h.b16 %v1184
    %v4667 = vunpack.c.l.b16 %v1185
    %v4668 = vunpack.c.h.b16 %v1185
    %v4669 = vunpack.c.l.b16 %v1186
    %v4670 = vunpack.c.h.b16 %v1186
    %v4671 = vunpack.c.l.b16 %v1187
    %v4672 = vunpack.c.h.b16 %v1187
    %v4673 = vunpack.c.l.b16 %v1188
    %v4674 = vunpack.c.h.b16 %v1188
    %v4675 = vunpack.c.l.b16 %v1189
    %v4676 = vunpack.c.h.b16 %v1189
    %v4677 = vunpack.c.l.b16 %v1190
    %v4678 = vunpack.c.h.b16 %v1190
    %v4679 = vunpack.c.l.b16 %v1191
    %v4680 = vunpack.c.h.b16 %v1191
    %v4681 = vunpack.c.l.b16 %v1192
    %v4682 = vunpack.c.h.b16 %v1192
    %v4683 = vunpack.c.l.b16 %v1193
    %v4684 = vunpack.c.h.b16 %v1193
    %v4685 = vunpack.c.l.b16 %v1194
    %v4686 = vunpack.c.h.b16 %v1194
    %v4687 = vunpack.c.l.b16 %v1195
    %v4688 = vunpack.c.h.b16 %v1195
    %v4689 = vunpack.c.l.b16 %v1196
    %v4690 = vunpack.c.h.b16 %v1196
    %v4691 = vunpack.c.l.b16 %v1197
    %v4692 = vunpack.c.h.b16 %v1197
    %v4693 = vunpack.c.l.b16 %v1198
    %v4694 = vunpack.c.h.b16 %v1198
    %v4695 = vunpack.c.l.b16 %v1199
    %v4696 = vunpack.c.h.b16 %v1199
    %v4697 = vunpack.c.l.b16 %v1200
    %v4698 = vunpack.c.h.b16 %v1200
    %v4699 = vunpack.c.l.b16 %v1201
    %v4700 = vunpack.c.h.b16 %v1201
    %v4701 = vunpack.c.l.b16 %v1202
    %v4702 = vunpack.c.h.b16 %v1202
    %v4703 = vunpack.c.l.b16 %v1203
    %v4704 = vunpack.c.h.b16 %v1203
    %v4705 = vunpack.c.l.b16 %v1204
    %v4706 = vunpack.c.h.b16 %v1204
    %v4707 = vunpack.c.l.b16 %v1205
    %v4708 = vunpack.c.h.b16 %v1205
    %v4709 = vunpack.c.l.b16 %v1206
    %v4710 = vunpack.c.h.b16 %v1206
    %v4711 = vunpack.c.l.b16 %v1207
    %v4712 = vunpack.c.h.b16 %v1207
    %v4713 = vunpack.c.l.b16 %v1208
    %v4714 = vunpack.c.h.b16 %v1208
    %v4715 = vunpack.c.l.b16 %v1209
    %v4716 = vunpack.c.h.b16 %v1209
    %v4717 = vunpack.c.l.b16 %v1210
    %v4718 = vunpack.c.h.b16 %v1210
    %v4719 = vunpack.c.l.b16 %v1211
    %v4720 = vunpack.c.h.b16 %v1211
    %v4721 = vunpack.c.l.b16 %v1212
    %v4722 = vunpack.c.h.b16 %v1212
    %v4723 = vunpack.c.l.b16 %v1213
    %v4724 = vunpack.c.h.b16 %v1213
    %v4725 = vunpack.c.l.b16 %v1214
    %v4726 = vunpack.c.h.b16 %v1214
    %v4727 = vunpack.c.l.b16 %v1215
    %v4728 = vunpack.c.h.b16 %v1215
    %v4729 = vunpack.c.l.b16 %v1216
    %v4730 = vunpack.c.h.b16 %v1216
    %v4731 = vunpack.c.l.b16 %v1217
    %v4732 = vunpack.c.h.b16 %v1217
    %v4733 = vunpack.c.l.b16 %v1218
    %v4734 = vunpack.c.h.b16 %v1218
    %v4735 = vunpack.c.l.b16 %v1219
    %v4736 = vunpack.c.h.b16 %v1219
    %v4737 = vunpack.c.l.b16 %v1220
    %v4738 = vunpack.c.h.b16 %v1220
    %v4739 = vunpack.c.l.b16 %v1221
    %v4740 = vunpack.c.h.b16 %v1221
    %v4741 = vunpack.c.l.b16 %v1222
    %v4742 = vunpack.c.h.b16 %v1222
    %v4743 = vunpack.c.l.b16 %v1223
    %v4744 = vunpack.c.h.b16 %v1223
    %v4745 = vunpack.c.l.b16 %v1224
    %v4746 = vunpack.c.h.b16 %v1224
    %v4747 = vunpack.c.l.b16 %v1225
    %v4748 = vunpack.c.h.b16 %v1225
    %v4749 = vunpack.c.l.b16 %v1226
    %v4750 = vunpack.c.h.b16 %v1226
    %v4751 = vunpack.c.l.b16 %v1227
    %v4752 = vunpack.c.h.b16 %v1227
    %v4753 = vunpack.c.l.b16 %v1228
    %v4754 = vunpack.c.h.b16 %v1228
    %v4755 = vunpack.c.l.b16 %v1229
    %v4756 = vunpack.c.h.b16 %v1229
    %v4757 = vunpack.c.l.b16 %v1230
    %v4758 = vunpack.c.h.b16 %v1230
    %v4759 = vunpack.c.l.b16 %v1231
    %v4760 = vunpack.c.h.b16 %v1231
    %v4761 = vunpack.c.l.b16 %v1232
    %v4762 = vunpack.c.h.b16 %v1232
    %v4763 = vunpack.c.l.b16 %v1233
    %v4764 = vunpack.c.h.b16 %v1233
    %v4765 = vunpack.c.l.b16 %v1234
    %v4766 = vunpack.c.h.b16 %v1234
    %v4767 = vunpack.c.l.b16 %v1235
    %v4768 = vunpack.c.h.b16 %v1235
    %v4769 = vunpack.c.l.b16 %v1236
    %v4770 = vunpack.c.h.b16 %v1236
    %v4771 = vunpack.c.l.b16 %v1237
    %v4772 = vunpack.c.h.b16 %v1237
    %v4773 = vunpack.c.l.b16 %v1238
    %v4774 = vunpack.c.h.b16 %v1238
    %v4775 = vunpack.c.l.b16 %v1239
    %v4776 = vunpack.c.h.b16 %v1239
    %v4777 = vunpack.c.l.b16 %v1240
    %v4778 = vunpack.c.h.b16 %v1240
    %v4779 = vunpack.c.l.b16 %v1241
    %v4780 = vunpack.c.h.b16 %v1241
    %v4781 = vunpack.c.l.b16 %v1242
    %v4782 = vunpack.c.h.b16 %v1242
    %v4783 = vunpack.c.l.b16 %v1243
    %v4784 = vunpack.c.h.b16 %v1243
    %v4785 = vunpack.c.l.b16 %v1244
    %v4786 = vunpack.c.h.b16 %v1244
    %v4787 = vunpack.c.l.b16 %v1245
    %v4788 = vunpack.c.h.b16 %v1245
    %v4789 = vunpack.c.l.b16 %v1246
    %v4790 = vunpack.c.h.b16 %v1246
    %v4791 = vunpack.c.l.b16 %v1247
    %v4792 = vunpack.c.h.b16 %v1247
    %v4793 = vunpack.c.l.b16 %v1248
    %v4794 = vunpack.c.h.b16 %v1248
    %v4795 = vunpack.c.l.b16 %v1249
    %v4796 = vunpack.c.h.b16 %v1249
    %v4797 = vunpack.c.l.b16 %v1250
    %v4798 = vunpack.c.h.b16 %v1250
    %v4799 = vunpack.c.l.b16 %v1251
    %v4800 = vunpack.c.h.b16 %v1251
    %v4801 = vunpack.c.l.b16 %v1252
    %v4802 = vunpack.c.h.b16 %v1252
    %v4803 = vunpack.c.l.b16 %v1253
    %v4804 = vunpack.c.h.b16 %v1253
    %v4805 = vunpack.c.l.b16 %v1254
    %v4806 = vunpack.c.h.b16 %v1254
    %v4807 = vunpack.c.l.b16 %v1255
    %v4808 = vunpack.c.h.b16 %v1255
    %v4809 = vunpack.c.l.b16 %v1256
    %v4810 = vunpack.c.h.b16 %v1256
    %v4811 = vunpack.c.l.b16 %v1257
    %v4812 = vunpack.c.h.b16 %v1257
    %v4813 = vunpack.c.l.b16 %v1258
    %v4814 = vunpack.c.h.b16 %v1258
    %v4815 = vunpack.c.l.b16 %v1259
    %v4816 = vunpack.c.h.b16 %v1259
    %v4817 = vunpack.c.l.b16 %v1260
    %v4818 = vunpack.c.h.b16 %v1260
    %v4819 = vunpack.c.l.b16 %v1261
    %v4820 = vunpack.c.h.b16 %v1261
    %v4821 = vunpack.c.l.b16 %v1262
    %v4822 = vunpack.c.h.b16 %v1262
    %v4823 = vunpack.c.l.b16 %v1263
    %v4824 = vunpack.c.h.b16 %v1263
    %v4825 = vpack.c.b16 %v2529, %v2521
    %v4826 = vpack.c.b16 %v2530, %v2522
    %v4827 = vpack.c.b16 %v2531, %v2523
    %v4828 = vpack.c.b16 %v2532, %v2524
    %v4829 = vpack.c.b16 %v2533, %v2525
    %v4830 = vpack.c.b16 %v2534, %v2526
    %v4831 = vpack.c.b16 %v2535, %v2527
    %v4832 = vpack.c.b16 %v2536, %v2528
    %v4833 = vpack.c.b16 %v2545, %v2537
    %v4834 = vpack.c.b16 %v2546, %v2538
    %v4835 = vpack.c.b16 %v2547, %v2539
    %v4836 = vpack.c.b16 %v2548, %v2540
    %v4837 = vpack.c.b16 %v2549, %v2541
    %v4838 = vpack.c.b16 %v2550, %v2542
    %v4839 = vpack.c.b16 %v2551, %v2543
    %v4840 = vpack.c.b16 %v2552, %v2544
    %v4841 = vpack.c.b16 %v2561, %v2553
    %v4842 = vpack.c.b16 %v2562, %v2554
    %v4843 = vpack.c.b16 %v2563, %v2555
    %v4844 = vpack.c.b16 %v2564, %v2556
    %v4845 = vpack.c.b16 %v2565, %v2557
    %v4846 = vpack.c.b16 %v2566, %v2558
    %v4847 = vpack.c.b16 %v2567, %v2559
    %v4848 = vpack.c.b16 %v2568, %v2560
    %v4849 = vpack.c.b16 %v2577, %v2569
    %v4850 = vpack.c.b16 %v2578, %v2570
    %v4851 = vpack.c.b16 %v2579, %v2571
    %v4852 = vpack.c.b16 %v2580, %v2572
    %v4853 = vpack.c.b16 %v2581, %v2573
    %v4854 = vpack.c.b16 %v2582, %v2574
    %v4855 = vpack.c.b16 %v2583, %v2575
    %v4856 = vpack.c.b16 %v2584, %v2576
    %v4857 = vpack.c.b16 %v2593, %v2585
    %v4858 = vpack.c.b16 %v2594, %v2586
    %v4859 = vpack.c.b16 %v2595, %v2587
    %v4860 = vpack.c.b16 %v2596, %v2588
    %v4861 = vpack.c.b16 %v2597, %v2589
    %v4862 = vpack.c.b16 %v2598, %v2590
    %v4863 = vpack.c.b16 %v2599, %v2591
    %v4864 = vpack.c.b16 %v2600, %v2592
    %v4865 = vpack.c.b16 %v2609, %v2601
    %v4866 = vpack.c.b16 %v2610, %v2602
    %v4867 = vpack.c.b16 %v2611, %v2603
    %v4868 = vpack.c.b16 %v2612, %v2604
    %v4869 = vpack.c.b16 %v2613, %v2605
    %v4870 = vpack.c.b16 %v2614, %v2606
    %v4871 = vpack.c.b16 %v2615, %v2607
    %v4872 = vpack.c.b16 %v2616, %v2608
    %v4873 = vpack.c.b16 %v2625, %v2617
    %v4874 = vpack.c.b16 %v2626, %v2618
    %v4875 = vpack.c.b16 %v2627, %v2619
    %v4876 = vpack.c.b16 %v2628, %v2620
    %v4877 = vpack.c.b16 %v2629, %v2621
    %v4878 = vpack.c.b16 %v2630, %v2622
    %v4879 = vpack.c.b16 %v2631, %v2623
    %v4880 = vpack.c.b16 %v2632, %v2624
    %v4881 = vpack.c.b16 %v2641, %v2633
    %v4882 = vpack.c.b16 %v2642, %v2634
    %v4883 = vpack.c.b16 %v2643, %v2635
    %v4884 = vpack.c.b16 %v2644, %v2636
    %v4885 = vpack.c.b16 %v2645, %v2637
    %v4886 = vpack.c.b16 %v2646, %v2638
    %v4887 = vpack.c.b16 %v2647, %v2639
    %v4888 = vpack.c.b16 %v2648, %v2640
    %v4889 = vpack.c.b16 %v2657, %v2649
    %v4890 = vpack.c.b16 %v2658, %v2650
    %v4891 = vpack.c.b16 %v2659, %v2651
    %v4892 = vpack.c.b16 %v2660, %v2652
    %v4893 = vpack.c.b16 %v2661, %v2653
    %v4894 = vpack.c.b16 %v2662, %v2654
    %v4895 = vpack.c.b16 %v2663, %v2655
    %v4896 = vpack.c.b16 %v2664, %v2656
    %v4897 = vpack.c.b16 %v2673, %v2665
    %v4898 = vpack.c.b16 %v2674, %v2666
    %v4899 = vpack.c.b16 %v2675, %v2667
    %v4900 = vpack.c.b16 %v2676, %v2668
    %v4901 = vpack.c.b16 %v2677, %v2669
    %v4902 = vpack.c.b16 %v2678, %v2670
    %v4903 = vpack.c.b16 %v2679, %v2671
    %v4904 = vpack.c.b16 %v2680, %v2672
    %v4905 = vpack.c.b16 %v2689, %v2681
    %v4906 = vpack.c.b16 %v2690, %v2682
    %v4907 = vpack.c.b16 %v2691, %v2683
    %v4908 = vpack.c.b16 %v2692, %v2684
    %v4909 = vpack.c.b16 %v2693, %v2685
    %v4910 = vpack.c.b16 %v2694, %v2686
    %v4911 = vpack.c.b16 %v2695, %v2687
    %v4912 = vpack.c.b16 %v2696, %v2688
    %v4913 = vpack.c.b16 %v2705, %v2697
    %v4914 = vpack.c.b16 %v2706, %v2698
    %v4915 = vpack.c.b16 %v2707, %v2699
    %v4916 = vpack.c.b16 %v2708, %v2700
    %v4917 = vpack.c.b16 %v2709, %v2701
    %v4918 = vpack.c.b16 %v2710, %v2702
    %v4919 = vpack.c.b16 %v2711, %v2703
    %v4920 = vpack.c.b16 %v2712, %v2704
    %v4921 = vpack.c.b16 %v2721, %v2713
    %v4922 = vpack.c.b16 %v2722, %v2714
    %v4923 = vpack.c.b16 %v2723, %v2715
    %v4924 = vpack.c.b16 %v2724, %v2716
    %v4925 = vpack.c.b16 %v2725, %v2717
    %v4926 = vpack.c.b16 %v2726, %v2718
    %v4927 = vpack.c.b16 %v2727, %v2719
    %v4928 = vpack.c.b16 %v2728, %v2720
    %v4929 = vpack.c.b16 %v2737, %v2729
    %v4930 = vpack.c.b16 %v2738, %v2730
    %v4931 = vpack.c.b16 %v2739, %v2731
    %v4932 = vpack.c.b16 %v2740, %v2732
    %v4933 = vpack.c.b16 %v2741, %v2733
    %v4934 = vpack.c.b16 %v2742, %v2734
    %v4935 = vpack.c.b16 %v2743, %v2735
    %v4936 = vpack.c.b16 %v2744, %v2736
    %v4937 = vpack.c.b16 %v2753, %v2745
    %v4938 = vpack.c.b16 %v2754, %v2746
    %v4939 = vpack.c.b16 %v2755, %v2747
    %v4940 = vpack.c.b16 %v2756, %v2748
    %v4941 = vpack.c.b16 %v2757, %v2749
    %v4942 = vpack.c.b16 %v2758, %v2750
    %v4943 = vpack.c.b16 %v2759, %v2751
    %v4944 = vpack.c.b16 %v2760, %v2752
    %v4945 = vpack.c.b16 %v2769, %v2761
    %v4946 = vpack.c.b16 %v2770, %v2762
    %v4947 = vpack.c.b16 %v2771, %v2763
    %v4948 = vpack.c.b16 %v2772, %v2764
    %v4949 = vpack.c.b16 %v2773, %v2765
    %v4950 = vpack.c.b16 %v2774, %v2766
    %v4951 = vpack.c.b16 %v2775, %v2767
    %v4952 = vpack.c.b16 %v2776, %v2768
    %v4953 = vpack.c.b16 %v2785, %v2777
    %v4954 = vpack.c.b16 %v2786, %v2778
    %v4955 = vpack.c.b16 %v2787, %v2779
    %v4956 = vpack.c.b16 %v2788, %v2780
    %v4957 = vpack.c.b16 %v2789, %v2781
    %v4958 = vpack.c.b16 %v2790, %v2782
    %v4959 = vpack.c.b16 %v2791, %v2783
    %v4960 = vpack.c.b16 %v2792, %v2784
    %v4961 = vpack.c.b16 %v2801, %v2793
    %v4962 = vpack.c.b16 %v2802, %v2794
    %v4963 = vpack.c.b16 %v2803, %v2795
    %v4964 = vpack.c.b16 %v2804, %v2796
    %v4965 = vpack.c.b16 %v2805, %v2797
    %v4966 = vpack.c.b16 %v2806, %v2798
    %v4967 = vpack.c.b16 %v2807, %v2799
    %v4968 = vpack.c.b16 %v2808, %v2800
    %v4969 = vpack.c.b16 %v2817, %v2809
    %v4970 = vpack.c.b16 %v2818, %v2810
    %v4971 = vpack.c.b16 %v2819, %v2811
    %v4972 = vpack.c.b16 %v2820, %v2812
    %v4973 = vpack.c.b16 %v2821, %v2813
    %v4974 = vpack.c.b16 %v2822, %v2814
    %v4975 = vpack.c.b16 %v2823, %v2815
    %v4976 = vpack.c.b16 %v2824, %v2816
    %v4977 = vpack.c.b16 %v2833, %v2825
    %v4978 = vpack.c.b16 %v2834, %v2826
    %v4979 = vpack.c.b16 %v2835, %v2827
    %v4980 = vpack.c.b16 %v2836, %v2828
    %v4981 = vpack.c.b16 %v2837, %v2829
    %v4982 = vpack.c.b16 %v2838, %v2830
    %v4983 = vpack.c.b16 %v2839, %v2831
    %v4984 = vpack.c.b16 %v2840, %v2832
    %v4985 = vpack.c.b16 %v2849, %v2841
    %v4986 = vpack.c.b16 %v2850, %v2842
    %v4987 = vpack.c.b16 %v2851, %v2843
    %v4988 = vpack.c.b16 %v2852, %v2844
    %v4989 = vpack.c.b16 %v2853, %v2845
    %v4990 = vpack.c.b16 %v2854, %v2846
    %v4991 = vpack.c.b16 %v2855, %v2847
    %v4992 = vpack.c.b16 %v2856, %v2848
    %v4993 = vpack.c.b16 %v2865, %v2857
    %v4994 = vpack.c.b16 %v2866, %v2858
    %v4995 = vpack.c.b16 %v2867, %v2859
    %v4996 = vpack.c.b16 %v2868, %v2860
    %v4997 = vpack.c.b16 %v2869, %v2861
    %v4998 = vpack.c.b16 %v2870, %v2862
    %v4999 = vpack.c.b16 %v2871, %v2863
    %v5000 = vpack.c.b16 %v2872, %v2864
    %v5001 = vpack.c.b16 %v2881, %v2873
    %v5002 = vpack.c.b16 %v2882, %v2874
    %v5003 = vpack.c.b16 %v2883, %v2875
    %v5004 = vpack.c.b16 %v2884, %v2876
    %v5005 = vpack.c.b16 %v2885, %v2877
    %v5006 = vpack.c.b16 %v2886, %v2878
    %v5007 = vpack.c.b16 %v2887, %v2879
    %v5008 = vpack.c.b16 %v2888, %v2880
    %v5009 = vpack.c.b16 %v2897, %v2889
    %v5010 = vpack.c.b16 %v2898, %v2890
    %v5011 = vpack.c.b16 %v2899, %v2891
    %v5012 = vpack.c.b16 %v2900, %v2892
    %v5013 = vpack.c.b16 %v2901, %v2893
    %v5014 = vpack.c.b16 %v2902, %v2894
    %v5015 = vpack.c.b16 %v2903, %v2895
    %v5016 = vpack.c.b16 %v2904, %v2896
    %v5017 = vpack.c.b16 %v2913, %v2905
    %v5018 = vpack.c.b16 %v2914, %v2906
    %v5019 = vpack.c.b16 %v2915, %v2907
    %v5020 = vpack.c.b16 %v2916, %v2908
    %v5021 = vpack.c.b16 %v2917, %v2909
    %v5022 = vpack.c.b16 %v2918, %v2910
    %v5023 = vpack.c.b16 %v2919, %v2911
    %v5024 = vpack.c.b16 %v2920, %v2912
    %v5025 = vpack.c.b16 %v2929, %v2921
    %v5026 = vpack.c.b16 %v2930, %v2922
    %v5027 = vpack.c.b16 %v2931, %v2923
    %v5028 = vpack.c.b16 %v2932, %v2924
    %v5029 = vpack.c.b16 %v2933, %v2925
    %v5030 = vpack.c.b16 %v2934, %v2926
    %v5031 = vpack.c.b16 %v2935, %v2927
    %v5032 = vpack.c.b16 %v2936, %v2928
    %v5033 = vpack.c.b16 %v2945, %v2937
    %v5034 = vpack.c.b16 %v2946, %v2938
    %v5035 = vpack.c.b16 %v2947, %v2939
    %v5036 = vpack.c.b16 %v2948, %v2940
    %v5037 = vpack.c.b16 %v2949, %v2941
    %v5038 = vpack.c.b16 %v2950, %v2942
    %v5039 = vpack.c.b16 %v2951, %v2943
    %v5040 = vpack.c.b16 %v2952, %v2944
    %v5041 = vpack.c.b16 %v2961, %v2953
    %v5042 = vpack.c.b16 %v2962, %v2954
    %v5043 = vpack.c.b16 %v2963, %v2955
    %v5044 = vpack.c.b16 %v2964, %v2956
    %v5045 = vpack.c.b16 %v2965, %v2957
    %v5046 = vpack.c.b16 %v2966, %v2958
    %v5047 = vpack.c.b16 %v2967, %v2959
    %v5048 = vpack.c.b16 %v2968, %v2960
    %v5049 = vpack.c.b16 %v2977, %v2969
    %v5050 = vpack.c.b16 %v2978, %v2970
    %v5051 = vpack.c.b16 %v2979, %v2971
    %v5052 = vpack.c.b16 %v2980, %v2972
    %v5053 = vpack.c.b16 %v2981, %v2973
    %v5054 = vpack.c.b16 %v2982, %v2974
    %v5055 = vpack.c.b16 %v2983, %v2975
    %v5056 = vpack.c.b16 %v2984, %v2976
    %v5057 = vpack.c.b16 %v2993, %v2985
    %v5058 = vpack.c.b16 %v2994, %v2986
    %v5059 = vpack.c.b16 %v2995, %v2987
    %v5060 = vpack.c.b16 %v2996, %v2988
    %v5061 = vpack.c.b16 %v2997, %v2989
    %v5062 = vpack.c.b16 %v2998, %v2990
    %v5063 = vpack.c.b16 %v2999, %v2991
    %v5064 = vpack.c.b16 %v3000, %v2992
    %v5065 = vpack.c.b16 %v3009, %v3001
    %v5066 = vpack.c.b16 %v3010, %v3002
    %v5067 = vpack.c.b16 %v3011, %v3003
    %v5068 = vpack.c.b16 %v3012, %v3004
    %v5069 = vpack.c.b16 %v3013, %v3005
    %v5070 = vpack.c.b16 %v3014, %v3006
    %v5071 = vpack.c.b16 %v3015, %v3007
    %v5072 = vpack.c.b16 %v3016, %v3008
    %v5073 = vpack.c.b16 %v3025, %v3017
    %v5074 = vpack.c.b16 %v3026, %v3018
    %v5075 = vpack.c.b16 %v3027, %v3019
    %v5076 = vpack.c.b16 %v3028, %v3020
    %v5077 = vpack.c.b16 %v3029, %v3021
    %v5078 = vpack.c.b16 %v3030, %v3022
    %v5079 = vpack.c.b16 %v3031, %v3023
    %v5080 = vpack.c.b16 %v3032, %v3024
    %v5081 = vpack.c.b16 %v3041, %v3033
    %v5082 = vpack.c.b16 %v3042, %v3034
    %v5083 = vpack.c.b16 %v3043, %v3035
    %v5084 = vpack.c.b16 %v3044, %v3036
    %v5085 = vpack.c.b16 %v3045, %v3037
    %v5086 = vpack.c.b16 %v3046, %v3038
    %v5087 = vpack.c.b16 %v3047, %v3039
    %v5088 = vpack.c.b16 %v3048, %v3040
    %v5089 = vpack.c.b16 %v3057, %v3049
    %v5090 = vpack.c.b16 %v3058, %v3050
    %v5091 = vpack.c.b16 %v3059, %v3051
    %v5092 = vpack.c.b16 %v3060, %v3052
    %v5093 = vpack.c.b16 %v3061, %v3053
    %v5094 = vpack.c.b16 %v3062, %v3054
    %v5095 = vpack.c.b16 %v3063, %v3055
    %v5096 = vpack.c.b16 %v3064, %v3056
    %v5097 = vpack.c.b16 %v3073, %v3065
    %v5098 = vpack.c.b16 %v3074, %v3066
    %v5099 = vpack.c.b16 %v3075, %v3067
    %v5100 = vpack.c.b16 %v3076, %v3068
    %v5101 = vpack.c.b16 %v3077, %v3069
    %v5102 = vpack.c.b16 %v3078, %v3070
    %v5103 = vpack.c.b16 %v3079, %v3071
    %v5104 = vpack.c.b16 %v3080, %v3072
    %v5105 = vpack.c.b16 %v3089, %v3081
    %v5106 = vpack.c.b16 %v3090, %v3082
    %v5107 = vpack.c.b16 %v3091, %v3083
    %v5108 = vpack.c.b16 %v3092, %v3084
    %v5109 = vpack.c.b16 %v3093, %v3085
    %v5110 = vpack.c.b16 %v3094, %v3086
    %v5111 = vpack.c.b16 %v3095, %v3087
    %v5112 = vpack.c.b16 %v3096, %v3088
    %v5113 = vpack.c.b16 %v3105, %v3097
    %v5114 = vpack.c.b16 %v3106, %v3098
    %v5115 = vpack.c.b16 %v3107, %v3099
    %v5116 = vpack.c.b16 %v3108, %v3100
    %v5117 = vpack.c.b16 %v3109, %v3101
    %v5118 = vpack.c.b16 %v3110, %v3102
    %v5119 = vpack.c.b16 %v3111, %v3103
    %v5120 = vpack.c.b16 %v3112, %v3104
    %v5121 = vpack.c.b16 %v3121, %v3113
    %v5122 = vpack.c.b16 %v3122, %v3114
    %v5123 = vpack.c.b16 %v3123, %v3115
    %v5124 = vpack.c.b16 %v3124, %v3116
    %v5125 = vpack.c.b16 %v3125, %v3117
    %v5126 = vpack.c.b16 %v3126, %v3118
    %v5127 = vpack.c.b16 %v3127, %v3119
    %v5128 = vpack.c.b16 %v3128, %v3120
    %v5129 = vpack.c.b16 %v3137, %v3129
    %v5130 = vpack.c.b16 %v3138, %v3130
    %v5131 = vpack.c.b16 %v3139, %v3131
    %v5132 = vpack.c.b16 %v3140, %v3132
    %v5133 = vpack.c.b16 %v3141, %v3133
    %v5134 = vpack.c.b16 %v3142, %v3134
    %v5135 = vpack.c.b16 %v3143, %v3135
    %v5136 = vpack.c.b16 %v3144, %v3136
    %v5137 = vpack.c.b16 %v3153, %v3145
    %v5138 = vpack.c.b16 %v3154, %v3146
    %v5139 = vpack.c.b16 %v3155, %v3147
    %v5140 = vpack.c.b16 %v3156, %v3148
    %v5141 = vpack.c.b16 %v3157, %v3149
    %v5142 = vpack.c.b16 %v3158, %v3150
    %v5143 = vpack.c.b16 %v3159, %v3151
    %v5144 = vpack.c.b16 %v3160, %v3152
    %v5145 = vpack.c.b16 %v3169, %v3161
    %v5146 = vpack.c.b16 %v3170, %v3162
    %v5147 = vpack.c.b16 %v3171, %v3163
    %v5148 = vpack.c.b16 %v3172, %v3164
    %v5149 = vpack.c.b16 %v3173, %v3165
    %v5150 = vpack.c.b16 %v3174, %v3166
    %v5151 = vpack.c.b16 %v3175, %v3167
    %v5152 = vpack.c.b16 %v3176, %v3168
    %v5153 = vpack.c.b16 %v3185, %v3177
    %v5154 = vpack.c.b16 %v3186, %v3178
    %v5155 = vpack.c.b16 %v3187, %v3179
    %v5156 = vpack.c.b16 %v3188, %v3180
    %v5157 = vpack.c.b16 %v3189, %v3181
    %v5158 = vpack.c.b16 %v3190, %v3182
    %v5159 = vpack.c.b16 %v3191, %v3183
    %v5160 = vpack.c.b16 %v3192, %v3184
    %v5161 = vpack.c.b16 %v3201, %v3193
    %v5162 = vpack.c.b16 %v3202, %v3194
    %v5163 = vpack.c.b16 %v3203, %v3195
    %v5164 = vpack.c.b16 %v3204, %v3196
    %v5165 = vpack.c.b16 %v3205, %v3197
    %v5166 = vpack.c.b16 %v3206, %v3198
    %v5167 = vpack.c.b16 %v3207, %v3199
    %v5168 = vpack.c.b16 %v3208, %v3200
    %v5169 = vpack.c.b16 %v3217, %v3209
    %v5170 = vpack.c.b16 %v3218, %v3210
    %v5171 = vpack.c.b16 %v3219, %v3211
    %v5172 = vpack.c.b16 %v3220, %v3212
    %v5173 = vpack.c.b16 %v3221, %v3213
    %v5174 = vpack.c.b16 %v3222, %v3214
    %v5175 = vpack.c.b16 %v3223, %v3215
    %v5176 = vpack.c.b16 %v3224, %v3216
    %v5177 = vpack.c.b16 %v3233, %v3225
    %v5178 = vpack.c.b16 %v3234, %v3226
    %v5179 = vpack.c.b16 %v3235, %v3227
    %v5180 = vpack.c.b16 %v3236, %v3228
    %v5181 = vpack.c.b16 %v3237, %v3229
    %v5182 = vpack.c.b16 %v3238, %v3230
    %v5183 = vpack.c.b16 %v3239, %v3231
    %v5184 = vpack.c.b16 %v3240, %v3232
    %v5185 = vpack.c.b16 %v3249, %v3241
    %v5186 = vpack.c.b16 %v3250, %v3242
    %v5187 = vpack.c.b16 %v3251, %v3243
    %v5188 = vpack.c.b16 %v3252, %v3244
    %v5189 = vpack.c.b16 %v3253, %v3245
    %v5190 = vpack.c.b16 %v3254, %v3246
    %v5191 = vpack.c.b16 %v3255, %v3247
    %v5192 = vpack.c.b16 %v3256, %v3248
    %v5193 = vpack.c.b16 %v3265, %v3257
    %v5194 = vpack.c.b16 %v3266, %v3258
    %v5195 = vpack.c.b16 %v3267, %v3259
    %v5196 = vpack.c.b16 %v3268, %v3260
    %v5197 = vpack.c.b16 %v3269, %v3261
    %v5198 = vpack.c.b16 %v3270, %v3262
    %v5199 = vpack.c.b16 %v3271, %v3263
    %v5200 = vpack.c.b16 %v3272, %v3264
    %v5201 = vpack.c.b16 %v3281, %v3273
    %v5202 = vpack.c.b16 %v3282, %v3274
    %v5203 = vpack.c.b16 %v3283, %v3275
    %v5204 = vpack.c.b16 %v3284, %v3276
    %v5205 = vpack.c.b16 %v3285, %v3277
    %v5206 = vpack.c.b16 %v3286, %v3278
    %v5207 = vpack.c.b16 %v3287, %v3279
    %v5208 = vpack.c.b16 %v3288, %v3280
    %v5209 = vpack.c.b16 %v3297, %v3289
    %v5210 = vpack.c.b16 %v3298, %v3290
    %v5211 = vpack.c.b16 %v3299, %v3291
    %v5212 = vpack.c.b16 %v3300, %v3292
    %v5213 = vpack.c.b16 %v3301, %v3293
    %v5214 = vpack.c.b16 %v3302, %v3294
    %v5215 = vpack.c.b16 %v3303, %v3295
    %v5216 = vpack.c.b16 %v3304, %v3296
    %v5217 = vpack.c.b16 %v3313, %v3305
    %v5218 = vpack.c.b16 %v3314, %v3306
    %v5219 = vpack.c.b16 %v3315, %v3307
    %v5220 = vpack.c.b16 %v3316, %v3308
    %v5221 = vpack.c.b16 %v3317, %v3309
    %v5222 = vpack.c.b16 %v3318, %v3310
    %v5223 = vpack.c.b16 %v3319, %v3311
    %v5224 = vpack.c.b16 %v3320, %v3312
    %v5225 = vpack.c.b16 %v3329, %v3321
    %v5226 = vpack.c.b16 %v3330, %v3322
    %v5227 = vpack.c.b16 %v3331, %v3323
    %v5228 = vpack.c.b16 %v3332, %v3324
    %v5229 = vpack.c.b16 %v3333, %v3325
    %v5230 = vpack.c.b16 %v3334, %v3326
    %v5231 = vpack.c.b16 %v3335, %v3327
    %v5232 = vpack.c.b16 %v3336, %v3328
    %v5233 = vpack.c.b16 %v3345, %v3337
    %v5234 = vpack.c.b16 %v3346, %v3338
    %v5235 = vpack.c.b16 %v3347, %v3339
    %v5236 = vpack.c.b16 %v3348, %v3340
    %v5237 = vpack.c.b16 %v3349, %v3341
    %v5238 = vpack.c.b16 %v3350, %v3342
    %v5239 = vpack.c.b16 %v3351, %v3343
    %v5240 = vpack.c.b16 %v3352, %v3344
    %v5241 = vpack.c.b16 %v3361, %v3353
    %v5242 = vpack.c.b16 %v3362, %v3354
    %v5243 = vpack.c.b16 %v3363, %v3355
    %v5244 = vpack.c.b16 %v3364, %v3356
    %v5245 = vpack.c.b16 %v3365, %v3357
    %v5246 = vpack.c.b16 %v3366, %v3358
    %v5247 = vpack.c.b16 %v3367, %v3359
    %v5248 = vpack.c.b16 %v3368, %v3360
    %v5249 = vpack.c.b16 %v3377, %v3369
    %v5250 = vpack.c.b16 %v3378, %v3370
    %v5251 = vpack.c.b16 %v3379, %v3371
    %v5252 = vpack.c.b16 %v3380, %v3372
    %v5253 = vpack.c.b16 %v3381, %v3373
    %v5254 = vpack.c.b16 %v3382, %v3374
    %v5255 = vpack.c.b16 %v3383, %v3375
    %v5256 = vpack.c.b16 %v3384, %v3376
    %v5257 = vpack.c.b16 %v3393, %v3385
    %v5258 = vpack.c.b16 %v3394, %v3386
    %v5259 = vpack.c.b16 %v3395, %v3387
    %v5260 = vpack.c.b16 %v3396, %v3388
    %v5261 = vpack.c.b16 %v3397, %v3389
    %v5262 = vpack.c.b16 %v3398, %v3390
    %v5263 = vpack.c.b16 %v3399, %v3391
    %v5264 = vpack.c.b16 %v3400, %v3392
    %v5265 = vpack.c.b16 %v3409, %v3401
    %v5266 = vpack.c.b16 %v3410, %v3402
    %v5267 = vpack.c.b16 %v3411, %v3403
    %v5268 = vpack.c.b16 %v3412, %v3404
    %v5269 = vpack.c.b16 %v3413, %v3405
    %v5270 = vpack.c.b16 %v3414, %v3406
    %v5271 = vpack.c.b16 %v3415, %v3407
    %v5272 = vpack.c.b16 %v3416, %v3408
    %v5273 = vpack.c.b16 %v3425, %v3417
    %v5274 = vpack.c.b16 %v3426, %v3418
    %v5275 = vpack.c.b16 %v3427, %v3419
    %v5276 = vpack.c.b16 %v3428, %v3420
    %v5277 = vpack.c.b16 %v3429, %v3421
    %v5278 = vpack.c.b16 %v3430, %v3422
    %v5279 = vpack.c.b16 %v3431, %v3423
    %v5280 = vpack.c.b16 %v3432, %v3424
    %v5281 = vpack.c.b16 %v3441, %v3433
    %v5282 = vpack.c.b16 %v3442, %v3434
    %v5283 = vpack.c.b16 %v3443, %v3435
    %v5284 = vpack.c.b16 %v3444, %v3436
    %v5285 = vpack.c.b16 %v3445, %v3437
    %v5286 = vpack.c.b16 %v3446, %v3438
    %v5287 = vpack.c.b16 %v3447, %v3439
    %v5288 = vpack.c.b16 %v3448, %v3440
    %v5289 = vpack.c.b16 %v3457, %v3449
    %v5290 = vpack.c.b16 %v3458, %v3450
    %v5291 = vpack.c.b16 %v3459, %v3451
    %v5292 = vpack.c.b16 %v3460, %v3452
    %v5293 = vpack.c.b16 %v3461, %v3453
    %v5294 = vpack.c.b16 %v3462, %v3454
    %v5295 = vpack.c.b16 %v3463, %v3455
    %v5296 = vpack.c.b16 %v3464, %v3456
    %v5297 = vpack.c.b16 %v3473, %v3465
    %v5298 = vpack.c.b16 %v3474, %v3466
    %v5299 = vpack.c.b16 %v3475, %v3467
    %v5300 = vpack.c.b16 %v3476, %v3468
    %v5301 = vpack.c.b16 %v3477, %v3469
    %v5302 = vpack.c.b16 %v3478, %v3470
    %v5303 = vpack.c.b16 %v3479, %v3471
    %v5304 = vpack.c.b16 %v3480, %v3472
    %v5305 = vpack.c.b16 %v3489, %v3481
    %v5306 = vpack.c.b16 %v3490, %v3482
    %v5307 = vpack.c.b16 %v3491, %v3483
    %v5308 = vpack.c.b16 %v3492, %v3484
    %v5309 = vpack.c.b16 %v3493, %v3485
    %v5310 = vpack.c.b16 %v3494, %v3486
    %v5311 = vpack.c.b16 %v3495, %v3487
    %v5312 = vpack.c.b16 %v3496, %v3488
    %v5313 = vpack.c.b16 %v3505, %v3497
    %v5314 = vpack.c.b16 %v3506, %v3498
    %v5315 = vpack.c.b16 %v3507, %v3499
    %v5316 = vpack.c.b16 %v3508, %v3500
    %v5317 = vpack.c.b16 %v3509, %v3501
    %v5318 = vpack.c.b16 %v3510, %v3502
    %v5319 = vpack.c.b16 %v3511, %v3503
    %v5320 = vpack.c.b16 %v3512, %v3504
    %v5321 = vpack.c.b16 %v3521, %v3513
    %v5322 = vpack.c.b16 %v3522, %v3514
    %v5323 = vpack.c.b16 %v3523, %v3515
    %v5324 = vpack.c.b16 %v3524, %v3516
    %v5325 = vpack.c.b16 %v3525, %v3517
    %v5326 = vpack.c.b16 %v3526, %v3518
    %v5327 = vpack.c.b16 %v3527, %v3519
    %v5328 = vpack.c.b16 %v3528, %v3520
    %v5329 = vpack.c.b16 %v3537, %v3529
    %v5330 = vpack.c.b16 %v3538, %v3530
    %v5331 = vpack.c.b16 %v3539, %v3531
    %v5332 = vpack.c.b16 %v3540, %v3532
    %v5333 = vpack.c.b16 %v3541, %v3533
    %v5334 = vpack.c.b16 %v3542, %v3534
    %v5335 = vpack.c.b16 %v3543, %v3535
    %v5336 = vpack.c.b16 %v3544, %v3536
    %v5337 = vpack.c.b16 %v3553, %v3545
    %v5338 = vpack.c.b16 %v3554, %v3546
    %v5339 = vpack.c.b16 %v3555, %v3547
    %v5340 = vpack.c.b16 %v3556, %v3548
    %v5341 = vpack.c.b16 %v3557, %v3549
    %v5342 = vpack.c.b16 %v3558, %v3550
    %v5343 = vpack.c.b16 %v3559, %v3551
    %v5344 = vpack.c.b16 %v3560, %v3552
    %v5345 = vpack.c.b16 %v3569, %v3561
    %v5346 = vpack.c.b16 %v3570, %v3562
    %v5347 = vpack.c.b16 %v3571, %v3563
    %v5348 = vpack.c.b16 %v3572, %v3564
    %v5349 = vpack.c.b16 %v3573, %v3565
    %v5350 = vpack.c.b16 %v3574, %v3566
    %v5351 = vpack.c.b16 %v3575, %v3567
    %v5352 = vpack.c.b16 %v3576, %v3568
    %v5353 = vpack.c.b16 %v3585, %v3577
    %v5354 = vpack.c.b16 %v3586, %v3578
    %v5355 = vpack.c.b16 %v3587, %v3579
    %v5356 = vpack.c.b16 %v3588, %v3580
    %v5357 = vpack.c.b16 %v3589, %v3581
    %v5358 = vpack.c.b16 %v3590, %v3582
    %v5359 = vpack.c.b16 %v3591, %v3583
    %v5360 = vpack.c.b16 %v3592, %v3584
    %v5361 = vpack.c.b16 %v3601, %v3593
    %v5362 = vpack.c.b16 %v3602, %v3594
    %v5363 = vpack.c.b16 %v3603, %v3595
    %v5364 = vpack.c.b16 %v3604, %v3596
    %v5365 = vpack.c.b16 %v3605, %v3597
    %v5366 = vpack.c.b16 %v3606, %v3598
    %v5367 = vpack.c.b16 %v3607, %v3599
    %v5368 = vpack.c.b16 %v3608, %v3600
    %v5369 = vpack.c.b16 %v3617, %v3609
    %v5370 = vpack.c.b16 %v3618, %v3610
    %v5371 = vpack.c.b16 %v3619, %v3611
    %v5372 = vpack.c.b16 %v3620, %v3612
    %v5373 = vpack.c.b16 %v3621, %v3613
    %v5374 = vpack.c.b16 %v3622, %v3614
    %v5375 = vpack.c.b16 %v3623, %v3615
    %v5376 = vpack.c.b16 %v3624, %v3616
    %v5377 = vpack.c.b16 %v3633, %v3625
    %v5378 = vpack.c.b16 %v3634, %v3626
    %v5379 = vpack.c.b16 %v3635, %v3627
    %v5380 = vpack.c.b16 %v3636, %v3628
    %v5381 = vpack.c.b16 %v3637, %v3629
    %v5382 = vpack.c.b16 %v3638, %v3630
    %v5383 = vpack.c.b16 %v3639, %v3631
    %v5384 = vpack.c.b16 %v3640, %v3632
    %v5385 = vpack.c.b16 %v3649, %v3641
    %v5386 = vpack.c.b16 %v3650, %v3642
    %v5387 = vpack.c.b16 %v3651, %v3643
    %v5388 = vpack.c.b16 %v3652, %v3644
    %v5389 = vpack.c.b16 %v3653, %v3645
    %v5390 = vpack.c.b16 %v3654, %v3646
    %v5391 = vpack.c.b16 %v3655, %v3647
    %v5392 = vpack.c.b16 %v3656, %v3648
    %v5393 = vpack.c.b16 %v3665, %v3657
    %v5394 = vpack.c.b16 %v3666, %v3658
    %v5395 = vpack.c.b16 %v3667, %v3659
    %v5396 = vpack.c.b16 %v3668, %v3660
    %v5397 = vpack.c.b16 %v3669, %v3661
    %v5398 = vpack.c.b16 %v3670, %v3662
    %v5399 = vpack.c.b16 %v3671, %v3663
    %v5400 = vpack.c.b16 %v3672, %v3664
    %v5401 = vpack.c.b16 %v3681, %v3673
    %v5402 = vpack.c.b16 %v3682, %v3674
    %v5403 = vpack.c.b16 %v3683, %v3675
    %v5404 = vpack.c.b16 %v3684, %v3676
    %v5405 = vpack.c.b16 %v3685, %v3677
    %v5406 = vpack.c.b16 %v3686, %v3678
    %v5407 = vpack.c.b16 %v3687, %v3679
    %v5408 = vpack.c.b16 %v3688, %v3680
    %v5409 = vpack.c.b16 %v3697, %v3689
    %v5410 = vpack.c.b16 %v3698, %v3690
    %v5411 = vpack.c.b16 %v3699, %v3691
    %v5412 = vpack.c.b16 %v3700, %v3692
    %v5413 = vpack.c.b16 %v3701, %v3693
    %v5414 = vpack.c.b16 %v3702, %v3694
    %v5415 = vpack.c.b16 %v3703, %v3695
    %v5416 = vpack.c.b16 %v3704, %v3696
    %v5417 = vpack.c.b16 %v3713, %v3705
    %v5418 = vpack.c.b16 %v3714, %v3706
    %v5419 = vpack.c.b16 %v3715, %v3707
    %v5420 = vpack.c.b16 %v3716, %v3708
    %v5421 = vpack.c.b16 %v3717, %v3709
    %v5422 = vpack.c.b16 %v3718, %v3710
    %v5423 = vpack.c.b16 %v3719, %v3711
    %v5424 = vpack.c.b16 %v3720, %v3712
    %v5425 = vpack.c.b16 %v3729, %v3721
    %v5426 = vpack.c.b16 %v3730, %v3722
    %v5427 = vpack.c.b16 %v3731, %v3723
    %v5428 = vpack.c.b16 %v3732, %v3724
    %v5429 = vpack.c.b16 %v3733, %v3725
    %v5430 = vpack.c.b16 %v3734, %v3726
    %v5431 = vpack.c.b16 %v3735, %v3727
    %v5432 = vpack.c.b16 %v3736, %v3728
    %v5433 = vpack.c.b16 %v3745, %v3737
    %v5434 = vpack.c.b16 %v3746, %v3738
    %v5435 = vpack.c.b16 %v3747, %v3739
    %v5436 = vpack.c.b16 %v3748, %v3740
    %v5437 = vpack.c.b16 %v3749, %v3741
    %v5438 = vpack.c.b16 %v3750, %v3742
    %v5439 = vpack.c.b16 %v3751, %v3743
    %v5440 = vpack.c.b16 %v3752, %v3744
    %v5441 = vpack.c.b16 %v3761, %v3753
    %v5442 = vpack.c.b16 %v3762, %v3754
    %v5443 = vpack.c.b16 %v3763, %v3755
    %v5444 = vpack.c.b16 %v3764, %v3756
    %v5445 = vpack.c.b16 %v3765, %v3757
    %v5446 = vpack.c.b16 %v3766, %v3758
    %v5447 = vpack.c.b16 %v3767, %v3759
    %v5448 = vpack.c.b16 %v3768, %v3760
    %v5449 = vpack.c.b16 %v3777, %v3769
    %v5450 = vpack.c.b16 %v3778, %v3770
    %v5451 = vpack.c.b16 %v3779, %v3771
    %v5452 = vpack.c.b16 %v3780, %v3772
    %v5453 = vpack.c.b16 %v3781, %v3773
    %v5454 = vpack.c.b16 %v3782, %v3774
    %v5455 = vpack.c.b16 %v3783, %v3775
    %v5456 = vpack.c.b16 %v3784, %v3776
    %v5457 = vpack.c.b16 %v3793, %v3785
    %v5458 = vpack.c.b16 %v3794, %v3786
    %v5459 = vpack.c.b16 %v3795, %v3787
    %v5460 = vpack.c.b16 %v3796, %v3788
    %v5461 = vpack.c.b16 %v3797, %v3789
    %v5462 = vpack.c.b16 %v3798, %v3790
    %v5463 = vpack.c.b16 %v3799, %v3791
    %v5464 = vpack.c.b16 %v3800, %v3792
    %v5465 = vpack.c.b16 %v3809, %v3801
    %v5466 = vpack.c.b16 %v3810, %v3802
    %v5467 = vpack.c.b16 %v3811, %v3803
    %v5468 = vpack.c.b16 %v3812, %v3804
    %v5469 = vpack.c.b16 %v3813, %v3805
    %v5470 = vpack.c.b16 %v3814, %v3806
    %v5471 = vpack.c.b16 %v3815, %v3807
    %v5472 = vpack.c.b16 %v3816, %v3808
    %v5473 = vpack.c.b16 %v3825, %v3817
    %v5474 = vpack.c.b16 %v3826, %v3818
    %v5475 = vpack.c.b16 %v3827, %v3819
    %v5476 = vpack.c.b16 %v3828, %v3820
    %v5477 = vpack.c.b16 %v3829, %v3821
    %v5478 = vpack.c.b16 %v3830, %v3822
    %v5479 = vpack.c.b16 %v3831, %v3823
    %v5480 = vpack.c.b16 %v3832, %v3824
    %v5481 = vpack.c.b16 %v3841, %v3833
    %v5482 = vpack.c.b16 %v3842, %v3834
    %v5483 = vpack.c.b16 %v3843, %v3835
    %v5484 = vpack.c.b16 %v3844, %v3836
    %v5485 = vpack.c.b16 %v3845, %v3837
    %v5486 = vpack.c.b16 %v3846, %v3838
    %v5487 = vpack.c.b16 %v3847, %v3839
    %v5488 = vpack.c.b16 %v3848, %v3840
    %v5489 = vpack.c.b16 %v3857, %v3849
    %v5490 = vpack.c.b16 %v3858, %v3850
    %v5491 = vpack.c.b16 %v3859, %v3851
    %v5492 = vpack.c.b16 %v3860, %v3852
    %v5493 = vpack.c.b16 %v3861, %v3853
    %v5494 = vpack.c.b16 %v3862, %v3854
    %v5495 = vpack.c.b16 %v3863, %v3855
    %v5496 = vpack.c.b16 %v3864, %v3856
    %v5497 = vpack.c.b16 %v3873, %v3865
    %v5498 = vpack.c.b16 %v3874, %v3866
    %v5499 = vpack.c.b16 %v3875, %v3867
    %v5500 = vpack.c.b16 %v3876, %v3868
    %v5501 = vpack.c.b16 %v3877, %v3869
    %v5502 = vpack.c.b16 %v3878, %v3870
    %v5503 = vpack.c.b16 %v3879, %v3871
    %v5504 = vpack.c.b16 %v3880, %v3872
    %v5505 = vpack.c.b16 %v3889, %v3881
    %v5506 = vpack.c.b16 %v3890, %v3882
    %v5507 = vpack.c.b16 %v3891, %v3883
    %v5508 = vpack.c.b16 %v3892, %v3884
    %v5509 = vpack.c.b16 %v3893, %v3885
    %v5510 = vpack.c.b16 %v3894, %v3886
    %v5511 = vpack.c.b16 %v3895, %v3887
    %v5512 = vpack.c.b16 %v3896, %v3888
    %v5513 = vpack.c.b16 %v3905, %v3897
    %v5514 = vpack.c.b16 %v3906, %v3898
    %v5515 = vpack.c.b16 %v3907, %v3899
    %v5516 = vpack.c.b16 %v3908, %v3900
    %v5517 = vpack.c.b16 %v3909, %v3901
    %v5518 = vpack.c.b16 %v3910, %v3902
    %v5519 = vpack.c.b16 %v3911, %v3903
    %v5520 = vpack.c.b16 %v3912, %v3904
    %v5521 = vpack.c.b16 %v3921, %v3913
    %v5522 = vpack.c.b16 %v3922, %v3914
    %v5523 = vpack.c.b16 %v3923, %v3915
    %v5524 = vpack.c.b16 %v3924, %v3916
    %v5525 = vpack.c.b16 %v3925, %v3917
    %v5526 = vpack.c.b16 %v3926, %v3918
    %v5527 = vpack.c.b16 %v3927, %v3919
    %v5528 = vpack.c.b16 %v3928, %v3920
    %v5529 = vpack.c.b16 %v3937, %v3929
    %v5530 = vpack.c.b16 %v3938, %v3930
    %v5531 = vpack.c.b16 %v3939, %v3931
    %v5532 = vpack.c.b16 %v3940, %v3932
    %v5533 = vpack.c.b16 %v3941, %v3933
    %v5534 = vpack.c.b16 %v3942, %v3934
    %v5535 = vpack.c.b16 %v3943, %v3935
    %v5536 = vpack.c.b16 %v3944, %v3936
    %v5537 = vpack.c.b16 %v3953, %v3945
    %v5538 = vpack.c.b16 %v3954, %v3946
    %v5539 = vpack.c.b16 %v3955, %v3947
    %v5540 = vpack.c.b16 %v3956, %v3948
    %v5541 = vpack.c.b16 %v3957, %v3949
    %v5542 = vpack.c.b16 %v3958, %v3950
    %v5543 = vpack.c.b16 %v3959, %v3951
    %v5544 = vpack.c.b16 %v3960, %v3952
    %v5545 = vpack.c.b16 %v3969, %v3961
    %v5546 = vpack.c.b16 %v3970, %v3962
    %v5547 = vpack.c.b16 %v3971, %v3963
    %v5548 = vpack.c.b16 %v3972, %v3964
    %v5549 = vpack.c.b16 %v3973, %v3965
    %v5550 = vpack.c.b16 %v3974, %v3966
    %v5551 = vpack.c.b16 %v3975, %v3967
    %v5552 = vpack.c.b16 %v3976, %v3968
    %v5553 = vpack.c.b16 %v3985, %v3977
    %v5554 = vpack.c.b16 %v3986, %v3978
    %v5555 = vpack.c.b16 %v3987, %v3979
    %v5556 = vpack.c.b16 %v3988, %v3980
    %v5557 = vpack.c.b16 %v3989, %v3981
    %v5558 = vpack.c.b16 %v3990, %v3982
    %v5559 = vpack.c.b16 %v3991, %v3983
    %v5560 = vpack.c.b16 %v3992, %v3984
    %v5561 = vpack.c.b16 %v4001, %v3993
    %v5562 = vpack.c.b16 %v4002, %v3994
    %v5563 = vpack.c.b16 %v4003, %v3995
    %v5564 = vpack.c.b16 %v4004, %v3996
    %v5565 = vpack.c.b16 %v4005, %v3997
    %v5566 = vpack.c.b16 %v4006, %v3998
    %v5567 = vpack.c.b16 %v4007, %v3999
    %v5568 = vpack.c.b16 %v4008, %v4000
    %v5569 = vpack.c.b16 %v4017, %v4009
    %v5570 = vpack.c.b16 %v4018, %v4010
    %v5571 = vpack.c.b16 %v4019, %v4011
    %v5572 = vpack.c.b16 %v4020, %v4012
    %v5573 = vpack.c.b16 %v4021, %v4013
    %v5574 = vpack.c.b16 %v4022, %v4014
    %v5575 = vpack.c.b16 %v4023, %v4015
    %v5576 = vpack.c.b16 %v4024, %v4016
    %v5577 = vpack.c.b16 %v4033, %v4025
    %v5578 = vpack.c.b16 %v4034, %v4026
    %v5579 = vpack.c.b16 %v4035, %v4027
    %v5580 = vpack.c.b16 %v4036, %v4028
    %v5581 = vpack.c.b16 %v4037, %v4029
    %v5582 = vpack.c.b16 %v4038, %v4030
    %v5583 = vpack.c.b16 %v4039, %v4031
    %v5584 = vpack.c.b16 %v4040, %v4032
    %v5585 = vpack.c.b16 %v4049, %v4041
    %v5586 = vpack.c.b16 %v4050, %v4042
    %v5587 = vpack.c.b16 %v4051, %v4043
    %v5588 = vpack.c.b16 %v4052, %v4044
    %v5589 = vpack.c.b16 %v4053, %v4045
    %v5590 = vpack.c.b16 %v4054, %v4046
    %v5591 = vpack.c.b16 %v4055, %v4047
    %v5592 = vpack.c.b16 %v4056, %v4048
    %v5593 = vpack.c.b16 %v4065, %v4057
    %v5594 = vpack.c.b16 %v4066, %v4058
    %v5595 = vpack.c.b16 %v4067, %v4059
    %v5596 = vpack.c.b16 %v4068, %v4060
    %v5597 = vpack.c.b16 %v4069, %v4061
    %v5598 = vpack.c.b16 %v4070, %v4062
    %v5599 = vpack.c.b16 %v4071, %v4063
    %v5600 = vpack.c.b16 %v4072, %v4064
    %v5601 = vpack.c.b16 %v4081, %v4073
    %v5602 = vpack.c.b16 %v4082, %v4074
    %v5603 = vpack.c.b16 %v4083, %v4075
    %v5604 = vpack.c.b16 %v4084, %v4076
    %v5605 = vpack.c.b16 %v4085, %v4077
    %v5606 = vpack.c.b16 %v4086, %v4078
    %v5607 = vpack.c.b16 %v4087, %v4079
    %v5608 = vpack.c.b16 %v4088, %v4080
    %v5609 = vpack.c.b16 %v4097, %v4089
    %v5610 = vpack.c.b16 %v4098, %v4090
    %v5611 = vpack.c.b16 %v4099, %v4091
    %v5612 = vpack.c.b16 %v4100, %v4092
    %v5613 = vpack.c.b16 %v4101, %v4093
    %v5614 = vpack.c.b16 %v4102, %v4094
    %v5615 = vpack.c.b16 %v4103, %v4095
    %v5616 = vpack.c.b16 %v4104, %v4096
    %v5617 = vpack.c.b16 %v4113, %v4105
    %v5618 = vpack.c.b16 %v4114, %v4106
    %v5619 = vpack.c.b16 %v4115, %v4107
    %v5620 = vpack.c.b16 %v4116, %v4108
    %v5621 = vpack.c.b16 %v4117, %v4109
    %v5622 = vpack.c.b16 %v4118, %v4110
    %v5623 = vpack.c.b16 %v4119, %v4111
    %v5624 = vpack.c.b16 %v4120, %v4112
    %v5625 = vpack.c.b16 %v4129, %v4121
    %v5626 = vpack.c.b16 %v4130, %v4122
    %v5627 = vpack.c.b16 %v4131, %v4123
    %v5628 = vpack.c.b16 %v4132, %v4124
    %v5629 = vpack.c.b16 %v4133, %v4125
    %v5630 = vpack.c.b16 %v4134, %v4126
    %v5631 = vpack.c.b16 %v4135, %v4127
    %v5632 = vpack.c.b16 %v4136, %v4128
    %v5633 = vpack.c.b16 %v4145, %v4137
    %v5634 = vpack.c.b16 %v4146, %v4138
    %v5635 = vpack.c.b16 %v4147, %v4139
    %v5636 = vpack.c.b16 %v4148, %v4140
    %v5637 = vpack.c.b16 %v4149, %v4141
    %v5638 = vpack.c.b16 %v4150, %v4142
    %v5639 = vpack.c.b16 %v4151, %v4143
    %v5640 = vpack.c.b16 %v4152, %v4144
    %v5641 = vpack.c.b16 %v4161, %v4153
    %v5642 = vpack.c.b16 %v4162, %v4154
    %v5643 = vpack.c.b16 %v4163, %v4155
    %v5644 = vpack.c.b16 %v4164, %v4156
    %v5645 = vpack.c.b16 %v4165, %v4157
    %v5646 = vpack.c.b16 %v4166, %v4158
    %v5647 = vpack.c.b16 %v4167, %v4159
    %v5648 = vpack.c.b16 %v4168, %v4160
    %v5649 = vpack.c.b16 %v4177, %v4169
    %v5650 = vpack.c.b16 %v4178, %v4170
    %v5651 = vpack.c.b16 %v4179, %v4171
    %v5652 = vpack.c.b16 %v4180, %v4172
    %v5653 = vpack.c.b16 %v4181, %v4173
    %v5654 = vpack.c.b16 %v4182, %v4174
    %v5655 = vpack.c.b16 %v4183, %v4175
    %v5656 = vpack.c.b16 %v4184, %v4176
    %v5657 = vpack.c.b16 %v4193, %v4185
    %v5658 = vpack.c.b16 %v4194, %v4186
    %v5659 = vpack.c.b16 %v4195, %v4187
    %v5660 = vpack.c.b16 %v4196, %v4188
    %v5661 = vpack.c.b16 %v4197, %v4189
    %v5662 = vpack.c.b16 %v4198, %v4190
    %v5663 = vpack.c.b16 %v4199, %v4191
    %v5664 = vpack.c.b16 %v4200, %v4192
    %v5665 = vpack.c.b16 %v4209, %v4201
    %v5666 = vpack.c.b16 %v4210, %v4202
    %v5667 = vpack.c.b16 %v4211, %v4203
    %v5668 = vpack.c.b16 %v4212, %v4204
    %v5669 = vpack.c.b16 %v4213, %v4205
    %v5670 = vpack.c.b16 %v4214, %v4206
    %v5671 = vpack.c.b16 %v4215, %v4207
    %v5672 = vpack.c.b16 %v4216, %v4208
    %v5673 = vpack.c.b16 %v4225, %v4217
    %v5674 = vpack.c.b16 %v4226, %v4218
    %v5675 = vpack.c.b16 %v4227, %v4219
    %v5676 = vpack.c.b16 %v4228, %v4220
    %v5677 = vpack.c.b16 %v4229, %v4221
    %v5678 = vpack.c.b16 %v4230, %v4222
    %v5679 = vpack.c.b16 %v4231, %v4223
    %v5680 = vpack.c.b16 %v4232, %v4224
    %v5681 = vpack.c.b16 %v4241, %v4233
    %v5682 = vpack.c.b16 %v4242, %v4234
    %v5683 = vpack.c.b16 %v4243, %v4235
    %v5684 = vpack.c.b16 %v4244, %v4236
    %v5685 = vpack.c.b16 %v4245, %v4237
    %v5686 = vpack.c.b16 %v4246, %v4238
    %v5687 = vpack.c.b16 %v4247, %v4239
    %v5688 = vpack.c.b16 %v4248, %v4240
    %v5689 = vpack.c.b16 %v4257, %v4249
    %v5690 = vpack.c.b16 %v4258, %v4250
    %v5691 = vpack.c.b16 %v4259, %v4251
    %v5692 = vpack.c.b16 %v4260, %v4252
    %v5693 = vpack.c.b16 %v4261, %v4253
    %v5694 = vpack.c.b16 %v4262, %v4254
    %v5695 = vpack.c.b16 %v4263, %v4255
    %v5696 = vpack.c.b16 %v4264, %v4256
    %v5697 = vpack.c.b16 %v4273, %v4265
    %v5698 = vpack.c.b16 %v4274, %v4266
    %v5699 = vpack.c.b16 %v4275, %v4267
    %v5700 = vpack.c.b16 %v4276, %v4268
    %v5701 = vpack.c.b16 %v4277, %v4269
    %v5702 = vpack.c.b16 %v4278, %v4270
    %v5703 = vpack.c.b16 %v4279, %v4271
    %v5704 = vpack.c.b16 %v4280, %v4272
    %v5705 = vpack.c.b16 %v4289, %v4281
    %v5706 = vpack.c.b16 %v4290, %v4282
    %v5707 = vpack.c.b16 %v4291, %v4283
    %v5708 = vpack.c.b16 %v4292, %v4284
    %v5709 = vpack.c.b16 %v4293, %v4285
    %v5710 = vpack.c.b16 %v4294, %v4286
    %v5711 = vpack.c.b16 %v4295, %v4287
    %v5712 = vpack.c.b16 %v4296, %v4288
    %v5713 = vpack.c.b16 %v4305, %v4297
    %v5714 = vpack.c.b16 %v4306, %v4298
    %v5715 = vpack.c.b16 %v4307, %v4299
    %v5716 = vpack.c.b16 %v4308, %v4300
    %v5717 = vpack.c.b16 %v4309, %v4301
    %v5718 = vpack.c.b16 %v4310, %v4302
    %v5719 = vpack.c.b16 %v4311, %v4303
    %v5720 = vpack.c.b16 %v4312, %v4304
    %v5721 = vpack.c.b16 %v4321, %v4313
    %v5722 = vpack.c.b16 %v4322, %v4314
    %v5723 = vpack.c.b16 %v4323, %v4315
    %v5724 = vpack.c.b16 %v4324, %v4316
    %v5725 = vpack.c.b16 %v4325, %v4317
    %v5726 = vpack.c.b16 %v4326, %v4318
    %v5727 = vpack.c.b16 %v4327, %v4319
    %v5728 = vpack.c.b16 %v4328, %v4320
    %v5729 = vpack.c.b16 %v4337, %v4329
    %v5730 = vpack.c.b16 %v4338, %v4330
    %v5731 = vpack.c.b16 %v4339, %v4331
    %v5732 = vpack.c.b16 %v4340, %v4332
    %v5733 = vpack.c.b16 %v4341, %v4333
    %v5734 = vpack.c.b16 %v4342, %v4334
    %v5735 = vpack.c.b16 %v4343, %v4335
    %v5736 = vpack.c.b16 %v4344, %v4336
    %v5737 = vpack.c.b16 %v4353, %v4345
    %v5738 = vpack.c.b16 %v4354, %v4346
    %v5739 = vpack.c.b16 %v4355, %v4347
    %v5740 = vpack.c.b16 %v4356, %v4348
    %v5741 = vpack.c.b16 %v4357, %v4349
    %v5742 = vpack.c.b16 %v4358, %v4350
    %v5743 = vpack.c.b16 %v4359, %v4351
    %v5744 = vpack.c.b16 %v4360, %v4352
    %v5745 = vpack.c.b16 %v4369, %v4361
    %v5746 = vpack.c.b16 %v4370, %v4362
    %v5747 = vpack.c.b16 %v4371, %v4363
    %v5748 = vpack.c.b16 %v4372, %v4364
    %v5749 = vpack.c.b16 %v4373, %v4365
    %v5750 = vpack.c.b16 %v4374, %v4366
    %v5751 = vpack.c.b16 %v4375, %v4367
    %v5752 = vpack.c.b16 %v4376, %v4368
    %v5753 = vpack.c.b16 %v4385, %v4377
    %v5754 = vpack.c.b16 %v4386, %v4378
    %v5755 = vpack.c.b16 %v4387, %v4379
    %v5756 = vpack.c.b16 %v4388, %v4380
    %v5757 = vpack.c.b16 %v4389, %v4381
    %v5758 = vpack.c.b16 %v4390, %v4382
    %v5759 = vpack.c.b16 %v4391, %v4383
    %v5760 = vpack.c.b16 %v4392, %v4384
    %v5761 = vpack.c.b16 %v4401, %v4393
    %v5762 = vpack.c.b16 %v4402, %v4394
    %v5763 = vpack.c.b16 %v4403, %v4395
    %v5764 = vpack.c.b16 %v4404, %v4396
    %v5765 = vpack.c.b16 %v4405, %v4397
    %v5766 = vpack.c.b16 %v4406, %v4398
    %v5767 = vpack.c.b16 %v4407, %v4399
    %v5768 = vpack.c.b16 %v4408, %v4400
    %v5769 = vpack.c.b16 %v4417, %v4409
    %v5770 = vpack.c.b16 %v4418, %v4410
    %v5771 = vpack.c.b16 %v4419, %v4411
    %v5772 = vpack.c.b16 %v4420, %v4412
    %v5773 = vpack.c.b16 %v4421, %v4413
    %v5774 = vpack.c.b16 %v4422, %v4414
    %v5775 = vpack.c.b16 %v4423, %v4415
    %v5776 = vpack.c.b16 %v4424, %v4416
    %v5777 = vpack.c.b16 %v4433, %v4425
    %v5778 = vpack.c.b16 %v4434, %v4426
    %v5779 = vpack.c.b16 %v4435, %v4427
    %v5780 = vpack.c.b16 %v4436, %v4428
    %v5781 = vpack.c.b16 %v4437, %v4429
    %v5782 = vpack.c.b16 %v4438, %v4430
    %v5783 = vpack.c.b16 %v4439, %v4431
    %v5784 = vpack.c.b16 %v4440, %v4432
    %v5785 = vpack.c.b16 %v4449, %v4441
    %v5786 = vpack.c.b16 %v4450, %v4442
    %v5787 = vpack.c.b16 %v4451, %v4443
    %v5788 = vpack.c.b16 %v4452, %v4444
    %v5789 = vpack.c.b16 %v4453, %v4445
    %v5790 = vpack.c.b16 %v4454, %v4446
    %v5791 = vpack.c.b16 %v4455, %v4447
    %v5792 = vpack.c.b16 %v4456, %v4448
    %v5793 = vpack.c.b16 %v4465, %v4457
    %v5794 = vpack.c.b16 %v4466, %v4458
    %v5795 = vpack.c.b16 %v4467, %v4459
    %v5796 = vpack.c.b16 %v4468, %v4460
    %v5797 = vpack.c.b16 %v4469, %v4461
    %v5798 = vpack.c.b16 %v4470, %v4462
    %v5799 = vpack.c.b16 %v4471, %v4463
    %v5800 = vpack.c.b16 %v4472, %v4464
    %v5801 = vpack.c.b16 %v4481, %v4473
    %v5802 = vpack.c.b16 %v4482, %v4474
    %v5803 = vpack.c.b16 %v4483, %v4475
    %v5804 = vpack.c.b16 %v4484, %v4476
    %v5805 = vpack.c.b16 %v4485, %v4477
    %v5806 = vpack.c.b16 %v4486, %v4478
    %v5807 = vpack.c.b16 %v4487, %v4479
    %v5808 = vpack.c.b16 %v4488, %v4480
    %v5809 = vpack.c.b16 %v4497, %v4489
    %v5810 = vpack.c.b16 %v4498, %v4490
    %v5811 = vpack.c.b16 %v4499, %v4491
    %v5812 = vpack.c.b16 %v4500, %v4492
    %v5813 = vpack.c.b16 %v4501, %v4493
    %v5814 = vpack.c.b16 %v4502, %v4494
    %v5815 = vpack.c.b16 %v4503, %v4495
    %v5816 = vpack.c.b16 %v4504, %v4496
    %v5817 = vpack.c.b16 %v4513, %v4505
    %v5818 = vpack.c.b16 %v4514, %v4506
    %v5819 = vpack.c.b16 %v4515, %v4507
    %v5820 = vpack.c.b16 %v4516, %v4508
    %v5821 = vpack.c.b16 %v4517, %v4509
    %v5822 = vpack.c.b16 %v4518, %v4510
    %v5823 = vpack.c.b16 %v4519, %v4511
    %v5824 = vpack.c.b16 %v4520, %v4512
    %v5825 = vpack.c.b16 %v4529, %v4521
    %v5826 = vpack.c.b16 %v4530, %v4522
    %v5827 = vpack.c.b16 %v4531, %v4523
    %v5828 = vpack.c.b16 %v4532, %v4524
    %v5829 = vpack.c.b16 %v4533, %v4525
    %v5830 = vpack.c.b16 %v4534, %v4526
    %v5831 = vpack.c.b16 %v4535, %v4527
    %v5832 = vpack.c.b16 %v4536, %v4528
    %v5833 = vpack.c.b16 %v4545, %v4537
    %v5834 = vpack.c.b16 %v4546, %v4538
    %v5835 = vpack.c.b16 %v4547, %v4539
    %v5836 = vpack.c.b16 %v4548, %v4540
    %v5837 = vpack.c.b16 %v4549, %v4541
    %v5838 = vpack.c.b16 %v4550, %v4542
    %v5839 = vpack.c.b16 %v4551, %v4543
    %v5840 = vpack.c.b16 %v4552, %v4544
    %v5841 = vpack.c.b16 %v4561, %v4553
    %v5842 = vpack.c.b16 %v4562, %v4554
    %v5843 = vpack.c.b16 %v4563, %v4555
    %v5844 = vpack.c.b16 %v4564, %v4556
    %v5845 = vpack.c.b16 %v4565, %v4557
    %v5846 = vpack.c.b16 %v4566, %v4558
    %v5847 = vpack.c.b16 %v4567, %v4559
    %v5848 = vpack.c.b16 %v4568, %v4560
    %v5849 = vpack.c.b16 %v4577, %v4569
    %v5850 = vpack.c.b16 %v4578, %v4570
    %v5851 = vpack.c.b16 %v4579, %v4571
    %v5852 = vpack.c.b16 %v4580, %v4572
    %v5853 = vpack.c.b16 %v4581, %v4573
    %v5854 = vpack.c.b16 %v4582, %v4574
    %v5855 = vpack.c.b16 %v4583, %v4575
    %v5856 = vpack.c.b16 %v4584, %v4576
    %v5857 = vpack.c.b16 %v4593, %v4585
    %v5858 = vpack.c.b16 %v4594, %v4586
    %v5859 = vpack.c.b16 %v4595, %v4587
    %v5860 = vpack.c.b16 %v4596, %v4588
    %v5861 = vpack.c.b16 %v4597, %v4589
    %v5862 = vpack.c.b16 %v4598, %v4590
    %v5863 = vpack.c.b16 %v4599, %v4591
    %v5864 = vpack.c.b16 %v4600, %v4592
    %v5865 = vpack.c.b16 %v4609, %v4601
    %v5866 = vpack.c.b16 %v4610, %v4602
    %v5867 = vpack.c.b16 %v4611, %v4603
    %v5868 = vpack.c.b16 %v4612, %v4604
    %v5869 = vpack.c.b16 %v4613, %v4605
    %v5870 = vpack.c.b16 %v4614, %v4606
    %v5871 = vpack.c.b16 %v4615, %v4607
    %v5872 = vpack.c.b16 %v4616, %v4608
    %v5873 = vpack.c.b16 %v4625, %v4617
    %v5874 = vpack.c.b16 %v4626, %v4618
    %v5875 = vpack.c.b16 %v4627, %v4619
    %v5876 = vpack.c.b16 %v4628, %v4620
    %v5877 = vpack.c.b16 %v4629, %v4621
    %v5878 = vpack.c.b16 %v4630, %v4622
    %v5879 = vpack.c.b16 %v4631, %v4623
    %v5880 = vpack.c.b16 %v4632, %v4624
    %v5881 = vpack.c.b16 %v4641, %v4633
    %v5882 = vpack.c.b16 %v4642, %v4634
    %v5883 = vpack.c.b16 %v4643, %v4635
    %v5884 = vpack.c.b16 %v4644, %v4636
    %v5885 = vpack.c.b16 %v4645, %v4637
    %v5886 = vpack.c.b16 %v4646, %v4638
    %v5887 = vpack.c.b16 %v4647, %v4639
    %v5888 = vpack.c.b16 %v4648, %v4640
    %v5889 = vpack.c.b16 %v4657, %v4649
    %v5890 = vpack.c.b16 %v4658, %v4650
    %v5891 = vpack.c.b16 %v4659, %v4651
    %v5892 = vpack.c.b16 %v4660, %v4652
    %v5893 = vpack.c.b16 %v4661, %v4653
    %v5894 = vpack.c.b16 %v4662, %v4654
    %v5895 = vpack.c.b16 %v4663, %v4655
    %v5896 = vpack.c.b16 %v4664, %v4656
    %v5897 = vpack.c.b16 %v4673, %v4665
    %v5898 = vpack.c.b16 %v4674, %v4666
    %v5899 = vpack.c.b16 %v4675, %v4667
    %v5900 = vpack.c.b16 %v4676, %v4668
    %v5901 = vpack.c.b16 %v4677, %v4669
    %v5902 = vpack.c.b16 %v4678, %v4670
    %v5903 = vpack.c.b16 %v4679, %v4671
    %v5904 = vpack.c.b16 %v4680, %v4672
    %v5905 = vpack.c.b16 %v4689, %v4681
    %v5906 = vpack.c.b16 %v4690, %v4682
    %v5907 = vpack.c.b16 %v4691, %v4683
    %v5908 = vpack.c.b16 %v4692, %v4684
    %v5909 = vpack.c.b16 %v4693, %v4685
    %v5910 = vpack.c.b16 %v4694, %v4686
    %v5911 = vpack.c.b16 %v4695, %v4687
    %v5912 = vpack.c.b16 %v4696, %v4688
    %v5913 = vpack.c.b16 %v4705, %v4697
    %v5914 = vpack.c.b16 %v4706, %v4698
    %v5915 = vpack.c.b16 %v4707, %v4699
    %v5916 = vpack.c.b16 %v4708, %v4700
    %v5917 = vpack.c.b16 %v4709, %v4701
    %v5918 = vpack.c.b16 %v4710, %v4702
    %v5919 = vpack.c.b16 %v4711, %v4703
    %v5920 = vpack.c.b16 %v4712, %v4704
    %v5921 = vpack.c.b16 %v4721, %v4713
    %v5922 = vpack.c.b16 %v4722, %v4714
    %v5923 = vpack.c.b16 %v4723, %v4715
    %v5924 = vpack.c.b16 %v4724, %v4716
    %v5925 = vpack.c.b16 %v4725, %v4717
    %v5926 = vpack.c.b16 %v4726, %v4718
    %v5927 = vpack.c.b16 %v4727, %v4719
    %v5928 = vpack.c.b16 %v4728, %v4720
    %v5929 = vpack.c.b16 %v4737, %v4729
    %v5930 = vpack.c.b16 %v4738, %v4730
    %v5931 = vpack.c.b16 %v4739, %v4731
    %v5932 = vpack.c.b16 %v4740, %v4732
    %v5933 = vpack.c.b16 %v4741, %v4733
    %v5934 = vpack.c.b16 %v4742, %v4734
    %v5935 = vpack.c.b16 %v4743, %v4735
    %v5936 = vpack.c.b16 %v4744, %v4736
    %v5937 = vpack.c.b16 %v4753, %v4745
    %v5938 = vpack.c.b16 %v4754, %v4746
    %v5939 = vpack.c.b16 %v4755, %v4747
    %v5940 = vpack.c.b16 %v4756, %v4748
    %v5941 = vpack.c.b16 %v4757, %v4749
    %v5942 = vpack.c.b16 %v4758, %v4750
    %v5943 = vpack.c.b16 %v4759, %v4751
    %v5944 = vpack.c.b16 %v4760, %v4752
    %v5945 = vpack.c.b16 %v4769, %v4761
    %v5946 = vpack.c.b16 %v4770, %v4762
    %v5947 = vpack.c.b16 %v4771, %v4763
    %v5948 = vpack.c.b16 %v4772, %v4764
    %v5949 = vpack.c.b16 %v4773, %v4765
    %v5950 = vpack.c.b16 %v4774, %v4766
    %v5951 = vpack.c.b16 %v4775, %v4767
    %v5952 = vpack.c.b16 %v4776, %v4768
    %v5953 = vpack.c.b16 %v4785, %v4777
    %v5954 = vpack.c.b16 %v4786, %v4778
    %v5955 = vpack.c.b16 %v4787, %v4779
    %v5956 = vpack.c.b16 %v4788, %v4780
    %v5957 = vpack.c.b16 %v4789, %v4781
    %v5958 = vpack.c.b16 %v4790, %v4782
    %v5959 = vpack.c.b16 %v4791, %v4783
    %v5960 = vpack.c.b16 %v4792, %v4784
    %v5961 = vpack.c.b16 %v4801, %v4793
    %v5962 = vpack.c.b16 %v4802, %v4794
    %v5963 = vpack.c.b16 %v4803, %v4795
    %v5964 = vpack.c.b16 %v4804, %v4796
    %v5965 = vpack.c.b16 %v4805, %v4797
    %v5966 = vpack.c.b16 %v4806, %v4798
    %v5967 = vpack.c.b16 %v4807, %v4799
    %v5968 = vpack.c.b16 %v4808, %v4800
    %v5969 = vpack.c.b16 %v4817, %v4809
    %v5970 = vpack.c.b16 %v4818, %v4810
    %v5971 = vpack.c.b16 %v4819, %v4811
    %v5972 = vpack.c.b16 %v4820, %v4812
    %v5973 = vpack.c.b16 %v4821, %v4813
    %v5974 = vpack.c.b16 %v4822, %v4814
    %v5975 = vpack.c.b16 %v4823, %v4815
    %v5976 = vpack.c.b16 %v4824, %v4816
    %7129 = vmatprep.subr.bf16.mxu0 %v4826
    %7130 = vmatpush1.bf16.msra.mxu0 %v4825
    %7131 = vmatprep.subr.bf16.mxu0 %v4834
    %7132 = vmatpush1.bf16.msra.mxu0 %v4833
    %7133 = vmatprep.subr.bf16.mxu0 %v4842
    %7134 = vmatpush1.bf16.msra.mxu0 %v4841
    %7135 = vmatprep.subr.bf16.mxu0 %v4850
    %7136 = vmatpush1.bf16.msra.mxu0 %v4849
    %7137 = vmatprep.subr.bf16.mxu0 %v4858
    %7138 = vmatpush1.bf16.msra.mxu0 %v4857
    %7139 = vmatprep.subr.bf16.mxu0 %v4866
    %7140 = vmatpush1.bf16.msra.mxu0 %v4865
    %7141 = vmatprep.subr.bf16.mxu0 %v4874
    %7142 = vmatpush1.bf16.msra.mxu0 %v4873
    %7143 = vmatprep.subr.bf16.mxu0 %v4882
    %7144 = vmatpush1.bf16.msra.mxu0 %v4881
    %7145 = vmatprep.subr.bf16.mxu0 %v4890
    %7146 = vmatpush1.bf16.msra.mxu0 %v4889
    %7147 = vmatprep.subr.bf16.mxu0 %v4898
    %7148 = vmatpush1.bf16.msra.mxu0 %v4897
    %7149 = vmatprep.subr.bf16.mxu0 %v4906
    %7150 = vmatpush1.bf16.msra.mxu0 %v4905
    %7151 = vmatprep.subr.bf16.mxu0 %v4914
    %7152 = vmatpush1.bf16.msra.mxu0 %v4913
    %7153 = vmatprep.subr.bf16.mxu0 %v4922
    %7154 = vmatpush1.bf16.msra.mxu0 %v4921
    %7155 = vmatprep.subr.bf16.mxu0 %v4930
    %7156 = vmatpush1.bf16.msra.mxu0 %v4929
    %7157 = vmatprep.subr.bf16.mxu0 %v4938
    %7158 = vmatpush1.bf16.msra.mxu0 %v4937
    %7159 = vmatprep.subr.bf16.mxu0 %v4946
    %7160 = vmatpush1.bf16.msra.mxu0 %v4945
    %7161 = vmatprep.mubr.bf16.mxu0 %v1334
    %7162 = vmatmul.mubr.bf16.gmra.mrb[0].mxu0 %v1333
    %v7163 = vpop.f32.mrb[0].mxu0
    %v7164 = vadd.f32 %v1269, %v7163
    %v7165 = vpop.f32.mrb[0].mxu0
    %v7166 = vadd.f32 %v1273, %v7165
    %v7167 = vpop.f32.mrb[0].mxu0
    %v7168 = vpop.f32.mrb[0].mxu0
    %7169 = vdwg.mxu0
    %7170 = vmatprep.subr.bf16.mxu0 %v4954
    %7171 = vmatpush1.bf16.msra.mxu0 %v4953
    %7172 = vmatprep.subr.bf16.mxu0 %v4962
    %7173 = vmatpush1.bf16.msra.mxu0 %v4961
    %7174 = vmatprep.subr.bf16.mxu0 %v4970
    %7175 = vmatpush1.bf16.msra.mxu0 %v4969
    %7176 = vmatprep.subr.bf16.mxu0 %v4978
    %7177 = vmatpush1.bf16.msra.mxu0 %v4977
    %7178 = vmatprep.subr.bf16.mxu0 %v4986
    %7179 = vmatpush1.bf16.msra.mxu0 %v4985
    %7180 = vmatprep.subr.bf16.mxu0 %v4994
    %7181 = vmatpush1.bf16.msra.mxu0 %v4993
    %7182 = vmatprep.subr.bf16.mxu0 %v5002
    %7183 = vmatpush1.bf16.msra.mxu0 %v5001
    %7184 = vmatprep.subr.bf16.mxu0 %v5010
    %7185 = vmatpush1.bf16.msra.mxu0 %v5009
    %7186 = vmatprep.subr.bf16.mxu0 %v5018
    %7187 = vmatpush1.bf16.msra.mxu0 %v5017
    %7188 = vmatprep.subr.bf16.mxu0 %v5026
    %7189 = vmatpush1.bf16.msra.mxu0 %v5025
    %7190 = vmatprep.subr.bf16.mxu0 %v5034
    %7191 = vmatpush1.bf16.msra.mxu0 %v5033
    %7192 = vmatprep.subr.bf16.mxu0 %v5042
    %7193 = vmatpush1.bf16.msra.mxu0 %v5041
    %7194 = vmatprep.subr.bf16.mxu0 %v5050
    %7195 = vmatpush1.bf16.msra.mxu0 %v5049
    %7196 = vmatprep.subr.bf16.mxu0 %v5058
    %7197 = vmatpush1.bf16.msra.mxu0 %v5057
    %7198 = vmatprep.subr.bf16.mxu0 %v5066
    %7199 = vmatpush1.bf16.msra.mxu0 %v5065
    %7200 = vmatprep.subr.bf16.mxu0 %v5074
    %7201 = vmatpush1.bf16.msra.mxu0 %v5073
    %7202 = vmatprep.mubr.bf16.mxu0 %v1336
    %7203 = vmatmul.mubr.bf16.gmra.mrb[0].mxu0 %v1335
    %v7204 = vpop.f32.mrb[0].mxu0
    %v7205 = vadd.f32 %v7164, %v7204
    %v7206 = vpop.f32.mrb[0].mxu0
    %v7207 = vadd.f32 %v7166, %v7206
    %v7208 = vpop.f32.mrb[0].mxu0
    %v7209 = vpop.f32.mrb[0].mxu0
    %7210 = vdwg.mxu0
    %7211 = vmatprep.subr.bf16.mxu0 %v5082
    %7212 = vmatpush1.bf16.msra.mxu0 %v5081
    %7213 = vmatprep.subr.bf16.mxu0 %v5090
    %7214 = vmatpush1.bf16.msra.mxu0 %v5089
    %7215 = vmatprep.subr.bf16.mxu0 %v5098
    %7216 = vmatpush1.bf16.msra.mxu0 %v5097
    %7217 = vmatprep.subr.bf16.mxu0 %v5106
    %7218 = vmatpush1.bf16.msra.mxu0 %v5105
    %7219 = vmatprep.subr.bf16.mxu0 %v5114
    %7220 = vmatpush1.bf16.msra.mxu0 %v5113
    %7221 = vmatprep.subr.bf16.mxu0 %v5122
    %7222 = vmatpush1.bf16.msra.mxu0 %v5121
    %7223 = vmatprep.subr.bf16.mxu0 %v5130
    %7224 = vmatpush1.bf16.msra.mxu0 %v5129
    %7225 = vmatprep.subr.bf16.mxu0 %v5138
    %7226 = vmatpush1.bf16.msra.mxu0 %v5137
    %7227 = vmatprep.subr.bf16.mxu0 %v5146
    %7228 = vmatpush1.bf16.msra.mxu0 %v5145
    %7229 = vmatprep.subr.bf16.mxu0 %v5154
    %7230 = vmatpush1.bf16.msra.mxu0 %v5153
    %7231 = vmatprep.subr.bf16.mxu0 %v5162
    %7232 = vmatpush1.bf16.msra.mxu0 %v5161
    %7233 = vmatprep.subr.bf16.mxu0 %v5170
    %7234 = vmatpush1.bf16.msra.mxu0 %v5169
    %7235 = vmatprep.subr.bf16.mxu0 %v5178
    %7236 = vmatpush1.bf16.msra.mxu0 %v5177
    %7237 = vmatprep.subr.bf16.mxu0 %v5186
    %7238 = vmatpush1.bf16.msra.mxu0 %v5185
    %7239 = vmatprep.subr.bf16.mxu0 %v5194
    %7240 = vmatpush1.bf16.msra.mxu0 %v5193
    %7241 = vmatprep.subr.bf16.mxu0 %v5202
    %7242 = vmatpush1.bf16.msra.mxu0 %v5201
    %7243 = vmatprep.mubr.bf16.mxu0 %v1338
    %7244 = vmatmul.mubr.bf16.gmra.mrb[0].mxu0 %v1337
    %v7245 = vpop.f32.mrb[0].mxu0
    %v7246 = vadd.f32 %v7205, %v7245
    %v7247 = vpop.f32.mrb[0].mxu0
    %v7248 = vadd.f32 %v7207, %v7247
    %v7249 = vpop.f32.mrb[0].mxu0
    %v7250 = vpop.f32.mrb[0].mxu0
    %7251 = vdwg.mxu0
    %7252 = vmatprep.subr.bf16.mxu0 %v5210
    %7253 = vmatpush1.bf16.msra.mxu0 %v5209
    %7254 = vmatprep.subr.bf16.mxu0 %v5218
    %7255 = vmatpush1.bf16.msra.mxu0 %v5217
    %7256 = vmatprep.subr.bf16.mxu0 %v5226
    %7257 = vmatpush1.bf16.msra.mxu0 %v5225
    %7258 = vmatprep.subr.bf16.mxu0 %v5234
    %7259 = vmatpush1.bf16.msra.mxu0 %v5233
    %7260 = vmatprep.subr.bf16.mxu0 %v5242
    %7261 = vmatpush1.bf16.msra.mxu0 %v5241
    %7262 = vmatprep.subr.bf16.mxu0 %v5250
    %7263 = vmatpush1.bf16.msra.mxu0 %v5249
    %7264 = vmatprep.subr.bf16.mxu0 %v5258
    %7265 = vmatpush1.bf16.msra.mxu0 %v5257
    %7266 = vmatprep.subr.bf16.mxu0 %v5266
    %7267 = vmatpush1.bf16.msra.mxu0 %v5265
    %7268 = vmatprep.subr.bf16.mxu0 %v5274
    %7269 = vmatpush1.bf16.msra.mxu0 %v5273
    %7270 = vmatprep.subr.bf16.mxu0 %v5282
    %7271 = vmatpush1.bf16.msra.mxu0 %v5281
    %7272 = vmatprep.subr.bf16.mxu0 %v5290
    %7273 = vmatpush1.bf16.msra.mxu0 %v5289
    %7274 = vmatprep.subr.bf16.mxu0 %v5298
    %7275 = vmatpush1.bf16.msra.mxu0 %v5297
    %7276 = vmatprep.subr.bf16.mxu0 %v5306
    %7277 = vmatpush1.bf16.msra.mxu0 %v5305
    %7278 = vmatprep.subr.bf16.mxu0 %v5314
    %7279 = vmatpush1.bf16.msra.mxu0 %v5313
    %7280 = vmatprep.subr.bf16.mxu0 %v5322
    %7281 = vmatpush1.bf16.msra.mxu0 %v5321
    %7282 = vmatprep.subr.bf16.mxu0 %v5330
    %7283 = vmatpush1.bf16.msra.mxu0 %v5329
    %7284 = vmatprep.mubr.bf16.mxu0 %v1340
    %7285 = vmatmul.mubr.bf16.gmra.mrb[0].mxu0 %v1339
    %v7286 = vpop.f32.mrb[0].mxu0
    %v7287 = vadd.f32 %v7246, %v7286
    %v7288 = vpop.f32.mrb[0].mxu0
    %v7289 = vadd.f32 %v7248, %v7288
    %v7290 = vpop.f32.mrb[0].mxu0
    %v7291 = vpop.f32.mrb[0].mxu0
    %7292 = vdwg.mxu0
    %7293 = vmatprep.subr.bf16.mxu0 %v5338
    %7294 = vmatpush1.bf16.msra.mxu0 %v5337
    %7295 = vmatprep.subr.bf16.mxu0 %v5346
    %7296 = vmatpush1.bf16.msra.mxu0 %v5345
    %7297 = vmatprep.subr.bf16.mxu0 %v5354
    %7298 = vmatpush1.bf16.msra.mxu0 %v5353
    %7299 = vmatprep.subr.bf16.mxu0 %v5362
    %7300 = vmatpush1.bf16.msra.mxu0 %v5361
    %7301 = vmatprep.subr.bf16.mxu0 %v5370
    %7302 = vmatpush1.bf16.msra.mxu0 %v5369
    %7303 = vmatprep.subr.bf16.mxu0 %v5378
    %7304 = vmatpush1.bf16.msra.mxu0 %v5377
    %7305 = vmatprep.subr.bf16.mxu0 %v5386
    %7306 = vmatpush1.bf16.msra.mxu0 %v5385
    %7307 = vmatprep.subr.bf16.mxu0 %v5394
    %7308 = vmatpush1.bf16.msra.mxu0 %v5393
    %7309 = vmatprep.subr.bf16.mxu0 %v5402
    %7310 = vmatpush1.bf16.msra.mxu0 %v5401
    %7311 = vmatprep.subr.bf16.mxu0 %v5410
    %7312 = vmatpush1.bf16.msra.mxu0 %v5409
    %7313 = vmatprep.subr.bf16.mxu0 %v5418
    %7314 = vmatpush1.bf16.msra.mxu0 %v5417
    %7315 = vmatprep.subr.bf16.mxu0 %v5426
    %7316 = vmatpush1.bf16.msra.mxu0 %v5425
    %7317 = vmatprep.subr.bf16.mxu0 %v5434
    %7318 = vmatpush1.bf16.msra.mxu0 %v5433
    %7319 = vmatprep.subr.bf16.mxu0 %v5442
    %7320 = vmatpush1.bf16.msra.mxu0 %v5441
    %7321 = vmatprep.subr.bf16.mxu0 %v5450
    %7322 = vmatpush1.bf16.msra.mxu0 %v5449
    %7323 = vmatprep.subr.bf16.mxu0 %v5458
    %7324 = vmatpush1.bf16.msra.mxu0 %v5457
    %7325 = vmatprep.mubr.bf16.mxu0 %v1342
    %7326 = vmatmul.mubr.bf16.gmra.mrb[0].mxu0 %v1341
    %v7327 = vpop.f32.mrb[0].mxu0
    %v7328 = vadd.f32 %v7287, %v7327
    %v7329 = vpop.f32.mrb[0].mxu0
    %v7330 = vadd.f32 %v7289, %v7329
    %v7331 = vpop.f32.mrb[0].mxu0
    %v7332 = vpop.f32.mrb[0].mxu0
    %7333 = vdwg.mxu0
    %7334 = vmatprep.subr.bf16.mxu0 %v5466
    %7335 = vmatpush1.bf16.msra.mxu0 %v5465
    %7336 = vmatprep.subr.bf16.mxu0 %v5474
    %7337 = vmatpush1.bf16.msra.mxu0 %v5473
    %7338 = vmatprep.subr.bf16.mxu0 %v5482
    %7339 = vmatpush1.bf16.msra.mxu0 %v5481
    %7340 = vmatprep.subr.bf16.mxu0 %v5490
    %7341 = vmatpush1.bf16.msra.mxu0 %v5489
    %7342 = vmatprep.subr.bf16.mxu0 %v5498
    %7343 = vmatpush1.bf16.msra.mxu0 %v5497
    %7344 = vmatprep.subr.bf16.mxu0 %v5506
    %7345 = vmatpush1.bf16.msra.mxu0 %v5505
    %7346 = vmatprep.subr.bf16.mxu0 %v5514
    %7347 = vmatpush1.bf16.msra.mxu0 %v5513
    %7348 = vmatprep.subr.bf16.mxu0 %v5522
    %7349 = vmatpush1.bf16.msra.mxu0 %v5521
    %7350 = vmatprep.subr.bf16.mxu0 %v5530
    %7351 = vmatpush1.bf16.msra.mxu0 %v5529
    %7352 = vmatprep.subr.bf16.mxu0 %v5538
    %7353 = vmatpush1.bf16.msra.mxu0 %v5537
    %7354 = vmatprep.subr.bf16.mxu0 %v5546
    %7355 = vmatpush1.bf16.msra.mxu0 %v5545
    %7356 = vmatprep.subr.bf16.mxu0 %v5554
    %7357 = vmatpush1.bf16.msra.mxu0 %v5553
    %7358 = vmatprep.subr.bf16.mxu0 %v5562
    %7359 = vmatpush1.bf16.msra.mxu0 %v5561
    %7360 = vmatprep.subr.bf16.mxu0 %v5570
    %7361 = vmatpush1.bf16.msra.mxu0 %v5569
    %7362 = vmatprep.subr.bf16.mxu0 %v5578
    %7363 = vmatpush1.bf16.msra.mxu0 %v5577
    %7364 = vmatprep.subr.bf16.mxu0 %v5586
    %7365 = vmatpush1.bf16.msra.mxu0 %v5585
    %7366 = vmatprep.mubr.bf16.mxu0 %v1344
    %7367 = vmatmul.mubr.bf16.gmra.mrb[0].mxu0 %v1343
    %v7368 = vpop.f32.mrb[0].mxu0
    %v7369 = vadd.f32 %v7328, %v7368
    %v7370 = vpop.f32.mrb[0].mxu0
    %v7371 = vadd.f32 %v7330, %v7370
    %v7372 = vpop.f32.mrb[0].mxu0
    %v7373 = vpop.f32.mrb[0].mxu0
    %7374 = vdwg.mxu0
    %7375 = vmatprep.subr.bf16.mxu0 %v5594
    %7376 = vmatpush1.bf16.msra.mxu0 %v5593
    %7377 = vmatprep.subr.bf16.mxu0 %v5602
    %7378 = vmatpush1.bf16.msra.mxu0 %v5601
    %7379 = vmatprep.subr.bf16.mxu0 %v5610
    %7380 = vmatpush1.bf16.msra.mxu0 %v5609
    %7381 = vmatprep.subr.bf16.mxu0 %v5618
    %7382 = vmatpush1.bf16.msra.mxu0 %v5617
    %7383 = vmatprep.subr.bf16.mxu0 %v5626
    %7384 = vmatpush1.bf16.msra.mxu0 %v5625
    %7385 = vmatprep.subr.bf16.mxu0 %v5634
    %7386 = vmatpush1.bf16.msra.mxu0 %v5633
    %7387 = vmatprep.subr.bf16.mxu0 %v5642
    %7388 = vmatpush1.bf16.msra.mxu0 %v5641
    %7389 = vmatprep.subr.bf16.mxu0 %v5650
    %7390 = vmatpush1.bf16.msra.mxu0 %v5649
    %7391 = vmatprep.subr.bf16.mxu0 %v5658
    %7392 = vmatpush1.bf16.msra.mxu0 %v5657
    %7393 = vmatprep.subr.bf16.mxu0 %v5666
    %7394 = vmatpush1.bf16.msra.mxu0 %v5665
    %7395 = vmatprep.subr.bf16.mxu0 %v5674
    %7396 = vmatpush1.bf16.msra.mxu0 %v5673
    %7397 = vmatprep.subr.bf16.mxu0 %v5682
    %7398 = vmatpush1.bf16.msra.mxu0 %v5681
    %7399 = vmatprep.subr.bf16.mxu0 %v5690
    %7400 = vmatpush1.bf16.msra.mxu0 %v5689
    %7401 = vmatprep.subr.bf16.mxu0 %v5698
    %7402 = vmatpush1.bf16.msra.mxu0 %v5697
    %7403 = vmatprep.subr.bf16.mxu0 %v5706
    %7404 = vmatpush1.bf16.msra.mxu0 %v5705
    %7405 = vmatprep.subr.bf16.mxu0 %v5714
    %7406 = vmatpush1.bf16.msra.mxu0 %v5713
    %7407 = vmatprep.mubr.bf16.mxu0 %v1346
    %7408 = vmatmul.mubr.bf16.gmra.mrb[0].mxu0 %v1345
    %v7409 = vpop.f32.mrb[0].mxu0
    %v7410 = vadd.f32 %v7369, %v7409
    %v7411 = vpop.f32.mrb[0].mxu0
    %v7412 = vadd.f32 %v7371, %v7411
    %v7413 = vpop.f32.mrb[0].mxu0
    %v7414 = vpop.f32.mrb[0].mxu0
    %7415 = vdwg.mxu0
    %7416 = vmatprep.subr.bf16.mxu0 %v5722
    %7417 = vmatpush1.bf16.msra.mxu0 %v5721
    %7418 = vmatprep.subr.bf16.mxu0 %v5730
    %7419 = vmatpush1.bf16.msra.mxu0 %v5729
    %7420 = vmatprep.subr.bf16.mxu0 %v5738
    %7421 = vmatpush1.bf16.msra.mxu0 %v5737
    %7422 = vmatprep.subr.bf16.mxu0 %v5746
    %7423 = vmatpush1.bf16.msra.mxu0 %v5745
    %7424 = vmatprep.subr.bf16.mxu0 %v5754
    %7425 = vmatpush1.bf16.msra.mxu0 %v5753
    %7426 = vmatprep.subr.bf16.mxu0 %v5762
    %7427 = vmatpush1.bf16.msra.mxu0 %v5761
    %7428 = vmatprep.subr.bf16.mxu0 %v5770
    %7429 = vmatpush1.bf16.msra.mxu0 %v5769
    %7430 = vmatprep.subr.bf16.mxu0 %v5778
    %7431 = vmatpush1.bf16.msra.mxu0 %v5777
    %7432 = vmatprep.subr.bf16.mxu0 %v5786
    %7433 = vmatpush1.bf16.msra.mxu0 %v5785
    %7434 = vmatprep.subr.bf16.mxu0 %v5794
    %7435 = vmatpush1.bf16.msra.mxu0 %v5793
    %7436 = vmatprep.subr.bf16.mxu0 %v5802
    %7437 = vmatpush1.bf16.msra.mxu0 %v5801
    %7438 = vmatprep.subr.bf16.mxu0 %v5810
    %7439 = vmatpush1.bf16.msra.mxu0 %v5809
    %7440 = vmatprep.subr.bf16.mxu0 %v5818
    %7441 = vmatpush1.bf16.msra.mxu0 %v5817
    %7442 = vmatprep.subr.bf16.mxu0 %v5826
    %7443 = vmatpush1.bf16.msra.mxu0 %v5825
    %7444 = vmatprep.subr.bf16.mxu0 %v5834
    %7445 = vmatpush1.bf16.msra.mxu0 %v5833
    %7446 = vmatprep.subr.bf16.mxu0 %v5842
    %7447 = vmatpush1.bf16.msra.mxu0 %v5841
    %7448 = vmatprep.mubr.bf16.mxu0 %v1348
    %7449 = vmatmul.mubr.bf16.gmra.mrb[0].mxu0 %v1347
    %v7450 = vpop.f32.mrb[0].mxu0
    %v7451 = vadd.f32 %v7410, %v7450
    %v7452 = vpop.f32.mrb[0].mxu0
    %v7453 = vadd.f32 %v7412, %v7452
    %v7454 = vpop.f32.mrb[0].mxu0
    %v7455 = vpop.f32.mrb[0].mxu0
    %7456 = vdwg.mxu0
    %7457 = vmatprep.subr.bf16.mxu0 %v5850
    %7458 = vmatpush1.bf16.msra.mxu0 %v5849
    %7459 = vmatprep.subr.bf16.mxu0 %v5858
    %7460 = vmatpush1.bf16.msra.mxu0 %v5857
    %7461 = vmatprep.subr.bf16.mxu0 %v5866
    %7462 = vmatpush1.bf16.msra.mxu0 %v5865
    %7463 = vmatprep.subr.bf16.mxu0 %v5874
    %7464 = vmatpush1.bf16.msra.mxu0 %v5873
    %7465 = vmatprep.subr.bf16.mxu0 %v5882
    %7466 = vmatpush1.bf16.msra.mxu0 %v5881
    %7467 = vmatprep.subr.bf16.mxu0 %v5890
    %7468 = vmatpush1.bf16.msra.mxu0 %v5889
    %7469 = vmatprep.subr.bf16.mxu0 %v5898
    %7470 = vmatpush1.bf16.msra.mxu0 %v5897
    %7471 = vmatprep.subr.bf16.mxu0 %v5906
    %7472 = vmatpush1.bf16.msra.mxu0 %v5905
    %7473 = vmatprep.subr.bf16.mxu0 %v5914
    %7474 = vmatpush1.bf16.msra.mxu0 %v5913
    %7475 = vmatprep.subr.bf16.mxu0 %v5922
    %7476 = vmatpush1.bf16.msra.mxu0 %v5921
    %7477 = vmatprep.subr.bf16.mxu0 %v5930
    %7478 = vmatpush1.bf16.msra.mxu0 %v5929
    %7479 = vmatprep.subr.bf16.mxu0 %v5938
    %7480 = vmatpush1.bf16.msra.mxu0 %v5937
    %7481 = vmatprep.subr.bf16.mxu0 %v5946
    %7482 = vmatpush1.bf16.msra.mxu0 %v5945
    %7483 = vmatprep.subr.bf16.mxu0 %v5954
    %7484 = vmatpush1.bf16.msra.mxu0 %v5953
    %7485 = vmatprep.subr.bf16.mxu0 %v5962
    %7486 = vmatpush1.bf16.msra.mxu0 %v5961
    %7487 = vmatprep.subr.bf16.mxu0 %v5970
    %7488 = vmatpush1.bf16.msra.mxu0 %v5969
    %7489 = vmatprep.mubr.bf16.mxu0 %v1350
    %7490 = vmatmul.mubr.bf16.gmra.mrb[0].mxu0 %v1349
    %v7491 = vpop.f32.mrb[0].mxu0
    %v7492 = vadd.f32 %v7451, %v7491
    %v7493 = vpop.f32.mrb[0].mxu0
    %v7494 = vadd.f32 %v7453, %v7493
    %v7495 = vpop.f32.mrb[0].mxu0
    %v7496 = vpop.f32.mrb[0].mxu0
    %7497 = vdwg.mxu0
    %7498 = vmatprep.subr.bf16.mxu0 %v4828
    %7499 = vmatpush1.bf16.msra.mxu0 %v4827
    %7500 = vmatprep.subr.bf16.mxu0 %v4836
    %7501 = vmatpush1.bf16.msra.mxu0 %v4835
    %7502 = vmatprep.subr.bf16.mxu0 %v4844
    %7503 = vmatpush1.bf16.msra.mxu0 %v4843
    %7504 = vmatprep.subr.bf16.mxu0 %v4852
    %7505 = vmatpush1.bf16.msra.mxu0 %v4851
    %7506 = vmatprep.subr.bf16.mxu0 %v4860
    %7507 = vmatpush1.bf16.msra.mxu0 %v4859
    %7508 = vmatprep.subr.bf16.mxu0 %v4868
    %7509 = vmatpush1.bf16.msra.mxu0 %v4867
    %7510 = vmatprep.subr.bf16.mxu0 %v4876
    %7511 = vmatpush1.bf16.msra.mxu0 %v4875
    %7512 = vmatprep.subr.bf16.mxu0 %v4884
    %7513 = vmatpush1.bf16.msra.mxu0 %v4883
    %7514 = vmatprep.subr.bf16.mxu0 %v4892
    %7515 = vmatpush1.bf16.msra.mxu0 %v4891
    %7516 = vmatprep.subr.bf16.mxu0 %v4900
    %7517 = vmatpush1.bf16.msra.mxu0 %v4899
    %7518 = vmatprep.subr.bf16.mxu0 %v4908
    %7519 = vmatpush1.bf16.msra.mxu0 %v4907
    %7520 = vmatprep.subr.bf16.mxu0 %v4916
    %7521 = vmatpush1.bf16.msra.mxu0 %v4915
    %7522 = vmatprep.subr.bf16.mxu0 %v4924
    %7523 = vmatpush1.bf16.msra.mxu0 %v4923
    %7524 = vmatprep.subr.bf16.mxu0 %v4932
    %7525 = vmatpush1.bf16.msra.mxu0 %v4931
    %7526 = vmatprep.subr.bf16.mxu0 %v4940
    %7527 = vmatpush1.bf16.msra.mxu0 %v4939
    %7528 = vmatprep.subr.bf16.mxu0 %v4948
    %7529 = vmatpush1.bf16.msra.mxu0 %v4947
    %7530 = vmatprep.mubr.bf16.mxu0 %v1334
    %7531 = vmatmul.mubr.bf16.gmra.mrb[0].mxu0 %v1333
    %v7532 = vpop.f32.mrb[0].mxu0
    %v7533 = vadd.f32 %v1277, %v7532
    %v7534 = vpop.f32.mrb[0].mxu0
    %v7535 = vadd.f32 %v1281, %v7534
    %v7536 = vpop.f32.mrb[0].mxu0
    %v7537 = vpop.f32.mrb[0].mxu0
    %7538 = vdwg.mxu0
    %7539 = vmatprep.subr.bf16.mxu0 %v4956
    %7540 = vmatpush1.bf16.msra.mxu0 %v4955
    %7541 = vmatprep.subr.bf16.mxu0 %v4964
    %7542 = vmatpush1.bf16.msra.mxu0 %v4963
    %7543 = vmatprep.subr.bf16.mxu0 %v4972
    %7544 = vmatpush1.bf16.msra.mxu0 %v4971
    %7545 = vmatprep.subr.bf16.mxu0 %v4980
    %7546 = vmatpush1.bf16.msra.mxu0 %v4979
    %7547 = vmatprep.subr.bf16.mxu0 %v4988
    %7548 = vmatpush1.bf16.msra.mxu0 %v4987
    %7549 = vmatprep.subr.bf16.mxu0 %v4996
    %7550 = vmatpush1.bf16.msra.mxu0 %v4995
    %7551 = vmatprep.subr.bf16.mxu0 %v5004
    %7552 = vmatpush1.bf16.msra.mxu0 %v5003
    %7553 = vmatprep.subr.bf16.mxu0 %v5012
    %7554 = vmatpush1.bf16.msra.mxu0 %v5011
    %7555 = vmatprep.subr.bf16.mxu0 %v5020
    %7556 = vmatpush1.bf16.msra.mxu0 %v5019
    %7557 = vmatprep.subr.bf16.mxu0 %v5028
    %7558 = vmatpush1.bf16.msra.mxu0 %v5027
    %7559 = vmatprep.subr.bf16.mxu0 %v5036
    %7560 = vmatpush1.bf16.msra.mxu0 %v5035
    %7561 = vmatprep.subr.bf16.mxu0 %v5044
    %7562 = vmatpush1.bf16.msra.mxu0 %v5043
    %7563 = vmatprep.subr.bf16.mxu0 %v5052
    %7564 = vmatpush1.bf16.msra.mxu0 %v5051
    %7565 = vmatprep.subr.bf16.mxu0 %v5060
    %7566 = vmatpush1.bf16.msra.mxu0 %v5059
    %7567 = vmatprep.subr.bf16.mxu0 %v5068
    %7568 = vmatpush1.bf16.msra.mxu0 %v5067
    %7569 = vmatprep.subr.bf16.mxu0 %v5076
    %7570 = vmatpush1.bf16.msra.mxu0 %v5075
    %7571 = vmatprep.mubr.bf16.mxu0 %v1336
    %7572 = vmatmul.mubr.bf16.gmra.mrb[0].mxu0 %v1335
    %v7573 = vpop.f32.mrb[0].mxu0
    %v7574 = vadd.f32 %v7533, %v7573
    %v7575 = vpop.f32.mrb[0].mxu0
    %v7576 = vadd.f32 %v7535, %v7575
    %v7577 = vpop.f32.mrb[0].mxu0
    %v7578 = vpop.f32.mrb[0].mxu0
    %7579 = vdwg.mxu0
    %7580 = vmatprep.subr.bf16.mxu0 %v5084
    %7581 = vmatpush1.bf16.msra.mxu0 %v5083
    %7582 = vmatprep.subr.bf16.mxu0 %v5092
    %7583 = vmatpush1.bf16.msra.mxu0 %v5091
    %7584 = vmatprep.subr.bf16.mxu0 %v5100
    %7585 = vmatpush1.bf16.msra.mxu0 %v5099
    %7586 = vmatprep.subr.bf16.mxu0 %v5108
    %7587 = vmatpush1.bf16.msra.mxu0 %v5107
    %7588 = vmatprep.subr.bf16.mxu0 %v5116
    %7589 = vmatpush1.bf16.msra.mxu0 %v5115
    %7590 = vmatprep.subr.bf16.mxu0 %v5124
    %7591 = vmatpush1.bf16.msra.mxu0 %v5123
    %7592 = vmatprep.subr.bf16.mxu0 %v5132
    %7593 = vmatpush1.bf16.msra.mxu0 %v5131
    %7594 = vmatprep.subr.bf16.mxu0 %v5140
    %7595 = vmatpush1.bf16.msra.mxu0 %v5139
    %7596 = vmatprep.subr.bf16.mxu0 %v5148
    %7597 = vmatpush1.bf16.msra.mxu0 %v5147
    %7598 = vmatprep.subr.bf16.mxu0 %v5156
    %7599 = vmatpush1.bf16.msra.mxu0 %v5155
    %7600 = vmatprep.subr.bf16.mxu0 %v5164
    %7601 = vmatpush1.bf16.msra.mxu0 %v5163
    %7602 = vmatprep.subr.bf16.mxu0 %v5172
    %7603 = vmatpush1.bf16.msra.mxu0 %v5171
    %7604 = vmatprep.subr.bf16.mxu0 %v5180
    %7605 = vmatpush1.bf16.msra.mxu0 %v5179
    %7606 = vmatprep.subr.bf16.mxu0 %v5188
    %7607 = vmatpush1.bf16.msra.mxu0 %v5187
    %7608 = vmatprep.subr.bf16.mxu0 %v5196
    %7609 = vmatpush1.bf16.msra.mxu0 %v5195
    %7610 = vmatprep.subr.bf16.mxu0 %v5204
    %7611 = vmatpush1.bf16.msra.mxu0 %v5203
    %7612 = vmatprep.mubr.bf16.mxu0 %v1338
    %7613 = vmatmul.mubr.bf16.gmra.mrb[0].mxu0 %v1337
    %v7614 = vpop.f32.mrb[0].mxu0
    %v7615 = vadd.f32 %v7574, %v7614
    %v7616 = vpop.f32.mrb[0].mxu0
    %v7617 = vadd.f32 %v7576, %v7616
    %v7618 = vpop.f32.mrb[0].mxu0
    %v7619 = vpop.f32.mrb[0].mxu0
    %7620 = vdwg.mxu0
    %7621 = vmatprep.subr.bf16.mxu0 %v5212
    %7622 = vmatpush1.bf16.msra.mxu0 %v5211
    %7623 = vmatprep.subr.bf16.mxu0 %v5220
    %7624 = vmatpush1.bf16.msra.mxu0 %v5219
    %7625 = vmatprep.subr.bf16.mxu0 %v5228
    %7626 = vmatpush1.bf16.msra.mxu0 %v5227
    %7627 = vmatprep.subr.bf16.mxu0 %v5236
    %7628 = vmatpush1.bf16.msra.mxu0 %v5235
    %7629 = vmatprep.subr.bf16.mxu0 %v5244
    %7630 = vmatpush1.bf16.msra.mxu0 %v5243
    %7631 = vmatprep.subr.bf16.mxu0 %v5252
    %7632 = vmatpush1.bf16.msra.mxu0 %v5251
    %7633 = vmatprep.subr.bf16.mxu0 %v5260
    %7634 = vmatpush1.bf16.msra.mxu0 %v5259
    %7635 = vmatprep.subr.bf16.mxu0 %v5268
    %7636 = vmatpush1.bf16.msra.mxu0 %v5267
    %7637 = vmatprep.subr.bf16.mxu0 %v5276
    %7638 = vmatpush1.bf16.msra.mxu0 %v5275
    %7639 = vmatprep.subr.bf16.mxu0 %v5284
    %7640 = vmatpush1.bf16.msra.mxu0 %v5283
    %7641 = vmatprep.subr.bf16.mxu0 %v5292
    %7642 = vmatpush1.bf16.msra.mxu0 %v5291
    %7643 = vmatprep.subr.bf16.mxu0 %v5300
    %7644 = vmatpush1.bf16.msra.mxu0 %v5299
    %7645 = vmatprep.subr.bf16.mxu0 %v5308
    %7646 = vmatpush1.bf16.msra.mxu0 %v5307
    %7647 = vmatprep.subr.bf16.mxu0 %v5316
    %7648 = vmatpush1.bf16.msra.mxu0 %v5315
    %7649 = vmatprep.subr.bf16.mxu0 %v5324
    %7650 = vmatpush1.bf16.msra.mxu0 %v5323
    %7651 = vmatprep.subr.bf16.mxu0 %v5332
    %7652 = vmatpush1.bf16.msra.mxu0 %v5331
    %7653 = vmatprep.mubr.bf16.mxu0 %v1340
    %7654 = vmatmul.mubr.bf16.gmra.mrb[0].mxu0 %v1339
    %v7655 = vpop.f32.mrb[0].mxu0
    %v7656 = vadd.f32 %v7615, %v7655
    %v7657 = vpop.f32.mrb[0].mxu0
    %v7658 = vadd.f32 %v7617, %v7657
    %v7659 = vpop.f32.mrb[0].mxu0
    %v7660 = vpop.f32.mrb[0].mxu0
    %7661 = vdwg.mxu0
    %7662 = vmatprep.subr.bf16.mxu0 %v5340
    %7663 = vmatpush1.bf16.msra.mxu0 %v5339
    %7664 = vmatprep.subr.bf16.mxu0 %v5348
    %7665 = vmatpush1.bf16.msra.mxu0 %v5347
    %7666 = vmatprep.subr.bf16.mxu0 %v5356
    %7667 = vmatpush1.bf16.msra.mxu0 %v5355
    %7668 = vmatprep.subr.bf16.mxu0 %v5364
    %7669 = vmatpush1.bf16.msra.mxu0 %v5363
    %7670 = vmatprep.subr.bf16.mxu0 %v5372
    %7671 = vmatpush1.bf16.msra.mxu0 %v5371
    %7672 = vmatprep.subr.bf16.mxu0 %v5380
    %7673 = vmatpush1.bf16.msra.mxu0 %v5379
    %7674 = vmatprep.subr.bf16.mxu0 %v5388
    %7675 = vmatpush1.bf16.msra.mxu0 %v5387
    %7676 = vmatprep.subr.bf16.mxu0 %v5396
    %7677 = vmatpush1.bf16.msra.mxu0 %v5395
    %7678 = vmatprep.subr.bf16.mxu0 %v5404
    %7679 = vmatpush1.bf16.msra.mxu0 %v5403
    %7680 = vmatprep.subr.bf16.mxu0 %v5412
    %7681 = vmatpush1.bf16.msra.mxu0 %v5411
    %7682 = vmatprep.subr.bf16.mxu0 %v5420
    %7683 = vmatpush1.bf16.msra.mxu0 %v5419
    %7684 = vmatprep.subr.bf16.mxu0 %v5428
    %7685 = vmatpush1.bf16.msra.mxu0 %v5427
    %7686 = vmatprep.subr.bf16.mxu0 %v5436
    %7687 = vmatpush1.bf16.msra.mxu0 %v5435
    %7688 = vmatprep.subr.bf16.mxu0 %v5444
    %7689 = vmatpush1.bf16.msra.mxu0 %v5443
    %7690 = vmatprep.subr.bf16.mxu0 %v5452
    %7691 = vmatpush1.bf16.msra.mxu0 %v5451
    %7692 = vmatprep.subr.bf16.mxu0 %v5460
    %7693 = vmatpush1.bf16.msra.mxu0 %v5459
    %7694 = vmatprep.mubr.bf16.mxu0 %v1342
    %7695 = vmatmul.mubr.bf16.gmra.mrb[0].mxu0 %v1341
    %v7696 = vpop.f32.mrb[0].mxu0
    %v7697 = vadd.f32 %v7656, %v7696
    %v7698 = vpop.f32.mrb[0].mxu0
    %v7699 = vadd.f32 %v7658, %v7698
    %v7700 = vpop.f32.mrb[0].mxu0
    %v7701 = vpop.f32.mrb[0].mxu0
    %7702 = vdwg.mxu0
    %7703 = vmatprep.subr.bf16.mxu0 %v5468
    %7704 = vmatpush1.bf16.msra.mxu0 %v5467
    %7705 = vmatprep.subr.bf16.mxu0 %v5476
    %7706 = vmatpush1.bf16.msra.mxu0 %v5475
    %7707 = vmatprep.subr.bf16.mxu0 %v5484
    %7708 = vmatpush1.bf16.msra.mxu0 %v5483
    %7709 = vmatprep.subr.bf16.mxu0 %v5492
    %7710 = vmatpush1.bf16.msra.mxu0 %v5491
    %7711 = vmatprep.subr.bf16.mxu0 %v5500
    %7712 = vmatpush1.bf16.msra.mxu0 %v5499
    %7713 = vmatprep.subr.bf16.mxu0 %v5508
    %7714 = vmatpush1.bf16.msra.mxu0 %v5507
    %7715 = vmatprep.subr.bf16.mxu0 %v5516
    %7716 = vmatpush1.bf16.msra.mxu0 %v5515
    %7717 = vmatprep.subr.bf16.mxu0 %v5524
    %7718 = vmatpush1.bf16.msra.mxu0 %v5523
    %7719 = vmatprep.subr.bf16.mxu0 %v5532
    %7720 = vmatpush1.bf16.msra.mxu0 %v5531
    %7721 = vmatprep.subr.bf16.mxu0 %v5540
    %7722 = vmatpush1.bf16.msra.mxu0 %v5539
    %7723 = vmatprep.subr.bf16.mxu0 %v5548
    %7724 = vmatpush1.bf16.msra.mxu0 %v5547
    %7725 = vmatprep.subr.bf16.mxu0 %v5556
    %7726 = vmatpush1.bf16.msra.mxu0 %v5555
    %7727 = vmatprep.subr.bf16.mxu0 %v5564
    %7728 = vmatpush1.bf16.msra.mxu0 %v5563
    %7729 = vmatprep.subr.bf16.mxu0 %v5572
    %7730 = vmatpush1.bf16.msra.mxu0 %v5571
    %7731 = vmatprep.subr.bf16.mxu0 %v5580
    %7732 = vmatpush1.bf16.msra.mxu0 %v5579
    %7733 = vmatprep.subr.bf16.mxu0 %v5588
    %7734 = vmatpush1.bf16.msra.mxu0 %v5587
    %7735 = vmatprep.mubr.bf16.mxu0 %v1344
    %7736 = vmatmul.mubr.bf16.gmra.mrb[0].mxu0 %v1343
    %v7737 = vpop.f32.mrb[0].mxu0
    %v7738 = vadd.f32 %v7697, %v7737
    %v7739 = vpop.f32.mrb[0].mxu0
    %v7740 = vadd.f32 %v7699, %v7739
    %v7741 = vpop.f32.mrb[0].mxu0
    %v7742 = vpop.f32.mrb[0].mxu0
    %7743 = vdwg.mxu0
    %7744 = vmatprep.subr.bf16.mxu0 %v5596
    %7745 = vmatpush1.bf16.msra.mxu0 %v5595
    %7746 = vmatprep.subr.bf16.mxu0 %v5604
    %7747 = vmatpush1.bf16.msra.mxu0 %v5603
    %7748 = vmatprep.subr.bf16.mxu0 %v5612
    %7749 = vmatpush1.bf16.msra.mxu0 %v5611
    %7750 = vmatprep.subr.bf16.mxu0 %v5620
    %7751 = vmatpush1.bf16.msra.mxu0 %v5619
    %7752 = vmatprep.subr.bf16.mxu0 %v5628
    %7753 = vmatpush1.bf16.msra.mxu0 %v5627
    %7754 = vmatprep.subr.bf16.mxu0 %v5636
    %7755 = vmatpush1.bf16.msra.mxu0 %v5635
    %7756 = vmatprep.subr.bf16.mxu0 %v5644
    %7757 = vmatpush1.bf16.msra.mxu0 %v5643
    %7758 = vmatprep.subr.bf16.mxu0 %v5652
    %7759 = vmatpush1.bf16.msra.mxu0 %v5651
    %7760 = vmatprep.subr.bf16.mxu0 %v5660
    %7761 = vmatpush1.bf16.msra.mxu0 %v5659
    %7762 = vmatprep.subr.bf16.mxu0 %v5668
    %7763 = vmatpush1.bf16.msra.mxu0 %v5667
    %7764 = vmatprep.subr.bf16.mxu0 %v5676
    %7765 = vmatpush1.bf16.msra.mxu0 %v5675
    %7766 = vmatprep.subr.bf16.mxu0 %v5684
    %7767 = vmatpush1.bf16.msra.mxu0 %v5683
    %7768 = vmatprep.subr.bf16.mxu0 %v5692
    %7769 = vmatpush1.bf16.msra.mxu0 %v5691
    %7770 = vmatprep.subr.bf16.mxu0 %v5700
    %7771 = vmatpush1.bf16.msra.mxu0 %v5699
    %7772 = vmatprep.subr.bf16.mxu0 %v5708
    %7773 = vmatpush1.bf16.msra.mxu0 %v5707
    %7774 = vmatprep.subr.bf16.mxu0 %v5716
    %7775 = vmatpush1.bf16.msra.mxu0 %v5715
    %7776 = vmatprep.mubr.bf16.mxu0 %v1346
    %7777 = vmatmul.mubr.bf16.gmra.mrb[0].mxu0 %v1345
    %v7778 = vpop.f32.mrb[0].mxu0
    %v7779 = vadd.f32 %v7738, %v7778
    %v7780 = vpop.f32.mrb[0].mxu0
    %v7781 = vadd.f32 %v7740, %v7780
    %v7782 = vpop.f32.mrb[0].mxu0
    %v7783 = vpop.f32.mrb[0].mxu0
    %7784 = vdwg.mxu0
    %7785 = vmatprep.subr.bf16.mxu0 %v5724
    %7786 = vmatpush1.bf16.msra.mxu0 %v5723
    %7787 = vmatprep.subr.bf16.mxu0 %v5732
    %7788 = vmatpush1.bf16.msra.mxu0 %v5731
    %7789 = vmatprep.subr.bf16.mxu0 %v5740
    %7790 = vmatpush1.bf16.msra.mxu0 %v5739
    %7791 = vmatprep.subr.bf16.mxu0 %v5748
    %7792 = vmatpush1.bf16.msra.mxu0 %v5747
    %7793 = vmatprep.subr.bf16.mxu0 %v5756
    %7794 = vmatpush1.bf16.msra.mxu0 %v5755
    %7795 = vmatprep.subr.bf16.mxu0 %v5764
    %7796 = vmatpush1.bf16.msra.mxu0 %v5763
    %7797 = vmatprep.subr.bf16.mxu0 %v5772
    %7798 = vmatpush1.bf16.msra.mxu0 %v5771
    %7799 = vmatprep.subr.bf16.mxu0 %v5780
    %7800 = vmatpush1.bf16.msra.mxu0 %v5779
    %7801 = vmatprep.subr.bf16.mxu0 %v5788
    %7802 = vmatpush1.bf16.msra.mxu0 %v5787
    %7803 = vmatprep.subr.bf16.mxu0 %v5796
    %7804 = vmatpush1.bf16.msra.mxu0 %v5795
    %7805 = vmatprep.subr.bf16.mxu0 %v5804
    %7806 = vmatpush1.bf16.msra.mxu0 %v5803
    %7807 = vmatprep.subr.bf16.mxu0 %v5812
    %7808 = vmatpush1.bf16.msra.mxu0 %v5811
    %7809 = vmatprep.subr.bf16.mxu0 %v5820
    %7810 = vmatpush1.bf16.msra.mxu0 %v5819
    %7811 = vmatprep.subr.bf16.mxu0 %v5828
    %7812 = vmatpush1.bf16.msra.mxu0 %v5827
    %7813 = vmatprep.subr.bf16.mxu0 %v5836
    %7814 = vmatpush1.bf16.msra.mxu0 %v5835
    %7815 = vmatprep.subr.bf16.mxu0 %v5844
    %7816 = vmatpush1.bf16.msra.mxu0 %v5843
    %7817 = vmatprep.mubr.bf16.mxu0 %v1348
    %7818 = vmatmul.mubr.bf16.gmra.mrb[0].mxu0 %v1347
    %v7819 = vpop.f32.mrb[0].mxu0
    %v7820 = vadd.f32 %v7779, %v7819
    %v7821 = vpop.f32.mrb[0].mxu0
    %v7822 = vadd.f32 %v7781, %v7821
    %v7823 = vpop.f32.mrb[0].mxu0
    %v7824 = vpop.f32.mrb[0].mxu0
    %7825 = vdwg.mxu0
    %7826 = vmatprep.subr.bf16.mxu0 %v5852
    %7827 = vmatpush1.bf16.msra.mxu0 %v5851
    %7828 = vmatprep.subr.bf16.mxu0 %v5860
    %7829 = vmatpush1.bf16.msra.mxu0 %v5859
    %7830 = vmatprep.subr.bf16.mxu0 %v5868
    %7831 = vmatpush1.bf16.msra.mxu0 %v5867
    %7832 = vmatprep.subr.bf16.mxu0 %v5876
    %7833 = vmatpush1.bf16.msra.mxu0 %v5875
    %7834 = vmatprep.subr.bf16.mxu0 %v5884
    %7835 = vmatpush1.bf16.msra.mxu0 %v5883
    %7836 = vmatprep.subr.bf16.mxu0 %v5892
    %7837 = vmatpush1.bf16.msra.mxu0 %v5891
    %7838 = vmatprep.subr.bf16.mxu0 %v5900
    %7839 = vmatpush1.bf16.msra.mxu0 %v5899
    %7840 = vmatprep.subr.bf16.mxu0 %v5908
    %7841 = vmatpush1.bf16.msra.mxu0 %v5907
    %7842 = vmatprep.subr.bf16.mxu0 %v5916
    %7843 = vmatpush1.bf16.msra.mxu0 %v5915
    %7844 = vmatprep.subr.bf16.mxu0 %v5924
    %7845 = vmatpush1.bf16.msra.mxu0 %v5923
    %7846 = vmatprep.subr.bf16.mxu0 %v5932
    %7847 = vmatpush1.bf16.msra.mxu0 %v5931
    %7848 = vmatprep.subr.bf16.mxu0 %v5940
    %7849 = vmatpush1.bf16.msra.mxu0 %v5939
    %7850 = vmatprep.subr.bf16.mxu0 %v5948
    %7851 = vmatpush1.bf16.msra.mxu0 %v5947
    %7852 = vmatprep.subr.bf16.mxu0 %v5956
    %7853 = vmatpush1.bf16.msra.mxu0 %v5955
    %7854 = vmatprep.subr.bf16.mxu0 %v5964
    %7855 = vmatpush1.bf16.msra.mxu0 %v5963
    %7856 = vmatprep.subr.bf16.mxu0 %v5972
    %7857 = vmatpush1.bf16.msra.mxu0 %v5971
    %7858 = vmatprep.mubr.bf16.mxu0 %v1350
    %7859 = vmatmul.mubr.bf16.gmra.mrb[0].mxu0 %v1349
    %v7860 = vpop.f32.mrb[0].mxu0
    %v7861 = vadd.f32 %v7820, %v7860
    %v7862 = vpop.f32.mrb[0].mxu0
    %v7863 = vadd.f32 %v7822, %v7862
    %v7864 = vpop.f32.mrb[0].mxu0
    %v7865 = vpop.f32.mrb[0].mxu0
    %7866 = vdwg.mxu0
    %7867 = vmatprep.subr.bf16.mxu0 %v4830
    %7868 = vmatpush1.bf16.msra.mxu0 %v4829
    %7869 = vmatprep.subr.bf16.mxu0 %v4838
    %7870 = vmatpush1.bf16.msra.mxu0 %v4837
    %7871 = vmatprep.subr.bf16.mxu0 %v4846
    %7872 = vmatpush1.bf16.msra.mxu0 %v4845
    %7873 = vmatprep.subr.bf16.mxu0 %v4854
    %7874 = vmatpush1.bf16.msra.mxu0 %v4853
    %7875 = vmatprep.subr.bf16.mxu0 %v4862
    %7876 = vmatpush1.bf16.msra.mxu0 %v4861
    %7877 = vmatprep.subr.bf16.mxu0 %v4870
    %7878 = vmatpush1.bf16.msra.mxu0 %v4869
    %7879 = vmatprep.subr.bf16.mxu0 %v4878
    %7880 = vmatpush1.bf16.msra.mxu0 %v4877
    %7881 = vmatprep.subr.bf16.mxu0 %v4886
    %7882 = vmatpush1.bf16.msra.mxu0 %v4885
    %7883 = vmatprep.subr.bf16.mxu0 %v4894
    %7884 = vmatpush1.bf16.msra.mxu0 %v4893
    %7885 = vmatprep.subr.bf16.mxu0 %v4902
    %7886 = vmatpush1.bf16.msra.mxu0 %v4901
    %7887 = vmatprep.subr.bf16.mxu0 %v4910
    %7888 = vmatpush1.bf16.msra.mxu0 %v4909
    %7889 = vmatprep.subr.bf16.mxu0 %v4918
    %7890 = vmatpush1.bf16.msra.mxu0 %v4917
    %7891 = vmatprep.subr.bf16.mxu0 %v4926
    %7892 = vmatpush1.bf16.msra.mxu0 %v4925
    %7893 = vmatprep.subr.bf16.mxu0 %v4934
    %7894 = vmatpush1.bf16.msra.mxu0 %v4933
    %7895 = vmatprep.subr.bf16.mxu0 %v4942
    %7896 = vmatpush1.bf16.msra.mxu0 %v4941
    %7897 = vmatprep.subr.bf16.mxu0 %v4950
    %7898 = vmatpush1.bf16.msra.mxu0 %v4949
    %7899 = vmatprep.mubr.bf16.mxu0 %v1334
    %7900 = vmatmul.mubr.bf16.gmra.mrb[0].mxu0 %v1333
    %v7901 = vpop.f32.mrb[0].mxu0
    %v7902 = vadd.f32 %v1285, %v7901
    %v7903 = vpop.f32.mrb[0].mxu0
    %v7904 = vadd.f32 %v1289, %v7903
    %v7905 = vpop.f32.mrb[0].mxu0
    %v7906 = vpop.f32.mrb[0].mxu0
    %7907 = vdwg.mxu0
    %7908 = vmatprep.subr.bf16.mxu0 %v4958
    %7909 = vmatpush1.bf16.msra.mxu0 %v4957
    %7910 = vmatprep.subr.bf16.mxu0 %v4966
    %7911 = vmatpush1.bf16.msra.mxu0 %v4965
    %7912 = vmatprep.subr.bf16.mxu0 %v4974
    %7913 = vmatpush1.bf16.msra.mxu0 %v4973
    %7914 = vmatprep.subr.bf16.mxu0 %v4982
    %7915 = vmatpush1.bf16.msra.mxu0 %v4981
    %7916 = vmatprep.subr.bf16.mxu0 %v4990
    %7917 = vmatpush1.bf16.msra.mxu0 %v4989
    %7918 = vmatprep.subr.bf16.mxu0 %v4998
    %7919 = vmatpush1.bf16.msra.mxu0 %v4997
    %7920 = vmatprep.subr.bf16.mxu0 %v5006
    %7921 = vmatpush1.bf16.msra.mxu0 %v5005
    %7922 = vmatprep.subr.bf16.mxu0 %v5014
    %7923 = vmatpush1.bf16.msra.mxu0 %v5013
    %7924 = vmatprep.subr.bf16.mxu0 %v5022
    %7925 = vmatpush1.bf16.msra.mxu0 %v5021
    %7926 = vmatprep.subr.bf16.mxu0 %v5030
    %7927 = vmatpush1.bf16.msra.mxu0 %v5029
    %7928 = vmatprep.subr.bf16.mxu0 %v5038
    %7929 = vmatpush1.bf16.msra.mxu0 %v5037
    %7930 = vmatprep.subr.bf16.mxu0 %v5046
    %7931 = vmatpush1.bf16.msra.mxu0 %v5045
    %7932 = vmatprep.subr.bf16.mxu0 %v5054
    %7933 = vmatpush1.bf16.msra.mxu0 %v5053
    %7934 = vmatprep.subr.bf16.mxu0 %v5062
    %7935 = vmatpush1.bf16.msra.mxu0 %v5061
    %7936 = vmatprep.subr.bf16.mxu0 %v5070
    %7937 = vmatpush1.bf16.msra.mxu0 %v5069
    %7938 = vmatprep.subr.bf16.mxu0 %v5078
    %7939 = vmatpush1.bf16.msra.mxu0 %v5077
    %7940 = vmatprep.mubr.bf16.mxu0 %v1336
    %7941 = vmatmul.mubr.bf16.gmra.mrb[0].mxu0 %v1335
    %v7942 = vpop.f32.mrb[0].mxu0
    %v7943 = vadd.f32 %v7902, %v7942
    %v7944 = vpop.f32.mrb[0].mxu0
    %v7945 = vadd.f32 %v7904, %v7944
    %v7946 = vpop.f32.mrb[0].mxu0
    %v7947 = vpop.f32.mrb[0].mxu0
    %7948 = vdwg.mxu0
    %7949 = vmatprep.subr.bf16.mxu0 %v5086
    %7950 = vmatpush1.bf16.msra.mxu0 %v5085
    %7951 = vmatprep.subr.bf16.mxu0 %v5094
    %7952 = vmatpush1.bf16.msra.mxu0 %v5093
    %7953 = vmatprep.subr.bf16.mxu0 %v5102
    %7954 = vmatpush1.bf16.msra.mxu0 %v5101
    %7955 = vmatprep.subr.bf16.mxu0 %v5110
    %7956 = vmatpush1.bf16.msra.mxu0 %v5109
    %7957 = vmatprep.subr.bf16.mxu0 %v5118
    %7958 = vmatpush1.bf16.msra.mxu0 %v5117
    %7959 = vmatprep.subr.bf16.mxu0 %v5126
    %7960 = vmatpush1.bf16.msra.mxu0 %v5125
    %7961 = vmatprep.subr.bf16.mxu0 %v5134
    %7962 = vmatpush1.bf16.msra.mxu0 %v5133
    %7963 = vmatprep.subr.bf16.mxu0 %v5142
    %7964 = vmatpush1.bf16.msra.mxu0 %v5141
    %7965 = vmatprep.subr.bf16.mxu0 %v5150
    %7966 = vmatpush1.bf16.msra.mxu0 %v5149
    %7967 = vmatprep.subr.bf16.mxu0 %v5158
    %7968 = vmatpush1.bf16.msra.mxu0 %v5157
    %7969 = vmatprep.subr.bf16.mxu0 %v5166
    %7970 = vmatpush1.bf16.msra.mxu0 %v5165
    %7971 = vmatprep.subr.bf16.mxu0 %v5174
    %7972 = vmatpush1.bf16.msra.mxu0 %v5173
    %7973 = vmatprep.subr.bf16.mxu0 %v5182
    %7974 = vmatpush1.bf16.msra.mxu0 %v5181
    %7975 = vmatprep.subr.bf16.mxu0 %v5190
    %7976 = vmatpush1.bf16.msra.mxu0 %v5189
    %7977 = vmatprep.subr.bf16.mxu0 %v5198
    %7978 = vmatpush1.bf16.msra.mxu0 %v5197
    %7979 = vmatprep.subr.bf16.mxu0 %v5206
    %7980 = vmatpush1.bf16.msra.mxu0 %v5205
    %7981 = vmatprep.mubr.bf16.mxu0 %v1338
    %7982 = vmatmul.mubr.bf16.gmra.mrb[0].mxu0 %v1337
    %v7983 = vpop.f32.mrb[0].mxu0
    %v7984 = vadd.f32 %v7943, %v7983
    %v7985 = vpop.f32.mrb[0].mxu0
    %v7986 = vadd.f32 %v7945, %v7985
    %v7987 = vpop.f32.mrb[0].mxu0
    %v7988 = vpop.f32.mrb[0].mxu0
    %7989 = vdwg.mxu0
    %7990 = vmatprep.subr.bf16.mxu0 %v5214
    %7991 = vmatpush1.bf16.msra.mxu0 %v5213
    %7992 = vmatprep.subr.bf16.mxu0 %v5222
    %7993 = vmatpush1.bf16.msra.mxu0 %v5221
    %7994 = vmatprep.subr.bf16.mxu0 %v5230
    %7995 = vmatpush1.bf16.msra.mxu0 %v5229
    %7996 = vmatprep.subr.bf16.mxu0 %v5238
    %7997 = vmatpush1.bf16.msra.mxu0 %v5237
    %7998 = vmatprep.subr.bf16.mxu0 %v5246
    %7999 = vmatpush1.bf16.msra.mxu0 %v5245
    %8000 = vmatprep.subr.bf16.mxu0 %v5254
    %8001 = vmatpush1.bf16.msra.mxu0 %v5253
    %8002 = vmatprep.subr.bf16.mxu0 %v5262
    %8003 = vmatpush1.bf16.msra.mxu0 %v5261
    %8004 = vmatprep.subr.bf16.mxu0 %v5270
    %8005 = vmatpush1.bf16.msra.mxu0 %v5269
    %8006 = vmatprep.subr.bf16.mxu0 %v5278
    %8007 = vmatpush1.bf16.msra.mxu0 %v5277
    %8008 = vmatprep.subr.bf16.mxu0 %v5286
    %8009 = vmatpush1.bf16.msra.mxu0 %v5285
    %8010 = vmatprep.subr.bf16.mxu0 %v5294
    %8011 = vmatpush1.bf16.msra.mxu0 %v5293
    %8012 = vmatprep.subr.bf16.mxu0 %v5302
    %8013 = vmatpush1.bf16.msra.mxu0 %v5301
    %8014 = vmatprep.subr.bf16.mxu0 %v5310
    %8015 = vmatpush1.bf16.msra.mxu0 %v5309
    %8016 = vmatprep.subr.bf16.mxu0 %v5318
    %8017 = vmatpush1.bf16.msra.mxu0 %v5317
    %8018 = vmatprep.subr.bf16.mxu0 %v5326
    %8019 = vmatpush1.bf16.msra.mxu0 %v5325
    %8020 = vmatprep.subr.bf16.mxu0 %v5334
    %8021 = vmatpush1.bf16.msra.mxu0 %v5333
    %8022 = vmatprep.mubr.bf16.mxu0 %v1340
    %8023 = vmatmul.mubr.bf16.gmra.mrb[0].mxu0 %v1339
    %v8024 = vpop.f32.mrb[0].mxu0
    %v8025 = vadd.f32 %v7984, %v8024
    %v8026 = vpop.f32.mrb[0].mxu0
    %v8027 = vadd.f32 %v7986, %v8026
    %v8028 = vpop.f32.mrb[0].mxu0
    %v8029 = vpop.f32.mrb[0].mxu0
    %8030 = vdwg.mxu0
    %8031 = vmatprep.subr.bf16.mxu0 %v5342
    %8032 = vmatpush1.bf16.msra.mxu0 %v5341
    %8033 = vmatprep.subr.bf16.mxu0 %v5350
    %8034 = vmatpush1.bf16.msra.mxu0 %v5349
    %8035 = vmatprep.subr.bf16.mxu0 %v5358
    %8036 = vmatpush1.bf16.msra.mxu0 %v5357
    %8037 = vmatprep.subr.bf16.mxu0 %v5366
    %8038 = vmatpush1.bf16.msra.mxu0 %v5365
    %8039 = vmatprep.subr.bf16.mxu0 %v5374
    %8040 = vmatpush1.bf16.msra.mxu0 %v5373
    %8041 = vmatprep.subr.bf16.mxu0 %v5382
    %8042 = vmatpush1.bf16.msra.mxu0 %v5381
    %8043 = vmatprep.subr.bf16.mxu0 %v5390
    %8044 = vmatpush1.bf16.msra.mxu0 %v5389
    %8045 = vmatprep.subr.bf16.mxu0 %v5398
    %8046 = vmatpush1.bf16.msra.mxu0 %v5397
    %8047 = vmatprep.subr.bf16.mxu0 %v5406
    %8048 = vmatpush1.bf16.msra.mxu0 %v5405
    %8049 = vmatprep.subr.bf16.mxu0 %v5414
    %8050 = vmatpush1.bf16.msra.mxu0 %v5413
    %8051 = vmatprep.subr.bf16.mxu0 %v5422
    %8052 = vmatpush1.bf16.msra.mxu0 %v5421
    %8053 = vmatprep.subr.bf16.mxu0 %v5430
    %8054 = vmatpush1.bf16.msra.mxu0 %v5429
    %8055 = vmatprep.subr.bf16.mxu0 %v5438
    %8056 = vmatpush1.bf16.msra.mxu0 %v5437
    %8057 = vmatprep.subr.bf16.mxu0 %v5446
    %8058 = vmatpush1.bf16.msra.mxu0 %v5445
    %8059 = vmatprep.subr.bf16.mxu0 %v5454
    %8060 = vmatpush1.bf16.msra.mxu0 %v5453
    %8061 = vmatprep.subr.bf16.mxu0 %v5462
    %8062 = vmatpush1.bf16.msra.mxu0 %v5461
    %8063 = vmatprep.mubr.bf16.mxu0 %v1342
    %8064 = vmatmul.mubr.bf16.gmra.mrb[0].mxu0 %v1341
    %v8065 = vpop.f32.mrb[0].mxu0
    %v8066 = vadd.f32 %v8025, %v8065
    %v8067 = vpop.f32.mrb[0].mxu0
    %v8068 = vadd.f32 %v8027, %v8067
    %v8069 = vpop.f32.mrb[0].mxu0
    %v8070 = vpop.f32.mrb[0].mxu0
    %8071 = vdwg.mxu0
    %8072 = vmatprep.subr.bf16.mxu0 %v5470
    %8073 = vmatpush1.bf16.msra.mxu0 %v5469
    %8074 = vmatprep.subr.bf16.mxu0 %v5478
    %8075 = vmatpush1.bf16.msra.mxu0 %v5477
    %8076 = vmatprep.subr.bf16.mxu0 %v5486
    %8077 = vmatpush1.bf16.msra.mxu0 %v5485
    %8078 = vmatprep.subr.bf16.mxu0 %v5494
    %8079 = vmatpush1.bf16.msra.mxu0 %v5493
    %8080 = vmatprep.subr.bf16.mxu0 %v5502
    %8081 = vmatpush1.bf16.msra.mxu0 %v5501
    %8082 = vmatprep.subr.bf16.mxu0 %v5510
    %8083 = vmatpush1.bf16.msra.mxu0 %v5509
    %8084 = vmatprep.subr.bf16.mxu0 %v5518
    %8085 = vmatpush1.bf16.msra.mxu0 %v5517
    %8086 = vmatprep.subr.bf16.mxu0 %v5526
    %8087 = vmatpush1.bf16.msra.mxu0 %v5525
    %8088 = vmatprep.subr.bf16.mxu0 %v5534
    %8089 = vmatpush1.bf16.msra.mxu0 %v5533
    %8090 = vmatprep.subr.bf16.mxu0 %v5542
    %8091 = vmatpush1.bf16.msra.mxu0 %v5541
    %8092 = vmatprep.subr.bf16.mxu0 %v5550
    %8093 = vmatpush1.bf16.msra.mxu0 %v5549
    %8094 = vmatprep.subr.bf16.mxu0 %v5558
    %8095 = vmatpush1.bf16.msra.mxu0 %v5557
    %8096 = vmatprep.subr.bf16.mxu0 %v5566
    %8097 = vmatpush1.bf16.msra.mxu0 %v5565
    %8098 = vmatprep.subr.bf16.mxu0 %v5574
    %8099 = vmatpush1.bf16.msra.mxu0 %v5573
    %8100 = vmatprep.subr.bf16.mxu0 %v5582
    %8101 = vmatpush1.bf16.msra.mxu0 %v5581
    %8102 = vmatprep.subr.bf16.mxu0 %v5590
    %8103 = vmatpush1.bf16.msra.mxu0 %v5589
    %8104 = vmatprep.mubr.bf16.mxu0 %v1344
    %8105 = vmatmul.mubr.bf16.gmra.mrb[0].mxu0 %v1343
    %v8106 = vpop.f32.mrb[0].mxu0
    %v8107 = vadd.f32 %v8066, %v8106
    %v8108 = vpop.f32.mrb[0].mxu0
    %v8109 = vadd.f32 %v8068, %v8108
    %v8110 = vpop.f32.mrb[0].mxu0
    %v8111 = vpop.f32.mrb[0].mxu0
    %8112 = vdwg.mxu0
    %8113 = vmatprep.subr.bf16.mxu0 %v5598
    %8114 = vmatpush1.bf16.msra.mxu0 %v5597
    %8115 = vmatprep.subr.bf16.mxu0 %v5606
    %8116 = vmatpush1.bf16.msra.mxu0 %v5605
    %8117 = vmatprep.subr.bf16.mxu0 %v5614
    %8118 = vmatpush1.bf16.msra.mxu0 %v5613
    %8119 = vmatprep.subr.bf16.mxu0 %v5622
    %8120 = vmatpush1.bf16.msra.mxu0 %v5621
    %8121 = vmatprep.subr.bf16.mxu0 %v5630
    %8122 = vmatpush1.bf16.msra.mxu0 %v5629
    %8123 = vmatprep.subr.bf16.mxu0 %v5638
    %8124 = vmatpush1.bf16.msra.mxu0 %v5637
    %8125 = vmatprep.subr.bf16.mxu0 %v5646
    %8126 = vmatpush1.bf16.msra.mxu0 %v5645
    %8127 = vmatprep.subr.bf16.mxu0 %v5654
    %8128 = vmatpush1.bf16.msra.mxu0 %v5653
    %8129 = vmatprep.subr.bf16.mxu0 %v5662
    %8130 = vmatpush1.bf16.msra.mxu0 %v5661
    %8131 = vmatprep.subr.bf16.mxu0 %v5670
    %8132 = vmatpush1.bf16.msra.mxu0 %v5669
    %8133 = vmatprep.subr.bf16.mxu0 %v5678
    %8134 = vmatpush1.bf16.msra.mxu0 %v5677
    %8135 = vmatprep.subr.bf16.mxu0 %v5686
    %8136 = vmatpush1.bf16.msra.mxu0 %v5685
    %8137 = vmatprep.subr.bf16.mxu0 %v5694
    %8138 = vmatpush1.bf16.msra.mxu0 %v5693
    %8139 = vmatprep.subr.bf16.mxu0 %v5702
    %8140 = vmatpush1.bf16.msra.mxu0 %v5701
    %8141 = vmatprep.subr.bf16.mxu0 %v5710
    %8142 = vmatpush1.bf16.msra.mxu0 %v5709
    %8143 = vmatprep.subr.bf16.mxu0 %v5718
    %8144 = vmatpush1.bf16.msra.mxu0 %v5717
    %8145 = vmatprep.mubr.bf16.mxu0 %v1346
    %8146 = vmatmul.mubr.bf16.gmra.mrb[0].mxu0 %v1345
    %v8147 = vpop.f32.mrb[0].mxu0
    %v8148 = vadd.f32 %v8107, %v8147
    %v8149 = vpop.f32.mrb[0].mxu0
    %v8150 = vadd.f32 %v8109, %v8149
    %v8151 = vpop.f32.mrb[0].mxu0
    %v8152 = vpop.f32.mrb[0].mxu0
    %8153 = vdwg.mxu0
    %8154 = vmatprep.subr.bf16.mxu0 %v5726
    %8155 = vmatpush1.bf16.msra.mxu0 %v5725
    %8156 = vmatprep.subr.bf16.mxu0 %v5734
    %8157 = vmatpush1.bf16.msra.mxu0 %v5733
    %8158 = vmatprep.subr.bf16.mxu0 %v5742
    %8159 = vmatpush1.bf16.msra.mxu0 %v5741
    %8160 = vmatprep.subr.bf16.mxu0 %v5750
    %8161 = vmatpush1.bf16.msra.mxu0 %v5749
    %8162 = vmatprep.subr.bf16.mxu0 %v5758
    %8163 = vmatpush1.bf16.msra.mxu0 %v5757
    %8164 = vmatprep.subr.bf16.mxu0 %v5766
    %8165 = vmatpush1.bf16.msra.mxu0 %v5765
    %8166 = vmatprep.subr.bf16.mxu0 %v5774
    %8167 = vmatpush1.bf16.msra.mxu0 %v5773
    %8168 = vmatprep.subr.bf16.mxu0 %v5782
    %8169 = vmatpush1.bf16.msra.mxu0 %v5781
    %8170 = vmatprep.subr.bf16.mxu0 %v5790
    %8171 = vmatpush1.bf16.msra.mxu0 %v5789
    %8172 = vmatprep.subr.bf16.mxu0 %v5798
    %8173 = vmatpush1.bf16.msra.mxu0 %v5797
    %8174 = vmatprep.subr.bf16.mxu0 %v5806
    %8175 = vmatpush1.bf16.msra.mxu0 %v5805
    %8176 = vmatprep.subr.bf16.mxu0 %v5814
    %8177 = vmatpush1.bf16.msra.mxu0 %v5813
    %8178 = vmatprep.subr.bf16.mxu0 %v5822
    %8179 = vmatpush1.bf16.msra.mxu0 %v5821
    %8180 = vmatprep.subr.bf16.mxu0 %v5830
    %8181 = vmatpush1.bf16.msra.mxu0 %v5829
    %8182 = vmatprep.subr.bf16.mxu0 %v5838
    %8183 = vmatpush1.bf16.msra.mxu0 %v5837
    %8184 = vmatprep.subr.bf16.mxu0 %v5846
    %8185 = vmatpush1.bf16.msra.mxu0 %v5845
    %8186 = vmatprep.mubr.bf16.mxu0 %v1348
    %8187 = vmatmul.mubr.bf16.gmra.mrb[0].mxu0 %v1347
    %v8188 = vpop.f32.mrb[0].mxu0
    %v8189 = vadd.f32 %v8148, %v8188
    %v8190 = vpop.f32.mrb[0].mxu0
    %v8191 = vadd.f32 %v8150, %v8190
    %v8192 = vpop.f32.mrb[0].mxu0
    %v8193 = vpop.f32.mrb[0].mxu0
    %8194 = vdwg.mxu0
    %8195 = vmatprep.subr.bf16.mxu0 %v5854
    %8196 = vmatpush1.bf16.msra.mxu0 %v5853
    %8197 = vmatprep.subr.bf16.mxu0 %v5862
    %8198 = vmatpush1.bf16.msra.mxu0 %v5861
    %8199 = vmatprep.subr.bf16.mxu0 %v5870
    %8200 = vmatpush1.bf16.msra.mxu0 %v5869
    %8201 = vmatprep.subr.bf16.mxu0 %v5878
    %8202 = vmatpush1.bf16.msra.mxu0 %v5877
    %8203 = vmatprep.subr.bf16.mxu0 %v5886
    %8204 = vmatpush1.bf16.msra.mxu0 %v5885
    %8205 = vmatprep.subr.bf16.mxu0 %v5894
    %8206 = vmatpush1.bf16.msra.mxu0 %v5893
    %8207 = vmatprep.subr.bf16.mxu0 %v5902
    %8208 = vmatpush1.bf16.msra.mxu0 %v5901
    %8209 = vmatprep.subr.bf16.mxu0 %v5910
    %8210 = vmatpush1.bf16.msra.mxu0 %v5909
    %8211 = vmatprep.subr.bf16.mxu0 %v5918
    %8212 = vmatpush1.bf16.msra.mxu0 %v5917
    %8213 = vmatprep.subr.bf16.mxu0 %v5926
    %8214 = vmatpush1.bf16.msra.mxu0 %v5925
    %8215 = vmatprep.subr.bf16.mxu0 %v5934
    %8216 = vmatpush1.bf16.msra.mxu0 %v5933
    %8217 = vmatprep.subr.bf16.mxu0 %v5942
    %8218 = vmatpush1.bf16.msra.mxu0 %v5941
    %8219 = vmatprep.subr.bf16.mxu0 %v5950
    %8220 = vmatpush1.bf16.msra.mxu0 %v5949
    %8221 = vmatprep.subr.bf16.mxu0 %v5958
    %8222 = vmatpush1.bf16.msra.mxu0 %v5957
    %8223 = vmatprep.subr.bf16.mxu0 %v5966
    %8224 = vmatpush1.bf16.msra.mxu0 %v5965
    %8225 = vmatprep.subr.bf16.mxu0 %v5974
    %8226 = vmatpush1.bf16.msra.mxu0 %v5973
    %8227 = vmatprep.mubr.bf16.mxu0 %v1350
    %8228 = vmatmul.mubr.bf16.gmra.mrb[0].mxu0 %v1349
    %v8229 = vpop.f32.mrb[0].mxu0
    %v8230 = vadd.f32 %v8189, %v8229
    %v8231 = vpop.f32.mrb[0].mxu0
    %v8232 = vadd.f32 %v8191, %v8231
    %v8233 = vpop.f32.mrb[0].mxu0
    %v8234 = vpop.f32.mrb[0].mxu0
    %8235 = vdwg.mxu0
    %8236 = vmatprep.subr.bf16.mxu0 %v4832
    %8237 = vmatpush1.bf16.msra.mxu0 %v4831
    %8238 = vmatprep.subr.bf16.mxu0 %v4840
    %8239 = vmatpush1.bf16.msra.mxu0 %v4839
    %8240 = vmatprep.subr.bf16.mxu0 %v4848
    %8241 = vmatpush1.bf16.msra.mxu0 %v4847
    %8242 = vmatprep.subr.bf16.mxu0 %v4856
    %8243 = vmatpush1.bf16.msra.mxu0 %v4855
    %8244 = vmatprep.subr.bf16.mxu0 %v4864
    %8245 = vmatpush1.bf16.msra.mxu0 %v4863
    %8246 = vmatprep.subr.bf16.mxu0 %v4872
    %8247 = vmatpush1.bf16.msra.mxu0 %v4871
    %8248 = vmatprep.subr.bf16.mxu0 %v4880
    %8249 = vmatpush1.bf16.msra.mxu0 %v4879
    %8250 = vmatprep.subr.bf16.mxu0 %v4888
    %8251 = vmatpush1.bf16.msra.mxu0 %v4887
    %8252 = vmatprep.subr.bf16.mxu0 %v4896
    %8253 = vmatpush1.bf16.msra.mxu0 %v4895
    %8254 = vmatprep.subr.bf16.mxu0 %v4904
    %8255 = vmatpush1.bf16.msra.mxu0 %v4903
    %8256 = vmatprep.subr.bf16.mxu0 %v4912
    %8257 = vmatpush1.bf16.msra.mxu0 %v4911
    %8258 = vmatprep.subr.bf16.mxu0 %v4920
    %8259 = vmatpush1.bf16.msra.mxu0 %v4919
    %8260 = vmatprep.subr.bf16.mxu0 %v4928
    %8261 = vmatpush1.bf16.msra.mxu0 %v4927
    %8262 = vmatprep.subr.bf16.mxu0 %v4936
    %8263 = vmatpush1.bf16.msra.mxu0 %v4935
    %8264 = vmatprep.subr.bf16.mxu0 %v4944
    %8265 = vmatpush1.bf16.msra.mxu0 %v4943
    %8266 = vmatprep.subr.bf16.mxu0 %v4952
    %8267 = vmatpush1.bf16.msra.mxu0 %v4951
    %8268 = vmatprep.mubr.bf16.mxu0 %v1334
    %8269 = vmatmul.mubr.bf16.gmra.mrb[0].mxu0 %v1333
    %v8270 = vpop.f32.mrb[0].mxu0
    %v8271 = vadd.f32 %v1293, %v8270
    %v8272 = vpop.f32.mrb[0].mxu0
    %v8273 = vadd.f32 %v1297, %v8272
    %v8274 = vpop.f32.mrb[0].mxu0
    %v8275 = vpop.f32.mrb[0].mxu0
    %8276 = vdwg.mxu0
    %8277 = vmatprep.subr.bf16.mxu0 %v4960
    %8278 = vmatpush1.bf16.msra.mxu0 %v4959
    %8279 = vmatprep.subr.bf16.mxu0 %v4968
    %8280 = vmatpush1.bf16.msra.mxu0 %v4967
    %8281 = vmatprep.subr.bf16.mxu0 %v4976
    %8282 = vmatpush1.bf16.msra.mxu0 %v4975
    %8283 = vmatprep.subr.bf16.mxu0 %v4984
    %8284 = vmatpush1.bf16.msra.mxu0 %v4983
    %8285 = vmatprep.subr.bf16.mxu0 %v4992
    %8286 = vmatpush1.bf16.msra.mxu0 %v4991
    %8287 = vmatprep.subr.bf16.mxu0 %v5000
    %8288 = vmatpush1.bf16.msra.mxu0 %v4999
    %8289 = vmatprep.subr.bf16.mxu0 %v5008
    %8290 = vmatpush1.bf16.msra.mxu0 %v5007
    %8291 = vmatprep.subr.bf16.mxu0 %v5016
    %8292 = vmatpush1.bf16.msra.mxu0 %v5015
    %8293 = vmatprep.subr.bf16.mxu0 %v5024
    %8294 = vmatpush1.bf16.msra.mxu0 %v5023
    %8295 = vmatprep.subr.bf16.mxu0 %v5032
    %8296 = vmatpush1.bf16.msra.mxu0 %v5031
    %8297 = vmatprep.subr.bf16.mxu0 %v5040
    %8298 = vmatpush1.bf16.msra.mxu0 %v5039
    %8299 = vmatprep.subr.bf16.mxu0 %v5048
    %8300 = vmatpush1.bf16.msra.mxu0 %v5047
    %8301 = vmatprep.subr.bf16.mxu0 %v5056
    %8302 = vmatpush1.bf16.msra.mxu0 %v5055
    %8303 = vmatprep.subr.bf16.mxu0 %v5064
    %8304 = vmatpush1.bf16.msra.mxu0 %v5063
    %8305 = vmatprep.subr.bf16.mxu0 %v5072
    %8306 = vmatpush1.bf16.msra.mxu0 %v5071
    %8307 = vmatprep.subr.bf16.mxu0 %v5080
    %8308 = vmatpush1.bf16.msra.mxu0 %v5079
    %8309 = vmatprep.mubr.bf16.mxu0 %v1336
    %8310 = vmatmul.mubr.bf16.gmra.mrb[0].mxu0 %v1335
    %v8311 = vpop.f32.mrb[0].mxu0
    %v8312 = vadd.f32 %v8271, %v8311
    %v8313 = vpop.f32.mrb[0].mxu0
    %v8314 = vadd.f32 %v8273, %v8313
    %v8315 = vpop.f32.mrb[0].mxu0
    %v8316 = vpop.f32.mrb[0].mxu0
    %8317 = vdwg.mxu0
    %8318 = vmatprep.subr.bf16.mxu0 %v5088
    %8319 = vmatpush1.bf16.msra.mxu0 %v5087
    %8320 = vmatprep.subr.bf16.mxu0 %v5096
    %8321 = vmatpush1.bf16.msra.mxu0 %v5095
    %8322 = vmatprep.subr.bf16.mxu0 %v5104
    %8323 = vmatpush1.bf16.msra.mxu0 %v5103
    %8324 = vmatprep.subr.bf16.mxu0 %v5112
    %8325 = vmatpush1.bf16.msra.mxu0 %v5111
    %8326 = vmatprep.subr.bf16.mxu0 %v5120
    %8327 = vmatpush1.bf16.msra.mxu0 %v5119
    %8328 = vmatprep.subr.bf16.mxu0 %v5128
    %8329 = vmatpush1.bf16.msra.mxu0 %v5127
    %8330 = vmatprep.subr.bf16.mxu0 %v5136
    %8331 = vmatpush1.bf16.msra.mxu0 %v5135
    %8332 = vmatprep.subr.bf16.mxu0 %v5144
    %8333 = vmatpush1.bf16.msra.mxu0 %v5143
    %8334 = vmatprep.subr.bf16.mxu0 %v5152
    %8335 = vmatpush1.bf16.msra.mxu0 %v5151
    %8336 = vmatprep.subr.bf16.mxu0 %v5160
    %8337 = vmatpush1.bf16.msra.mxu0 %v5159
    %8338 = vmatprep.subr.bf16.mxu0 %v5168
    %8339 = vmatpush1.bf16.msra.mxu0 %v5167
    %8340 = vmatprep.subr.bf16.mxu0 %v5176
    %8341 = vmatpush1.bf16.msra.mxu0 %v5175
    %8342 = vmatprep.subr.bf16.mxu0 %v5184
    %8343 = vmatpush1.bf16.msra.mxu0 %v5183
    %8344 = vmatprep.subr.bf16.mxu0 %v5192
    %8345 = vmatpush1.bf16.msra.mxu0 %v5191
    %8346 = vmatprep.subr.bf16.mxu0 %v5200
    %8347 = vmatpush1.bf16.msra.mxu0 %v5199
    %8348 = vmatprep.subr.bf16.mxu0 %v5208
    %8349 = vmatpush1.bf16.msra.mxu0 %v5207
    %8350 = vmatprep.mubr.bf16.mxu0 %v1338
    %8351 = vmatmul.mubr.bf16.gmra.mrb[0].mxu0 %v1337
    %v8352 = vpop.f32.mrb[0].mxu0
    %v8353 = vadd.f32 %v8312, %v8352
    %v8354 = vpop.f32.mrb[0].mxu0
    %v8355 = vadd.f32 %v8314, %v8354
    %v8356 = vpop.f32.mrb[0].mxu0
    %v8357 = vpop.f32.mrb[0].mxu0
    %8358 = vdwg.mxu0
    %8359 = vmatprep.subr.bf16.mxu0 %v5216
    %8360 = vmatpush1.bf16.msra.mxu0 %v5215
    %8361 = vmatprep.subr.bf16.mxu0 %v5224
    %8362 = vmatpush1.bf16.msra.mxu0 %v5223
    %8363 = vmatprep.subr.bf16.mxu0 %v5232
    %8364 = vmatpush1.bf16.msra.mxu0 %v5231
    %8365 = vmatprep.subr.bf16.mxu0 %v5240
    %8366 = vmatpush1.bf16.msra.mxu0 %v5239
    %8367 = vmatprep.subr.bf16.mxu0 %v5248
    %8368 = vmatpush1.bf16.msra.mxu0 %v5247
    %8369 = vmatprep.subr.bf16.mxu0 %v5256
    %8370 = vmatpush1.bf16.msra.mxu0 %v5255
    %8371 = vmatprep.subr.bf16.mxu0 %v5264
    %8372 = vmatpush1.bf16.msra.mxu0 %v5263
    %8373 = vmatprep.subr.bf16.mxu0 %v5272
    %8374 = vmatpush1.bf16.msra.mxu0 %v5271
    %8375 = vmatprep.subr.bf16.mxu0 %v5280
    %8376 = vmatpush1.bf16.msra.mxu0 %v5279
    %8377 = vmatprep.subr.bf16.mxu0 %v5288
    %8378 = vmatpush1.bf16.msra.mxu0 %v5287
    %8379 = vmatprep.subr.bf16.mxu0 %v5296
    %8380 = vmatpush1.bf16.msra.mxu0 %v5295
    %8381 = vmatprep.subr.bf16.mxu0 %v5304
    %8382 = vmatpush1.bf16.msra.mxu0 %v5303
    %8383 = vmatprep.subr.bf16.mxu0 %v5312
    %8384 = vmatpush1.bf16.msra.mxu0 %v5311
    %8385 = vmatprep.subr.bf16.mxu0 %v5320
    %8386 = vmatpush1.bf16.msra.mxu0 %v5319
    %8387 = vmatprep.subr.bf16.mxu0 %v5328
    %8388 = vmatpush1.bf16.msra.mxu0 %v5327
    %8389 = vmatprep.subr.bf16.mxu0 %v5336
    %8390 = vmatpush1.bf16.msra.mxu0 %v5335
    %8391 = vmatprep.mubr.bf16.mxu0 %v1340
    %8392 = vmatmul.mubr.bf16.gmra.mrb[0].mxu0 %v1339
    %v8393 = vpop.f32.mrb[0].mxu0
    %v8394 = vadd.f32 %v8353, %v8393
    %v8395 = vpop.f32.mrb[0].mxu0
    %v8396 = vadd.f32 %v8355, %v8395
    %v8397 = vpop.f32.mrb[0].mxu0
    %v8398 = vpop.f32.mrb[0].mxu0
    %8399 = vdwg.mxu0
    %8400 = vmatprep.subr.bf16.mxu0 %v5344
    %8401 = vmatpush1.bf16.msra.mxu0 %v5343
    %8402 = vmatprep.subr.bf16.mxu0 %v5352
    %8403 = vmatpush1.bf16.msra.mxu0 %v5351
    %8404 = vmatprep.subr.bf16.mxu0 %v5360
    %8405 = vmatpush1.bf16.msra.mxu0 %v5359
    %8406 = vmatprep.subr.bf16.mxu0 %v5368
    %8407 = vmatpush1.bf16.msra.mxu0 %v5367
    %8408 = vmatprep.subr.bf16.mxu0 %v5376
    %8409 = vmatpush1.bf16.msra.mxu0 %v5375
    %8410 = vmatprep.subr.bf16.mxu0 %v5384
    %8411 = vmatpush1.bf16.msra.mxu0 %v5383
    %8412 = vmatprep.subr.bf16.mxu0 %v5392
    %8413 = vmatpush1.bf16.msra.mxu0 %v5391
    %8414 = vmatprep.subr.bf16.mxu0 %v5400
    %8415 = vmatpush1.bf16.msra.mxu0 %v5399
    %8416 = vmatprep.subr.bf16.mxu0 %v5408
    %8417 = vmatpush1.bf16.msra.mxu0 %v5407
    %8418 = vmatprep.subr.bf16.mxu0 %v5416
    %8419 = vmatpush1.bf16.msra.mxu0 %v5415
    %8420 = vmatprep.subr.bf16.mxu0 %v5424
    %8421 = vmatpush1.bf16.msra.mxu0 %v5423
    %8422 = vmatprep.subr.bf16.mxu0 %v5432
    %8423 = vmatpush1.bf16.msra.mxu0 %v5431
    %8424 = vmatprep.subr.bf16.mxu0 %v5440
    %8425 = vmatpush1.bf16.msra.mxu0 %v5439
    %8426 = vmatprep.subr.bf16.mxu0 %v5448
    %8427 = vmatpush1.bf16.msra.mxu0 %v5447
    %8428 = vmatprep.subr.bf16.mxu0 %v5456
    %8429 = vmatpush1.bf16.msra.mxu0 %v5455
    %8430 = vmatprep.subr.bf16.mxu0 %v5464
    %8431 = vmatpush1.bf16.msra.mxu0 %v5463
    %8432 = vmatprep.mubr.bf16.mxu0 %v1342
    %8433 = vmatmul.mubr.bf16.gmra.mrb[0].mxu0 %v1341
    %v8434 = vpop.f32.mrb[0].mxu0
    %v8435 = vadd.f32 %v8394, %v8434
    %v8436 = vpop.f32.mrb[0].mxu0
    %v8437 = vadd.f32 %v8396, %v8436
    %v8438 = vpop.f32.mrb[0].mxu0
    %v8439 = vpop.f32.mrb[0].mxu0
    %8440 = vdwg.mxu0
    %8441 = vmatprep.subr.bf16.mxu0 %v5472
    %8442 = vmatpush1.bf16.msra.mxu0 %v5471
    %8443 = vmatprep.subr.bf16.mxu0 %v5480
    %8444 = vmatpush1.bf16.msra.mxu0 %v5479
    %8445 = vmatprep.subr.bf16.mxu0 %v5488
    %8446 = vmatpush1.bf16.msra.mxu0 %v5487
    %8447 = vmatprep.subr.bf16.mxu0 %v5496
    %8448 = vmatpush1.bf16.msra.mxu0 %v5495
    %8449 = vmatprep.subr.bf16.mxu0 %v5504
    %8450 = vmatpush1.bf16.msra.mxu0 %v5503
    %8451 = vmatprep.subr.bf16.mxu0 %v5512
    %8452 = vmatpush1.bf16.msra.mxu0 %v5511
    %8453 = vmatprep.subr.bf16.mxu0 %v5520
    %8454 = vmatpush1.bf16.msra.mxu0 %v5519
    %8455 = vmatprep.subr.bf16.mxu0 %v5528
    %8456 = vmatpush1.bf16.msra.mxu0 %v5527
    %8457 = vmatprep.subr.bf16.mxu0 %v5536
    %8458 = vmatpush1.bf16.msra.mxu0 %v5535
    %8459 = vmatprep.subr.bf16.mxu0 %v5544
    %8460 = vmatpush1.bf16.msra.mxu0 %v5543
    %8461 = vmatprep.subr.bf16.mxu0 %v5552
    %8462 = vmatpush1.bf16.msra.mxu0 %v5551
    %8463 = vmatprep.subr.bf16.mxu0 %v5560
    %8464 = vmatpush1.bf16.msra.mxu0 %v5559
    %8465 = vmatprep.subr.bf16.mxu0 %v5568
    %8466 = vmatpush1.bf16.msra.mxu0 %v5567
    %8467 = vmatprep.subr.bf16.mxu0 %v5576
    %8468 = vmatpush1.bf16.msra.mxu0 %v5575
    %8469 = vmatprep.subr.bf16.mxu0 %v5584
    %8470 = vmatpush1.bf16.msra.mxu0 %v5583
    %8471 = vmatprep.subr.bf16.mxu0 %v5592
    %8472 = vmatpush1.bf16.msra.mxu0 %v5591
    %8473 = vmatprep.mubr.bf16.mxu0 %v1344
    %8474 = vmatmul.mubr.bf16.gmra.mrb[0].mxu0 %v1343
    %v8475 = vpop.f32.mrb[0].mxu0
    %v8476 = vadd.f32 %v8435, %v8475
    %v8477 = vpop.f32.mrb[0].mxu0
    %v8478 = vadd.f32 %v8437, %v8477
    %v8479 = vpop.f32.mrb[0].mxu0
    %v8480 = vpop.f32.mrb[0].mxu0
    %8481 = vdwg.mxu0
    %8482 = vmatprep.subr.bf16.mxu0 %v5600
    %8483 = vmatpush1.bf16.msra.mxu0 %v5599
    %8484 = vmatprep.subr.bf16.mxu0 %v5608
    %8485 = vmatpush1.bf16.msra.mxu0 %v5607
    %8486 = vmatprep.subr.bf16.mxu0 %v5616
    %8487 = vmatpush1.bf16.msra.mxu0 %v5615
    %8488 = vmatprep.subr.bf16.mxu0 %v5624
    %8489 = vmatpush1.bf16.msra.mxu0 %v5623
    %8490 = vmatprep.subr.bf16.mxu0 %v5632
    %8491 = vmatpush1.bf16.msra.mxu0 %v5631
    %8492 = vmatprep.subr.bf16.mxu0 %v5640
    %8493 = vmatpush1.bf16.msra.mxu0 %v5639
    %8494 = vmatprep.subr.bf16.mxu0 %v5648
    %8495 = vmatpush1.bf16.msra.mxu0 %v5647
    %8496 = vmatprep.subr.bf16.mxu0 %v5656
    %8497 = vmatpush1.bf16.msra.mxu0 %v5655
    %8498 = vmatprep.subr.bf16.mxu0 %v5664
    %8499 = vmatpush1.bf16.msra.mxu0 %v5663
    %8500 = vmatprep.subr.bf16.mxu0 %v5672
    %8501 = vmatpush1.bf16.msra.mxu0 %v5671
    %8502 = vmatprep.subr.bf16.mxu0 %v5680
    %8503 = vmatpush1.bf16.msra.mxu0 %v5679
    %8504 = vmatprep.subr.bf16.mxu0 %v5688
    %8505 = vmatpush1.bf16.msra.mxu0 %v5687
    %8506 = vmatprep.subr.bf16.mxu0 %v5696
    %8507 = vmatpush1.bf16.msra.mxu0 %v5695
    %8508 = vmatprep.subr.bf16.mxu0 %v5704
    %8509 = vmatpush1.bf16.msra.mxu0 %v5703
    %8510 = vmatprep.subr.bf16.mxu0 %v5712
    %8511 = vmatpush1.bf16.msra.mxu0 %v5711
    %8512 = vmatprep.subr.bf16.mxu0 %v5720
    %8513 = vmatpush1.bf16.msra.mxu0 %v5719
    %8514 = vmatprep.mubr.bf16.mxu0 %v1346
    %8515 = vmatmul.mubr.bf16.gmra.mrb[0].mxu0 %v1345
    %v8516 = vpop.f32.mrb[0].mxu0
    %v8517 = vadd.f32 %v8476, %v8516
    %v8518 = vpop.f32.mrb[0].mxu0
    %v8519 = vadd.f32 %v8478, %v8518
    %v8520 = vpop.f32.mrb[0].mxu0
    %v8521 = vpop.f32.mrb[0].mxu0
    %8522 = vdwg.mxu0
    %8523 = vmatprep.subr.bf16.mxu0 %v5728
    %8524 = vmatpush1.bf16.msra.mxu0 %v5727
    %8525 = vmatprep.subr.bf16.mxu0 %v5736
    %8526 = vmatpush1.bf16.msra.mxu0 %v5735
    %8527 = vmatprep.subr.bf16.mxu0 %v5744
    %8528 = vmatpush1.bf16.msra.mxu0 %v5743
    %8529 = vmatprep.subr.bf16.mxu0 %v5752
    %8530 = vmatpush1.bf16.msra.mxu0 %v5751
    %8531 = vmatprep.subr.bf16.mxu0 %v5760
    %8532 = vmatpush1.bf16.msra.mxu0 %v5759
    %8533 = vmatprep.subr.bf16.mxu0 %v5768
    %8534 = vmatpush1.bf16.msra.mxu0 %v5767
    %8535 = vmatprep.subr.bf16.mxu0 %v5776
    %8536 = vmatpush1.bf16.msra.mxu0 %v5775
    %8537 = vmatprep.subr.bf16.mxu0 %v5784
    %8538 = vmatpush1.bf16.msra.mxu0 %v5783
    %8539 = vmatprep.subr.bf16.mxu0 %v5792
    %8540 = vmatpush1.bf16.msra.mxu0 %v5791
    %8541 = vmatprep.subr.bf16.mxu0 %v5800
    %8542 = vmatpush1.bf16.msra.mxu0 %v5799
    %8543 = vmatprep.subr.bf16.mxu0 %v5808
    %8544 = vmatpush1.bf16.msra.mxu0 %v5807
    %8545 = vmatprep.subr.bf16.mxu0 %v5816
    %8546 = vmatpush1.bf16.msra.mxu0 %v5815
    %8547 = vmatprep.subr.bf16.mxu0 %v5824
    %8548 = vmatpush1.bf16.msra.mxu0 %v5823
    %8549 = vmatprep.subr.bf16.mxu0 %v5832
    %8550 = vmatpush1.bf16.msra.mxu0 %v5831
    %8551 = vmatprep.subr.bf16.mxu0 %v5840
    %8552 = vmatpush1.bf16.msra.mxu0 %v5839
    %8553 = vmatprep.subr.bf16.mxu0 %v5848
    %8554 = vmatpush1.bf16.msra.mxu0 %v5847
    %8555 = vmatprep.mubr.bf16.mxu0 %v1348
    %8556 = vmatmul.mubr.bf16.gmra.mrb[0].mxu0 %v1347
    %v8557 = vpop.f32.mrb[0].mxu0
    %v8558 = vadd.f32 %v8517, %v8557
    %v8559 = vpop.f32.mrb[0].mxu0
    %v8560 = vadd.f32 %v8519, %v8559
    %v8561 = vpop.f32.mrb[0].mxu0
    %v8562 = vpop.f32.mrb[0].mxu0
    %8563 = vdwg.mxu0
    %8564 = vmatprep.subr.bf16.mxu0 %v5856
    %8565 = vmatpush1.bf16.msra.mxu0 %v5855
    %8566 = vmatprep.subr.bf16.mxu0 %v5864
    %8567 = vmatpush1.bf16.msra.mxu0 %v5863
    %8568 = vmatprep.subr.bf16.mxu0 %v5872
    %8569 = vmatpush1.bf16.msra.mxu0 %v5871
    %8570 = vmatprep.subr.bf16.mxu0 %v5880
    %8571 = vmatpush1.bf16.msra.mxu0 %v5879
    %8572 = vmatprep.subr.bf16.mxu0 %v5888
    %8573 = vmatpush1.bf16.msra.mxu0 %v5887
    %8574 = vmatprep.subr.bf16.mxu0 %v5896
    %8575 = vmatpush1.bf16.msra.mxu0 %v5895
    %8576 = vmatprep.subr.bf16.mxu0 %v5904
    %8577 = vmatpush1.bf16.msra.mxu0 %v5903
    %8578 = vmatprep.subr.bf16.mxu0 %v5912
    %8579 = vmatpush1.bf16.msra.mxu0 %v5911
    %8580 = vmatprep.subr.bf16.mxu0 %v5920
    %8581 = vmatpush1.bf16.msra.mxu0 %v5919
    %8582 = vmatprep.subr.bf16.mxu0 %v5928
    %8583 = vmatpush1.bf16.msra.mxu0 %v5927
    %8584 = vmatprep.subr.bf16.mxu0 %v5936
    %8585 = vmatpush1.bf16.msra.mxu0 %v5935
    %8586 = vmatprep.subr.bf16.mxu0 %v5944
    %8587 = vmatpush1.bf16.msra.mxu0 %v5943
    %8588 = vmatprep.subr.bf16.mxu0 %v5952
    %8589 = vmatpush1.bf16.msra.mxu0 %v5951
    %8590 = vmatprep.subr.bf16.mxu0 %v5960
    %8591 = vmatpush1.bf16.msra.mxu0 %v5959
    %8592 = vmatprep.subr.bf16.mxu0 %v5968
    %8593 = vmatpush1.bf16.msra.mxu0 %v5967
    %8594 = vmatprep.subr.bf16.mxu0 %v5976
    %8595 = vmatpush1.bf16.msra.mxu0 %v5975
    %8596 = vmatprep.mubr.bf16.mxu0 %v1350
    %8597 = vmatmul.mubr.bf16.gmra.mrb[0].mxu0 %v1349
    %v8598 = vpop.f32.mrb[0].mxu0
    %v8599 = vadd.f32 %v8558, %v8598
    %v8600 = vpop.f32.mrb[0].mxu0
    %v8601 = vadd.f32 %v8560, %v8600
    %v8602 = vpop.f32.mrb[0].mxu0
    %v8603 = vpop.f32.mrb[0].mxu0
    %8604 = vdwg.mxu0
    %v8605 = vmax.f32 %v7492, 0.0
    %v8606 = vmax.f32 %v7494, 0.0
    %v8607 = vmax.f32 %v7861, 0.0
    %v8608 = vmax.f32 %v7863, 0.0
    %v8609 = vmax.f32 %v8230, 0.0
    %v8610 = vmax.f32 %v8232, 0.0
    %v8611 = vmax.f32 %v8599, 0.0
    %v8612 = vmax.f32 %v8601, 0.0
    %v8613 = vpack.c.bf16 %v8605, %v8605
    %v8614 = vpack.c.bf16 %v8606, %v8606
    %v8615 = vpack.c.bf16 %v8607, %v8607
    %v8616 = vpack.c.bf16 %v8608, %v8608
    %v8617 = vpack.c.bf16 %v8609, %v8609
    %v8618 = vpack.c.bf16 %v8610, %v8610
    %v8619 = vpack.c.bf16 %v8611, %v8611
    %v8620 = vpack.c.bf16 %v8612, %v8612
    %v8621 = vld [vmem:[#allocation6] sm:$0xff]
    %v8622 = vld [vmem:[#allocation6 + $0x8] sm:$0xff]
    %v8623 = vld [vmem:[#allocation6 + $0x10] sm:$0xff]
    %v8624 = vld [vmem:[#allocation6 + $0x18] sm:$0xff]
    %v8625 = vld [vmem:[#allocation6 + $0x20] sm:$0xff]
    %v8626 = vld [vmem:[#allocation6 + $0x28] sm:$0xff]
    %v8627 = vld [vmem:[#allocation6 + $0x30] sm:$0xff]
    %v8628 = vld [vmem:[#allocation6 + $0x38] sm:$0xff]
    %v8629 = vld [vmem:[#allocation6 + $0x40] sm:$0xff]
    %v8630 = vld [vmem:[#allocation6 + $0x48] sm:$0xff]
    %v8631 = vld [vmem:[#allocation6 + $0x50] sm:$0xff]
    %v8632 = vld [vmem:[#allocation6 + $0x58] sm:$0xff]
    %v8633 = vld [vmem:[#allocation6 + $0x60] sm:$0xff]
    %v8634 = vld [vmem:[#allocation6 + $0x68] sm:$0xff]
    %v8635 = vld [vmem:[#allocation6 + $0x70] sm:$0xff]
    %v8636 = vld [vmem:[#allocation6 + $0x78] sm:$0xff]
    %v8637 = vld [vmem:[#allocation6 + $0x80] sm:$0xff]
    %v8638 = vld [vmem:[#allocation6 + $0x88] sm:$0xff]
    %v8639 = vld [vmem:[#allocation6 + $0x90] sm:$0xff]
    %v8640 = vld [vmem:[#allocation6 + $0x98] sm:$0xff]
    %v8641 = vld [vmem:[#allocation6 + $0xa0] sm:$0xff]
    %v8642 = vld [vmem:[#allocation6 + $0xa8] sm:$0xff]
    %v8643 = vld [vmem:[#allocation6 + $0xb0] sm:$0xff]
    %v8644 = vld [vmem:[#allocation6 + $0xb8] sm:$0xff]
    %v8645 = vld [vmem:[#allocation6 + $0xc0] sm:$0xff]
    %v8646 = vld [vmem:[#allocation6 + $0xc8] sm:$0xff]
    %v8647 = vld [vmem:[#allocation6 + $0xd0] sm:$0xff]
    %v8648 = vld [vmem:[#allocation6 + $0xd8] sm:$0xff]
    %v8649 = vld [vmem:[#allocation6 + $0xe0] sm:$0xff]
    %v8650 = vld [vmem:[#allocation6 + $0xe8] sm:$0xff]
    %v8651 = vld [vmem:[#allocation6 + $0xf0] sm:$0xff]
    %v8652 = vld [vmem:[#allocation6 + $0xf8] sm:$0xff]
    %v8653 = vld [vmem:[#allocation6 + $0x100] sm:$0xff]
    %v8654 = vld [vmem:[#allocation6 + $0x108] sm:$0xff]
    %v8655 = vld [vmem:[#allocation6 + $0x110] sm:$0xff]
    %v8656 = vld [vmem:[#allocation6 + $0x118] sm:$0xff]
    %v8657 = vld [vmem:[#allocation6 + $0x120] sm:$0xff]
    %v8658 = vld [vmem:[#allocation6 + $0x128] sm:$0xff]
    %v8659 = vld [vmem:[#allocation6 + $0x130] sm:$0xff]
    %v8660 = vld [vmem:[#allocation6 + $0x138] sm:$0xff]
    %v8661 = vld [vmem:[#allocation6 + $0x140] sm:$0xff]
    %v8662 = vld [vmem:[#allocation6 + $0x148] sm:$0xff]
    %v8663 = vld [vmem:[#allocation6 + $0x150] sm:$0xff]
    %v8664 = vld [vmem:[#allocation6 + $0x158] sm:$0xff]
    %v8665 = vld [vmem:[#allocation6 + $0x160] sm:$0xff]
    %v8666 = vld [vmem:[#allocation6 + $0x168] sm:$0xff]
    %v8667 = vld [vmem:[#allocation6 + $0x170] sm:$0xff]
    %v8668 = vld [vmem:[#allocation6 + $0x178] sm:$0xff]
    %v8669 = vld [vmem:[#allocation6 + $0x180] sm:$0xff]
    %v8670 = vld [vmem:[#allocation6 + $0x188] sm:$0xff]
    %v8671 = vld [vmem:[#allocation6 + $0x190] sm:$0xff]
    %v8672 = vld [vmem:[#allocation6 + $0x198] sm:$0xff]
    %v8673 = vld [vmem:[#allocation6 + $0x1a0] sm:$0xff]
    %v8674 = vld [vmem:[#allocation6 + $0x1a8] sm:$0xff]
    %v8675 = vld [vmem:[#allocation6 + $0x1b0] sm:$0xff]
    %v8676 = vld [vmem:[#allocation6 + $0x1b8] sm:$0xff]
    %v8677 = vld [vmem:[#allocation6 + $0x1c0] sm:$0xff]
    %v8678 = vld [vmem:[#allocation6 + $0x1c8] sm:$0xff]
    %v8679 = vld [vmem:[#allocation6 + $0x1d0] sm:$0xff]
    %v8680 = vld [vmem:[#allocation6 + $0x1d8] sm:$0xff]
    %v8681 = vld [vmem:[#allocation6 + $0x1e0] sm:$0xff]
    %v8682 = vld [vmem:[#allocation6 + $0x1e8] sm:$0xff]
    %v8683 = vld [vmem:[#allocation6 + $0x1f0] sm:$0xff]
    %v8684 = vld [vmem:[#allocation6 + $0x1f8] sm:$0xff]
    %v8685 = vld [vmem:[#allocation6 + $0x200] sm:$0xff]
    %v8686 = vld [vmem:[#allocation6 + $0x208] sm:$0xff]
    %v8687 = vld [vmem:[#allocation6 + $0x210] sm:$0xff]
    %v8688 = vld [vmem:[#allocation6 + $0x218] sm:$0xff]
    %v8689 = vld [vmem:[#allocation6 + $0x220] sm:$0xff]
    %v8690 = vld [vmem:[#allocation6 + $0x228] sm:$0xff]
    %v8691 = vld [vmem:[#allocation6 + $0x230] sm:$0xff]
    %v8692 = vld [vmem:[#allocation6 + $0x238] sm:$0xff]
    %v8693 = vld [vmem:[#allocation6 + $0x240] sm:$0xff]
    %v8694 = vld [vmem:[#allocation6 + $0x248] sm:$0xff]
    %v8695 = vld [vmem:[#allocation6 + $0x250] sm:$0xff]
    %v8696 = vld [vmem:[#allocation6 + $0x258] sm:$0xff]
    %v8697 = vld [vmem:[#allocation6 + $0x260] sm:$0xff]
    %v8698 = vld [vmem:[#allocation6 + $0x268] sm:$0xff]
    %v8699 = vld [vmem:[#allocation6 + $0x270] sm:$0xff]
    %v8700 = vld [vmem:[#allocation6 + $0x278] sm:$0xff]
    %v8701 = vld [vmem:[#allocation6 + $0x280] sm:$0xff]
    %v8702 = vld [vmem:[#allocation6 + $0x288] sm:$0xff]
    %v8703 = vld [vmem:[#allocation6 + $0x290] sm:$0xff]
    %v8704 = vld [vmem:[#allocation6 + $0x298] sm:$0xff]
    %v8705 = vld [vmem:[#allocation6 + $0x2a0] sm:$0xff]
    %v8706 = vld [vmem:[#allocation6 + $0x2a8] sm:$0xff]
    %v8707 = vld [vmem:[#allocation6 + $0x2b0] sm:$0xff]
    %v8708 = vld [vmem:[#allocation6 + $0x2b8] sm:$0xff]
    %v8709 = vld [vmem:[#allocation6 + $0x2c0] sm:$0xff]
    %v8710 = vld [vmem:[#allocation6 + $0x2c8] sm:$0xff]
    %v8711 = vld [vmem:[#allocation6 + $0x2d0] sm:$0xff]
    %v8712 = vld [vmem:[#allocation6 + $0x2d8] sm:$0xff]
    %v8713 = vld [vmem:[#allocation6 + $0x2e0] sm:$0xff]
    %v8714 = vld [vmem:[#allocation6 + $0x2e8] sm:$0xff]
    %v8715 = vld [vmem:[#allocation6 + $0x2f0] sm:$0xff]
    %v8716 = vld [vmem:[#allocation6 + $0x2f8] sm:$0xff]
    %v8717 = vld [vmem:[#allocation6 + $0x300] sm:$0xff]
    %v8718 = vld [vmem:[#allocation6 + $0x308] sm:$0xff]
    %v8719 = vld [vmem:[#allocation6 + $0x310] sm:$0xff]
    %v8720 = vld [vmem:[#allocation6 + $0x318] sm:$0xff]
    %v8721 = vld [vmem:[#allocation6 + $0x320] sm:$0xff]
    %v8722 = vld [vmem:[#allocation6 + $0x328] sm:$0xff]
    %v8723 = vld [vmem:[#allocation6 + $0x330] sm:$0xff]
    %v8724 = vld [vmem:[#allocation6 + $0x338] sm:$0xff]
    %v8725 = vld [vmem:[#allocation6 + $0x340] sm:$0xff]
    %v8726 = vld [vmem:[#allocation6 + $0x348] sm:$0xff]
    %v8727 = vld [vmem:[#allocation6 + $0x350] sm:$0xff]
    %v8728 = vld [vmem:[#allocation6 + $0x358] sm:$0xff]
    %v8729 = vld [vmem:[#allocation6 + $0x360] sm:$0xff]
    %v8730 = vld [vmem:[#allocation6 + $0x368] sm:$0xff]
    %v8731 = vld [vmem:[#allocation6 + $0x370] sm:$0xff]
    %v8732 = vld [vmem:[#allocation6 + $0x378] sm:$0xff]
    %v8733 = vld [vmem:[#allocation6 + $0x380] sm:$0xff]
    %v8734 = vld [vmem:[#allocation6 + $0x388] sm:$0xff]
    %v8735 = vld [vmem:[#allocation6 + $0x390] sm:$0xff]
    %v8736 = vld [vmem:[#allocation6 + $0x398] sm:$0xff]
    %v8737 = vld [vmem:[#allocation6 + $0x3a0] sm:$0xff]
    %v8738 = vld [vmem:[#allocation6 + $0x3a8] sm:$0xff]
    %v8739 = vld [vmem:[#allocation6 + $0x3b0] sm:$0xff]
    %v8740 = vld [vmem:[#allocation6 + $0x3b8] sm:$0xff]
    %v8741 = vld [vmem:[#allocation6 + $0x3c0] sm:$0xff]
    %v8742 = vld [vmem:[#allocation6 + $0x3c8] sm:$0xff]
    %v8743 = vld [vmem:[#allocation6 + $0x3d0] sm:$0xff]
    %v8744 = vld [vmem:[#allocation6 + $0x3d8] sm:$0xff]
    %v8745 = vld [vmem:[#allocation6 + $0x3e0] sm:$0xff]
    %v8746 = vld [vmem:[#allocation6 + $0x3e8] sm:$0xff]
    %v8747 = vld [vmem:[#allocation6 + $0x3f0] sm:$0xff]
    %v8748 = vld [vmem:[#allocation6 + $0x3f8] sm:$0xff]
    %v8749 = vld [vmem:[#allocation6 + $0x400] sm:$0xff]
    %v8750 = vld [vmem:[#allocation6 + $0x408] sm:$0xff]
    %v8751 = vld [vmem:[#allocation6 + $0x410] sm:$0xff]
    %v8752 = vld [vmem:[#allocation6 + $0x418] sm:$0xff]
    %v8753 = vld [vmem:[#allocation6 + $0x420] sm:$0xff]
    %v8754 = vld [vmem:[#allocation6 + $0x428] sm:$0xff]
    %v8755 = vld [vmem:[#allocation6 + $0x430] sm:$0xff]
    %v8756 = vld [vmem:[#allocation6 + $0x438] sm:$0xff]
    %v8757 = vld [vmem:[#allocation6 + $0x440] sm:$0xff]
    %v8758 = vld [vmem:[#allocation6 + $0x448] sm:$0xff]
    %v8759 = vld [vmem:[#allocation6 + $0x450] sm:$0xff]
    %v8760 = vld [vmem:[#allocation6 + $0x458] sm:$0xff]
    %v8761 = vld [vmem:[#allocation6 + $0x460] sm:$0xff]
    %v8762 = vld [vmem:[#allocation6 + $0x468] sm:$0xff]
    %v8763 = vld [vmem:[#allocation6 + $0x470] sm:$0xff]
    %v8764 = vld [vmem:[#allocation6 + $0x478] sm:$0xff]
    %v8765 = vld [vmem:[#allocation6 + $0x480] sm:$0xff]
    %v8766 = vld [vmem:[#allocation6 + $0x488] sm:$0xff]
    %v8767 = vld [vmem:[#allocation6 + $0x490] sm:$0xff]
    %v8768 = vld [vmem:[#allocation6 + $0x498] sm:$0xff]
    %v8769 = vld [vmem:[#allocation6 + $0x4a0] sm:$0xff]
    %v8770 = vld [vmem:[#allocation6 + $0x4a8] sm:$0xff]
    %v8771 = vld [vmem:[#allocation6 + $0x4b0] sm:$0xff]
    %v8772 = vld [vmem:[#allocation6 + $0x4b8] sm:$0xff]
    %v8773 = vld [vmem:[#allocation6 + $0x4c0] sm:$0xff]
    %v8774 = vld [vmem:[#allocation6 + $0x4c8] sm:$0xff]
    %v8775 = vld [vmem:[#allocation6 + $0x4d0] sm:$0xff]
    %v8776 = vld [vmem:[#allocation6 + $0x4d8] sm:$0xff]
    %v8777 = vld [vmem:[#allocation6 + $0x4e0] sm:$0xff]
    %v8778 = vld [vmem:[#allocation6 + $0x4e8] sm:$0xff]
    %v8779 = vld [vmem:[#allocation6 + $0x4f0] sm:$0xff]
    %v8780 = vld [vmem:[#allocation6 + $0x4f8] sm:$0xff]
    %v8781 = vld [vmem:[#allocation6 + $0x500] sm:$0xff]
    %v8782 = vld [vmem:[#allocation6 + $0x508] sm:$0xff]
    %v8783 = vld [vmem:[#allocation6 + $0x510] sm:$0xff]
    %v8784 = vld [vmem:[#allocation6 + $0x518] sm:$0xff]
    %v8785 = vld [vmem:[#allocation6 + $0x520] sm:$0xff]
    %v8786 = vld [vmem:[#allocation6 + $0x528] sm:$0xff]
    %v8787 = vld [vmem:[#allocation6 + $0x530] sm:$0xff]
    %v8788 = vld [vmem:[#allocation6 + $0x538] sm:$0xff]
    %v8789 = vld [vmem:[#allocation6 + $0x540] sm:$0xff]
    %v8790 = vld [vmem:[#allocation6 + $0x548] sm:$0xff]
    %v8791 = vld [vmem:[#allocation6 + $0x550] sm:$0xff]
    %v8792 = vld [vmem:[#allocation6 + $0x558] sm:$0xff]
    %v8793 = vld [vmem:[#allocation6 + $0x560] sm:$0xff]
    %v8794 = vld [vmem:[#allocation6 + $0x568] sm:$0xff]
    %v8795 = vld [vmem:[#allocation6 + $0x570] sm:$0xff]
    %v8796 = vld [vmem:[#allocation6 + $0x578] sm:$0xff]
    %v8797 = vld [vmem:[#allocation6 + $0x580] sm:$0xff]
    %v8798 = vld [vmem:[#allocation6 + $0x588] sm:$0xff]
    %v8799 = vld [vmem:[#allocation6 + $0x590] sm:$0xff]
    %v8800 = vld [vmem:[#allocation6 + $0x598] sm:$0xff]
    %v8801 = vld [vmem:[#allocation6 + $0x5a0] sm:$0xff]
    %v8802 = vld [vmem:[#allocation6 + $0x5a8] sm:$0xff]
    %v8803 = vld [vmem:[#allocation6 + $0x5b0] sm:$0xff]
    %v8804 = vld [vmem:[#allocation6 + $0x5b8] sm:$0xff]
    %v8805 = vld [vmem:[#allocation6 + $0x5c0] sm:$0xff]
    %v8806 = vld [vmem:[#allocation6 + $0x5c8] sm:$0xff]
    %v8807 = vld [vmem:[#allocation6 + $0x5d0] sm:$0xff]
    %v8808 = vld [vmem:[#allocation6 + $0x5d8] sm:$0xff]
    %v8809 = vld [vmem:[#allocation6 + $0x5e0] sm:$0xff]
    %v8810 = vld [vmem:[#allocation6 + $0x5e8] sm:$0xff]
    %v8811 = vld [vmem:[#allocation6 + $0x5f0] sm:$0xff]
    %v8812 = vld [vmem:[#allocation6 + $0x5f8] sm:$0xff]
    %v8813 = vld [vmem:[#allocation6 + $0x600] sm:$0xff]
    %v8814 = vld [vmem:[#allocation6 + $0x608] sm:$0xff]
    %v8815 = vld [vmem:[#allocation6 + $0x610] sm:$0xff]
    %v8816 = vld [vmem:[#allocation6 + $0x618] sm:$0xff]
    %v8817 = vld [vmem:[#allocation6 + $0x620] sm:$0xff]
    %v8818 = vld [vmem:[#allocation6 + $0x628] sm:$0xff]
    %v8819 = vld [vmem:[#allocation6 + $0x630] sm:$0xff]
    %v8820 = vld [vmem:[#allocation6 + $0x638] sm:$0xff]
    %v8821 = vld [vmem:[#allocation6 + $0x640] sm:$0xff]
    %v8822 = vld [vmem:[#allocation6 + $0x648] sm:$0xff]
    %v8823 = vld [vmem:[#allocation6 + $0x650] sm:$0xff]
    %v8824 = vld [vmem:[#allocation6 + $0x658] sm:$0xff]
    %v8825 = vld [vmem:[#allocation6 + $0x660] sm:$0xff]
    %v8826 = vld [vmem:[#allocation6 + $0x668] sm:$0xff]
    %v8827 = vld [vmem:[#allocation6 + $0x670] sm:$0xff]
    %v8828 = vld [vmem:[#allocation6 + $0x678] sm:$0xff]
    %v8829 = vld [vmem:[#allocation6 + $0x680] sm:$0xff]
    %v8830 = vld [vmem:[#allocation6 + $0x688] sm:$0xff]
    %v8831 = vld [vmem:[#allocation6 + $0x690] sm:$0xff]
    %v8832 = vld [vmem:[#allocation6 + $0x698] sm:$0xff]
    %v8833 = vld [vmem:[#allocation6 + $0x6a0] sm:$0xff]
    %v8834 = vld [vmem:[#allocation6 + $0x6a8] sm:$0xff]
    %v8835 = vld [vmem:[#allocation6 + $0x6b0] sm:$0xff]
    %v8836 = vld [vmem:[#allocation6 + $0x6b8] sm:$0xff]
    %v8837 = vld [vmem:[#allocation6 + $0x6c0] sm:$0xff]
    %v8838 = vld [vmem:[#allocation6 + $0x6c8] sm:$0xff]
    %v8839 = vld [vmem:[#allocation6 + $0x6d0] sm:$0xff]
    %v8840 = vld [vmem:[#allocation6 + $0x6d8] sm:$0xff]
    %v8841 = vld [vmem:[#allocation6 + $0x6e0] sm:$0xff]
    %v8842 = vld [vmem:[#allocation6 + $0x6e8] sm:$0xff]
    %v8843 = vld [vmem:[#allocation6 + $0x6f0] sm:$0xff]
    %v8844 = vld [vmem:[#allocation6 + $0x6f8] sm:$0xff]
    %v8845 = vld [vmem:[#allocation6 + $0x700] sm:$0xff]
    %v8846 = vld [vmem:[#allocation6 + $0x708] sm:$0xff]
    %v8847 = vld [vmem:[#allocation6 + $0x710] sm:$0xff]
    %v8848 = vld [vmem:[#allocation6 + $0x718] sm:$0xff]
    %v8849 = vld [vmem:[#allocation6 + $0x720] sm:$0xff]
    %v8850 = vld [vmem:[#allocation6 + $0x728] sm:$0xff]
    %v8851 = vld [vmem:[#allocation6 + $0x730] sm:$0xff]
    %v8852 = vld [vmem:[#allocation6 + $0x738] sm:$0xff]
    %v8853 = vld [vmem:[#allocation6 + $0x740] sm:$0xff]
    %v8854 = vld [vmem:[#allocation6 + $0x748] sm:$0xff]
    %v8855 = vld [vmem:[#allocation6 + $0x750] sm:$0xff]
    %v8856 = vld [vmem:[#allocation6 + $0x758] sm:$0xff]
    %v8857 = vld [vmem:[#allocation6 + $0x760] sm:$0xff]
    %v8858 = vld [vmem:[#allocation6 + $0x768] sm:$0xff]
    %v8859 = vld [vmem:[#allocation6 + $0x770] sm:$0xff]
    %v8860 = vld [vmem:[#allocation6 + $0x778] sm:$0xff]
    %v8861 = vld [vmem:[#allocation6 + $0x780] sm:$0xff]
    %v8862 = vld [vmem:[#allocation6 + $0x788] sm:$0xff]
    %v8863 = vld [vmem:[#allocation6 + $0x790] sm:$0xff]
    %v8864 = vld [vmem:[#allocation6 + $0x798] sm:$0xff]
    %v8865 = vld [vmem:[#allocation6 + $0x7a0] sm:$0xff]
    %v8866 = vld [vmem:[#allocation6 + $0x7a8] sm:$0xff]
    %v8867 = vld [vmem:[#allocation6 + $0x7b0] sm:$0xff]
    %v8868 = vld [vmem:[#allocation6 + $0x7b8] sm:$0xff]
    %v8869 = vld [vmem:[#allocation6 + $0x7c0] sm:$0xff]
    %v8870 = vld [vmem:[#allocation6 + $0x7c8] sm:$0xff]
    %v8871 = vld [vmem:[#allocation6 + $0x7d0] sm:$0xff]
    %v8872 = vld [vmem:[#allocation6 + $0x7d8] sm:$0xff]
    %v8873 = vld [vmem:[#allocation6 + $0x7e0] sm:$0xff]
    %v8874 = vld [vmem:[#allocation6 + $0x7e8] sm:$0xff]
    %v8875 = vld [vmem:[#allocation6 + $0x7f0] sm:$0xff]
    %v8876 = vld [vmem:[#allocation6 + $0x7f8] sm:$0xff]
    %v8877 = vld [vmem:[#allocation6 + $0x800] sm:$0xff]
    %v8878 = vld [vmem:[#allocation6 + $0x808] sm:$0xff]
    %v8879 = vld [vmem:[#allocation6 + $0x810] sm:$0xff]
    %v8880 = vld [vmem:[#allocation6 + $0x818] sm:$0xff]
    %v8881 = vld [vmem:[#allocation6 + $0x820] sm:$0xff]
    %v8882 = vld [vmem:[#allocation6 + $0x828] sm:$0xff]
    %v8883 = vld [vmem:[#allocation6 + $0x830] sm:$0xff]
    %v8884 = vld [vmem:[#allocation6 + $0x838] sm:$0xff]
    %v8885 = vld [vmem:[#allocation6 + $0x840] sm:$0xff]
    %v8886 = vld [vmem:[#allocation6 + $0x848] sm:$0xff]
    %v8887 = vld [vmem:[#allocation6 + $0x850] sm:$0xff]
    %v8888 = vld [vmem:[#allocation6 + $0x858] sm:$0xff]
    %v8889 = vld [vmem:[#allocation6 + $0x860] sm:$0xff]
    %v8890 = vld [vmem:[#allocation6 + $0x868] sm:$0xff]
    %v8891 = vld [vmem:[#allocation6 + $0x870] sm:$0xff]
    %v8892 = vld [vmem:[#allocation6 + $0x878] sm:$0xff]
    %v8893 = vld [vmem:[#allocation6 + $0x880] sm:$0xff]
    %v8894 = vld [vmem:[#allocation6 + $0x888] sm:$0xff]
    %v8895 = vld [vmem:[#allocation6 + $0x890] sm:$0xff]
    %v8896 = vld [vmem:[#allocation6 + $0x898] sm:$0xff]
    %v8897 = vld [vmem:[#allocation6 + $0x8a0] sm:$0xff]
    %v8898 = vld [vmem:[#allocation6 + $0x8a8] sm:$0xff]
    %v8899 = vld [vmem:[#allocation6 + $0x8b0] sm:$0xff]
    %v8900 = vld [vmem:[#allocation6 + $0x8b8] sm:$0xff]
    %v8901 = vld [vmem:[#allocation6 + $0x8c0] sm:$0xff]
    %v8902 = vld [vmem:[#allocation6 + $0x8c8] sm:$0xff]
    %v8903 = vld [vmem:[#allocation6 + $0x8d0] sm:$0xff]
    %v8904 = vld [vmem:[#allocation6 + $0x8d8] sm:$0xff]
    %v8905 = vld [vmem:[#allocation6 + $0x8e0] sm:$0xff]
    %v8906 = vld [vmem:[#allocation6 + $0x8e8] sm:$0xff]
    %v8907 = vld [vmem:[#allocation6 + $0x8f0] sm:$0xff]
    %v8908 = vld [vmem:[#allocation6 + $0x8f8] sm:$0xff]
    %v8909 = vld [vmem:[#allocation6 + $0x900] sm:$0xff]
    %v8910 = vld [vmem:[#allocation6 + $0x908] sm:$0xff]
    %v8911 = vld [vmem:[#allocation6 + $0x910] sm:$0xff]
    %v8912 = vld [vmem:[#allocation6 + $0x918] sm:$0xff]
    %v8913 = vld [vmem:[#allocation6 + $0x920] sm:$0xff]
    %v8914 = vld [vmem:[#allocation6 + $0x928] sm:$0xff]
    %v8915 = vld [vmem:[#allocation6 + $0x930] sm:$0xff]
    %v8916 = vld [vmem:[#allocation6 + $0x938] sm:$0xff]
    %v8917 = vld [vmem:[#allocation6 + $0x940] sm:$0xff]
    %v8918 = vld [vmem:[#allocation6 + $0x948] sm:$0xff]
    %v8919 = vld [vmem:[#allocation6 + $0x950] sm:$0xff]
    %v8920 = vld [vmem:[#allocation6 + $0x958] sm:$0xff]
    %v8921 = vld [vmem:[#allocation6 + $0x960] sm:$0xff]
    %v8922 = vld [vmem:[#allocation6 + $0x968] sm:$0xff]
    %v8923 = vld [vmem:[#allocation6 + $0x970] sm:$0xff]
    %v8924 = vld [vmem:[#allocation6 + $0x978] sm:$0xff]
    %v8925 = vld [vmem:[#allocation6 + $0x980] sm:$0xff]
    %v8926 = vld [vmem:[#allocation6 + $0x988] sm:$0xff]
    %v8927 = vld [vmem:[#allocation6 + $0x990] sm:$0xff]
    %v8928 = vld [vmem:[#allocation6 + $0x998] sm:$0xff]
    %v8929 = vld [vmem:[#allocation6 + $0x9a0] sm:$0xff]
    %v8930 = vld [vmem:[#allocation6 + $0x9a8] sm:$0xff]
    %v8931 = vld [vmem:[#allocation6 + $0x9b0] sm:$0xff]
    %v8932 = vld [vmem:[#allocation6 + $0x9b8] sm:$0xff]
    %v8933 = vld [vmem:[#allocation6 + $0x9c0] sm:$0xff]
    %v8934 = vld [vmem:[#allocation6 + $0x9c8] sm:$0xff]
    %v8935 = vld [vmem:[#allocation6 + $0x9d0] sm:$0xff]
    %v8936 = vld [vmem:[#allocation6 + $0x9d8] sm:$0xff]
    %v8937 = vld [vmem:[#allocation6 + $0x9e0] sm:$0xff]
    %v8938 = vld [vmem:[#allocation6 + $0x9e8] sm:$0xff]
    %v8939 = vld [vmem:[#allocation6 + $0x9f0] sm:$0xff]
    %v8940 = vld [vmem:[#allocation6 + $0x9f8] sm:$0xff]
    %v8941 = vld [vmem:[#allocation6 + $0xa00] sm:$0xff]
    %v8942 = vld [vmem:[#allocation6 + $0xa08] sm:$0xff]
    %v8943 = vld [vmem:[#allocation6 + $0xa10] sm:$0xff]
    %v8944 = vld [vmem:[#allocation6 + $0xa18] sm:$0xff]
    %v8945 = vld [vmem:[#allocation6 + $0xa20] sm:$0xff]
    %v8946 = vld [vmem:[#allocation6 + $0xa28] sm:$0xff]
    %v8947 = vld [vmem:[#allocation6 + $0xa30] sm:$0xff]
    %v8948 = vld [vmem:[#allocation6 + $0xa38] sm:$0xff]
    %v8949 = vld [vmem:[#allocation6 + $0xa40] sm:$0xff]
    %v8950 = vld [vmem:[#allocation6 + $0xa48] sm:$0xff]
    %v8951 = vld [vmem:[#allocation6 + $0xa50] sm:$0xff]
    %v8952 = vld [vmem:[#allocation6 + $0xa58] sm:$0xff]
    %v8953 = vld [vmem:[#allocation6 + $0xa60] sm:$0xff]
    %v8954 = vld [vmem:[#allocation6 + $0xa68] sm:$0xff]
    %v8955 = vld [vmem:[#allocation6 + $0xa70] sm:$0xff]
    %v8956 = vld [vmem:[#allocation6 + $0xa78] sm:$0xff]
    %v8957 = vld [vmem:[#allocation6 + $0xa80] sm:$0xff]
    %v8958 = vld [vmem:[#allocation6 + $0xa88] sm:$0xff]
    %v8959 = vld [vmem:[#allocation6 + $0xa90] sm:$0xff]
    %v8960 = vld [vmem:[#allocation6 + $0xa98] sm:$0xff]
    %v8961 = vld [vmem:[#allocation6 + $0xaa0] sm:$0xff]
    %v8962 = vld [vmem:[#allocation6 + $0xaa8] sm:$0xff]
    %v8963 = vld [vmem:[#allocation6 + $0xab0] sm:$0xff]
    %v8964 = vld [vmem:[#allocation6 + $0xab8] sm:$0xff]
    %v8965 = vld [vmem:[#allocation6 + $0xac0] sm:$0xff]
    %v8966 = vld [vmem:[#allocation6 + $0xac8] sm:$0xff]
    %v8967 = vld [vmem:[#allocation6 + $0xad0] sm:$0xff]
    %v8968 = vld [vmem:[#allocation6 + $0xad8] sm:$0xff]
    %v8969 = vld [vmem:[#allocation6 + $0xae0] sm:$0xff]
    %v8970 = vld [vmem:[#allocation6 + $0xae8] sm:$0xff]
    %v8971 = vld [vmem:[#allocation6 + $0xaf0] sm:$0xff]
    %v8972 = vld [vmem:[#allocation6 + $0xaf8] sm:$0xff]
    %v8973 = vld [vmem:[#allocation6 + $0xb00] sm:$0xff]
    %v8974 = vld [vmem:[#allocation6 + $0xb08] sm:$0xff]
    %v8975 = vld [vmem:[#allocation6 + $0xb10] sm:$0xff]
    %v8976 = vld [vmem:[#allocation6 + $0xb18] sm:$0xff]
    %v8977 = vld [vmem:[#allocation6 + $0xb20] sm:$0xff]
    %v8978 = vld [vmem:[#allocation6 + $0xb28] sm:$0xff]
    %v8979 = vld [vmem:[#allocation6 + $0xb30] sm:$0xff]
    %v8980 = vld [vmem:[#allocation6 + $0xb38] sm:$0xff]
    %v8981 = vld [vmem:[#allocation6 + $0xb40] sm:$0xff]
    %v8982 = vld [vmem:[#allocation6 + $0xb48] sm:$0xff]
    %v8983 = vld [vmem:[#allocation6 + $0xb50] sm:$0xff]
    %v8984 = vld [vmem:[#allocation6 + $0xb58] sm:$0xff]
    %v8985 = vld [vmem:[#allocation6 + $0xb60] sm:$0xff]
    %v8986 = vld [vmem:[#allocation6 + $0xb68] sm:$0xff]
    %v8987 = vld [vmem:[#allocation6 + $0xb70] sm:$0xff]
    %v8988 = vld [vmem:[#allocation6 + $0xb78] sm:$0xff]
    %v8989 = vld [vmem:[#allocation6 + $0xb80] sm:$0xff]
    %v8990 = vld [vmem:[#allocation6 + $0xb88] sm:$0xff]
    %v8991 = vld [vmem:[#allocation6 + $0xb90] sm:$0xff]
    %v8992 = vld [vmem:[#allocation6 + $0xb98] sm:$0xff]
    %v8993 = vld [vmem:[#allocation6 + $0xba0] sm:$0xff]
    %v8994 = vld [vmem:[#allocation6 + $0xba8] sm:$0xff]
    %v8995 = vld [vmem:[#allocation6 + $0xbb0] sm:$0xff]
    %v8996 = vld [vmem:[#allocation6 + $0xbb8] sm:$0xff]
    %v8997 = vld [vmem:[#allocation6 + $0xbc0] sm:$0xff]
    %v8998 = vld [vmem:[#allocation6 + $0xbc8] sm:$0xff]
    %v8999 = vld [vmem:[#allocation6 + $0xbd0] sm:$0xff]
    %v9000 = vld [vmem:[#allocation6 + $0xbd8] sm:$0xff]
    %v9001 = vld [vmem:[#allocation6 + $0xbe0] sm:$0xff]
    %v9002 = vld [vmem:[#allocation6 + $0xbe8] sm:$0xff]
    %v9003 = vld [vmem:[#allocation6 + $0xbf0] sm:$0xff]
    %v9004 = vld [vmem:[#allocation6 + $0xbf8] sm:$0xff]
    %v9005 = vld [vmem:[#allocation6 + $0xc00] sm:$0xff]
    %v9006 = vld [vmem:[#allocation6 + $0xc08] sm:$0xff]
    %v9007 = vld [vmem:[#allocation6 + $0xc10] sm:$0xff]
    %v9008 = vld [vmem:[#allocation6 + $0xc18] sm:$0xff]
    %v9009 = vld [vmem:[#allocation6 + $0xc20] sm:$0xff]
    %v9010 = vld [vmem:[#allocation6 + $0xc28] sm:$0xff]
    %v9011 = vld [vmem:[#allocation6 + $0xc30] sm:$0xff]
    %v9012 = vld [vmem:[#allocation6 + $0xc38] sm:$0xff]
    %v9013 = vld [vmem:[#allocation6 + $0xc40] sm:$0xff]
    %v9014 = vld [vmem:[#allocation6 + $0xc48] sm:$0xff]
    %v9015 = vld [vmem:[#allocation6 + $0xc50] sm:$0xff]
    %v9016 = vld [vmem:[#allocation6 + $0xc58] sm:$0xff]
    %v9017 = vld [vmem:[#allocation6 + $0xc60] sm:$0xff]
    %v9018 = vld [vmem:[#allocation6 + $0xc68] sm:$0xff]
    %v9019 = vld [vmem:[#allocation6 + $0xc70] sm:$0xff]
    %v9020 = vld [vmem:[#allocation6 + $0xc78] sm:$0xff]
    %v9021 = vld [vmem:[#allocation6 + $0xc80] sm:$0xff]
    %v9022 = vld [vmem:[#allocation6 + $0xc88] sm:$0xff]
    %v9023 = vld [vmem:[#allocation6 + $0xc90] sm:$0xff]
    %v9024 = vld [vmem:[#allocation6 + $0xc98] sm:$0xff]
    %v9025 = vld [vmem:[#allocation6 + $0xca0] sm:$0xff]
    %v9026 = vld [vmem:[#allocation6 + $0xca8] sm:$0xff]
    %v9027 = vld [vmem:[#allocation6 + $0xcb0] sm:$0xff]
    %v9028 = vld [vmem:[#allocation6 + $0xcb8] sm:$0xff]
    %v9029 = vld [vmem:[#allocation6 + $0xcc0] sm:$0xff]
    %v9030 = vld [vmem:[#allocation6 + $0xcc8] sm:$0xff]
    %v9031 = vld [vmem:[#allocation6 + $0xcd0] sm:$0xff]
    %v9032 = vld [vmem:[#allocation6 + $0xcd8] sm:$0xff]
    %v9033 = vld [vmem:[#allocation6 + $0xce0] sm:$0xff]
    %v9034 = vld [vmem:[#allocation6 + $0xce8] sm:$0xff]
    %v9035 = vld [vmem:[#allocation6 + $0xcf0] sm:$0xff]
    %v9036 = vld [vmem:[#allocation6 + $0xcf8] sm:$0xff]
    %v9037 = vld [vmem:[#allocation6 + $0xd00] sm:$0xff]
    %v9038 = vld [vmem:[#allocation6 + $0xd08] sm:$0xff]
    %v9039 = vld [vmem:[#allocation6 + $0xd10] sm:$0xff]
    %v9040 = vld [vmem:[#allocation6 + $0xd18] sm:$0xff]
    %v9041 = vld [vmem:[#allocation6 + $0xd20] sm:$0xff]
    %v9042 = vld [vmem:[#allocation6 + $0xd28] sm:$0xff]
    %v9043 = vld [vmem:[#allocation6 + $0xd30] sm:$0xff]
    %v9044 = vld [vmem:[#allocation6 + $0xd38] sm:$0xff]
    %v9045 = vld [vmem:[#allocation6 + $0xd40] sm:$0xff]
    %v9046 = vld [vmem:[#allocation6 + $0xd48] sm:$0xff]
    %v9047 = vld [vmem:[#allocation6 + $0xd50] sm:$0xff]
    %v9048 = vld [vmem:[#allocation6 + $0xd58] sm:$0xff]
    %v9049 = vld [vmem:[#allocation6 + $0xd60] sm:$0xff]
    %v9050 = vld [vmem:[#allocation6 + $0xd68] sm:$0xff]
    %v9051 = vld [vmem:[#allocation6 + $0xd70] sm:$0xff]
    %v9052 = vld [vmem:[#allocation6 + $0xd78] sm:$0xff]
    %v9053 = vld [vmem:[#allocation6 + $0xd80] sm:$0xff]
    %v9054 = vld [vmem:[#allocation6 + $0xd88] sm:$0xff]
    %v9055 = vld [vmem:[#allocation6 + $0xd90] sm:$0xff]
    %v9056 = vld [vmem:[#allocation6 + $0xd98] sm:$0xff]
    %v9057 = vld [vmem:[#allocation6 + $0xda0] sm:$0xff]
    %v9058 = vld [vmem:[#allocation6 + $0xda8] sm:$0xff]
    %v9059 = vld [vmem:[#allocation6 + $0xdb0] sm:$0xff]
    %v9060 = vld [vmem:[#allocation6 + $0xdb8] sm:$0xff]
    %v9061 = vld [vmem:[#allocation6 + $0xdc0] sm:$0xff]
    %v9062 = vld [vmem:[#allocation6 + $0xdc8] sm:$0xff]
    %v9063 = vld [vmem:[#allocation6 + $0xdd0] sm:$0xff]
    %v9064 = vld [vmem:[#allocation6 + $0xdd8] sm:$0xff]
    %v9065 = vld [vmem:[#allocation6 + $0xde0] sm:$0xff]
    %v9066 = vld [vmem:[#allocation6 + $0xde8] sm:$0xff]
    %v9067 = vld [vmem:[#allocation6 + $0xdf0] sm:$0xff]
    %v9068 = vld [vmem:[#allocation6 + $0xdf8] sm:$0xff]
    %v9069 = vld [vmem:[#allocation6 + $0xe00] sm:$0xff]
    %v9070 = vld [vmem:[#allocation6 + $0xe08] sm:$0xff]
    %v9071 = vld [vmem:[#allocation6 + $0xe10] sm:$0xff]
    %v9072 = vld [vmem:[#allocation6 + $0xe18] sm:$0xff]
    %v9073 = vld [vmem:[#allocation6 + $0xe20] sm:$0xff]
    %v9074 = vld [vmem:[#allocation6 + $0xe28] sm:$0xff]
    %v9075 = vld [vmem:[#allocation6 + $0xe30] sm:$0xff]
    %v9076 = vld [vmem:[#allocation6 + $0xe38] sm:$0xff]
    %v9077 = vld [vmem:[#allocation6 + $0xe40] sm:$0xff]
    %v9078 = vld [vmem:[#allocation6 + $0xe48] sm:$0xff]
    %v9079 = vld [vmem:[#allocation6 + $0xe50] sm:$0xff]
    %v9080 = vld [vmem:[#allocation6 + $0xe58] sm:$0xff]
    %v9081 = vld [vmem:[#allocation6 + $0xe60] sm:$0xff]
    %v9082 = vld [vmem:[#allocation6 + $0xe68] sm:$0xff]
    %v9083 = vld [vmem:[#allocation6 + $0xe70] sm:$0xff]
    %v9084 = vld [vmem:[#allocation6 + $0xe78] sm:$0xff]
    %v9085 = vld [vmem:[#allocation6 + $0xe80] sm:$0xff]
    %v9086 = vld [vmem:[#allocation6 + $0xe88] sm:$0xff]
    %v9087 = vld [vmem:[#allocation6 + $0xe90] sm:$0xff]
    %v9088 = vld [vmem:[#allocation6 + $0xe98] sm:$0xff]
    %v9089 = vld [vmem:[#allocation6 + $0xea0] sm:$0xff]
    %v9090 = vld [vmem:[#allocation6 + $0xea8] sm:$0xff]
    %v9091 = vld [vmem:[#allocation6 + $0xeb0] sm:$0xff]
    %v9092 = vld [vmem:[#allocation6 + $0xeb8] sm:$0xff]
    %v9093 = vld [vmem:[#allocation6 + $0xec0] sm:$0xff]
    %v9094 = vld [vmem:[#allocation6 + $0xec8] sm:$0xff]
    %v9095 = vld [vmem:[#allocation6 + $0xed0] sm:$0xff]
    %v9096 = vld [vmem:[#allocation6 + $0xed8] sm:$0xff]
    %v9097 = vld [vmem:[#allocation6 + $0xee0] sm:$0xff]
    %v9098 = vld [vmem:[#allocation6 + $0xee8] sm:$0xff]
    %v9099 = vld [vmem:[#allocation6 + $0xef0] sm:$0xff]
    %v9100 = vld [vmem:[#allocation6 + $0xef8] sm:$0xff]
    %v9101 = vld [vmem:[#allocation6 + $0xf00] sm:$0xff]
    %v9102 = vld [vmem:[#allocation6 + $0xf08] sm:$0xff]
    %v9103 = vld [vmem:[#allocation6 + $0xf10] sm:$0xff]
    %v9104 = vld [vmem:[#allocation6 + $0xf18] sm:$0xff]
    %v9105 = vld [vmem:[#allocation6 + $0xf20] sm:$0xff]
    %v9106 = vld [vmem:[#allocation6 + $0xf28] sm:$0xff]
    %v9107 = vld [vmem:[#allocation6 + $0xf30] sm:$0xff]
    %v9108 = vld [vmem:[#allocation6 + $0xf38] sm:$0xff]
    %v9109 = vld [vmem:[#allocation6 + $0xf40] sm:$0xff]
    %v9110 = vld [vmem:[#allocation6 + $0xf48] sm:$0xff]
    %v9111 = vld [vmem:[#allocation6 + $0xf50] sm:$0xff]
    %v9112 = vld [vmem:[#allocation6 + $0xf58] sm:$0xff]
    %v9113 = vld [vmem:[#allocation6 + $0xf60] sm:$0xff]
    %v9114 = vld [vmem:[#allocation6 + $0xf68] sm:$0xff]
    %v9115 = vld [vmem:[#allocation6 + $0xf70] sm:$0xff]
    %v9116 = vld [vmem:[#allocation6 + $0xf78] sm:$0xff]
    %v9117 = vld [vmem:[#allocation6 + $0xf80] sm:$0xff]
    %v9118 = vld [vmem:[#allocation6 + $0xf88] sm:$0xff]
    %v9119 = vld [vmem:[#allocation6 + $0xf90] sm:$0xff]
    %v9120 = vld [vmem:[#allocation6 + $0xf98] sm:$0xff]
    %v9121 = vld [vmem:[#allocation6 + $0xfa0] sm:$0xff]
    %v9122 = vld [vmem:[#allocation6 + $0xfa8] sm:$0xff]
    %v9123 = vld [vmem:[#allocation6 + $0xfb0] sm:$0xff]
    %v9124 = vld [vmem:[#allocation6 + $0xfb8] sm:$0xff]
    %v9125 = vld [vmem:[#allocation6 + $0xfc0] sm:$0xff]
    %v9126 = vld [vmem:[#allocation6 + $0xfc8] sm:$0xff]
    %v9127 = vld [vmem:[#allocation6 + $0xfd0] sm:$0xff]
    %v9128 = vld [vmem:[#allocation6 + $0xfd8] sm:$0xff]
    %v9129 = vld [vmem:[#allocation6 + $0xfe0] sm:$0xff]
    %v9130 = vld [vmem:[#allocation6 + $0xfe8] sm:$0xff]
    %v9131 = vld [vmem:[#allocation6 + $0xff0] sm:$0xff]
    %v9132 = vld [vmem:[#allocation6 + $0xff8] sm:$0xff]
    %v9133 = vld [vmem:[#allocation7] sm:$0xff]
    %v9135 = vlaneseq
    %v9136 = vshrl.u32 %v9135, 7
    %v9137 = vsub.s32 0, %v9136
    %v9138 = vrot.slane %v9133, %v9137
    %v9139 = vlaneseq
    %v9140 = vshrl.u32 %v9139, 7
    %v9141 = vsub.s32 1, %v9140
    %v9142 = vrot.slane %v9133, %v9141
    %v9143 = vlaneseq
    %v9144 = vshrl.u32 %v9143, 7
    %v9145 = vsub.s32 2, %v9144
    %v9146 = vrot.slane %v9133, %v9145
    %v9147 = vlaneseq
    %v9148 = vshrl.u32 %v9147, 7
    %v9149 = vsub.s32 3, %v9148
    %v9150 = vrot.slane %v9133, %v9149
    %v9151 = vlaneseq
    %v9152 = vshrl.u32 %v9151, 7
    %v9153 = vsub.s32 4, %v9152
    %v9154 = vrot.slane %v9133, %v9153
    %v9155 = vlaneseq
    %v9156 = vshrl.u32 %v9155, 7
    %v9157 = vsub.s32 5, %v9156
    %v9158 = vrot.slane %v9133, %v9157
    %v9159 = vlaneseq
    %v9160 = vshrl.u32 %v9159, 7
    %v9161 = vsub.s32 6, %v9160
    %v9162 = vrot.slane %v9133, %v9161
    %v9163 = vlaneseq
    %v9164 = vshrl.u32 %v9163, 7
    %v9165 = vsub.s32 7, %v9164
    %v9166 = vrot.slane %v9133, %v9165
    %v9687 = vunpack.c.l.b16 %v8621
    %v9688 = vunpack.c.h.b16 %v8621
    %v9689 = vunpack.c.l.b16 %v8622
    %v9690 = vunpack.c.h.b16 %v8622
    %v9691 = vunpack.c.l.b16 %v8623
    %v9692 = vunpack.c.h.b16 %v8623
    %v9693 = vunpack.c.l.b16 %v8624
    %v9694 = vunpack.c.h.b16 %v8624
    %v9695 = vunpack.c.l.b16 %v8625
    %v9696 = vunpack.c.h.b16 %v8625
    %v9697 = vunpack.c.l.b16 %v8626
    %v9698 = vunpack.c.h.b16 %v8626
    %v9699 = vunpack.c.l.b16 %v8627
    %v9700 = vunpack.c.h.b16 %v8627
    %v9701 = vunpack.c.l.b16 %v8628
    %v9702 = vunpack.c.h.b16 %v8628
    %v9703 = vunpack.c.l.b16 %v8629
    %v9704 = vunpack.c.h.b16 %v8629
    %v9705 = vunpack.c.l.b16 %v8630
    %v9706 = vunpack.c.h.b16 %v8630
    %v9707 = vunpack.c.l.b16 %v8631
    %v9708 = vunpack.c.h.b16 %v8631
    %v9709 = vunpack.c.l.b16 %v8632
    %v9710 = vunpack.c.h.b16 %v8632
    %v9711 = vunpack.c.l.b16 %v8633
    %v9712 = vunpack.c.h.b16 %v8633
    %v9713 = vunpack.c.l.b16 %v8634
    %v9714 = vunpack.c.h.b16 %v8634
    %v9715 = vunpack.c.l.b16 %v8635
    %v9716 = vunpack.c.h.b16 %v8635
    %v9717 = vunpack.c.l.b16 %v8636
    %v9718 = vunpack.c.h.b16 %v8636
    %v9719 = vunpack.c.l.b16 %v8637
    %v9720 = vunpack.c.h.b16 %v8637
    %v9721 = vunpack.c.l.b16 %v8638
    %v9722 = vunpack.c.h.b16 %v8638
    %v9723 = vunpack.c.l.b16 %v8639
    %v9724 = vunpack.c.h.b16 %v8639
    %v9725 = vunpack.c.l.b16 %v8640
    %v9726 = vunpack.c.h.b16 %v8640
    %v9727 = vunpack.c.l.b16 %v8641
    %v9728 = vunpack.c.h.b16 %v8641
    %v9729 = vunpack.c.l.b16 %v8642
    %v9730 = vunpack.c.h.b16 %v8642
    %v9731 = vunpack.c.l.b16 %v8643
    %v9732 = vunpack.c.h.b16 %v8643
    %v9733 = vunpack.c.l.b16 %v8644
    %v9734 = vunpack.c.h.b16 %v8644
    %v9735 = vunpack.c.l.b16 %v8645
    %v9736 = vunpack.c.h.b16 %v8645
    %v9737 = vunpack.c.l.b16 %v8646
    %v9738 = vunpack.c.h.b16 %v8646
    %v9739 = vunpack.c.l.b16 %v8647
    %v9740 = vunpack.c.h.b16 %v8647
    %v9741 = vunpack.c.l.b16 %v8648
    %v9742 = vunpack.c.h.b16 %v8648
    %v9743 = vunpack.c.l.b16 %v8649
    %v9744 = vunpack.c.h.b16 %v8649
    %v9745 = vunpack.c.l.b16 %v8650
    %v9746 = vunpack.c.h.b16 %v8650
    %v9747 = vunpack.c.l.b16 %v8651
    %v9748 = vunpack.c.h.b16 %v8651
    %v9749 = vunpack.c.l.b16 %v8652
    %v9750 = vunpack.c.h.b16 %v8652
    %v9751 = vunpack.c.l.b16 %v8653
    %v9752 = vunpack.c.h.b16 %v8653
    %v9753 = vunpack.c.l.b16 %v8654
    %v9754 = vunpack.c.h.b16 %v8654
    %v9755 = vunpack.c.l.b16 %v8655
    %v9756 = vunpack.c.h.b16 %v8655
    %v9757 = vunpack.c.l.b16 %v8656
    %v9758 = vunpack.c.h.b16 %v8656
    %v9759 = vunpack.c.l.b16 %v8657
    %v9760 = vunpack.c.h.b16 %v8657
    %v9761 = vunpack.c.l.b16 %v8658
    %v9762 = vunpack.c.h.b16 %v8658
    %v9763 = vunpack.c.l.b16 %v8659
    %v9764 = vunpack.c.h.b16 %v8659
    %v9765 = vunpack.c.l.b16 %v8660
    %v9766 = vunpack.c.h.b16 %v8660
    %v9767 = vunpack.c.l.b16 %v8661
    %v9768 = vunpack.c.h.b16 %v8661
    %v9769 = vunpack.c.l.b16 %v8662
    %v9770 = vunpack.c.h.b16 %v8662
    %v9771 = vunpack.c.l.b16 %v8663
    %v9772 = vunpack.c.h.b16 %v8663
    %v9773 = vunpack.c.l.b16 %v8664
    %v9774 = vunpack.c.h.b16 %v8664
    %v9775 = vunpack.c.l.b16 %v8665
    %v9776 = vunpack.c.h.b16 %v8665
    %v9777 = vunpack.c.l.b16 %v8666
    %v9778 = vunpack.c.h.b16 %v8666
    %v9779 = vunpack.c.l.b16 %v8667
    %v9780 = vunpack.c.h.b16 %v8667
    %v9781 = vunpack.c.l.b16 %v8668
    %v9782 = vunpack.c.h.b16 %v8668
    %v9783 = vunpack.c.l.b16 %v8669
    %v9784 = vunpack.c.h.b16 %v8669
    %v9785 = vunpack.c.l.b16 %v8670
    %v9786 = vunpack.c.h.b16 %v8670
    %v9787 = vunpack.c.l.b16 %v8671
    %v9788 = vunpack.c.h.b16 %v8671
    %v9789 = vunpack.c.l.b16 %v8672
    %v9790 = vunpack.c.h.b16 %v8672
    %v9791 = vunpack.c.l.b16 %v8673
    %v9792 = vunpack.c.h.b16 %v8673
    %v9793 = vunpack.c.l.b16 %v8674
    %v9794 = vunpack.c.h.b16 %v8674
    %v9795 = vunpack.c.l.b16 %v8675
    %v9796 = vunpack.c.h.b16 %v8675
    %v9797 = vunpack.c.l.b16 %v8676
    %v9798 = vunpack.c.h.b16 %v8676
    %v9799 = vunpack.c.l.b16 %v8677
    %v9800 = vunpack.c.h.b16 %v8677
    %v9801 = vunpack.c.l.b16 %v8678
    %v9802 = vunpack.c.h.b16 %v8678
    %v9803 = vunpack.c.l.b16 %v8679
    %v9804 = vunpack.c.h.b16 %v8679
    %v9805 = vunpack.c.l.b16 %v8680
    %v9806 = vunpack.c.h.b16 %v8680
    %v9807 = vunpack.c.l.b16 %v8681
    %v9808 = vunpack.c.h.b16 %v8681
    %v9809 = vunpack.c.l.b16 %v8682
    %v9810 = vunpack.c.h.b16 %v8682
    %v9811 = vunpack.c.l.b16 %v8683
    %v9812 = vunpack.c.h.b16 %v8683
    %v9813 = vunpack.c.l.b16 %v8684
    %v9814 = vunpack.c.h.b16 %v8684
    %v9815 = vunpack.c.l.b16 %v8685
    %v9816 = vunpack.c.h.b16 %v8685
    %v9817 = vunpack.c.l.b16 %v8686
    %v9818 = vunpack.c.h.b16 %v8686
    %v9819 = vunpack.c.l.b16 %v8687
    %v9820 = vunpack.c.h.b16 %v8687
    %v9821 = vunpack.c.l.b16 %v8688
    %v9822 = vunpack.c.h.b16 %v8688
    %v9823 = vunpack.c.l.b16 %v8689
    %v9824 = vunpack.c.h.b16 %v8689
    %v9825 = vunpack.c.l.b16 %v8690
    %v9826 = vunpack.c.h.b16 %v8690
    %v9827 = vunpack.c.l.b16 %v8691
    %v9828 = vunpack.c.h.b16 %v8691
    %v9829 = vunpack.c.l.b16 %v8692
    %v9830 = vunpack.c.h.b16 %v8692
    %v9831 = vunpack.c.l.b16 %v8693
    %v9832 = vunpack.c.h.b16 %v8693
    %v9833 = vunpack.c.l.b16 %v8694
    %v9834 = vunpack.c.h.b16 %v8694
    %v9835 = vunpack.c.l.b16 %v8695
    %v9836 = vunpack.c.h.b16 %v8695
    %v9837 = vunpack.c.l.b16 %v8696
    %v9838 = vunpack.c.h.b16 %v8696
    %v9839 = vunpack.c.l.b16 %v8697
    %v9840 = vunpack.c.h.b16 %v8697
    %v9841 = vunpack.c.l.b16 %v8698
    %v9842 = vunpack.c.h.b16 %v8698
    %v9843 = vunpack.c.l.b16 %v8699
    %v9844 = vunpack.c.h.b16 %v8699
    %v9845 = vunpack.c.l.b16 %v8700
    %v9846 = vunpack.c.h.b16 %v8700
    %v9847 = vunpack.c.l.b16 %v8701
    %v9848 = vunpack.c.h.b16 %v8701
    %v9849 = vunpack.c.l.b16 %v8702
    %v9850 = vunpack.c.h.b16 %v8702
    %v9851 = vunpack.c.l.b16 %v8703
    %v9852 = vunpack.c.h.b16 %v8703
    %v9853 = vunpack.c.l.b16 %v8704
    %v9854 = vunpack.c.h.b16 %v8704
    %v9855 = vunpack.c.l.b16 %v8705
    %v9856 = vunpack.c.h.b16 %v8705
    %v9857 = vunpack.c.l.b16 %v8706
    %v9858 = vunpack.c.h.b16 %v8706
    %v9859 = vunpack.c.l.b16 %v8707
    %v9860 = vunpack.c.h.b16 %v8707
    %v9861 = vunpack.c.l.b16 %v8708
    %v9862 = vunpack.c.h.b16 %v8708
    %v9863 = vunpack.c.l.b16 %v8709
    %v9864 = vunpack.c.h.b16 %v8709
    %v9865 = vunpack.c.l.b16 %v8710
    %v9866 = vunpack.c.h.b16 %v8710
    %v9867 = vunpack.c.l.b16 %v8711
    %v9868 = vunpack.c.h.b16 %v8711
    %v9869 = vunpack.c.l.b16 %v8712
    %v9870 = vunpack.c.h.b16 %v8712
    %v9871 = vunpack.c.l.b16 %v8713
    %v9872 = vunpack.c.h.b16 %v8713
    %v9873 = vunpack.c.l.b16 %v8714
    %v9874 = vunpack.c.h.b16 %v8714
    %v9875 = vunpack.c.l.b16 %v8715
    %v9876 = vunpack.c.h.b16 %v8715
    %v9877 = vunpack.c.l.b16 %v8716
    %v9878 = vunpack.c.h.b16 %v8716
    %v9879 = vunpack.c.l.b16 %v8717
    %v9880 = vunpack.c.h.b16 %v8717
    %v9881 = vunpack.c.l.b16 %v8718
    %v9882 = vunpack.c.h.b16 %v8718
    %v9883 = vunpack.c.l.b16 %v8719
    %v9884 = vunpack.c.h.b16 %v8719
    %v9885 = vunpack.c.l.b16 %v8720
    %v9886 = vunpack.c.h.b16 %v8720
    %v9887 = vunpack.c.l.b16 %v8721
    %v9888 = vunpack.c.h.b16 %v8721
    %v9889 = vunpack.c.l.b16 %v8722
    %v9890 = vunpack.c.h.b16 %v8722
    %v9891 = vunpack.c.l.b16 %v8723
    %v9892 = vunpack.c.h.b16 %v8723
    %v9893 = vunpack.c.l.b16 %v8724
    %v9894 = vunpack.c.h.b16 %v8724
    %v9895 = vunpack.c.l.b16 %v8725
    %v9896 = vunpack.c.h.b16 %v8725
    %v9897 = vunpack.c.l.b16 %v8726
    %v9898 = vunpack.c.h.b16 %v8726
    %v9899 = vunpack.c.l.b16 %v8727
    %v9900 = vunpack.c.h.b16 %v8727
    %v9901 = vunpack.c.l.b16 %v8728
    %v9902 = vunpack.c.h.b16 %v8728
    %v9903 = vunpack.c.l.b16 %v8729
    %v9904 = vunpack.c.h.b16 %v8729
    %v9905 = vunpack.c.l.b16 %v8730
    %v9906 = vunpack.c.h.b16 %v8730
    %v9907 = vunpack.c.l.b16 %v8731
    %v9908 = vunpack.c.h.b16 %v8731
    %v9909 = vunpack.c.l.b16 %v8732
    %v9910 = vunpack.c.h.b16 %v8732
    %v9911 = vunpack.c.l.b16 %v8733
    %v9912 = vunpack.c.h.b16 %v8733
    %v9913 = vunpack.c.l.b16 %v8734
    %v9914 = vunpack.c.h.b16 %v8734
    %v9915 = vunpack.c.l.b16 %v8735
    %v9916 = vunpack.c.h.b16 %v8735
    %v9917 = vunpack.c.l.b16 %v8736
    %v9918 = vunpack.c.h.b16 %v8736
    %v9919 = vunpack.c.l.b16 %v8737
    %v9920 = vunpack.c.h.b16 %v8737
    %v9921 = vunpack.c.l.b16 %v8738
    %v9922 = vunpack.c.h.b16 %v8738
    %v9923 = vunpack.c.l.b16 %v8739
    %v9924 = vunpack.c.h.b16 %v8739
    %v9925 = vunpack.c.l.b16 %v8740
    %v9926 = vunpack.c.h.b16 %v8740
    %v9927 = vunpack.c.l.b16 %v8741
    %v9928 = vunpack.c.h.b16 %v8741
    %v9929 = vunpack.c.l.b16 %v8742
    %v9930 = vunpack.c.h.b16 %v8742
    %v9931 = vunpack.c.l.b16 %v8743
    %v9932 = vunpack.c.h.b16 %v8743
    %v9933 = vunpack.c.l.b16 %v8744
    %v9934 = vunpack.c.h.b16 %v8744
    %v9935 = vunpack.c.l.b16 %v8745
    %v9936 = vunpack.c.h.b16 %v8745
    %v9937 = vunpack.c.l.b16 %v8746
    %v9938 = vunpack.c.h.b16 %v8746
    %v9939 = vunpack.c.l.b16 %v8747
    %v9940 = vunpack.c.h.b16 %v8747
    %v9941 = vunpack.c.l.b16 %v8748
    %v9942 = vunpack.c.h.b16 %v8748
    %v9943 = vunpack.c.l.b16 %v8749
    %v9944 = vunpack.c.h.b16 %v8749
    %v9945 = vunpack.c.l.b16 %v8750
    %v9946 = vunpack.c.h.b16 %v8750
    %v9947 = vunpack.c.l.b16 %v8751
    %v9948 = vunpack.c.h.b16 %v8751
    %v9949 = vunpack.c.l.b16 %v8752
    %v9950 = vunpack.c.h.b16 %v8752
    %v9951 = vunpack.c.l.b16 %v8753
    %v9952 = vunpack.c.h.b16 %v8753
    %v9953 = vunpack.c.l.b16 %v8754
    %v9954 = vunpack.c.h.b16 %v8754
    %v9955 = vunpack.c.l.b16 %v8755
    %v9956 = vunpack.c.h.b16 %v8755
    %v9957 = vunpack.c.l.b16 %v8756
    %v9958 = vunpack.c.h.b16 %v8756
    %v9959 = vunpack.c.l.b16 %v8757
    %v9960 = vunpack.c.h.b16 %v8757
    %v9961 = vunpack.c.l.b16 %v8758
    %v9962 = vunpack.c.h.b16 %v8758
    %v9963 = vunpack.c.l.b16 %v8759
    %v9964 = vunpack.c.h.b16 %v8759
    %v9965 = vunpack.c.l.b16 %v8760
    %v9966 = vunpack.c.h.b16 %v8760
    %v9967 = vunpack.c.l.b16 %v8761
    %v9968 = vunpack.c.h.b16 %v8761
    %v9969 = vunpack.c.l.b16 %v8762
    %v9970 = vunpack.c.h.b16 %v8762
    %v9971 = vunpack.c.l.b16 %v8763
    %v9972 = vunpack.c.h.b16 %v8763
    %v9973 = vunpack.c.l.b16 %v8764
    %v9974 = vunpack.c.h.b16 %v8764
    %v9975 = vunpack.c.l.b16 %v8765
    %v9976 = vunpack.c.h.b16 %v8765
    %v9977 = vunpack.c.l.b16 %v8766
    %v9978 = vunpack.c.h.b16 %v8766
    %v9979 = vunpack.c.l.b16 %v8767
    %v9980 = vunpack.c.h.b16 %v8767
    %v9981 = vunpack.c.l.b16 %v8768
    %v9982 = vunpack.c.h.b16 %v8768
    %v9983 = vunpack.c.l.b16 %v8769
    %v9984 = vunpack.c.h.b16 %v8769
    %v9985 = vunpack.c.l.b16 %v8770
    %v9986 = vunpack.c.h.b16 %v8770
    %v9987 = vunpack.c.l.b16 %v8771
    %v9988 = vunpack.c.h.b16 %v8771
    %v9989 = vunpack.c.l.b16 %v8772
    %v9990 = vunpack.c.h.b16 %v8772
    %v9991 = vunpack.c.l.b16 %v8773
    %v9992 = vunpack.c.h.b16 %v8773
    %v9993 = vunpack.c.l.b16 %v8774
    %v9994 = vunpack.c.h.b16 %v8774
    %v9995 = vunpack.c.l.b16 %v8775
    %v9996 = vunpack.c.h.b16 %v8775
    %v9997 = vunpack.c.l.b16 %v8776
    %v9998 = vunpack.c.h.b16 %v8776
    %v9999 = vunpack.c.l.b16 %v8777
    %v10000 = vunpack.c.h.b16 %v8777
    %v10001 = vunpack.c.l.b16 %v8778
    %v10002 = vunpack.c.h.b16 %v8778
    %v10003 = vunpack.c.l.b16 %v8779
    %v10004 = vunpack.c.h.b16 %v8779
    %v10005 = vunpack.c.l.b16 %v8780
    %v10006 = vunpack.c.h.b16 %v8780
    %v10007 = vunpack.c.l.b16 %v8781
    %v10008 = vunpack.c.h.b16 %v8781
    %v10009 = vunpack.c.l.b16 %v8782
    %v10010 = vunpack.c.h.b16 %v8782
    %v10011 = vunpack.c.l.b16 %v8783
    %v10012 = vunpack.c.h.b16 %v8783
    %v10013 = vunpack.c.l.b16 %v8784
    %v10014 = vunpack.c.h.b16 %v8784
    %v10015 = vunpack.c.l.b16 %v8785
    %v10016 = vunpack.c.h.b16 %v8785
    %v10017 = vunpack.c.l.b16 %v8786
    %v10018 = vunpack.c.h.b16 %v8786
    %v10019 = vunpack.c.l.b16 %v8787
    %v10020 = vunpack.c.h.b16 %v8787
    %v10021 = vunpack.c.l.b16 %v8788
    %v10022 = vunpack.c.h.b16 %v8788
    %v10023 = vunpack.c.l.b16 %v8789
    %v10024 = vunpack.c.h.b16 %v8789
    %v10025 = vunpack.c.l.b16 %v8790
    %v10026 = vunpack.c.h.b16 %v8790
    %v10027 = vunpack.c.l.b16 %v8791
    %v10028 = vunpack.c.h.b16 %v8791
    %v10029 = vunpack.c.l.b16 %v8792
    %v10030 = vunpack.c.h.b16 %v8792
    %v10031 = vunpack.c.l.b16 %v8793
    %v10032 = vunpack.c.h.b16 %v8793
    %v10033 = vunpack.c.l.b16 %v8794
    %v10034 = vunpack.c.h.b16 %v8794
    %v10035 = vunpack.c.l.b16 %v8795
    %v10036 = vunpack.c.h.b16 %v8795
    %v10037 = vunpack.c.l.b16 %v8796
    %v10038 = vunpack.c.h.b16 %v8796
    %v10039 = vunpack.c.l.b16 %v8797
    %v10040 = vunpack.c.h.b16 %v8797
    %v10041 = vunpack.c.l.b16 %v8798
    %v10042 = vunpack.c.h.b16 %v8798
    %v10043 = vunpack.c.l.b16 %v8799
    %v10044 = vunpack.c.h.b16 %v8799
    %v10045 = vunpack.c.l.b16 %v8800
    %v10046 = vunpack.c.h.b16 %v8800
    %v10047 = vunpack.c.l.b16 %v8801
    %v10048 = vunpack.c.h.b16 %v8801
    %v10049 = vunpack.c.l.b16 %v8802
    %v10050 = vunpack.c.h.b16 %v8802
    %v10051 = vunpack.c.l.b16 %v8803
    %v10052 = vunpack.c.h.b16 %v8803
    %v10053 = vunpack.c.l.b16 %v8804
    %v10054 = vunpack.c.h.b16 %v8804
    %v10055 = vunpack.c.l.b16 %v8805
    %v10056 = vunpack.c.h.b16 %v8805
    %v10057 = vunpack.c.l.b16 %v8806
    %v10058 = vunpack.c.h.b16 %v8806
    %v10059 = vunpack.c.l.b16 %v8807
    %v10060 = vunpack.c.h.b16 %v8807
    %v10061 = vunpack.c.l.b16 %v8808
    %v10062 = vunpack.c.h.b16 %v8808
    %v10063 = vunpack.c.l.b16 %v8809
    %v10064 = vunpack.c.h.b16 %v8809
    %v10065 = vunpack.c.l.b16 %v8810
    %v10066 = vunpack.c.h.b16 %v8810
    %v10067 = vunpack.c.l.b16 %v8811
    %v10068 = vunpack.c.h.b16 %v8811
    %v10069 = vunpack.c.l.b16 %v8812
    %v10070 = vunpack.c.h.b16 %v8812
    %v10071 = vunpack.c.l.b16 %v8813
    %v10072 = vunpack.c.h.b16 %v8813
    %v10073 = vunpack.c.l.b16 %v8814
    %v10074 = vunpack.c.h.b16 %v8814
    %v10075 = vunpack.c.l.b16 %v8815
    %v10076 = vunpack.c.h.b16 %v8815
    %v10077 = vunpack.c.l.b16 %v8816
    %v10078 = vunpack.c.h.b16 %v8816
    %v10079 = vunpack.c.l.b16 %v8817
    %v10080 = vunpack.c.h.b16 %v8817
    %v10081 = vunpack.c.l.b16 %v8818
    %v10082 = vunpack.c.h.b16 %v8818
    %v10083 = vunpack.c.l.b16 %v8819
    %v10084 = vunpack.c.h.b16 %v8819
    %v10085 = vunpack.c.l.b16 %v8820
    %v10086 = vunpack.c.h.b16 %v8820
    %v10087 = vunpack.c.l.b16 %v8821
    %v10088 = vunpack.c.h.b16 %v8821
    %v10089 = vunpack.c.l.b16 %v8822
    %v10090 = vunpack.c.h.b16 %v8822
    %v10091 = vunpack.c.l.b16 %v8823
    %v10092 = vunpack.c.h.b16 %v8823
    %v10093 = vunpack.c.l.b16 %v8824
    %v10094 = vunpack.c.h.b16 %v8824
    %v10095 = vunpack.c.l.b16 %v8825
    %v10096 = vunpack.c.h.b16 %v8825
    %v10097 = vunpack.c.l.b16 %v8826
    %v10098 = vunpack.c.h.b16 %v8826
    %v10099 = vunpack.c.l.b16 %v8827
    %v10100 = vunpack.c.h.b16 %v8827
    %v10101 = vunpack.c.l.b16 %v8828
    %v10102 = vunpack.c.h.b16 %v8828
    %v10103 = vunpack.c.l.b16 %v8829
    %v10104 = vunpack.c.h.b16 %v8829
    %v10105 = vunpack.c.l.b16 %v8830
    %v10106 = vunpack.c.h.b16 %v8830
    %v10107 = vunpack.c.l.b16 %v8831
    %v10108 = vunpack.c.h.b16 %v8831
    %v10109 = vunpack.c.l.b16 %v8832
    %v10110 = vunpack.c.h.b16 %v8832
    %v10111 = vunpack.c.l.b16 %v8833
    %v10112 = vunpack.c.h.b16 %v8833
    %v10113 = vunpack.c.l.b16 %v8834
    %v10114 = vunpack.c.h.b16 %v8834
    %v10115 = vunpack.c.l.b16 %v8835
    %v10116 = vunpack.c.h.b16 %v8835
    %v10117 = vunpack.c.l.b16 %v8836
    %v10118 = vunpack.c.h.b16 %v8836
    %v10119 = vunpack.c.l.b16 %v8837
    %v10120 = vunpack.c.h.b16 %v8837
    %v10121 = vunpack.c.l.b16 %v8838
    %v10122 = vunpack.c.h.b16 %v8838
    %v10123 = vunpack.c.l.b16 %v8839
    %v10124 = vunpack.c.h.b16 %v8839
    %v10125 = vunpack.c.l.b16 %v8840
    %v10126 = vunpack.c.h.b16 %v8840
    %v10127 = vunpack.c.l.b16 %v8841
    %v10128 = vunpack.c.h.b16 %v8841
    %v10129 = vunpack.c.l.b16 %v8842
    %v10130 = vunpack.c.h.b16 %v8842
    %v10131 = vunpack.c.l.b16 %v8843
    %v10132 = vunpack.c.h.b16 %v8843
    %v10133 = vunpack.c.l.b16 %v8844
    %v10134 = vunpack.c.h.b16 %v8844
    %v10135 = vunpack.c.l.b16 %v8845
    %v10136 = vunpack.c.h.b16 %v8845
    %v10137 = vunpack.c.l.b16 %v8846
    %v10138 = vunpack.c.h.b16 %v8846
    %v10139 = vunpack.c.l.b16 %v8847
    %v10140 = vunpack.c.h.b16 %v8847
    %v10141 = vunpack.c.l.b16 %v8848
    %v10142 = vunpack.c.h.b16 %v8848
    %v10143 = vunpack.c.l.b16 %v8849
    %v10144 = vunpack.c.h.b16 %v8849
    %v10145 = vunpack.c.l.b16 %v8850
    %v10146 = vunpack.c.h.b16 %v8850
    %v10147 = vunpack.c.l.b16 %v8851
    %v10148 = vunpack.c.h.b16 %v8851
    %v10149 = vunpack.c.l.b16 %v8852
    %v10150 = vunpack.c.h.b16 %v8852
    %v10151 = vunpack.c.l.b16 %v8853
    %v10152 = vunpack.c.h.b16 %v8853
    %v10153 = vunpack.c.l.b16 %v8854
    %v10154 = vunpack.c.h.b16 %v8854
    %v10155 = vunpack.c.l.b16 %v8855
    %v10156 = vunpack.c.h.b16 %v8855
    %v10157 = vunpack.c.l.b16 %v8856
    %v10158 = vunpack.c.h.b16 %v8856
    %v10159 = vunpack.c.l.b16 %v8857
    %v10160 = vunpack.c.h.b16 %v8857
    %v10161 = vunpack.c.l.b16 %v8858
    %v10162 = vunpack.c.h.b16 %v8858
    %v10163 = vunpack.c.l.b16 %v8859
    %v10164 = vunpack.c.h.b16 %v8859
    %v10165 = vunpack.c.l.b16 %v8860
    %v10166 = vunpack.c.h.b16 %v8860
    %v10167 = vunpack.c.l.b16 %v8861
    %v10168 = vunpack.c.h.b16 %v8861
    %v10169 = vunpack.c.l.b16 %v8862
    %v10170 = vunpack.c.h.b16 %v8862
    %v10171 = vunpack.c.l.b16 %v8863
    %v10172 = vunpack.c.h.b16 %v8863
    %v10173 = vunpack.c.l.b16 %v8864
    %v10174 = vunpack.c.h.b16 %v8864
    %v10175 = vunpack.c.l.b16 %v8865
    %v10176 = vunpack.c.h.b16 %v8865
    %v10177 = vunpack.c.l.b16 %v8866
    %v10178 = vunpack.c.h.b16 %v8866
    %v10179 = vunpack.c.l.b16 %v8867
    %v10180 = vunpack.c.h.b16 %v8867
    %v10181 = vunpack.c.l.b16 %v8868
    %v10182 = vunpack.c.h.b16 %v8868
    %v10183 = vunpack.c.l.b16 %v8869
    %v10184 = vunpack.c.h.b16 %v8869
    %v10185 = vunpack.c.l.b16 %v8870
    %v10186 = vunpack.c.h.b16 %v8870
    %v10187 = vunpack.c.l.b16 %v8871
    %v10188 = vunpack.c.h.b16 %v8871
    %v10189 = vunpack.c.l.b16 %v8872
    %v10190 = vunpack.c.h.b16 %v8872
    %v10191 = vunpack.c.l.b16 %v8873
    %v10192 = vunpack.c.h.b16 %v8873
    %v10193 = vunpack.c.l.b16 %v8874
    %v10194 = vunpack.c.h.b16 %v8874
    %v10195 = vunpack.c.l.b16 %v8875
    %v10196 = vunpack.c.h.b16 %v8875
    %v10197 = vunpack.c.l.b16 %v8876
    %v10198 = vunpack.c.h.b16 %v8876
    %v10199 = vunpack.c.l.b16 %v8877
    %v10200 = vunpack.c.h.b16 %v8877
    %v10201 = vunpack.c.l.b16 %v8878
    %v10202 = vunpack.c.h.b16 %v8878
    %v10203 = vunpack.c.l.b16 %v8879
    %v10204 = vunpack.c.h.b16 %v8879
    %v10205 = vunpack.c.l.b16 %v8880
    %v10206 = vunpack.c.h.b16 %v8880
    %v10207 = vunpack.c.l.b16 %v8881
    %v10208 = vunpack.c.h.b16 %v8881
    %v10209 = vunpack.c.l.b16 %v8882
    %v10210 = vunpack.c.h.b16 %v8882
    %v10211 = vunpack.c.l.b16 %v8883
    %v10212 = vunpack.c.h.b16 %v8883
    %v10213 = vunpack.c.l.b16 %v8884
    %v10214 = vunpack.c.h.b16 %v8884
    %v10215 = vunpack.c.l.b16 %v8885
    %v10216 = vunpack.c.h.b16 %v8885
    %v10217 = vunpack.c.l.b16 %v8886
    %v10218 = vunpack.c.h.b16 %v8886
    %v10219 = vunpack.c.l.b16 %v8887
    %v10220 = vunpack.c.h.b16 %v8887
    %v10221 = vunpack.c.l.b16 %v8888
    %v10222 = vunpack.c.h.b16 %v8888
    %v10223 = vunpack.c.l.b16 %v8889
    %v10224 = vunpack.c.h.b16 %v8889
    %v10225 = vunpack.c.l.b16 %v8890
    %v10226 = vunpack.c.h.b16 %v8890
    %v10227 = vunpack.c.l.b16 %v8891
    %v10228 = vunpack.c.h.b16 %v8891
    %v10229 = vunpack.c.l.b16 %v8892
    %v10230 = vunpack.c.h.b16 %v8892
    %v10231 = vunpack.c.l.b16 %v8893
    %v10232 = vunpack.c.h.b16 %v8893
    %v10233 = vunpack.c.l.b16 %v8894
    %v10234 = vunpack.c.h.b16 %v8894
    %v10235 = vunpack.c.l.b16 %v8895
    %v10236 = vunpack.c.h.b16 %v8895
    %v10237 = vunpack.c.l.b16 %v8896
    %v10238 = vunpack.c.h.b16 %v8896
    %v10239 = vunpack.c.l.b16 %v8897
    %v10240 = vunpack.c.h.b16 %v8897
    %v10241 = vunpack.c.l.b16 %v8898
    %v10242 = vunpack.c.h.b16 %v8898
    %v10243 = vunpack.c.l.b16 %v8899
    %v10244 = vunpack.c.h.b16 %v8899
    %v10245 = vunpack.c.l.b16 %v8900
    %v10246 = vunpack.c.h.b16 %v8900
    %v10247 = vunpack.c.l.b16 %v8901
    %v10248 = vunpack.c.h.b16 %v8901
    %v10249 = vunpack.c.l.b16 %v8902
    %v10250 = vunpack.c.h.b16 %v8902
    %v10251 = vunpack.c.l.b16 %v8903
    %v10252 = vunpack.c.h.b16 %v8903
    %v10253 = vunpack.c.l.b16 %v8904
    %v10254 = vunpack.c.h.b16 %v8904
    %v10255 = vunpack.c.l.b16 %v8905
    %v10256 = vunpack.c.h.b16 %v8905
    %v10257 = vunpack.c.l.b16 %v8906
    %v10258 = vunpack.c.h.b16 %v8906
    %v10259 = vunpack.c.l.b16 %v8907
    %v10260 = vunpack.c.h.b16 %v8907
    %v10261 = vunpack.c.l.b16 %v8908
    %v10262 = vunpack.c.h.b16 %v8908
    %v10263 = vunpack.c.l.b16 %v8909
    %v10264 = vunpack.c.h.b16 %v8909
    %v10265 = vunpack.c.l.b16 %v8910
    %v10266 = vunpack.c.h.b16 %v8910
    %v10267 = vunpack.c.l.b16 %v8911
    %v10268 = vunpack.c.h.b16 %v8911
    %v10269 = vunpack.c.l.b16 %v8912
    %v10270 = vunpack.c.h.b16 %v8912
    %v10271 = vunpack.c.l.b16 %v8913
    %v10272 = vunpack.c.h.b16 %v8913
    %v10273 = vunpack.c.l.b16 %v8914
    %v10274 = vunpack.c.h.b16 %v8914
    %v10275 = vunpack.c.l.b16 %v8915
    %v10276 = vunpack.c.h.b16 %v8915
    %v10277 = vunpack.c.l.b16 %v8916
    %v10278 = vunpack.c.h.b16 %v8916
    %v10279 = vunpack.c.l.b16 %v8917
    %v10280 = vunpack.c.h.b16 %v8917
    %v10281 = vunpack.c.l.b16 %v8918
    %v10282 = vunpack.c.h.b16 %v8918
    %v10283 = vunpack.c.l.b16 %v8919
    %v10284 = vunpack.c.h.b16 %v8919
    %v10285 = vunpack.c.l.b16 %v8920
    %v10286 = vunpack.c.h.b16 %v8920
    %v10287 = vunpack.c.l.b16 %v8921
    %v10288 = vunpack.c.h.b16 %v8921
    %v10289 = vunpack.c.l.b16 %v8922
    %v10290 = vunpack.c.h.b16 %v8922
    %v10291 = vunpack.c.l.b16 %v8923
    %v10292 = vunpack.c.h.b16 %v8923
    %v10293 = vunpack.c.l.b16 %v8924
    %v10294 = vunpack.c.h.b16 %v8924
    %v10295 = vunpack.c.l.b16 %v8925
    %v10296 = vunpack.c.h.b16 %v8925
    %v10297 = vunpack.c.l.b16 %v8926
    %v10298 = vunpack.c.h.b16 %v8926
    %v10299 = vunpack.c.l.b16 %v8927
    %v10300 = vunpack.c.h.b16 %v8927
    %v10301 = vunpack.c.l.b16 %v8928
    %v10302 = vunpack.c.h.b16 %v8928
    %v10303 = vunpack.c.l.b16 %v8929
    %v10304 = vunpack.c.h.b16 %v8929
    %v10305 = vunpack.c.l.b16 %v8930
    %v10306 = vunpack.c.h.b16 %v8930
    %v10307 = vunpack.c.l.b16 %v8931
    %v10308 = vunpack.c.h.b16 %v8931
    %v10309 = vunpack.c.l.b16 %v8932
    %v10310 = vunpack.c.h.b16 %v8932
    %v10311 = vunpack.c.l.b16 %v8933
    %v10312 = vunpack.c.h.b16 %v8933
    %v10313 = vunpack.c.l.b16 %v8934
    %v10314 = vunpack.c.h.b16 %v8934
    %v10315 = vunpack.c.l.b16 %v8935
    %v10316 = vunpack.c.h.b16 %v8935
    %v10317 = vunpack.c.l.b16 %v8936
    %v10318 = vunpack.c.h.b16 %v8936
    %v10319 = vunpack.c.l.b16 %v8937
    %v10320 = vunpack.c.h.b16 %v8937
    %v10321 = vunpack.c.l.b16 %v8938
    %v10322 = vunpack.c.h.b16 %v8938
    %v10323 = vunpack.c.l.b16 %v8939
    %v10324 = vunpack.c.h.b16 %v8939
    %v10325 = vunpack.c.l.b16 %v8940
    %v10326 = vunpack.c.h.b16 %v8940
    %v10327 = vunpack.c.l.b16 %v8941
    %v10328 = vunpack.c.h.b16 %v8941
    %v10329 = vunpack.c.l.b16 %v8942
    %v10330 = vunpack.c.h.b16 %v8942
    %v10331 = vunpack.c.l.b16 %v8943
    %v10332 = vunpack.c.h.b16 %v8943
    %v10333 = vunpack.c.l.b16 %v8944
    %v10334 = vunpack.c.h.b16 %v8944
    %v10335 = vunpack.c.l.b16 %v8945
    %v10336 = vunpack.c.h.b16 %v8945
    %v10337 = vunpack.c.l.b16 %v8946
    %v10338 = vunpack.c.h.b16 %v8946
    %v10339 = vunpack.c.l.b16 %v8947
    %v10340 = vunpack.c.h.b16 %v8947
    %v10341 = vunpack.c.l.b16 %v8948
    %v10342 = vunpack.c.h.b16 %v8948
    %v10343 = vunpack.c.l.b16 %v8949
    %v10344 = vunpack.c.h.b16 %v8949
    %v10345 = vunpack.c.l.b16 %v8950
    %v10346 = vunpack.c.h.b16 %v8950
    %v10347 = vunpack.c.l.b16 %v8951
    %v10348 = vunpack.c.h.b16 %v8951
    %v10349 = vunpack.c.l.b16 %v8952
    %v10350 = vunpack.c.h.b16 %v8952
    %v10351 = vunpack.c.l.b16 %v8953
    %v10352 = vunpack.c.h.b16 %v8953
    %v10353 = vunpack.c.l.b16 %v8954
    %v10354 = vunpack.c.h.b16 %v8954
    %v10355 = vunpack.c.l.b16 %v8955
    %v10356 = vunpack.c.h.b16 %v8955
    %v10357 = vunpack.c.l.b16 %v8956
    %v10358 = vunpack.c.h.b16 %v8956
    %v10359 = vunpack.c.l.b16 %v8957
    %v10360 = vunpack.c.h.b16 %v8957
    %v10361 = vunpack.c.l.b16 %v8958
    %v10362 = vunpack.c.h.b16 %v8958
    %v10363 = vunpack.c.l.b16 %v8959
    %v10364 = vunpack.c.h.b16 %v8959
    %v10365 = vunpack.c.l.b16 %v8960
    %v10366 = vunpack.c.h.b16 %v8960
    %v10367 = vunpack.c.l.b16 %v8961
    %v10368 = vunpack.c.h.b16 %v8961
    %v10369 = vunpack.c.l.b16 %v8962
    %v10370 = vunpack.c.h.b16 %v8962
    %v10371 = vunpack.c.l.b16 %v8963
    %v10372 = vunpack.c.h.b16 %v8963
    %v10373 = vunpack.c.l.b16 %v8964
    %v10374 = vunpack.c.h.b16 %v8964
    %v10375 = vunpack.c.l.b16 %v8965
    %v10376 = vunpack.c.h.b16 %v8965
    %v10377 = vunpack.c.l.b16 %v8966
    %v10378 = vunpack.c.h.b16 %v8966
    %v10379 = vunpack.c.l.b16 %v8967
    %v10380 = vunpack.c.h.b16 %v8967
    %v10381 = vunpack.c.l.b16 %v8968
    %v10382 = vunpack.c.h.b16 %v8968
    %v10383 = vunpack.c.l.b16 %v8969
    %v10384 = vunpack.c.h.b16 %v8969
    %v10385 = vunpack.c.l.b16 %v8970
    %v10386 = vunpack.c.h.b16 %v8970
    %v10387 = vunpack.c.l.b16 %v8971
    %v10388 = vunpack.c.h.b16 %v8971
    %v10389 = vunpack.c.l.b16 %v8972
    %v10390 = vunpack.c.h.b16 %v8972
    %v10391 = vunpack.c.l.b16 %v8973
    %v10392 = vunpack.c.h.b16 %v8973
    %v10393 = vunpack.c.l.b16 %v8974
    %v10394 = vunpack.c.h.b16 %v8974
    %v10395 = vunpack.c.l.b16 %v8975
    %v10396 = vunpack.c.h.b16 %v8975
    %v10397 = vunpack.c.l.b16 %v8976
    %v10398 = vunpack.c.h.b16 %v8976
    %v10399 = vunpack.c.l.b16 %v8977
    %v10400 = vunpack.c.h.b16 %v8977
    %v10401 = vunpack.c.l.b16 %v8978
    %v10402 = vunpack.c.h.b16 %v8978
    %v10403 = vunpack.c.l.b16 %v8979
    %v10404 = vunpack.c.h.b16 %v8979
    %v10405 = vunpack.c.l.b16 %v8980
    %v10406 = vunpack.c.h.b16 %v8980
    %v10407 = vunpack.c.l.b16 %v8981
    %v10408 = vunpack.c.h.b16 %v8981
    %v10409 = vunpack.c.l.b16 %v8982
    %v10410 = vunpack.c.h.b16 %v8982
    %v10411 = vunpack.c.l.b16 %v8983
    %v10412 = vunpack.c.h.b16 %v8983
    %v10413 = vunpack.c.l.b16 %v8984
    %v10414 = vunpack.c.h.b16 %v8984
    %v10415 = vunpack.c.l.b16 %v8985
    %v10416 = vunpack.c.h.b16 %v8985
    %v10417 = vunpack.c.l.b16 %v8986
    %v10418 = vunpack.c.h.b16 %v8986
    %v10419 = vunpack.c.l.b16 %v8987
    %v10420 = vunpack.c.h.b16 %v8987
    %v10421 = vunpack.c.l.b16 %v8988
    %v10422 = vunpack.c.h.b16 %v8988
    %v10423 = vunpack.c.l.b16 %v8989
    %v10424 = vunpack.c.h.b16 %v8989
    %v10425 = vunpack.c.l.b16 %v8990
    %v10426 = vunpack.c.h.b16 %v8990
    %v10427 = vunpack.c.l.b16 %v8991
    %v10428 = vunpack.c.h.b16 %v8991
    %v10429 = vunpack.c.l.b16 %v8992
    %v10430 = vunpack.c.h.b16 %v8992
    %v10431 = vunpack.c.l.b16 %v8993
    %v10432 = vunpack.c.h.b16 %v8993
    %v10433 = vunpack.c.l.b16 %v8994
    %v10434 = vunpack.c.h.b16 %v8994
    %v10435 = vunpack.c.l.b16 %v8995
    %v10436 = vunpack.c.h.b16 %v8995
    %v10437 = vunpack.c.l.b16 %v8996
    %v10438 = vunpack.c.h.b16 %v8996
    %v10439 = vunpack.c.l.b16 %v8997
    %v10440 = vunpack.c.h.b16 %v8997
    %v10441 = vunpack.c.l.b16 %v8998
    %v10442 = vunpack.c.h.b16 %v8998
    %v10443 = vunpack.c.l.b16 %v8999
    %v10444 = vunpack.c.h.b16 %v8999
    %v10445 = vunpack.c.l.b16 %v9000
    %v10446 = vunpack.c.h.b16 %v9000
    %v10447 = vunpack.c.l.b16 %v9001
    %v10448 = vunpack.c.h.b16 %v9001
    %v10449 = vunpack.c.l.b16 %v9002
    %v10450 = vunpack.c.h.b16 %v9002
    %v10451 = vunpack.c.l.b16 %v9003
    %v10452 = vunpack.c.h.b16 %v9003
    %v10453 = vunpack.c.l.b16 %v9004
    %v10454 = vunpack.c.h.b16 %v9004
    %v10455 = vunpack.c.l.b16 %v9005
    %v10456 = vunpack.c.h.b16 %v9005
    %v10457 = vunpack.c.l.b16 %v9006
    %v10458 = vunpack.c.h.b16 %v9006
    %v10459 = vunpack.c.l.b16 %v9007
    %v10460 = vunpack.c.h.b16 %v9007
    %v10461 = vunpack.c.l.b16 %v9008
    %v10462 = vunpack.c.h.b16 %v9008
    %v10463 = vunpack.c.l.b16 %v9009
    %v10464 = vunpack.c.h.b16 %v9009
    %v10465 = vunpack.c.l.b16 %v9010
    %v10466 = vunpack.c.h.b16 %v9010
    %v10467 = vunpack.c.l.b16 %v9011
    %v10468 = vunpack.c.h.b16 %v9011
    %v10469 = vunpack.c.l.b16 %v9012
    %v10470 = vunpack.c.h.b16 %v9012
    %v10471 = vunpack.c.l.b16 %v9013
    %v10472 = vunpack.c.h.b16 %v9013
    %v10473 = vunpack.c.l.b16 %v9014
    %v10474 = vunpack.c.h.b16 %v9014
    %v10475 = vunpack.c.l.b16 %v9015
    %v10476 = vunpack.c.h.b16 %v9015
    %v10477 = vunpack.c.l.b16 %v9016
    %v10478 = vunpack.c.h.b16 %v9016
    %v10479 = vunpack.c.l.b16 %v9017
    %v10480 = vunpack.c.h.b16 %v9017
    %v10481 = vunpack.c.l.b16 %v9018
    %v10482 = vunpack.c.h.b16 %v9018
    %v10483 = vunpack.c.l.b16 %v9019
    %v10484 = vunpack.c.h.b16 %v9019
    %v10485 = vunpack.c.l.b16 %v9020
    %v10486 = vunpack.c.h.b16 %v9020
    %v10487 = vunpack.c.l.b16 %v9021
    %v10488 = vunpack.c.h.b16 %v9021
    %v10489 = vunpack.c.l.b16 %v9022
    %v10490 = vunpack.c.h.b16 %v9022
    %v10491 = vunpack.c.l.b16 %v9023
    %v10492 = vunpack.c.h.b16 %v9023
    %v10493 = vunpack.c.l.b16 %v9024
    %v10494 = vunpack.c.h.b16 %v9024
    %v10495 = vunpack.c.l.b16 %v9025
    %v10496 = vunpack.c.h.b16 %v9025
    %v10497 = vunpack.c.l.b16 %v9026
    %v10498 = vunpack.c.h.b16 %v9026
    %v10499 = vunpack.c.l.b16 %v9027
    %v10500 = vunpack.c.h.b16 %v9027
    %v10501 = vunpack.c.l.b16 %v9028
    %v10502 = vunpack.c.h.b16 %v9028
    %v10503 = vunpack.c.l.b16 %v9029
    %v10504 = vunpack.c.h.b16 %v9029
    %v10505 = vunpack.c.l.b16 %v9030
    %v10506 = vunpack.c.h.b16 %v9030
    %v10507 = vunpack.c.l.b16 %v9031
    %v10508 = vunpack.c.h.b16 %v9031
    %v10509 = vunpack.c.l.b16 %v9032
    %v10510 = vunpack.c.h.b16 %v9032
    %v10511 = vunpack.c.l.b16 %v9033
    %v10512 = vunpack.c.h.b16 %v9033
    %v10513 = vunpack.c.l.b16 %v9034
    %v10514 = vunpack.c.h.b16 %v9034
    %v10515 = vunpack.c.l.b16 %v9035
    %v10516 = vunpack.c.h.b16 %v9035
    %v10517 = vunpack.c.l.b16 %v9036
    %v10518 = vunpack.c.h.b16 %v9036
    %v10519 = vunpack.c.l.b16 %v9037
    %v10520 = vunpack.c.h.b16 %v9037
    %v10521 = vunpack.c.l.b16 %v9038
    %v10522 = vunpack.c.h.b16 %v9038
    %v10523 = vunpack.c.l.b16 %v9039
    %v10524 = vunpack.c.h.b16 %v9039
    %v10525 = vunpack.c.l.b16 %v9040
    %v10526 = vunpack.c.h.b16 %v9040
    %v10527 = vunpack.c.l.b16 %v9041
    %v10528 = vunpack.c.h.b16 %v9041
    %v10529 = vunpack.c.l.b16 %v9042
    %v10530 = vunpack.c.h.b16 %v9042
    %v10531 = vunpack.c.l.b16 %v9043
    %v10532 = vunpack.c.h.b16 %v9043
    %v10533 = vunpack.c.l.b16 %v9044
    %v10534 = vunpack.c.h.b16 %v9044
    %v10535 = vunpack.c.l.b16 %v9045
    %v10536 = vunpack.c.h.b16 %v9045
    %v10537 = vunpack.c.l.b16 %v9046
    %v10538 = vunpack.c.h.b16 %v9046
    %v10539 = vunpack.c.l.b16 %v9047
    %v10540 = vunpack.c.h.b16 %v9047
    %v10541 = vunpack.c.l.b16 %v9048
    %v10542 = vunpack.c.h.b16 %v9048
    %v10543 = vunpack.c.l.b16 %v9049
    %v10544 = vunpack.c.h.b16 %v9049
    %v10545 = vunpack.c.l.b16 %v9050
    %v10546 = vunpack.c.h.b16 %v9050
    %v10547 = vunpack.c.l.b16 %v9051
    %v10548 = vunpack.c.h.b16 %v9051
    %v10549 = vunpack.c.l.b16 %v9052
    %v10550 = vunpack.c.h.b16 %v9052
    %v10551 = vunpack.c.l.b16 %v9053
    %v10552 = vunpack.c.h.b16 %v9053
    %v10553 = vunpack.c.l.b16 %v9054
    %v10554 = vunpack.c.h.b16 %v9054
    %v10555 = vunpack.c.l.b16 %v9055
    %v10556 = vunpack.c.h.b16 %v9055
    %v10557 = vunpack.c.l.b16 %v9056
    %v10558 = vunpack.c.h.b16 %v9056
    %v10559 = vunpack.c.l.b16 %v9057
    %v10560 = vunpack.c.h.b16 %v9057
    %v10561 = vunpack.c.l.b16 %v9058
    %v10562 = vunpack.c.h.b16 %v9058
    %v10563 = vunpack.c.l.b16 %v9059
    %v10564 = vunpack.c.h.b16 %v9059
    %v10565 = vunpack.c.l.b16 %v9060
    %v10566 = vunpack.c.h.b16 %v9060
    %v10567 = vunpack.c.l.b16 %v9061
    %v10568 = vunpack.c.h.b16 %v9061
    %v10569 = vunpack.c.l.b16 %v9062
    %v10570 = vunpack.c.h.b16 %v9062
    %v10571 = vunpack.c.l.b16 %v9063
    %v10572 = vunpack.c.h.b16 %v9063
    %v10573 = vunpack.c.l.b16 %v9064
    %v10574 = vunpack.c.h.b16 %v9064
    %v10575 = vunpack.c.l.b16 %v9065
    %v10576 = vunpack.c.h.b16 %v9065
    %v10577 = vunpack.c.l.b16 %v9066
    %v10578 = vunpack.c.h.b16 %v9066
    %v10579 = vunpack.c.l.b16 %v9067
    %v10580 = vunpack.c.h.b16 %v9067
    %v10581 = vunpack.c.l.b16 %v9068
    %v10582 = vunpack.c.h.b16 %v9068
    %v10583 = vunpack.c.l.b16 %v9069
    %v10584 = vunpack.c.h.b16 %v9069
    %v10585 = vunpack.c.l.b16 %v9070
    %v10586 = vunpack.c.h.b16 %v9070
    %v10587 = vunpack.c.l.b16 %v9071
    %v10588 = vunpack.c.h.b16 %v9071
    %v10589 = vunpack.c.l.b16 %v9072
    %v10590 = vunpack.c.h.b16 %v9072
    %v10591 = vunpack.c.l.b16 %v9073
    %v10592 = vunpack.c.h.b16 %v9073
    %v10593 = vunpack.c.l.b16 %v9074
    %v10594 = vunpack.c.h.b16 %v9074
    %v10595 = vunpack.c.l.b16 %v9075
    %v10596 = vunpack.c.h.b16 %v9075
    %v10597 = vunpack.c.l.b16 %v9076
    %v10598 = vunpack.c.h.b16 %v9076
    %v10599 = vunpack.c.l.b16 %v9077
    %v10600 = vunpack.c.h.b16 %v9077
    %v10601 = vunpack.c.l.b16 %v9078
    %v10602 = vunpack.c.h.b16 %v9078
    %v10603 = vunpack.c.l.b16 %v9079
    %v10604 = vunpack.c.h.b16 %v9079
    %v10605 = vunpack.c.l.b16 %v9080
    %v10606 = vunpack.c.h.b16 %v9080
    %v10607 = vunpack.c.l.b16 %v9081
    %v10608 = vunpack.c.h.b16 %v9081
    %v10609 = vunpack.c.l.b16 %v9082
    %v10610 = vunpack.c.h.b16 %v9082
    %v10611 = vunpack.c.l.b16 %v9083
    %v10612 = vunpack.c.h.b16 %v9083
    %v10613 = vunpack.c.l.b16 %v9084
    %v10614 = vunpack.c.h.b16 %v9084
    %v10615 = vunpack.c.l.b16 %v9085
    %v10616 = vunpack.c.h.b16 %v9085
    %v10617 = vunpack.c.l.b16 %v9086
    %v10618 = vunpack.c.h.b16 %v9086
    %v10619 = vunpack.c.l.b16 %v9087
    %v10620 = vunpack.c.h.b16 %v9087
    %v10621 = vunpack.c.l.b16 %v9088
    %v10622 = vunpack.c.h.b16 %v9088
    %v10623 = vunpack.c.l.b16 %v9089
    %v10624 = vunpack.c.h.b16 %v9089
    %v10625 = vunpack.c.l.b16 %v9090
    %v10626 = vunpack.c.h.b16 %v9090
    %v10627 = vunpack.c.l.b16 %v9091
    %v10628 = vunpack.c.h.b16 %v9091
    %v10629 = vunpack.c.l.b16 %v9092
    %v10630 = vunpack.c.h.b16 %v9092
    %v10631 = vunpack.c.l.b16 %v9093
    %v10632 = vunpack.c.h.b16 %v9093
    %v10633 = vunpack.c.l.b16 %v9094
    %v10634 = vunpack.c.h.b16 %v9094
    %v10635 = vunpack.c.l.b16 %v9095
    %v10636 = vunpack.c.h.b16 %v9095
    %v10637 = vunpack.c.l.b16 %v9096
    %v10638 = vunpack.c.h.b16 %v9096
    %v10639 = vunpack.c.l.b16 %v9097
    %v10640 = vunpack.c.h.b16 %v9097
    %v10641 = vunpack.c.l.b16 %v9098
    %v10642 = vunpack.c.h.b16 %v9098
    %v10643 = vunpack.c.l.b16 %v9099
    %v10644 = vunpack.c.h.b16 %v9099
    %v10645 = vunpack.c.l.b16 %v9100
    %v10646 = vunpack.c.h.b16 %v9100
    %v10647 = vunpack.c.l.b16 %v9101
    %v10648 = vunpack.c.h.b16 %v9101
    %v10649 = vunpack.c.l.b16 %v9102
    %v10650 = vunpack.c.h.b16 %v9102
    %v10651 = vunpack.c.l.b16 %v9103
    %v10652 = vunpack.c.h.b16 %v9103
    %v10653 = vunpack.c.l.b16 %v9104
    %v10654 = vunpack.c.h.b16 %v9104
    %v10655 = vunpack.c.l.b16 %v9105
    %v10656 = vunpack.c.h.b16 %v9105
    %v10657 = vunpack.c.l.b16 %v9106
    %v10658 = vunpack.c.h.b16 %v9106
    %v10659 = vunpack.c.l.b16 %v9107
    %v10660 = vunpack.c.h.b16 %v9107
    %v10661 = vunpack.c.l.b16 %v9108
    %v10662 = vunpack.c.h.b16 %v9108
    %v10663 = vunpack.c.l.b16 %v9109
    %v10664 = vunpack.c.h.b16 %v9109
    %v10665 = vunpack.c.l.b16 %v9110
    %v10666 = vunpack.c.h.b16 %v9110
    %v10667 = vunpack.c.l.b16 %v9111
    %v10668 = vunpack.c.h.b16 %v9111
    %v10669 = vunpack.c.l.b16 %v9112
    %v10670 = vunpack.c.h.b16 %v9112
    %v10671 = vunpack.c.l.b16 %v9113
    %v10672 = vunpack.c.h.b16 %v9113
    %v10673 = vunpack.c.l.b16 %v9114
    %v10674 = vunpack.c.h.b16 %v9114
    %v10675 = vunpack.c.l.b16 %v9115
    %v10676 = vunpack.c.h.b16 %v9115
    %v10677 = vunpack.c.l.b16 %v9116
    %v10678 = vunpack.c.h.b16 %v9116
    %v10679 = vunpack.c.l.b16 %v9117
    %v10680 = vunpack.c.h.b16 %v9117
    %v10681 = vunpack.c.l.b16 %v9118
    %v10682 = vunpack.c.h.b16 %v9118
    %v10683 = vunpack.c.l.b16 %v9119
    %v10684 = vunpack.c.h.b16 %v9119
    %v10685 = vunpack.c.l.b16 %v9120
    %v10686 = vunpack.c.h.b16 %v9120
    %v10687 = vunpack.c.l.b16 %v9121
    %v10688 = vunpack.c.h.b16 %v9121
    %v10689 = vunpack.c.l.b16 %v9122
    %v10690 = vunpack.c.h.b16 %v9122
    %v10691 = vunpack.c.l.b16 %v9123
    %v10692 = vunpack.c.h.b16 %v9123
    %v10693 = vunpack.c.l.b16 %v9124
    %v10694 = vunpack.c.h.b16 %v9124
    %v10695 = vunpack.c.l.b16 %v9125
    %v10696 = vunpack.c.h.b16 %v9125
    %v10697 = vunpack.c.l.b16 %v9126
    %v10698 = vunpack.c.h.b16 %v9126
    %v10699 = vunpack.c.l.b16 %v9127
    %v10700 = vunpack.c.h.b16 %v9127
    %v10701 = vunpack.c.l.b16 %v9128
    %v10702 = vunpack.c.h.b16 %v9128
    %v10703 = vunpack.c.l.b16 %v9129
    %v10704 = vunpack.c.h.b16 %v9129
    %v10705 = vunpack.c.l.b16 %v9130
    %v10706 = vunpack.c.h.b16 %v9130
    %v10707 = vunpack.c.l.b16 %v9131
    %v10708 = vunpack.c.h.b16 %v9131
    %v10709 = vunpack.c.l.b16 %v9132
    %v10710 = vunpack.c.h.b16 %v9132
    %v10711 = vpack.c.b16 %v9695, %v9687
    %v10712 = vpack.c.b16 %v9696, %v9688
    %v10713 = vpack.c.b16 %v9697, %v9689
    %v10714 = vpack.c.b16 %v9698, %v9690
    %v10715 = vpack.c.b16 %v9699, %v9691
    %v10716 = vpack.c.b16 %v9700, %v9692
    %v10717 = vpack.c.b16 %v9701, %v9693
    %v10718 = vpack.c.b16 %v9702, %v9694
    %v10719 = vpack.c.b16 %v9711, %v9703
    %v10720 = vpack.c.b16 %v9712, %v9704
    %v10721 = vpack.c.b16 %v9713, %v9705
    %v10722 = vpack.c.b16 %v9714, %v9706
    %v10723 = vpack.c.b16 %v9715, %v9707
    %v10724 = vpack.c.b16 %v9716, %v9708
    %v10725 = vpack.c.b16 %v9717, %v9709
    %v10726 = vpack.c.b16 %v9718, %v9710
    %v10727 = vpack.c.b16 %v9727, %v9719
    %v10728 = vpack.c.b16 %v9728, %v9720
    %v10729 = vpack.c.b16 %v9729, %v9721
    %v10730 = vpack.c.b16 %v9730, %v9722
    %v10731 = vpack.c.b16 %v9731, %v9723
    %v10732 = vpack.c.b16 %v9732, %v9724
    %v10733 = vpack.c.b16 %v9733, %v9725
    %v10734 = vpack.c.b16 %v9734, %v9726
    %v10735 = vpack.c.b16 %v9743, %v9735
    %v10736 = vpack.c.b16 %v9744, %v9736
    %v10737 = vpack.c.b16 %v9745, %v9737
    %v10738 = vpack.c.b16 %v9746, %v9738
    %v10739 = vpack.c.b16 %v9747, %v9739
    %v10740 = vpack.c.b16 %v9748, %v9740
    %v10741 = vpack.c.b16 %v9749, %v9741
    %v10742 = vpack.c.b16 %v9750, %v9742
    %v10743 = vpack.c.b16 %v9759, %v9751
    %v10744 = vpack.c.b16 %v9760, %v9752
    %v10745 = vpack.c.b16 %v9761, %v9753
    %v10746 = vpack.c.b16 %v9762, %v9754
    %v10747 = vpack.c.b16 %v9763, %v9755
    %v10748 = vpack.c.b16 %v9764, %v9756
    %v10749 = vpack.c.b16 %v9765, %v9757
    %v10750 = vpack.c.b16 %v9766, %v9758
    %v10751 = vpack.c.b16 %v9775, %v9767
    %v10752 = vpack.c.b16 %v9776, %v9768
    %v10753 = vpack.c.b16 %v9777, %v9769
    %v10754 = vpack.c.b16 %v9778, %v9770
    %v10755 = vpack.c.b16 %v9779, %v9771
    %v10756 = vpack.c.b16 %v9780, %v9772
    %v10757 = vpack.c.b16 %v9781, %v9773
    %v10758 = vpack.c.b16 %v9782, %v9774
    %v10759 = vpack.c.b16 %v9791, %v9783
    %v10760 = vpack.c.b16 %v9792, %v9784
    %v10761 = vpack.c.b16 %v9793, %v9785
    %v10762 = vpack.c.b16 %v9794, %v9786
    %v10763 = vpack.c.b16 %v9795, %v9787
    %v10764 = vpack.c.b16 %v9796, %v9788
    %v10765 = vpack.c.b16 %v9797, %v9789
    %v10766 = vpack.c.b16 %v9798, %v9790
    %v10767 = vpack.c.b16 %v9807, %v9799
    %v10768 = vpack.c.b16 %v9808, %v9800
    %v10769 = vpack.c.b16 %v9809, %v9801
    %v10770 = vpack.c.b16 %v9810, %v9802
    %v10771 = vpack.c.b16 %v9811, %v9803
    %v10772 = vpack.c.b16 %v9812, %v9804
    %v10773 = vpack.c.b16 %v9813, %v9805
    %v10774 = vpack.c.b16 %v9814, %v9806
    %v10775 = vpack.c.b16 %v9823, %v9815
    %v10776 = vpack.c.b16 %v9824, %v9816
    %v10777 = vpack.c.b16 %v9825, %v9817
    %v10778 = vpack.c.b16 %v9826, %v9818
    %v10779 = vpack.c.b16 %v9827, %v9819
    %v10780 = vpack.c.b16 %v9828, %v9820
    %v10781 = vpack.c.b16 %v9829, %v9821
    %v10782 = vpack.c.b16 %v9830, %v9822
    %v10783 = vpack.c.b16 %v9839, %v9831
    %v10784 = vpack.c.b16 %v9840, %v9832
    %v10785 = vpack.c.b16 %v9841, %v9833
    %v10786 = vpack.c.b16 %v9842, %v9834
    %v10787 = vpack.c.b16 %v9843, %v9835
    %v10788 = vpack.c.b16 %v9844, %v9836
    %v10789 = vpack.c.b16 %v9845, %v9837
    %v10790 = vpack.c.b16 %v9846, %v9838
    %v10791 = vpack.c.b16 %v9855, %v9847
    %v10792 = vpack.c.b16 %v9856, %v9848
    %v10793 = vpack.c.b16 %v9857, %v9849
    %v10794 = vpack.c.b16 %v9858, %v9850
    %v10795 = vpack.c.b16 %v9859, %v9851
    %v10796 = vpack.c.b16 %v9860, %v9852
    %v10797 = vpack.c.b16 %v9861, %v9853
    %v10798 = vpack.c.b16 %v9862, %v9854
    %v10799 = vpack.c.b16 %v9871, %v9863
    %v10800 = vpack.c.b16 %v9872, %v9864
    %v10801 = vpack.c.b16 %v9873, %v9865
    %v10802 = vpack.c.b16 %v9874, %v9866
    %v10803 = vpack.c.b16 %v9875, %v9867
    %v10804 = vpack.c.b16 %v9876, %v9868
    %v10805 = vpack.c.b16 %v9877, %v9869
    %v10806 = vpack.c.b16 %v9878, %v9870
    %v10807 = vpack.c.b16 %v9887, %v9879
    %v10808 = vpack.c.b16 %v9888, %v9880
    %v10809 = vpack.c.b16 %v9889, %v9881
    %v10810 = vpack.c.b16 %v9890, %v9882
    %v10811 = vpack.c.b16 %v9891, %v9883
    %v10812 = vpack.c.b16 %v9892, %v9884
    %v10813 = vpack.c.b16 %v9893, %v9885
    %v10814 = vpack.c.b16 %v9894, %v9886
    %v10815 = vpack.c.b16 %v9903, %v9895
    %v10816 = vpack.c.b16 %v9904, %v9896
    %v10817 = vpack.c.b16 %v9905, %v9897
    %v10818 = vpack.c.b16 %v9906, %v9898
    %v10819 = vpack.c.b16 %v9907, %v9899
    %v10820 = vpack.c.b16 %v9908, %v9900
    %v10821 = vpack.c.b16 %v9909, %v9901
    %v10822 = vpack.c.b16 %v9910, %v9902
    %v10823 = vpack.c.b16 %v9919, %v9911
    %v10824 = vpack.c.b16 %v9920, %v9912
    %v10825 = vpack.c.b16 %v9921, %v9913
    %v10826 = vpack.c.b16 %v9922, %v9914
    %v10827 = vpack.c.b16 %v9923, %v9915
    %v10828 = vpack.c.b16 %v9924, %v9916
    %v10829 = vpack.c.b16 %v9925, %v9917
    %v10830 = vpack.c.b16 %v9926, %v9918
    %v10831 = vpack.c.b16 %v9935, %v9927
    %v10832 = vpack.c.b16 %v9936, %v9928
    %v10833 = vpack.c.b16 %v9937, %v9929
    %v10834 = vpack.c.b16 %v9938, %v9930
    %v10835 = vpack.c.b16 %v9939, %v9931
    %v10836 = vpack.c.b16 %v9940, %v9932
    %v10837 = vpack.c.b16 %v9941, %v9933
    %v10838 = vpack.c.b16 %v9942, %v9934
    %v10839 = vpack.c.b16 %v9951, %v9943
    %v10840 = vpack.c.b16 %v9952, %v9944
    %v10841 = vpack.c.b16 %v9953, %v9945
    %v10842 = vpack.c.b16 %v9954, %v9946
    %v10843 = vpack.c.b16 %v9955, %v9947
    %v10844 = vpack.c.b16 %v9956, %v9948
    %v10845 = vpack.c.b16 %v9957, %v9949
    %v10846 = vpack.c.b16 %v9958, %v9950
    %v10847 = vpack.c.b16 %v9967, %v9959
    %v10848 = vpack.c.b16 %v9968, %v9960
    %v10849 = vpack.c.b16 %v9969, %v9961
    %v10850 = vpack.c.b16 %v9970, %v9962
    %v10851 = vpack.c.b16 %v9971, %v9963
    %v10852 = vpack.c.b16 %v9972, %v9964
    %v10853 = vpack.c.b16 %v9973, %v9965
    %v10854 = vpack.c.b16 %v9974, %v9966
    %v10855 = vpack.c.b16 %v9983, %v9975
    %v10856 = vpack.c.b16 %v9984, %v9976
    %v10857 = vpack.c.b16 %v9985, %v9977
    %v10858 = vpack.c.b16 %v9986, %v9978
    %v10859 = vpack.c.b16 %v9987, %v9979
    %v10860 = vpack.c.b16 %v9988, %v9980
    %v10861 = vpack.c.b16 %v9989, %v9981
    %v10862 = vpack.c.b16 %v9990, %v9982
    %v10863 = vpack.c.b16 %v9999, %v9991
    %v10864 = vpack.c.b16 %v10000, %v9992
    %v10865 = vpack.c.b16 %v10001, %v9993
    %v10866 = vpack.c.b16 %v10002, %v9994
    %v10867 = vpack.c.b16 %v10003, %v9995
    %v10868 = vpack.c.b16 %v10004, %v9996
    %v10869 = vpack.c.b16 %v10005, %v9997
    %v10870 = vpack.c.b16 %v10006, %v9998
    %v10871 = vpack.c.b16 %v10015, %v10007
    %v10872 = vpack.c.b16 %v10016, %v10008
    %v10873 = vpack.c.b16 %v10017, %v10009
    %v10874 = vpack.c.b16 %v10018, %v10010
    %v10875 = vpack.c.b16 %v10019, %v10011
    %v10876 = vpack.c.b16 %v10020, %v10012
    %v10877 = vpack.c.b16 %v10021, %v10013
    %v10878 = vpack.c.b16 %v10022, %v10014
    %v10879 = vpack.c.b16 %v10031, %v10023
    %v10880 = vpack.c.b16 %v10032, %v10024
    %v10881 = vpack.c.b16 %v10033, %v10025
    %v10882 = vpack.c.b16 %v10034, %v10026
    %v10883 = vpack.c.b16 %v10035, %v10027
    %v10884 = vpack.c.b16 %v10036, %v10028
    %v10885 = vpack.c.b16 %v10037, %v10029
    %v10886 = vpack.c.b16 %v10038, %v10030
    %v10887 = vpack.c.b16 %v10047, %v10039
    %v10888 = vpack.c.b16 %v10048, %v10040
    %v10889 = vpack.c.b16 %v10049, %v10041
    %v10890 = vpack.c.b16 %v10050, %v10042
    %v10891 = vpack.c.b16 %v10051, %v10043
    %v10892 = vpack.c.b16 %v10052, %v10044
    %v10893 = vpack.c.b16 %v10053, %v10045
    %v10894 = vpack.c.b16 %v10054, %v10046
    %v10895 = vpack.c.b16 %v10063, %v10055
    %v10896 = vpack.c.b16 %v10064, %v10056
    %v10897 = vpack.c.b16 %v10065, %v10057
    %v10898 = vpack.c.b16 %v10066, %v10058
    %v10899 = vpack.c.b16 %v10067, %v10059
    %v10900 = vpack.c.b16 %v10068, %v10060
    %v10901 = vpack.c.b16 %v10069, %v10061
    %v10902 = vpack.c.b16 %v10070, %v10062
    %v10903 = vpack.c.b16 %v10079, %v10071
    %v10904 = vpack.c.b16 %v10080, %v10072
    %v10905 = vpack.c.b16 %v10081, %v10073
    %v10906 = vpack.c.b16 %v10082, %v10074
    %v10907 = vpack.c.b16 %v10083, %v10075
    %v10908 = vpack.c.b16 %v10084, %v10076
    %v10909 = vpack.c.b16 %v10085, %v10077
    %v10910 = vpack.c.b16 %v10086, %v10078
    %v10911 = vpack.c.b16 %v10095, %v10087
    %v10912 = vpack.c.b16 %v10096, %v10088
    %v10913 = vpack.c.b16 %v10097, %v10089
    %v10914 = vpack.c.b16 %v10098, %v10090
    %v10915 = vpack.c.b16 %v10099, %v10091
    %v10916 = vpack.c.b16 %v10100, %v10092
    %v10917 = vpack.c.b16 %v10101, %v10093
    %v10918 = vpack.c.b16 %v10102, %v10094
    %v10919 = vpack.c.b16 %v10111, %v10103
    %v10920 = vpack.c.b16 %v10112, %v10104
    %v10921 = vpack.c.b16 %v10113, %v10105
    %v10922 = vpack.c.b16 %v10114, %v10106
    %v10923 = vpack.c.b16 %v10115, %v10107
    %v10924 = vpack.c.b16 %v10116, %v10108
    %v10925 = vpack.c.b16 %v10117, %v10109
    %v10926 = vpack.c.b16 %v10118, %v10110
    %v10927 = vpack.c.b16 %v10127, %v10119
    %v10928 = vpack.c.b16 %v10128, %v10120
    %v10929 = vpack.c.b16 %v10129, %v10121
    %v10930 = vpack.c.b16 %v10130, %v10122
    %v10931 = vpack.c.b16 %v10131, %v10123
    %v10932 = vpack.c.b16 %v10132, %v10124
    %v10933 = vpack.c.b16 %v10133, %v10125
    %v10934 = vpack.c.b16 %v10134, %v10126
    %v10935 = vpack.c.b16 %v10143, %v10135
    %v10936 = vpack.c.b16 %v10144, %v10136
    %v10937 = vpack.c.b16 %v10145, %v10137
    %v10938 = vpack.c.b16 %v10146, %v10138
    %v10939 = vpack.c.b16 %v10147, %v10139
    %v10940 = vpack.c.b16 %v10148, %v10140
    %v10941 = vpack.c.b16 %v10149, %v10141
    %v10942 = vpack.c.b16 %v10150, %v10142
    %v10943 = vpack.c.b16 %v10159, %v10151
    %v10944 = vpack.c.b16 %v10160, %v10152
    %v10945 = vpack.c.b16 %v10161, %v10153
    %v10946 = vpack.c.b16 %v10162, %v10154
    %v10947 = vpack.c.b16 %v10163, %v10155
    %v10948 = vpack.c.b16 %v10164, %v10156
    %v10949 = vpack.c.b16 %v10165, %v10157
    %v10950 = vpack.c.b16 %v10166, %v10158
    %v10951 = vpack.c.b16 %v10175, %v10167
    %v10952 = vpack.c.b16 %v10176, %v10168
    %v10953 = vpack.c.b16 %v10177, %v10169
    %v10954 = vpack.c.b16 %v10178, %v10170
    %v10955 = vpack.c.b16 %v10179, %v10171
    %v10956 = vpack.c.b16 %v10180, %v10172
    %v10957 = vpack.c.b16 %v10181, %v10173
    %v10958 = vpack.c.b16 %v10182, %v10174
    %v10959 = vpack.c.b16 %v10191, %v10183
    %v10960 = vpack.c.b16 %v10192, %v10184
    %v10961 = vpack.c.b16 %v10193, %v10185
    %v10962 = vpack.c.b16 %v10194, %v10186
    %v10963 = vpack.c.b16 %v10195, %v10187
    %v10964 = vpack.c.b16 %v10196, %v10188
    %v10965 = vpack.c.b16 %v10197, %v10189
    %v10966 = vpack.c.b16 %v10198, %v10190
    %v10967 = vpack.c.b16 %v10207, %v10199
    %v10968 = vpack.c.b16 %v10208, %v10200
    %v10969 = vpack.c.b16 %v10209, %v10201
    %v10970 = vpack.c.b16 %v10210, %v10202
    %v10971 = vpack.c.b16 %v10211, %v10203
    %v10972 = vpack.c.b16 %v10212, %v10204
    %v10973 = vpack.c.b16 %v10213, %v10205
    %v10974 = vpack.c.b16 %v10214, %v10206
    %v10975 = vpack.c.b16 %v10223, %v10215
    %v10976 = vpack.c.b16 %v10224, %v10216
    %v10977 = vpack.c.b16 %v10225, %v10217
    %v10978 = vpack.c.b16 %v10226, %v10218
    %v10979 = vpack.c.b16 %v10227, %v10219
    %v10980 = vpack.c.b16 %v10228, %v10220
    %v10981 = vpack.c.b16 %v10229, %v10221
    %v10982 = vpack.c.b16 %v10230, %v10222
    %v10983 = vpack.c.b16 %v10239, %v10231
    %v10984 = vpack.c.b16 %v10240, %v10232
    %v10985 = vpack.c.b16 %v10241, %v10233
    %v10986 = vpack.c.b16 %v10242, %v10234
    %v10987 = vpack.c.b16 %v10243, %v10235
    %v10988 = vpack.c.b16 %v10244, %v10236
    %v10989 = vpack.c.b16 %v10245, %v10237
    %v10990 = vpack.c.b16 %v10246, %v10238
    %v10991 = vpack.c.b16 %v10255, %v10247
    %v10992 = vpack.c.b16 %v10256, %v10248
    %v10993 = vpack.c.b16 %v10257, %v10249
    %v10994 = vpack.c.b16 %v10258, %v10250
    %v10995 = vpack.c.b16 %v10259, %v10251
    %v10996 = vpack.c.b16 %v10260, %v10252
    %v10997 = vpack.c.b16 %v10261, %v10253
    %v10998 = vpack.c.b16 %v10262, %v10254
    %v10999 = vpack.c.b16 %v10271, %v10263
    %v11000 = vpack.c.b16 %v10272, %v10264
    %v11001 = vpack.c.b16 %v10273, %v10265
    %v11002 = vpack.c.b16 %v10274, %v10266
    %v11003 = vpack.c.b16 %v10275, %v10267
    %v11004 = vpack.c.b16 %v10276, %v10268
    %v11005 = vpack.c.b16 %v10277, %v10269
    %v11006 = vpack.c.b16 %v10278, %v10270
    %v11007 = vpack.c.b16 %v10287, %v10279
    %v11008 = vpack.c.b16 %v10288, %v10280
    %v11009 = vpack.c.b16 %v10289, %v10281
    %v11010 = vpack.c.b16 %v10290, %v10282
    %v11011 = vpack.c.b16 %v10291, %v10283
    %v11012 = vpack.c.b16 %v10292, %v10284
    %v11013 = vpack.c.b16 %v10293, %v10285
    %v11014 = vpack.c.b16 %v10294, %v10286
    %v11015 = vpack.c.b16 %v10303, %v10295
    %v11016 = vpack.c.b16 %v10304, %v10296
    %v11017 = vpack.c.b16 %v10305, %v10297
    %v11018 = vpack.c.b16 %v10306, %v10298
    %v11019 = vpack.c.b16 %v10307, %v10299
    %v11020 = vpack.c.b16 %v10308, %v10300
    %v11021 = vpack.c.b16 %v10309, %v10301
    %v11022 = vpack.c.b16 %v10310, %v10302
    %v11023 = vpack.c.b16 %v10319, %v10311
    %v11024 = vpack.c.b16 %v10320, %v10312
    %v11025 = vpack.c.b16 %v10321, %v10313
    %v11026 = vpack.c.b16 %v10322, %v10314
    %v11027 = vpack.c.b16 %v10323, %v10315
    %v11028 = vpack.c.b16 %v10324, %v10316
    %v11029 = vpack.c.b16 %v10325, %v10317
    %v11030 = vpack.c.b16 %v10326, %v10318
    %v11031 = vpack.c.b16 %v10335, %v10327
    %v11032 = vpack.c.b16 %v10336, %v10328
    %v11033 = vpack.c.b16 %v10337, %v10329
    %v11034 = vpack.c.b16 %v10338, %v10330
    %v11035 = vpack.c.b16 %v10339, %v10331
    %v11036 = vpack.c.b16 %v10340, %v10332
    %v11037 = vpack.c.b16 %v10341, %v10333
    %v11038 = vpack.c.b16 %v10342, %v10334
    %v11039 = vpack.c.b16 %v10351, %v10343
    %v11040 = vpack.c.b16 %v10352, %v10344
    %v11041 = vpack.c.b16 %v10353, %v10345
    %v11042 = vpack.c.b16 %v10354, %v10346
    %v11043 = vpack.c.b16 %v10355, %v10347
    %v11044 = vpack.c.b16 %v10356, %v10348
    %v11045 = vpack.c.b16 %v10357, %v10349
    %v11046 = vpack.c.b16 %v10358, %v10350
    %v11047 = vpack.c.b16 %v10367, %v10359
    %v11048 = vpack.c.b16 %v10368, %v10360
    %v11049 = vpack.c.b16 %v10369, %v10361
    %v11050 = vpack.c.b16 %v10370, %v10362
    %v11051 = vpack.c.b16 %v10371, %v10363
    %v11052 = vpack.c.b16 %v10372, %v10364
    %v11053 = vpack.c.b16 %v10373, %v10365
    %v11054 = vpack.c.b16 %v10374, %v10366
    %v11055 = vpack.c.b16 %v10383, %v10375
    %v11056 = vpack.c.b16 %v10384, %v10376
    %v11057 = vpack.c.b16 %v10385, %v10377
    %v11058 = vpack.c.b16 %v10386, %v10378
    %v11059 = vpack.c.b16 %v10387, %v10379
    %v11060 = vpack.c.b16 %v10388, %v10380
    %v11061 = vpack.c.b16 %v10389, %v10381
    %v11062 = vpack.c.b16 %v10390, %v10382
    %v11063 = vpack.c.b16 %v10399, %v10391
    %v11064 = vpack.c.b16 %v10400, %v10392
    %v11065 = vpack.c.b16 %v10401, %v10393
    %v11066 = vpack.c.b16 %v10402, %v10394
    %v11067 = vpack.c.b16 %v10403, %v10395
    %v11068 = vpack.c.b16 %v10404, %v10396
    %v11069 = vpack.c.b16 %v10405, %v10397
    %v11070 = vpack.c.b16 %v10406, %v10398
    %v11071 = vpack.c.b16 %v10415, %v10407
    %v11072 = vpack.c.b16 %v10416, %v10408
    %v11073 = vpack.c.b16 %v10417, %v10409
    %v11074 = vpack.c.b16 %v10418, %v10410
    %v11075 = vpack.c.b16 %v10419, %v10411
    %v11076 = vpack.c.b16 %v10420, %v10412
    %v11077 = vpack.c.b16 %v10421, %v10413
    %v11078 = vpack.c.b16 %v10422, %v10414
    %v11079 = vpack.c.b16 %v10431, %v10423
    %v11080 = vpack.c.b16 %v10432, %v10424
    %v11081 = vpack.c.b16 %v10433, %v10425
    %v11082 = vpack.c.b16 %v10434, %v10426
    %v11083 = vpack.c.b16 %v10435, %v10427
    %v11084 = vpack.c.b16 %v10436, %v10428
    %v11085 = vpack.c.b16 %v10437, %v10429
    %v11086 = vpack.c.b16 %v10438, %v10430
    %v11087 = vpack.c.b16 %v10447, %v10439
    %v11088 = vpack.c.b16 %v10448, %v10440
    %v11089 = vpack.c.b16 %v10449, %v10441
    %v11090 = vpack.c.b16 %v10450, %v10442
    %v11091 = vpack.c.b16 %v10451, %v10443
    %v11092 = vpack.c.b16 %v10452, %v10444
    %v11093 = vpack.c.b16 %v10453, %v10445
    %v11094 = vpack.c.b16 %v10454, %v10446
    %v11095 = vpack.c.b16 %v10463, %v10455
    %v11096 = vpack.c.b16 %v10464, %v10456
    %v11097 = vpack.c.b16 %v10465, %v10457
    %v11098 = vpack.c.b16 %v10466, %v10458
    %v11099 = vpack.c.b16 %v10467, %v10459
    %v11100 = vpack.c.b16 %v10468, %v10460
    %v11101 = vpack.c.b16 %v10469, %v10461
    %v11102 = vpack.c.b16 %v10470, %v10462
    %v11103 = vpack.c.b16 %v10479, %v10471
    %v11104 = vpack.c.b16 %v10480, %v10472
    %v11105 = vpack.c.b16 %v10481, %v10473
    %v11106 = vpack.c.b16 %v10482, %v10474
    %v11107 = vpack.c.b16 %v10483, %v10475
    %v11108 = vpack.c.b16 %v10484, %v10476
    %v11109 = vpack.c.b16 %v10485, %v10477
    %v11110 = vpack.c.b16 %v10486, %v10478
    %v11111 = vpack.c.b16 %v10495, %v10487
    %v11112 = vpack.c.b16 %v10496, %v10488
    %v11113 = vpack.c.b16 %v10497, %v10489
    %v11114 = vpack.c.b16 %v10498, %v10490
    %v11115 = vpack.c.b16 %v10499, %v10491
    %v11116 = vpack.c.b16 %v10500, %v10492
    %v11117 = vpack.c.b16 %v10501, %v10493
    %v11118 = vpack.c.b16 %v10502, %v10494
    %v11119 = vpack.c.b16 %v10511, %v10503
    %v11120 = vpack.c.b16 %v10512, %v10504
    %v11121 = vpack.c.b16 %v10513, %v10505
    %v11122 = vpack.c.b16 %v10514, %v10506
    %v11123 = vpack.c.b16 %v10515, %v10507
    %v11124 = vpack.c.b16 %v10516, %v10508
    %v11125 = vpack.c.b16 %v10517, %v10509
    %v11126 = vpack.c.b16 %v10518, %v10510
    %v11127 = vpack.c.b16 %v10527, %v10519
    %v11128 = vpack.c.b16 %v10528, %v10520
    %v11129 = vpack.c.b16 %v10529, %v10521
    %v11130 = vpack.c.b16 %v10530, %v10522
    %v11131 = vpack.c.b16 %v10531, %v10523
    %v11132 = vpack.c.b16 %v10532, %v10524
    %v11133 = vpack.c.b16 %v10533, %v10525
    %v11134 = vpack.c.b16 %v10534, %v10526
    %v11135 = vpack.c.b16 %v10543, %v10535
    %v11136 = vpack.c.b16 %v10544, %v10536
    %v11137 = vpack.c.b16 %v10545, %v10537
    %v11138 = vpack.c.b16 %v10546, %v10538
    %v11139 = vpack.c.b16 %v10547, %v10539
    %v11140 = vpack.c.b16 %v10548, %v10540
    %v11141 = vpack.c.b16 %v10549, %v10541
    %v11142 = vpack.c.b16 %v10550, %v10542
    %v11143 = vpack.c.b16 %v10559, %v10551
    %v11144 = vpack.c.b16 %v10560, %v10552
    %v11145 = vpack.c.b16 %v10561, %v10553
    %v11146 = vpack.c.b16 %v10562, %v10554
    %v11147 = vpack.c.b16 %v10563, %v10555
    %v11148 = vpack.c.b16 %v10564, %v10556
    %v11149 = vpack.c.b16 %v10565, %v10557
    %v11150 = vpack.c.b16 %v10566, %v10558
    %v11151 = vpack.c.b16 %v10575, %v10567
    %v11152 = vpack.c.b16 %v10576, %v10568
    %v11153 = vpack.c.b16 %v10577, %v10569
    %v11154 = vpack.c.b16 %v10578, %v10570
    %v11155 = vpack.c.b16 %v10579, %v10571
    %v11156 = vpack.c.b16 %v10580, %v10572
    %v11157 = vpack.c.b16 %v10581, %v10573
    %v11158 = vpack.c.b16 %v10582, %v10574
    %v11159 = vpack.c.b16 %v10591, %v10583
    %v11160 = vpack.c.b16 %v10592, %v10584
    %v11161 = vpack.c.b16 %v10593, %v10585
    %v11162 = vpack.c.b16 %v10594, %v10586
    %v11163 = vpack.c.b16 %v10595, %v10587
    %v11164 = vpack.c.b16 %v10596, %v10588
    %v11165 = vpack.c.b16 %v10597, %v10589
    %v11166 = vpack.c.b16 %v10598, %v10590
    %v11167 = vpack.c.b16 %v10607, %v10599
    %v11168 = vpack.c.b16 %v10608, %v10600
    %v11169 = vpack.c.b16 %v10609, %v10601
    %v11170 = vpack.c.b16 %v10610, %v10602
    %v11171 = vpack.c.b16 %v10611, %v10603
    %v11172 = vpack.c.b16 %v10612, %v10604
    %v11173 = vpack.c.b16 %v10613, %v10605
    %v11174 = vpack.c.b16 %v10614, %v10606
    %v11175 = vpack.c.b16 %v10623, %v10615
    %v11176 = vpack.c.b16 %v10624, %v10616
    %v11177 = vpack.c.b16 %v10625, %v10617
    %v11178 = vpack.c.b16 %v10626, %v10618
    %v11179 = vpack.c.b16 %v10627, %v10619
    %v11180 = vpack.c.b16 %v10628, %v10620
    %v11181 = vpack.c.b16 %v10629, %v10621
    %v11182 = vpack.c.b16 %v10630, %v10622
    %v11183 = vpack.c.b16 %v10639, %v10631
    %v11184 = vpack.c.b16 %v10640, %v10632
    %v11185 = vpack.c.b16 %v10641, %v10633
    %v11186 = vpack.c.b16 %v10642, %v10634
    %v11187 = vpack.c.b16 %v10643, %v10635
    %v11188 = vpack.c.b16 %v10644, %v10636
    %v11189 = vpack.c.b16 %v10645, %v10637
    %v11190 = vpack.c.b16 %v10646, %v10638
    %v11191 = vpack.c.b16 %v10655, %v10647
    %v11192 = vpack.c.b16 %v10656, %v10648
    %v11193 = vpack.c.b16 %v10657, %v10649
    %v11194 = vpack.c.b16 %v10658, %v10650
    %v11195 = vpack.c.b16 %v10659, %v10651
    %v11196 = vpack.c.b16 %v10660, %v10652
    %v11197 = vpack.c.b16 %v10661, %v10653
    %v11198 = vpack.c.b16 %v10662, %v10654
    %v11199 = vpack.c.b16 %v10671, %v10663
    %v11200 = vpack.c.b16 %v10672, %v10664
    %v11201 = vpack.c.b16 %v10673, %v10665
    %v11202 = vpack.c.b16 %v10674, %v10666
    %v11203 = vpack.c.b16 %v10675, %v10667
    %v11204 = vpack.c.b16 %v10676, %v10668
    %v11205 = vpack.c.b16 %v10677, %v10669
    %v11206 = vpack.c.b16 %v10678, %v10670
    %v11207 = vpack.c.b16 %v10687, %v10679
    %v11208 = vpack.c.b16 %v10688, %v10680
    %v11209 = vpack.c.b16 %v10689, %v10681
    %v11210 = vpack.c.b16 %v10690, %v10682
    %v11211 = vpack.c.b16 %v10691, %v10683
    %v11212 = vpack.c.b16 %v10692, %v10684
    %v11213 = vpack.c.b16 %v10693, %v10685
    %v11214 = vpack.c.b16 %v10694, %v10686
    %v11215 = vpack.c.b16 %v10703, %v10695
    %v11216 = vpack.c.b16 %v10704, %v10696
    %v11217 = vpack.c.b16 %v10705, %v10697
    %v11218 = vpack.c.b16 %v10706, %v10698
    %v11219 = vpack.c.b16 %v10707, %v10699
    %v11220 = vpack.c.b16 %v10708, %v10700
    %v11221 = vpack.c.b16 %v10709, %v10701
    %v11222 = vpack.c.b16 %v10710, %v10702
    %11735 = vmatprep.subr.bf16.mxu0 %v10712
    %11736 = vmatpush1.bf16.msra.mxu0 %v10711
    %11737 = vmatprep.subr.bf16.mxu0 %v10720
    %11738 = vmatpush1.bf16.msra.mxu0 %v10719
    %11739 = vmatprep.subr.bf16.mxu0 %v10728
    %11740 = vmatpush1.bf16.msra.mxu0 %v10727
    %11741 = vmatprep.subr.bf16.mxu0 %v10736
    %11742 = vmatpush1.bf16.msra.mxu0 %v10735
    %11743 = vmatprep.subr.bf16.mxu0 %v10744
    %11744 = vmatpush1.bf16.msra.mxu0 %v10743
    %11745 = vmatprep.subr.bf16.mxu0 %v10752
    %11746 = vmatpush1.bf16.msra.mxu0 %v10751
    %11747 = vmatprep.subr.bf16.mxu0 %v10760
    %11748 = vmatpush1.bf16.msra.mxu0 %v10759
    %11749 = vmatprep.subr.bf16.mxu0 %v10768
    %11750 = vmatpush1.bf16.msra.mxu0 %v10767
    %11751 = vmatprep.subr.bf16.mxu0 %v10776
    %11752 = vmatpush1.bf16.msra.mxu0 %v10775
    %11753 = vmatprep.subr.bf16.mxu0 %v10784
    %11754 = vmatpush1.bf16.msra.mxu0 %v10783
    %11755 = vmatprep.subr.bf16.mxu0 %v10792
    %11756 = vmatpush1.bf16.msra.mxu0 %v10791
    %11757 = vmatprep.subr.bf16.mxu0 %v10800
    %11758 = vmatpush1.bf16.msra.mxu0 %v10799
    %11759 = vmatprep.subr.bf16.mxu0 %v10808
    %11760 = vmatpush1.bf16.msra.mxu0 %v10807
    %11761 = vmatprep.subr.bf16.mxu0 %v10816
    %11762 = vmatpush1.bf16.msra.mxu0 %v10815
    %11763 = vmatprep.subr.bf16.mxu0 %v10824
    %11764 = vmatpush1.bf16.msra.mxu0 %v10823
    %11765 = vmatprep.subr.bf16.mxu0 %v10832
    %11766 = vmatpush1.bf16.msra.mxu0 %v10831
    %11767 = vmatprep.mubr.bf16.mxu0 %v8614
    %11768 = vmatmul.mubr.bf16.gmra.mrb[0].mxu0 %v8613
    %v11769 = vpop.f32.mrb[0].mxu0
    %v11770 = vadd.f32 %v9138, %v11769
    %v11771 = vpop.f32.mrb[0].mxu0
    %v11772 = vadd.f32 %v9142, %v11771
    %v11773 = vpop.f32.mrb[0].mxu0
    %v11774 = vpop.f32.mrb[0].mxu0
    %11775 = vdwg.mxu0
    %11776 = vmatprep.subr.bf16.mxu0 %v10840
    %11777 = vmatpush1.bf16.msra.mxu0 %v10839
    %11778 = vmatprep.subr.bf16.mxu0 %v10848
    %11779 = vmatpush1.bf16.msra.mxu0 %v10847
    %11780 = vmatprep.subr.bf16.mxu0 %v10856
    %11781 = vmatpush1.bf16.msra.mxu0 %v10855
    %11782 = vmatprep.subr.bf16.mxu0 %v10864
    %11783 = vmatpush1.bf16.msra.mxu0 %v10863
    %11784 = vmatprep.subr.bf16.mxu0 %v10872
    %11785 = vmatpush1.bf16.msra.mxu0 %v10871
    %11786 = vmatprep.subr.bf16.mxu0 %v10880
    %11787 = vmatpush1.bf16.msra.mxu0 %v10879
    %11788 = vmatprep.subr.bf16.mxu0 %v10888
    %11789 = vmatpush1.bf16.msra.mxu0 %v10887
    %11790 = vmatprep.subr.bf16.mxu0 %v10896
    %11791 = vmatpush1.bf16.msra.mxu0 %v10895
    %11792 = vmatprep.subr.bf16.mxu0 %v10904
    %11793 = vmatpush1.bf16.msra.mxu0 %v10903
    %11794 = vmatprep.subr.bf16.mxu0 %v10912
    %11795 = vmatpush1.bf16.msra.mxu0 %v10911
    %11796 = vmatprep.subr.bf16.mxu0 %v10920
    %11797 = vmatpush1.bf16.msra.mxu0 %v10919
    %11798 = vmatprep.subr.bf16.mxu0 %v10928
    %11799 = vmatpush1.bf16.msra.mxu0 %v10927
    %11800 = vmatprep.subr.bf16.mxu0 %v10936
    %11801 = vmatpush1.bf16.msra.mxu0 %v10935
    %11802 = vmatprep.subr.bf16.mxu0 %v10944
    %11803 = vmatpush1.bf16.msra.mxu0 %v10943
    %11804 = vmatprep.subr.bf16.mxu0 %v10952
    %11805 = vmatpush1.bf16.msra.mxu0 %v10951
    %11806 = vmatprep.subr.bf16.mxu0 %v10960
    %11807 = vmatpush1.bf16.msra.mxu0 %v10959
    %11808 = vmatprep.mubr.bf16.mxu0 %v8616
    %11809 = vmatmul.mubr.bf16.gmra.mrb[0].mxu0 %v8615
    %v11810 = vpop.f32.mrb[0].mxu0
    %v11811 = vadd.f32 %v11770, %v11810
    %v11812 = vpop.f32.mrb[0].mxu0
    %v11813 = vadd.f32 %v11772, %v11812
    %v11814 = vpop.f32.mrb[0].mxu0
    %v11815 = vpop.f32.mrb[0].mxu0
    %11816 = vdwg.mxu0
    %11817 = vmatprep.subr.bf16.mxu0 %v10968
    %11818 = vmatpush1.bf16.msra.mxu0 %v10967
    %11819 = vmatprep.subr.bf16.mxu0 %v10976
    %11820 = vmatpush1.bf16.msra.mxu0 %v10975
    %11821 = vmatprep.subr.bf16.mxu0 %v10984
    %11822 = vmatpush1.bf16.msra.mxu0 %v10983
    %11823 = vmatprep.subr.bf16.mxu0 %v10992
    %11824 = vmatpush1.bf16.msra.mxu0 %v10991
    %11825 = vmatprep.subr.bf16.mxu0 %v11000
    %11826 = vmatpush1.bf16.msra.mxu0 %v10999
    %11827 = vmatprep.subr.bf16.mxu0 %v11008
    %11828 = vmatpush1.bf16.msra.mxu0 %v11007
    %11829 = vmatprep.subr.bf16.mxu0 %v11016
    %11830 = vmatpush1.bf16.msra.mxu0 %v11015
    %11831 = vmatprep.subr.bf16.mxu0 %v11024
    %11832 = vmatpush1.bf16.msra.mxu0 %v11023
    %11833 = vmatprep.subr.bf16.mxu0 %v11032
    %11834 = vmatpush1.bf16.msra.mxu0 %v11031
    %11835 = vmatprep.subr.bf16.mxu0 %v11040
    %11836 = vmatpush1.bf16.msra.mxu0 %v11039
    %11837 = vmatprep.subr.bf16.mxu0 %v11048
    %11838 = vmatpush1.bf16.msra.mxu0 %v11047
    %11839 = vmatprep.subr.bf16.mxu0 %v11056
    %11840 = vmatpush1.bf16.msra.mxu0 %v11055
    %11841 = vmatprep.subr.bf16.mxu0 %v11064
    %11842 = vmatpush1.bf16.msra.mxu0 %v11063
    %11843 = vmatprep.subr.bf16.mxu0 %v11072
    %11844 = vmatpush1.bf16.msra.mxu0 %v11071
    %11845 = vmatprep.subr.bf16.mxu0 %v11080
    %11846 = vmatpush1.bf16.msra.mxu0 %v11079
    %11847 = vmatprep.subr.bf16.mxu0 %v11088
    %11848 = vmatpush1.bf16.msra.mxu0 %v11087
    %11849 = vmatprep.mubr.bf16.mxu0 %v8618
    %11850 = vmatmul.mubr.bf16.gmra.mrb[0].mxu0 %v8617
    %v11851 = vpop.f32.mrb[0].mxu0
    %v11852 = vadd.f32 %v11811, %v11851
    %v11853 = vpop.f32.mrb[0].mxu0
    %v11854 = vadd.f32 %v11813, %v11853
    %v11855 = vpop.f32.mrb[0].mxu0
    %v11856 = vpop.f32.mrb[0].mxu0
    %11857 = vdwg.mxu0
    %11858 = vmatprep.subr.bf16.mxu0 %v11096
    %11859 = vmatpush1.bf16.msra.mxu0 %v11095
    %11860 = vmatprep.subr.bf16.mxu0 %v11104
    %11861 = vmatpush1.bf16.msra.mxu0 %v11103
    %11862 = vmatprep.subr.bf16.mxu0 %v11112
    %11863 = vmatpush1.bf16.msra.mxu0 %v11111
    %11864 = vmatprep.subr.bf16.mxu0 %v11120
    %11865 = vmatpush1.bf16.msra.mxu0 %v11119
    %11866 = vmatprep.subr.bf16.mxu0 %v11128
    %11867 = vmatpush1.bf16.msra.mxu0 %v11127
    %11868 = vmatprep.subr.bf16.mxu0 %v11136
    %11869 = vmatpush1.bf16.msra.mxu0 %v11135
    %11870 = vmatprep.subr.bf16.mxu0 %v11144
    %11871 = vmatpush1.bf16.msra.mxu0 %v11143
    %11872 = vmatprep.subr.bf16.mxu0 %v11152
    %11873 = vmatpush1.bf16.msra.mxu0 %v11151
    %11874 = vmatprep.subr.bf16.mxu0 %v11160
    %11875 = vmatpush1.bf16.msra.mxu0 %v11159
    %11876 = vmatprep.subr.bf16.mxu0 %v11168
    %11877 = vmatpush1.bf16.msra.mxu0 %v11167
    %11878 = vmatprep.subr.bf16.mxu0 %v11176
    %11879 = vmatpush1.bf16.msra.mxu0 %v11175
    %11880 = vmatprep.subr.bf16.mxu0 %v11184
    %11881 = vmatpush1.bf16.msra.mxu0 %v11183
    %11882 = vmatprep.subr.bf16.mxu0 %v11192
    %11883 = vmatpush1.bf16.msra.mxu0 %v11191
    %11884 = vmatprep.subr.bf16.mxu0 %v11200
    %11885 = vmatpush1.bf16.msra.mxu0 %v11199
    %11886 = vmatprep.subr.bf16.mxu0 %v11208
    %11887 = vmatpush1.bf16.msra.mxu0 %v11207
    %11888 = vmatprep.subr.bf16.mxu0 %v11216
    %11889 = vmatpush1.bf16.msra.mxu0 %v11215
    %11890 = vmatprep.mubr.bf16.mxu0 %v8620
    %11891 = vmatmul.mubr.bf16.gmra.mrb[0].mxu0 %v8619
    %v11892 = vpop.f32.mrb[0].mxu0
    %v11893 = vadd.f32 %v11852, %v11892
    %v11894 = vpop.f32.mrb[0].mxu0
    %v11895 = vadd.f32 %v11854, %v11894
    %v11896 = vpop.f32.mrb[0].mxu0
    %v11897 = vpop.f32.mrb[0].mxu0
    %11898 = vdwg.mxu0
    %11899 = vmatprep.subr.bf16.mxu0 %v10714
    %11900 = vmatpush1.bf16.msra.mxu0 %v10713
    %11901 = vmatprep.subr.bf16.mxu0 %v10722
    %11902 = vmatpush1.bf16.msra.mxu0 %v10721
    %11903 = vmatprep.subr.bf16.mxu0 %v10730
    %11904 = vmatpush1.bf16.msra.mxu0 %v10729
    %11905 = vmatprep.subr.bf16.mxu0 %v10738
    %11906 = vmatpush1.bf16.msra.mxu0 %v10737
    %11907 = vmatprep.subr.bf16.mxu0 %v10746
    %11908 = vmatpush1.bf16.msra.mxu0 %v10745
    %11909 = vmatprep.subr.bf16.mxu0 %v10754
    %11910 = vmatpush1.bf16.msra.mxu0 %v10753
    %11911 = vmatprep.subr.bf16.mxu0 %v10762
    %11912 = vmatpush1.bf16.msra.mxu0 %v10761
    %11913 = vmatprep.subr.bf16.mxu0 %v10770
    %11914 = vmatpush1.bf16.msra.mxu0 %v10769
    %11915 = vmatprep.subr.bf16.mxu0 %v10778
    %11916 = vmatpush1.bf16.msra.mxu0 %v10777
    %11917 = vmatprep.subr.bf16.mxu0 %v10786
    %11918 = vmatpush1.bf16.msra.mxu0 %v10785
    %11919 = vmatprep.subr.bf16.mxu0 %v10794
    %11920 = vmatpush1.bf16.msra.mxu0 %v10793
    %11921 = vmatprep.subr.bf16.mxu0 %v10802
    %11922 = vmatpush1.bf16.msra.mxu0 %v10801
    %11923 = vmatprep.subr.bf16.mxu0 %v10810
    %11924 = vmatpush1.bf16.msra.mxu0 %v10809
    %11925 = vmatprep.subr.bf16.mxu0 %v10818
    %11926 = vmatpush1.bf16.msra.mxu0 %v10817
    %11927 = vmatprep.subr.bf16.mxu0 %v10826
    %11928 = vmatpush1.bf16.msra.mxu0 %v10825
    %11929 = vmatprep.subr.bf16.mxu0 %v10834
    %11930 = vmatpush1.bf16.msra.mxu0 %v10833
    %11931 = vmatprep.mubr.bf16.mxu0 %v8614
    %11932 = vmatmul.mubr.bf16.gmra.mrb[0].mxu0 %v8613
    %v11933 = vpop.f32.mrb[0].mxu0
    %v11934 = vadd.f32 %v9146, %v11933
    %v11935 = vpop.f32.mrb[0].mxu0
    %v11936 = vadd.f32 %v9150, %v11935
    %v11937 = vpop.f32.mrb[0].mxu0
    %v11938 = vpop.f32.mrb[0].mxu0
    %11939 = vdwg.mxu0
    %11940 = vmatprep.subr.bf16.mxu0 %v10842
    %11941 = vmatpush1.bf16.msra.mxu0 %v10841
    %11942 = vmatprep.subr.bf16.mxu0 %v10850
    %11943 = vmatpush1.bf16.msra.mxu0 %v10849
    %11944 = vmatprep.subr.bf16.mxu0 %v10858
    %11945 = vmatpush1.bf16.msra.mxu0 %v10857
    %11946 = vmatprep.subr.bf16.mxu0 %v10866
    %11947 = vmatpush1.bf16.msra.mxu0 %v10865
    %11948 = vmatprep.subr.bf16.mxu0 %v10874
    %11949 = vmatpush1.bf16.msra.mxu0 %v10873
    %11950 = vmatprep.subr.bf16.mxu0 %v10882
    %11951 = vmatpush1.bf16.msra.mxu0 %v10881
    %11952 = vmatprep.subr.bf16.mxu0 %v10890
    %11953 = vmatpush1.bf16.msra.mxu0 %v10889
    %11954 = vmatprep.subr.bf16.mxu0 %v10898
    %11955 = vmatpush1.bf16.msra.mxu0 %v10897
    %11956 = vmatprep.subr.bf16.mxu0 %v10906
    %11957 = vmatpush1.bf16.msra.mxu0 %v10905
    %11958 = vmatprep.subr.bf16.mxu0 %v10914
    %11959 = vmatpush1.bf16.msra.mxu0 %v10913
    %11960 = vmatprep.subr.bf16.mxu0 %v10922
    %11961 = vmatpush1.bf16.msra.mxu0 %v10921
    %11962 = vmatprep.subr.bf16.mxu0 %v10930
    %11963 = vmatpush1.bf16.msra.mxu0 %v10929
    %11964 = vmatprep.subr.bf16.mxu0 %v10938
    %11965 = vmatpush1.bf16.msra.mxu0 %v10937
    %11966 = vmatprep.subr.bf16.mxu0 %v10946
    %11967 = vmatpush1.bf16.msra.mxu0 %v10945
    %11968 = vmatprep.subr.bf16.mxu0 %v10954
    %11969 = vmatpush1.bf16.msra.mxu0 %v10953
    %11970 = vmatprep.subr.bf16.mxu0 %v10962
    %11971 = vmatpush1.bf16.msra.mxu0 %v10961
    %11972 = vmatprep.mubr.bf16.mxu0 %v8616
    %11973 = vmatmul.mubr.bf16.gmra.mrb[0].mxu0 %v8615
    %v11974 = vpop.f32.mrb[0].mxu0
    %v11975 = vadd.f32 %v11934, %v11974
    %v11976 = vpop.f32.mrb[0].mxu0
    %v11977 = vadd.f32 %v11936, %v11976
    %v11978 = vpop.f32.mrb[0].mxu0
    %v11979 = vpop.f32.mrb[0].mxu0
    %11980 = vdwg.mxu0
    %11981 = vmatprep.subr.bf16.mxu0 %v10970
    %11982 = vmatpush1.bf16.msra.mxu0 %v10969
    %11983 = vmatprep.subr.bf16.mxu0 %v10978
    %11984 = vmatpush1.bf16.msra.mxu0 %v10977
    %11985 = vmatprep.subr.bf16.mxu0 %v10986
    %11986 = vmatpush1.bf16.msra.mxu0 %v10985
    %11987 = vmatprep.subr.bf16.mxu0 %v10994
    %11988 = vmatpush1.bf16.msra.mxu0 %v10993
    %11989 = vmatprep.subr.bf16.mxu0 %v11002
    %11990 = vmatpush1.bf16.msra.mxu0 %v11001
    %11991 = vmatprep.subr.bf16.mxu0 %v11010
    %11992 = vmatpush1.bf16.msra.mxu0 %v11009
    %11993 = vmatprep.subr.bf16.mxu0 %v11018
    %11994 = vmatpush1.bf16.msra.mxu0 %v11017
    %11995 = vmatprep.subr.bf16.mxu0 %v11026
    %11996 = vmatpush1.bf16.msra.mxu0 %v11025
    %11997 = vmatprep.subr.bf16.mxu0 %v11034
    %11998 = vmatpush1.bf16.msra.mxu0 %v11033
    %11999 = vmatprep.subr.bf16.mxu0 %v11042
    %12000 = vmatpush1.bf16.msra.mxu0 %v11041
    %12001 = vmatprep.subr.bf16.mxu0 %v11050
    %12002 = vmatpush1.bf16.msra.mxu0 %v11049
    %12003 = vmatprep.subr.bf16.mxu0 %v11058
    %12004 = vmatpush1.bf16.msra.mxu0 %v11057
    %12005 = vmatprep.subr.bf16.mxu0 %v11066
    %12006 = vmatpush1.bf16.msra.mxu0 %v11065
    %12007 = vmatprep.subr.bf16.mxu0 %v11074
    %12008 = vmatpush1.bf16.msra.mxu0 %v11073
    %12009 = vmatprep.subr.bf16.mxu0 %v11082
    %12010 = vmatpush1.bf16.msra.mxu0 %v11081
    %12011 = vmatprep.subr.bf16.mxu0 %v11090
    %12012 = vmatpush1.bf16.msra.mxu0 %v11089
    %12013 = vmatprep.mubr.bf16.mxu0 %v8618
    %12014 = vmatmul.mubr.bf16.gmra.mrb[0].mxu0 %v8617
    %v12015 = vpop.f32.mrb[0].mxu0
    %v12016 = vadd.f32 %v11975, %v12015
    %v12017 = vpop.f32.mrb[0].mxu0
    %v12018 = vadd.f32 %v11977, %v12017
    %v12019 = vpop.f32.mrb[0].mxu0
    %v12020 = vpop.f32.mrb[0].mxu0
    %12021 = vdwg.mxu0
    %12022 = vmatprep.subr.bf16.mxu0 %v11098
    %12023 = vmatpush1.bf16.msra.mxu0 %v11097
    %12024 = vmatprep.subr.bf16.mxu0 %v11106
    %12025 = vmatpush1.bf16.msra.mxu0 %v11105
    %12026 = vmatprep.subr.bf16.mxu0 %v11114
    %12027 = vmatpush1.bf16.msra.mxu0 %v11113
    %12028 = vmatprep.subr.bf16.mxu0 %v11122
    %12029 = vmatpush1.bf16.msra.mxu0 %v11121
    %12030 = vmatprep.subr.bf16.mxu0 %v11130
    %12031 = vmatpush1.bf16.msra.mxu0 %v11129
    %12032 = vmatprep.subr.bf16.mxu0 %v11138
    %12033 = vmatpush1.bf16.msra.mxu0 %v11137
    %12034 = vmatprep.subr.bf16.mxu0 %v11146
    %12035 = vmatpush1.bf16.msra.mxu0 %v11145
    %12036 = vmatprep.subr.bf16.mxu0 %v11154
    %12037 = vmatpush1.bf16.msra.mxu0 %v11153
    %12038 = vmatprep.subr.bf16.mxu0 %v11162
    %12039 = vmatpush1.bf16.msra.mxu0 %v11161
    %12040 = vmatprep.subr.bf16.mxu0 %v11170
    %12041 = vmatpush1.bf16.msra.mxu0 %v11169
    %12042 = vmatprep.subr.bf16.mxu0 %v11178
    %12043 = vmatpush1.bf16.msra.mxu0 %v11177
    %12044 = vmatprep.subr.bf16.mxu0 %v11186
    %12045 = vmatpush1.bf16.msra.mxu0 %v11185
    %12046 = vmatprep.subr.bf16.mxu0 %v11194
    %12047 = vmatpush1.bf16.msra.mxu0 %v11193
    %12048 = vmatprep.subr.bf16.mxu0 %v11202
    %12049 = vmatpush1.bf16.msra.mxu0 %v11201
    %12050 = vmatprep.subr.bf16.mxu0 %v11210
    %12051 = vmatpush1.bf16.msra.mxu0 %v11209
    %12052 = vmatprep.subr.bf16.mxu0 %v11218
    %12053 = vmatpush1.bf16.msra.mxu0 %v11217
    %12054 = vmatprep.mubr.bf16.mxu0 %v8620
    %12055 = vmatmul.mubr.bf16.gmra.mrb[0].mxu0 %v8619
    %v12056 = vpop.f32.mrb[0].mxu0
    %v12057 = vadd.f32 %v12016, %v12056
    %v12058 = vpop.f32.mrb[0].mxu0
    %v12059 = vadd.f32 %v12018, %v12058
    %v12060 = vpop.f32.mrb[0].mxu0
    %v12061 = vpop.f32.mrb[0].mxu0
    %12062 = vdwg.mxu0
    %12063 = vmatprep.subr.bf16.mxu0 %v10716
    %12064 = vmatpush1.bf16.msra.mxu0 %v10715
    %12065 = vmatprep.subr.bf16.mxu0 %v10724
    %12066 = vmatpush1.bf16.msra.mxu0 %v10723
    %12067 = vmatprep.subr.bf16.mxu0 %v10732
    %12068 = vmatpush1.bf16.msra.mxu0 %v10731
    %12069 = vmatprep.subr.bf16.mxu0 %v10740
    %12070 = vmatpush1.bf16.msra.mxu0 %v10739
    %12071 = vmatprep.subr.bf16.mxu0 %v10748
    %12072 = vmatpush1.bf16.msra.mxu0 %v10747
    %12073 = vmatprep.subr.bf16.mxu0 %v10756
    %12074 = vmatpush1.bf16.msra.mxu0 %v10755
    %12075 = vmatprep.subr.bf16.mxu0 %v10764
    %12076 = vmatpush1.bf16.msra.mxu0 %v10763
    %12077 = vmatprep.subr.bf16.mxu0 %v10772
    %12078 = vmatpush1.bf16.msra.mxu0 %v10771
    %12079 = vmatprep.subr.bf16.mxu0 %v10780
    %12080 = vmatpush1.bf16.msra.mxu0 %v10779
    %12081 = vmatprep.subr.bf16.mxu0 %v10788
    %12082 = vmatpush1.bf16.msra.mxu0 %v10787
    %12083 = vmatprep.subr.bf16.mxu0 %v10796
    %12084 = vmatpush1.bf16.msra.mxu0 %v10795
    %12085 = vmatprep.subr.bf16.mxu0 %v10804
    %12086 = vmatpush1.bf16.msra.mxu0 %v10803
    %12087 = vmatprep.subr.bf16.mxu0 %v10812
    %12088 = vmatpush1.bf16.msra.mxu0 %v10811
    %12089 = vmatprep.subr.bf16.mxu0 %v10820
    %12090 = vmatpush1.bf16.msra.mxu0 %v10819
    %12091 = vmatprep.subr.bf16.mxu0 %v10828
    %12092 = vmatpush1.bf16.msra.mxu0 %v10827
    %12093 = vmatprep.subr.bf16.mxu0 %v10836
    %12094 = vmatpush1.bf16.msra.mxu0 %v10835
    %12095 = vmatprep.mubr.bf16.mxu0 %v8614
    %12096 = vmatmul.mubr.bf16.gmra.mrb[0].mxu0 %v8613
    %v12097 = vpop.f32.mrb[0].mxu0
    %v12098 = vadd.f32 %v9154, %v12097
    %v12099 = vpop.f32.mrb[0].mxu0
    %v12100 = vadd.f32 %v9158, %v12099
    %v12101 = vpop.f32.mrb[0].mxu0
    %v12102 = vpop.f32.mrb[0].mxu0
    %12103 = vdwg.mxu0
    %12104 = vmatprep.subr.bf16.mxu0 %v10844
    %12105 = vmatpush1.bf16.msra.mxu0 %v10843
    %12106 = vmatprep.subr.bf16.mxu0 %v10852
    %12107 = vmatpush1.bf16.msra.mxu0 %v10851
    %12108 = vmatprep.subr.bf16.mxu0 %v10860
    %12109 = vmatpush1.bf16.msra.mxu0 %v10859
    %12110 = vmatprep.subr.bf16.mxu0 %v10868
    %12111 = vmatpush1.bf16.msra.mxu0 %v10867
    %12112 = vmatprep.subr.bf16.mxu0 %v10876
    %12113 = vmatpush1.bf16.msra.mxu0 %v10875
    %12114 = vmatprep.subr.bf16.mxu0 %v10884
    %12115 = vmatpush1.bf16.msra.mxu0 %v10883
    %12116 = vmatprep.subr.bf16.mxu0 %v10892
    %12117 = vmatpush1.bf16.msra.mxu0 %v10891
    %12118 = vmatprep.subr.bf16.mxu0 %v10900
    %12119 = vmatpush1.bf16.msra.mxu0 %v10899
    %12120 = vmatprep.subr.bf16.mxu0 %v10908
    %12121 = vmatpush1.bf16.msra.mxu0 %v10907
    %12122 = vmatprep.subr.bf16.mxu0 %v10916
    %12123 = vmatpush1.bf16.msra.mxu0 %v10915
    %12124 = vmatprep.subr.bf16.mxu0 %v10924
    %12125 = vmatpush1.bf16.msra.mxu0 %v10923
    %12126 = vmatprep.subr.bf16.mxu0 %v10932
    %12127 = vmatpush1.bf16.msra.mxu0 %v10931
    %12128 = vmatprep.subr.bf16.mxu0 %v10940
    %12129 = vmatpush1.bf16.msra.mxu0 %v10939
    %12130 = vmatprep.subr.bf16.mxu0 %v10948
    %12131 = vmatpush1.bf16.msra.mxu0 %v10947
    %12132 = vmatprep.subr.bf16.mxu0 %v10956
    %12133 = vmatpush1.bf16.msra.mxu0 %v10955
    %12134 = vmatprep.subr.bf16.mxu0 %v10964
    %12135 = vmatpush1.bf16.msra.mxu0 %v10963
    %12136 = vmatprep.mubr.bf16.mxu0 %v8616
    %12137 = vmatmul.mubr.bf16.gmra.mrb[0].mxu0 %v8615
    %v12138 = vpop.f32.mrb[0].mxu0
    %v12139 = vadd.f32 %v12098, %v12138
    %v12140 = vpop.f32.mrb[0].mxu0
    %v12141 = vadd.f32 %v12100, %v12140
    %v12142 = vpop.f32.mrb[0].mxu0
    %v12143 = vpop.f32.mrb[0].mxu0
    %12144 = vdwg.mxu0
    %12145 = vmatprep.subr.bf16.mxu0 %v10972
    %12146 = vmatpush1.bf16.msra.mxu0 %v10971
    %12147 = vmatprep.subr.bf16.mxu0 %v10980
    %12148 = vmatpush1.bf16.msra.mxu0 %v10979
    %12149 = vmatprep.subr.bf16.mxu0 %v10988
    %12150 = vmatpush1.bf16.msra.mxu0 %v10987
    %12151 = vmatprep.subr.bf16.mxu0 %v10996
    %12152 = vmatpush1.bf16.msra.mxu0 %v10995
    %12153 = vmatprep.subr.bf16.mxu0 %v11004
    %12154 = vmatpush1.bf16.msra.mxu0 %v11003
    %12155 = vmatprep.subr.bf16.mxu0 %v11012
    %12156 = vmatpush1.bf16.msra.mxu0 %v11011
    %12157 = vmatprep.subr.bf16.mxu0 %v11020
    %12158 = vmatpush1.bf16.msra.mxu0 %v11019
    %12159 = vmatprep.subr.bf16.mxu0 %v11028
    %12160 = vmatpush1.bf16.msra.mxu0 %v11027
    %12161 = vmatprep.subr.bf16.mxu0 %v11036
    %12162 = vmatpush1.bf16.msra.mxu0 %v11035
    %12163 = vmatprep.subr.bf16.mxu0 %v11044
    %12164 = vmatpush1.bf16.msra.mxu0 %v11043
    %12165 = vmatprep.subr.bf16.mxu0 %v11052
    %12166 = vmatpush1.bf16.msra.mxu0 %v11051
    %12167 = vmatprep.subr.bf16.mxu0 %v11060
    %12168 = vmatpush1.bf16.msra.mxu0 %v11059
    %12169 = vmatprep.subr.bf16.mxu0 %v11068
    %12170 = vmatpush1.bf16.msra.mxu0 %v11067
    %12171 = vmatprep.subr.bf16.mxu0 %v11076
    %12172 = vmatpush1.bf16.msra.mxu0 %v11075
    %12173 = vmatprep.subr.bf16.mxu0 %v11084
    %12174 = vmatpush1.bf16.msra.mxu0 %v11083
    %12175 = vmatprep.subr.bf16.mxu0 %v11092
    %12176 = vmatpush1.bf16.msra.mxu0 %v11091
    %12177 = vmatprep.mubr.bf16.mxu0 %v8618
    %12178 = vmatmul.mubr.bf16.gmra.mrb[0].mxu0 %v8617
    %v12179 = vpop.f32.mrb[0].mxu0
    %v12180 = vadd.f32 %v12139, %v12179
    %v12181 = vpop.f32.mrb[0].mxu0
    %v12182 = vadd.f32 %v12141, %v12181
    %v12183 = vpop.f32.mrb[0].mxu0
    %v12184 = vpop.f32.mrb[0].mxu0
    %12185 = vdwg.mxu0
    %12186 = vmatprep.subr.bf16.mxu0 %v11100
    %12187 = vmatpush1.bf16.msra.mxu0 %v11099
    %12188 = vmatprep.subr.bf16.mxu0 %v11108
    %12189 = vmatpush1.bf16.msra.mxu0 %v11107
    %12190 = vmatprep.subr.bf16.mxu0 %v11116
    %12191 = vmatpush1.bf16.msra.mxu0 %v11115
    %12192 = vmatprep.subr.bf16.mxu0 %v11124
    %12193 = vmatpush1.bf16.msra.mxu0 %v11123
    %12194 = vmatprep.subr.bf16.mxu0 %v11132
    %12195 = vmatpush1.bf16.msra.mxu0 %v11131
    %12196 = vmatprep.subr.bf16.mxu0 %v11140
    %12197 = vmatpush1.bf16.msra.mxu0 %v11139
    %12198 = vmatprep.subr.bf16.mxu0 %v11148
    %12199 = vmatpush1.bf16.msra.mxu0 %v11147
    %12200 = vmatprep.subr.bf16.mxu0 %v11156
    %12201 = vmatpush1.bf16.msra.mxu0 %v11155
    %12202 = vmatprep.subr.bf16.mxu0 %v11164
    %12203 = vmatpush1.bf16.msra.mxu0 %v11163
    %12204 = vmatprep.subr.bf16.mxu0 %v11172
    %12205 = vmatpush1.bf16.msra.mxu0 %v11171
    %12206 = vmatprep.subr.bf16.mxu0 %v11180
    %12207 = vmatpush1.bf16.msra.mxu0 %v11179
    %12208 = vmatprep.subr.bf16.mxu0 %v11188
    %12209 = vmatpush1.bf16.msra.mxu0 %v11187
    %12210 = vmatprep.subr.bf16.mxu0 %v11196
    %12211 = vmatpush1.bf16.msra.mxu0 %v11195
    %12212 = vmatprep.subr.bf16.mxu0 %v11204
    %12213 = vmatpush1.bf16.msra.mxu0 %v11203
    %12214 = vmatprep.subr.bf16.mxu0 %v11212
    %12215 = vmatpush1.bf16.msra.mxu0 %v11211
    %12216 = vmatprep.subr.bf16.mxu0 %v11220
    %12217 = vmatpush1.bf16.msra.mxu0 %v11219
    %12218 = vmatprep.mubr.bf16.mxu0 %v8620
    %12219 = vmatmul.mubr.bf16.gmra.mrb[0].mxu0 %v8619
    %v12220 = vpop.f32.mrb[0].mxu0
    %v12221 = vadd.f32 %v12180, %v12220
    %v12222 = vpop.f32.mrb[0].mxu0
    %v12223 = vadd.f32 %v12182, %v12222
    %v12224 = vpop.f32.mrb[0].mxu0
    %v12225 = vpop.f32.mrb[0].mxu0
    %12226 = vdwg.mxu0
    %12227 = vmatprep.subr.bf16.mxu0 %v10718
    %12228 = vmatpush1.bf16.msra.mxu0 %v10717
    %12229 = vmatprep.subr.bf16.mxu0 %v10726
    %12230 = vmatpush1.bf16.msra.mxu0 %v10725
    %12231 = vmatprep.subr.bf16.mxu0 %v10734
    %12232 = vmatpush1.bf16.msra.mxu0 %v10733
    %12233 = vmatprep.subr.bf16.mxu0 %v10742
    %12234 = vmatpush1.bf16.msra.mxu0 %v10741
    %12235 = vmatprep.subr.bf16.mxu0 %v10750
    %12236 = vmatpush1.bf16.msra.mxu0 %v10749
    %12237 = vmatprep.subr.bf16.mxu0 %v10758
    %12238 = vmatpush1.bf16.msra.mxu0 %v10757
    %12239 = vmatprep.subr.bf16.mxu0 %v10766
    %12240 = vmatpush1.bf16.msra.mxu0 %v10765
    %12241 = vmatprep.subr.bf16.mxu0 %v10774
    %12242 = vmatpush1.bf16.msra.mxu0 %v10773
    %12243 = vmatprep.subr.bf16.mxu0 %v10782
    %12244 = vmatpush1.bf16.msra.mxu0 %v10781
    %12245 = vmatprep.subr.bf16.mxu0 %v10790
    %12246 = vmatpush1.bf16.msra.mxu0 %v10789
    %12247 = vmatprep.subr.bf16.mxu0 %v10798
    %12248 = vmatpush1.bf16.msra.mxu0 %v10797
    %12249 = vmatprep.subr.bf16.mxu0 %v10806
    %12250 = vmatpush1.bf16.msra.mxu0 %v10805
    %12251 = vmatprep.subr.bf16.mxu0 %v10814
    %12252 = vmatpush1.bf16.msra.mxu0 %v10813
    %12253 = vmatprep.subr.bf16.mxu0 %v10822
    %12254 = vmatpush1.bf16.msra.mxu0 %v10821
    %12255 = vmatprep.subr.bf16.mxu0 %v10830
    %12256 = vmatpush1.bf16.msra.mxu0 %v10829
    %12257 = vmatprep.subr.bf16.mxu0 %v10838
    %12258 = vmatpush1.bf16.msra.mxu0 %v10837
    %12259 = vmatprep.mubr.bf16.mxu0 %v8614
    %12260 = vmatmul.mubr.bf16.gmra.mrb[0].mxu0 %v8613
    %v12261 = vpop.f32.mrb[0].mxu0
    %v12262 = vadd.f32 %v9162, %v12261
    %v12263 = vpop.f32.mrb[0].mxu0
    %v12264 = vadd.f32 %v9166, %v12263
    %v12265 = vpop.f32.mrb[0].mxu0
    %v12266 = vpop.f32.mrb[0].mxu0
    %12267 = vdwg.mxu0
    %12268 = vmatprep.subr.bf16.mxu0 %v10846
    %12269 = vmatpush1.bf16.msra.mxu0 %v10845
    %12270 = vmatprep.subr.bf16.mxu0 %v10854
    %12271 = vmatpush1.bf16.msra.mxu0 %v10853
    %12272 = vmatprep.subr.bf16.mxu0 %v10862
    %12273 = vmatpush1.bf16.msra.mxu0 %v10861
    %12274 = vmatprep.subr.bf16.mxu0 %v10870
    %12275 = vmatpush1.bf16.msra.mxu0 %v10869
    %12276 = vmatprep.subr.bf16.mxu0 %v10878
    %12277 = vmatpush1.bf16.msra.mxu0 %v10877
    %12278 = vmatprep.subr.bf16.mxu0 %v10886
    %12279 = vmatpush1.bf16.msra.mxu0 %v10885
    %12280 = vmatprep.subr.bf16.mxu0 %v10894
    %12281 = vmatpush1.bf16.msra.mxu0 %v10893
    %12282 = vmatprep.subr.bf16.mxu0 %v10902
    %12283 = vmatpush1.bf16.msra.mxu0 %v10901
    %12284 = vmatprep.subr.bf16.mxu0 %v10910
    %12285 = vmatpush1.bf16.msra.mxu0 %v10909
    %12286 = vmatprep.subr.bf16.mxu0 %v10918
    %12287 = vmatpush1.bf16.msra.mxu0 %v10917
    %12288 = vmatprep.subr.bf16.mxu0 %v10926
    %12289 = vmatpush1.bf16.msra.mxu0 %v10925
    %12290 = vmatprep.subr.bf16.mxu0 %v10934
    %12291 = vmatpush1.bf16.msra.mxu0 %v10933
    %12292 = vmatprep.subr.bf16.mxu0 %v10942
    %12293 = vmatpush1.bf16.msra.mxu0 %v10941
    %12294 = vmatprep.subr.bf16.mxu0 %v10950
    %12295 = vmatpush1.bf16.msra.mxu0 %v10949
    %12296 = vmatprep.subr.bf16.mxu0 %v10958
    %12297 = vmatpush1.bf16.msra.mxu0 %v10957
    %12298 = vmatprep.subr.bf16.mxu0 %v10966
    %12299 = vmatpush1.bf16.msra.mxu0 %v10965
    %12300 = vmatprep.mubr.bf16.mxu0 %v8616
    %12301 = vmatmul.mubr.bf16.gmra.mrb[0].mxu0 %v8615
    %v12302 = vpop.f32.mrb[0].mxu0
    %v12303 = vadd.f32 %v12262, %v12302
    %v12304 = vpop.f32.mrb[0].mxu0
    %v12305 = vadd.f32 %v12264, %v12304
    %v12306 = vpop.f32.mrb[0].mxu0
    %v12307 = vpop.f32.mrb[0].mxu0
    %12308 = vdwg.mxu0
    %12309 = vmatprep.subr.bf16.mxu0 %v10974
    %12310 = vmatpush1.bf16.msra.mxu0 %v10973
    %12311 = vmatprep.subr.bf16.mxu0 %v10982
    %12312 = vmatpush1.bf16.msra.mxu0 %v10981
    %12313 = vmatprep.subr.bf16.mxu0 %v10990
    %12314 = vmatpush1.bf16.msra.mxu0 %v10989
    %12315 = vmatprep.subr.bf16.mxu0 %v10998
    %12316 = vmatpush1.bf16.msra.mxu0 %v10997
    %12317 = vmatprep.subr.bf16.mxu0 %v11006
    %12318 = vmatpush1.bf16.msra.mxu0 %v11005
    %12319 = vmatprep.subr.bf16.mxu0 %v11014
    %12320 = vmatpush1.bf16.msra.mxu0 %v11013
    %12321 = vmatprep.subr.bf16.mxu0 %v11022
    %12322 = vmatpush1.bf16.msra.mxu0 %v11021
    %12323 = vmatprep.subr.bf16.mxu0 %v11030
    %12324 = vmatpush1.bf16.msra.mxu0 %v11029
    %12325 = vmatprep.subr.bf16.mxu0 %v11038
    %12326 = vmatpush1.bf16.msra.mxu0 %v11037
    %12327 = vmatprep.subr.bf16.mxu0 %v11046
    %12328 = vmatpush1.bf16.msra.mxu0 %v11045
    %12329 = vmatprep.subr.bf16.mxu0 %v11054
    %12330 = vmatpush1.bf16.msra.mxu0 %v11053
    %12331 = vmatprep.subr.bf16.mxu0 %v11062
    %12332 = vmatpush1.bf16.msra.mxu0 %v11061
    %12333 = vmatprep.subr.bf16.mxu0 %v11070
    %12334 = vmatpush1.bf16.msra.mxu0 %v11069
    %12335 = vmatprep.subr.bf16.mxu0 %v11078
    %12336 = vmatpush1.bf16.msra.mxu0 %v11077
    %12337 = vmatprep.subr.bf16.mxu0 %v11086
    %12338 = vmatpush1.bf16.msra.mxu0 %v11085
    %12339 = vmatprep.subr.bf16.mxu0 %v11094
    %12340 = vmatpush1.bf16.msra.mxu0 %v11093
    %12341 = vmatprep.mubr.bf16.mxu0 %v8618
    %12342 = vmatmul.mubr.bf16.gmra.mrb[0].mxu0 %v8617
    %v12343 = vpop.f32.mrb[0].mxu0
    %v12344 = vadd.f32 %v12303, %v12343
    %v12345 = vpop.f32.mrb[0].mxu0
    %v12346 = vadd.f32 %v12305, %v12345
    %v12347 = vpop.f32.mrb[0].mxu0
    %v12348 = vpop.f32.mrb[0].mxu0
    %12349 = vdwg.mxu0
    %12350 = vmatprep.subr.bf16.mxu0 %v11102
    %12351 = vmatpush1.bf16.msra.mxu0 %v11101
    %12352 = vmatprep.subr.bf16.mxu0 %v11110
    %12353 = vmatpush1.bf16.msra.mxu0 %v11109
    %12354 = vmatprep.subr.bf16.mxu0 %v11118
    %12355 = vmatpush1.bf16.msra.mxu0 %v11117
    %12356 = vmatprep.subr.bf16.mxu0 %v11126
    %12357 = vmatpush1.bf16.msra.mxu0 %v11125
    %12358 = vmatprep.subr.bf16.mxu0 %v11134
    %12359 = vmatpush1.bf16.msra.mxu0 %v11133
    %12360 = vmatprep.subr.bf16.mxu0 %v11142
    %12361 = vmatpush1.bf16.msra.mxu0 %v11141
    %12362 = vmatprep.subr.bf16.mxu0 %v11150
    %12363 = vmatpush1.bf16.msra.mxu0 %v11149
    %12364 = vmatprep.subr.bf16.mxu0 %v11158
    %12365 = vmatpush1.bf16.msra.mxu0 %v11157
    %12366 = vmatprep.subr.bf16.mxu0 %v11166
    %12367 = vmatpush1.bf16.msra.mxu0 %v11165
    %12368 = vmatprep.subr.bf16.mxu0 %v11174
    %12369 = vmatpush1.bf16.msra.mxu0 %v11173
    %12370 = vmatprep.subr.bf16.mxu0 %v11182
    %12371 = vmatpush1.bf16.msra.mxu0 %v11181
    %12372 = vmatprep.subr.bf16.mxu0 %v11190
    %12373 = vmatpush1.bf16.msra.mxu0 %v11189
    %12374 = vmatprep.subr.bf16.mxu0 %v11198
    %12375 = vmatpush1.bf16.msra.mxu0 %v11197
    %12376 = vmatprep.subr.bf16.mxu0 %v11206
    %12377 = vmatpush1.bf16.msra.mxu0 %v11205
    %12378 = vmatprep.subr.bf16.mxu0 %v11214
    %12379 = vmatpush1.bf16.msra.mxu0 %v11213
    %12380 = vmatprep.subr.bf16.mxu0 %v11222
    %12381 = vmatpush1.bf16.msra.mxu0 %v11221
    %12382 = vmatprep.mubr.bf16.mxu0 %v8620
    %12383 = vmatmul.mubr.bf16.gmra.mrb[0].mxu0 %v8619
    %v12384 = vpop.f32.mrb[0].mxu0
    %v12385 = vadd.f32 %v12344, %v12384
    %v12386 = vpop.f32.mrb[0].mxu0
    %v12387 = vadd.f32 %v12346, %v12386
    %v12388 = vpop.f32.mrb[0].mxu0
    %v12389 = vpop.f32.mrb[0].mxu0
    %12390 = vdwg.mxu0
    %v12391 = vmax.f32 %v11893, 0.0
    %v12392 = vmax.f32 %v11895, 0.0
    %v12393 = vmax.f32 %v12057, 0.0
    %v12394 = vmax.f32 %v12059, 0.0
    %v12395 = vmax.f32 %v12221, 0.0
    %v12396 = vmax.f32 %v12223, 0.0
    %v12397 = vmax.f32 %v12385, 0.0
    %v12398 = vmax.f32 %v12387, 0.0
    %v12399 = vpack.c.bf16 %v12391, %v12391
    %v12400 = vpack.c.bf16 %v12392, %v12392
    %v12401 = vpack.c.bf16 %v12393, %v12393
    %v12402 = vpack.c.bf16 %v12394, %v12394
    %v12403 = vpack.c.bf16 %v12395, %v12395
    %v12404 = vpack.c.bf16 %v12396, %v12396
    %v12405 = vpack.c.bf16 %v12397, %v12397
    %v12406 = vpack.c.bf16 %v12398, %v12398
    %v12407 = vld [vmem:[#allocation9] sm:$0xf]
    %v12408 = vld [vmem:[#allocation9 + $0x4] sm:$0xf]
    %v12409 = vld [vmem:[#allocation9 + $0x8] sm:$0xf]
    %v12410 = vld [vmem:[#allocation9 + $0xc] sm:$0xf]
    %v12411 = vld [vmem:[#allocation9 + $0x10] sm:$0xf]
    %v12412 = vld [vmem:[#allocation9 + $0x14] sm:$0xf]
    %v12413 = vld [vmem:[#allocation9 + $0x18] sm:$0xf]
    %v12414 = vld [vmem:[#allocation9 + $0x1c] sm:$0xf]
    %v12415 = vld [vmem:[#allocation9 + $0x20] sm:$0xf]
    %v12416 = vld [vmem:[#allocation9 + $0x24] sm:$0xf]
    %v12417 = vld [vmem:[#allocation9 + $0x28] sm:$0xf]
    %v12418 = vld [vmem:[#allocation9 + $0x2c] sm:$0xf]
    %v12419 = vld [vmem:[#allocation9 + $0x30] sm:$0xf]
    %v12420 = vld [vmem:[#allocation9 + $0x34] sm:$0xf]
    %v12421 = vld [vmem:[#allocation9 + $0x38] sm:$0xf]
    %v12422 = vld [vmem:[#allocation9 + $0x3c] sm:$0xf]
    %v12423 = vld [vmem:[#allocation9 + $0x40] sm:$0xf]
    %v12424 = vld [vmem:[#allocation9 + $0x44] sm:$0xf]
    %v12425 = vld [vmem:[#allocation9 + $0x48] sm:$0xf]
    %v12426 = vld [vmem:[#allocation9 + $0x4c] sm:$0xf]
    %v12427 = vld [vmem:[#allocation9 + $0x50] sm:$0xf]
    %v12428 = vld [vmem:[#allocation9 + $0x54] sm:$0xf]
    %v12429 = vld [vmem:[#allocation9 + $0x58] sm:$0xf]
    %v12430 = vld [vmem:[#allocation9 + $0x5c] sm:$0xf]
    %v12431 = vld [vmem:[#allocation9 + $0x60] sm:$0xf]
    %v12432 = vld [vmem:[#allocation9 + $0x64] sm:$0xf]
    %v12433 = vld [vmem:[#allocation9 + $0x68] sm:$0xf]
    %v12434 = vld [vmem:[#allocation9 + $0x6c] sm:$0xf]
    %v12435 = vld [vmem:[#allocation9 + $0x70] sm:$0xf]
    %v12436 = vld [vmem:[#allocation9 + $0x74] sm:$0xf]
    %v12437 = vld [vmem:[#allocation9 + $0x78] sm:$0xf]
    %v12438 = vld [vmem:[#allocation9 + $0x7c] sm:$0xf]
    %v12439 = vld [vmem:[#allocation9 + $0x80] sm:$0xf]
    %v12440 = vld [vmem:[#allocation9 + $0x84] sm:$0xf]
    %v12441 = vld [vmem:[#allocation9 + $0x88] sm:$0xf]
    %v12442 = vld [vmem:[#allocation9 + $0x8c] sm:$0xf]
    %v12443 = vld [vmem:[#allocation9 + $0x90] sm:$0xf]
    %v12444 = vld [vmem:[#allocation9 + $0x94] sm:$0xf]
    %v12445 = vld [vmem:[#allocation9 + $0x98] sm:$0xf]
    %v12446 = vld [vmem:[#allocation9 + $0x9c] sm:$0xf]
    %v12447 = vld [vmem:[#allocation9 + $0xa0] sm:$0xf]
    %v12448 = vld [vmem:[#allocation9 + $0xa4] sm:$0xf]
    %v12449 = vld [vmem:[#allocation9 + $0xa8] sm:$0xf]
    %v12450 = vld [vmem:[#allocation9 + $0xac] sm:$0xf]
    %v12451 = vld [vmem:[#allocation9 + $0xb0] sm:$0xf]
    %v12452 = vld [vmem:[#allocation9 + $0xb4] sm:$0xf]
    %v12453 = vld [vmem:[#allocation9 + $0xb8] sm:$0xf]
    %v12454 = vld [vmem:[#allocation9 + $0xbc] sm:$0xf]
    %v12455 = vld [vmem:[#allocation9 + $0xc0] sm:$0xf]
    %v12456 = vld [vmem:[#allocation9 + $0xc4] sm:$0xf]
    %v12457 = vld [vmem:[#allocation9 + $0xc8] sm:$0xf]
    %v12458 = vld [vmem:[#allocation9 + $0xcc] sm:$0xf]
    %v12459 = vld [vmem:[#allocation9 + $0xd0] sm:$0xf]
    %v12460 = vld [vmem:[#allocation9 + $0xd4] sm:$0xf]
    %v12461 = vld [vmem:[#allocation9 + $0xd8] sm:$0xf]
    %v12462 = vld [vmem:[#allocation9 + $0xdc] sm:$0xf]
    %v12463 = vld [vmem:[#allocation9 + $0xe0] sm:$0xf]
    %v12464 = vld [vmem:[#allocation9 + $0xe4] sm:$0xf]
    %v12465 = vld [vmem:[#allocation9 + $0xe8] sm:$0xf]
    %v12466 = vld [vmem:[#allocation9 + $0xec] sm:$0xf]
    %v12467 = vld [vmem:[#allocation9 + $0xf0] sm:$0xf]
    %v12468 = vld [vmem:[#allocation9 + $0xf4] sm:$0xf]
    %v12469 = vld [vmem:[#allocation9 + $0xf8] sm:$0xf]
    %v12470 = vld [vmem:[#allocation9 + $0xfc] sm:$0xf]
    %v12471 = vld [vmem:[#allocation9 + $0x100] sm:$0xf]
    %v12472 = vld [vmem:[#allocation9 + $0x104] sm:$0xf]
    %v12473 = vld [vmem:[#allocation9 + $0x108] sm:$0xf]
    %v12474 = vld [vmem:[#allocation9 + $0x10c] sm:$0xf]
    %v12475 = vld [vmem:[#allocation9 + $0x110] sm:$0xf]
    %v12476 = vld [vmem:[#allocation9 + $0x114] sm:$0xf]
    %v12477 = vld [vmem:[#allocation9 + $0x118] sm:$0xf]
    %v12478 = vld [vmem:[#allocation9 + $0x11c] sm:$0xf]
    %v12479 = vld [vmem:[#allocation9 + $0x120] sm:$0xf]
    %v12480 = vld [vmem:[#allocation9 + $0x124] sm:$0xf]
    %v12481 = vld [vmem:[#allocation9 + $0x128] sm:$0xf]
    %v12482 = vld [vmem:[#allocation9 + $0x12c] sm:$0xf]
    %v12483 = vld [vmem:[#allocation9 + $0x130] sm:$0xf]
    %v12484 = vld [vmem:[#allocation9 + $0x134] sm:$0xf]
    %v12485 = vld [vmem:[#allocation9 + $0x138] sm:$0xf]
    %v12486 = vld [vmem:[#allocation9 + $0x13c] sm:$0xf]
    %v12487 = vld [vmem:[#allocation9 + $0x140] sm:$0xf]
    %v12488 = vld [vmem:[#allocation9 + $0x144] sm:$0xf]
    %v12489 = vld [vmem:[#allocation9 + $0x148] sm:$0xf]
    %v12490 = vld [vmem:[#allocation9 + $0x14c] sm:$0xf]
    %v12491 = vld [vmem:[#allocation9 + $0x150] sm:$0xf]
    %v12492 = vld [vmem:[#allocation9 + $0x154] sm:$0xf]
    %v12493 = vld [vmem:[#allocation9 + $0x158] sm:$0xf]
    %v12494 = vld [vmem:[#allocation9 + $0x15c] sm:$0xf]
    %v12495 = vld [vmem:[#allocation9 + $0x160] sm:$0xf]
    %v12496 = vld [vmem:[#allocation9 + $0x164] sm:$0xf]
    %v12497 = vld [vmem:[#allocation9 + $0x168] sm:$0xf]
    %v12498 = vld [vmem:[#allocation9 + $0x16c] sm:$0xf]
    %v12499 = vld [vmem:[#allocation9 + $0x170] sm:$0xf]
    %v12500 = vld [vmem:[#allocation9 + $0x174] sm:$0xf]
    %v12501 = vld [vmem:[#allocation9 + $0x178] sm:$0xf]
    %v12502 = vld [vmem:[#allocation9 + $0x17c] sm:$0xf]
    %v12503 = vld [vmem:[#allocation9 + $0x180] sm:$0xf]
    %v12504 = vld [vmem:[#allocation9 + $0x184] sm:$0xf]
    %v12505 = vld [vmem:[#allocation9 + $0x188] sm:$0xf]
    %v12506 = vld [vmem:[#allocation9 + $0x18c] sm:$0xf]
    %v12507 = vld [vmem:[#allocation9 + $0x190] sm:$0xf]
    %v12508 = vld [vmem:[#allocation9 + $0x194] sm:$0xf]
    %v12509 = vld [vmem:[#allocation9 + $0x198] sm:$0xf]
    %v12510 = vld [vmem:[#allocation9 + $0x19c] sm:$0xf]
    %v12511 = vld [vmem:[#allocation9 + $0x1a0] sm:$0xf]
    %v12512 = vld [vmem:[#allocation9 + $0x1a4] sm:$0xf]
    %v12513 = vld [vmem:[#allocation9 + $0x1a8] sm:$0xf]
    %v12514 = vld [vmem:[#allocation9 + $0x1ac] sm:$0xf]
    %v12515 = vld [vmem:[#allocation9 + $0x1b0] sm:$0xf]
    %v12516 = vld [vmem:[#allocation9 + $0x1b4] sm:$0xf]
    %v12517 = vld [vmem:[#allocation9 + $0x1b8] sm:$0xf]
    %v12518 = vld [vmem:[#allocation9 + $0x1bc] sm:$0xf]
    %v12519 = vld [vmem:[#allocation9 + $0x1c0] sm:$0xf]
    %v12520 = vld [vmem:[#allocation9 + $0x1c4] sm:$0xf]
    %v12521 = vld [vmem:[#allocation9 + $0x1c8] sm:$0xf]
    %v12522 = vld [vmem:[#allocation9 + $0x1cc] sm:$0xf]
    %v12523 = vld [vmem:[#allocation9 + $0x1d0] sm:$0xf]
    %v12524 = vld [vmem:[#allocation9 + $0x1d4] sm:$0xf]
    %v12525 = vld [vmem:[#allocation9 + $0x1d8] sm:$0xf]
    %v12526 = vld [vmem:[#allocation9 + $0x1dc] sm:$0xf]
    %v12527 = vld [vmem:[#allocation9 + $0x1e0] sm:$0xf]
    %v12528 = vld [vmem:[#allocation9 + $0x1e4] sm:$0xf]
    %v12529 = vld [vmem:[#allocation9 + $0x1e8] sm:$0xf]
    %v12530 = vld [vmem:[#allocation9 + $0x1ec] sm:$0xf]
    %v12531 = vld [vmem:[#allocation9 + $0x1f0] sm:$0xf]
    %v12532 = vld [vmem:[#allocation9 + $0x1f4] sm:$0xf]
    %v12533 = vld [vmem:[#allocation9 + $0x1f8] sm:$0xf]
    %v12534 = vld [vmem:[#allocation9 + $0x1fc] sm:$0xf]
    %v12535 = vld [vmem:[#allocation10] sm:$0x1]
    %v12537 = vlaneseq
    %v12538 = vshrl.u32 %v12537, 7
    %v12539 = vsub.s32 0, %v12538
    %v12540 = vrot.slane %v12535, %v12539
    %v12670 = vunpack.c.l.b16 %v12407
    %v12671 = vunpack.c.l.b16 %v12408
    %v12672 = vunpack.c.l.b16 %v12409
    %v12673 = vunpack.c.l.b16 %v12410
    %v12674 = vunpack.c.l.b16 %v12411
    %v12675 = vunpack.c.l.b16 %v12412
    %v12676 = vunpack.c.l.b16 %v12413
    %v12677 = vunpack.c.l.b16 %v12414
    %v12678 = vunpack.c.l.b16 %v12415
    %v12679 = vunpack.c.l.b16 %v12416
    %v12680 = vunpack.c.l.b16 %v12417
    %v12681 = vunpack.c.l.b16 %v12418
    %v12682 = vunpack.c.l.b16 %v12419
    %v12683 = vunpack.c.l.b16 %v12420
    %v12684 = vunpack.c.l.b16 %v12421
    %v12685 = vunpack.c.l.b16 %v12422
    %v12686 = vunpack.c.l.b16 %v12423
    %v12687 = vunpack.c.l.b16 %v12424
    %v12688 = vunpack.c.l.b16 %v12425
    %v12689 = vunpack.c.l.b16 %v12426
    %v12690 = vunpack.c.l.b16 %v12427
    %v12691 = vunpack.c.l.b16 %v12428
    %v12692 = vunpack.c.l.b16 %v12429
    %v12693 = vunpack.c.l.b16 %v12430
    %v12694 = vunpack.c.l.b16 %v12431
    %v12695 = vunpack.c.l.b16 %v12432
    %v12696 = vunpack.c.l.b16 %v12433
    %v12697 = vunpack.c.l.b16 %v12434
    %v12698 = vunpack.c.l.b16 %v12435
    %v12699 = vunpack.c.l.b16 %v12436
    %v12700 = vunpack.c.l.b16 %v12437
    %v12701 = vunpack.c.l.b16 %v12438
    %v12702 = vunpack.c.l.b16 %v12439
    %v12703 = vunpack.c.l.b16 %v12440
    %v12704 = vunpack.c.l.b16 %v12441
    %v12705 = vunpack.c.l.b16 %v12442
    %v12706 = vunpack.c.l.b16 %v12443
    %v12707 = vunpack.c.l.b16 %v12444
    %v12708 = vunpack.c.l.b16 %v12445
    %v12709 = vunpack.c.l.b16 %v12446
    %v12710 = vunpack.c.l.b16 %v12447
    %v12711 = vunpack.c.l.b16 %v12448
    %v12712 = vunpack.c.l.b16 %v12449
    %v12713 = vunpack.c.l.b16 %v12450
    %v12714 = vunpack.c.l.b16 %v12451
    %v12715 = vunpack.c.l.b16 %v12452
    %v12716 = vunpack.c.l.b16 %v12453
    %v12717 = vunpack.c.l.b16 %v12454
    %v12718 = vunpack.c.l.b16 %v12455
    %v12719 = vunpack.c.l.b16 %v12456
    %v12720 = vunpack.c.l.b16 %v12457
    %v12721 = vunpack.c.l.b16 %v12458
    %v12722 = vunpack.c.l.b16 %v12459
    %v12723 = vunpack.c.l.b16 %v12460
    %v12724 = vunpack.c.l.b16 %v12461
    %v12725 = vunpack.c.l.b16 %v12462
    %v12726 = vunpack.c.l.b16 %v12463
    %v12727 = vunpack.c.l.b16 %v12464
    %v12728 = vunpack.c.l.b16 %v12465
    %v12729 = vunpack.c.l.b16 %v12466
    %v12730 = vunpack.c.l.b16 %v12467
    %v12731 = vunpack.c.l.b16 %v12468
    %v12732 = vunpack.c.l.b16 %v12469
    %v12733 = vunpack.c.l.b16 %v12470
    %v12734 = vunpack.c.l.b16 %v12471
    %v12735 = vunpack.c.l.b16 %v12472
    %v12736 = vunpack.c.l.b16 %v12473
    %v12737 = vunpack.c.l.b16 %v12474
    %v12738 = vunpack.c.l.b16 %v12475
    %v12739 = vunpack.c.l.b16 %v12476
    %v12740 = vunpack.c.l.b16 %v12477
    %v12741 = vunpack.c.l.b16 %v12478
    %v12742 = vunpack.c.l.b16 %v12479
    %v12743 = vunpack.c.l.b16 %v12480
    %v12744 = vunpack.c.l.b16 %v12481
    %v12745 = vunpack.c.l.b16 %v12482
    %v12746 = vunpack.c.l.b16 %v12483
    %v12747 = vunpack.c.l.b16 %v12484
    %v12748 = vunpack.c.l.b16 %v12485
    %v12749 = vunpack.c.l.b16 %v12486
    %v12750 = vunpack.c.l.b16 %v12487
    %v12751 = vunpack.c.l.b16 %v12488
    %v12752 = vunpack.c.l.b16 %v12489
    %v12753 = vunpack.c.l.b16 %v12490
    %v12754 = vunpack.c.l.b16 %v12491
    %v12755 = vunpack.c.l.b16 %v12492
    %v12756 = vunpack.c.l.b16 %v12493
    %v12757 = vunpack.c.l.b16 %v12494
    %v12758 = vunpack.c.l.b16 %v12495
    %v12759 = vunpack.c.l.b16 %v12496
    %v12760 = vunpack.c.l.b16 %v12497
    %v12761 = vunpack.c.l.b16 %v12498
    %v12762 = vunpack.c.l.b16 %v12499
    %v12763 = vunpack.c.l.b16 %v12500
    %v12764 = vunpack.c.l.b16 %v12501
    %v12765 = vunpack.c.l.b16 %v12502
    %v12766 = vunpack.c.l.b16 %v12503
    %v12767 = vunpack.c.l.b16 %v12504
    %v12768 = vunpack.c.l.b16 %v12505
    %v12769 = vunpack.c.l.b16 %v12506
    %v12770 = vunpack.c.l.b16 %v12507
    %v12771 = vunpack.c.l.b16 %v12508
    %v12772 = vunpack.c.l.b16 %v12509
    %v12773 = vunpack.c.l.b16 %v12510
    %v12774 = vunpack.c.l.b16 %v12511
    %v12775 = vunpack.c.l.b16 %v12512
    %v12776 = vunpack.c.l.b16 %v12513
    %v12777 = vunpack.c.l.b16 %v12514
    %v12778 = vunpack.c.l.b16 %v12515
    %v12779 = vunpack.c.l.b16 %v12516
    %v12780 = vunpack.c.l.b16 %v12517
    %v12781 = vunpack.c.l.b16 %v12518
    %v12782 = vunpack.c.l.b16 %v12519
    %v12783 = vunpack.c.l.b16 %v12520
    %v12784 = vunpack.c.l.b16 %v12521
    %v12785 = vunpack.c.l.b16 %v12522
    %v12786 = vunpack.c.l.b16 %v12523
    %v12787 = vunpack.c.l.b16 %v12524
    %v12788 = vunpack.c.l.b16 %v12525
    %v12789 = vunpack.c.l.b16 %v12526
    %v12790 = vunpack.c.l.b16 %v12527
    %v12791 = vunpack.c.l.b16 %v12528
    %v12792 = vunpack.c.l.b16 %v12529
    %v12793 = vunpack.c.l.b16 %v12530
    %v12794 = vunpack.c.l.b16 %v12531
    %v12795 = vunpack.c.l.b16 %v12532
    %v12796 = vunpack.c.l.b16 %v12533
    %v12797 = vunpack.c.l.b16 %v12534
    %v12798 = vpack.c.b16 %v12671, %v12670
    %v12799 = vpack.c.b16 %v12673, %v12672
    %v12800 = vpack.c.b16 %v12675, %v12674
    %v12801 = vpack.c.b16 %v12677, %v12676
    %v12802 = vpack.c.b16 %v12679, %v12678
    %v12803 = vpack.c.b16 %v12681, %v12680
    %v12804 = vpack.c.b16 %v12683, %v12682
    %v12805 = vpack.c.b16 %v12685, %v12684
    %v12806 = vpack.c.b16 %v12687, %v12686
    %v12807 = vpack.c.b16 %v12689, %v12688
    %v12808 = vpack.c.b16 %v12691, %v12690
    %v12809 = vpack.c.b16 %v12693, %v12692
    %v12810 = vpack.c.b16 %v12695, %v12694
    %v12811 = vpack.c.b16 %v12697, %v12696
    %v12812 = vpack.c.b16 %v12699, %v12698
    %v12813 = vpack.c.b16 %v12701, %v12700
    %v12814 = vpack.c.b16 %v12703, %v12702
    %v12815 = vpack.c.b16 %v12705, %v12704
    %v12816 = vpack.c.b16 %v12707, %v12706
    %v12817 = vpack.c.b16 %v12709, %v12708
    %v12818 = vpack.c.b16 %v12711, %v12710
    %v12819 = vpack.c.b16 %v12713, %v12712
    %v12820 = vpack.c.b16 %v12715, %v12714
    %v12821 = vpack.c.b16 %v12717, %v12716
    %v12822 = vpack.c.b16 %v12719, %v12718
    %v12823 = vpack.c.b16 %v12721, %v12720
    %v12824 = vpack.c.b16 %v12723, %v12722
    %v12825 = vpack.c.b16 %v12725, %v12724
    %v12826 = vpack.c.b16 %v12727, %v12726
    %v12827 = vpack.c.b16 %v12729, %v12728
    %v12828 = vpack.c.b16 %v12731, %v12730
    %v12829 = vpack.c.b16 %v12733, %v12732
    %v12830 = vpack.c.b16 %v12735, %v12734
    %v12831 = vpack.c.b16 %v12737, %v12736
    %v12832 = vpack.c.b16 %v12739, %v12738
    %v12833 = vpack.c.b16 %v12741, %v12740
    %v12834 = vpack.c.b16 %v12743, %v12742
    %v12835 = vpack.c.b16 %v12745, %v12744
    %v12836 = vpack.c.b16 %v12747, %v12746
    %v12837 = vpack.c.b16 %v12749, %v12748
    %v12838 = vpack.c.b16 %v12751, %v12750
    %v12839 = vpack.c.b16 %v12753, %v12752
    %v12840 = vpack.c.b16 %v12755, %v12754
    %v12841 = vpack.c.b16 %v12757, %v12756
    %v12842 = vpack.c.b16 %v12759, %v12758
    %v12843 = vpack.c.b16 %v12761, %v12760
    %v12844 = vpack.c.b16 %v12763, %v12762
    %v12845 = vpack.c.b16 %v12765, %v12764
    %v12846 = vpack.c.b16 %v12767, %v12766
    %v12847 = vpack.c.b16 %v12769, %v12768
    %v12848 = vpack.c.b16 %v12771, %v12770
    %v12849 = vpack.c.b16 %v12773, %v12772
    %v12850 = vpack.c.b16 %v12775, %v12774
    %v12851 = vpack.c.b16 %v12777, %v12776
    %v12852 = vpack.c.b16 %v12779, %v12778
    %v12853 = vpack.c.b16 %v12781, %v12780
    %v12854 = vpack.c.b16 %v12783, %v12782
    %v12855 = vpack.c.b16 %v12785, %v12784
    %v12856 = vpack.c.b16 %v12787, %v12786
    %v12857 = vpack.c.b16 %v12789, %v12788
    %v12858 = vpack.c.b16 %v12791, %v12790
    %v12859 = vpack.c.b16 %v12793, %v12792
    %v12860 = vpack.c.b16 %v12795, %v12794
    %v12861 = vpack.c.b16 %v12797, %v12796
    %12926 = vmatprep.subr.bf16.mxu0 0
    %12927 = vmatpush1.bf16.msra.mxu0 %v12798
    %12928 = vmatprep.subr.bf16.mxu0 0
    %12929 = vmatpush1.bf16.msra.mxu0 %v12799
    %12930 = vmatprep.subr.bf16.mxu0 0
    %12931 = vmatpush1.bf16.msra.mxu0 %v12800
    %12932 = vmatprep.subr.bf16.mxu0 0
    %12933 = vmatpush1.bf16.msra.mxu0 %v12801
    %12934 = vmatprep.subr.bf16.mxu0 0
    %12935 = vmatpush1.bf16.msra.mxu0 %v12802
    %12936 = vmatprep.subr.bf16.mxu0 0
    %12937 = vmatpush1.bf16.msra.mxu0 %v12803
    %12938 = vmatprep.subr.bf16.mxu0 0
    %12939 = vmatpush1.bf16.msra.mxu0 %v12804
    %12940 = vmatprep.subr.bf16.mxu0 0
    %12941 = vmatpush1.bf16.msra.mxu0 %v12805
    %12942 = vmatprep.subr.bf16.mxu0 0
    %12943 = vmatpush1.bf16.msra.mxu0 %v12806
    %12944 = vmatprep.subr.bf16.mxu0 0
    %12945 = vmatpush1.bf16.msra.mxu0 %v12807
    %12946 = vmatprep.subr.bf16.mxu0 0
    %12947 = vmatpush1.bf16.msra.mxu0 %v12808
    %12948 = vmatprep.subr.bf16.mxu0 0
    %12949 = vmatpush1.bf16.msra.mxu0 %v12809
    %12950 = vmatprep.subr.bf16.mxu0 0
    %12951 = vmatpush1.bf16.msra.mxu0 %v12810
    %12952 = vmatprep.subr.bf16.mxu0 0
    %12953 = vmatpush1.bf16.msra.mxu0 %v12811
    %12954 = vmatprep.subr.bf16.mxu0 0
    %12955 = vmatpush1.bf16.msra.mxu0 %v12812
    %12956 = vmatprep.subr.bf16.mxu0 0
    %12957 = vmatpush1.bf16.msra.mxu0 %v12813
    %12958 = vmatprep.mubr.bf16.mxu0 %v12400
    %12959 = vmatmul.mubr.bf16.gmra.mrb[0].mxu0 %v12399
    %v12960 = vpop.f32.mrb[0].mxu0
    %v12961 = vadd.f32 %v12540, %v12960
    %v12962 = vpop.f32.mrb[0].mxu0
    %v12963 = vpop.f32.mrb[0].mxu0
    %v12964 = vpop.f32.mrb[0].mxu0
    %12965 = vdwg.mxu0
    %12966 = vmatprep.subr.bf16.mxu0 0
    %12967 = vmatpush1.bf16.msra.mxu0 %v12814
    %12968 = vmatprep.subr.bf16.mxu0 0
    %12969 = vmatpush1.bf16.msra.mxu0 %v12815
    %12970 = vmatprep.subr.bf16.mxu0 0
    %12971 = vmatpush1.bf16.msra.mxu0 %v12816
    %12972 = vmatprep.subr.bf16.mxu0 0
    %12973 = vmatpush1.bf16.msra.mxu0 %v12817
    %12974 = vmatprep.subr.bf16.mxu0 0
    %12975 = vmatpush1.bf16.msra.mxu0 %v12818
    %12976 = vmatprep.subr.bf16.mxu0 0
    %12977 = vmatpush1.bf16.msra.mxu0 %v12819
    %12978 = vmatprep.subr.bf16.mxu0 0
    %12979 = vmatpush1.bf16.msra.mxu0 %v12820
    %12980 = vmatprep.subr.bf16.mxu0 0
    %12981 = vmatpush1.bf16.msra.mxu0 %v12821
    %12982 = vmatprep.subr.bf16.mxu0 0
    %12983 = vmatpush1.bf16.msra.mxu0 %v12822
    %12984 = vmatprep.subr.bf16.mxu0 0
    %12985 = vmatpush1.bf16.msra.mxu0 %v12823
    %12986 = vmatprep.subr.bf16.mxu0 0
    %12987 = vmatpush1.bf16.msra.mxu0 %v12824
    %12988 = vmatprep.subr.bf16.mxu0 0
    %12989 = vmatpush1.bf16.msra.mxu0 %v12825
    %12990 = vmatprep.subr.bf16.mxu0 0
    %12991 = vmatpush1.bf16.msra.mxu0 %v12826
    %12992 = vmatprep.subr.bf16.mxu0 0
    %12993 = vmatpush1.bf16.msra.mxu0 %v12827
    %12994 = vmatprep.subr.bf16.mxu0 0
    %12995 = vmatpush1.bf16.msra.mxu0 %v12828
    %12996 = vmatprep.subr.bf16.mxu0 0
    %12997 = vmatpush1.bf16.msra.mxu0 %v12829
    %12998 = vmatprep.mubr.bf16.mxu0 %v12402
    %12999 = vmatmul.mubr.bf16.gmra.mrb[0].mxu0 %v12401
    %v13000 = vpop.f32.mrb[0].mxu0
    %v13001 = vadd.f32 %v12961, %v13000
    %v13002 = vpop.f32.mrb[0].mxu0
    %v13003 = vpop.f32.mrb[0].mxu0
    %v13004 = vpop.f32.mrb[0].mxu0
    %13005 = vdwg.mxu0
    %13006 = vmatprep.subr.bf16.mxu0 0
    %13007 = vmatpush1.bf16.msra.mxu0 %v12830
    %13008 = vmatprep.subr.bf16.mxu0 0
    %13009 = vmatpush1.bf16.msra.mxu0 %v12831
    %13010 = vmatprep.subr.bf16.mxu0 0
    %13011 = vmatpush1.bf16.msra.mxu0 %v12832
    %13012 = vmatprep.subr.bf16.mxu0 0
    %13013 = vmatpush1.bf16.msra.mxu0 %v12833
    %13014 = vmatprep.subr.bf16.mxu0 0
    %13015 = vmatpush1.bf16.msra.mxu0 %v12834
    %13016 = vmatprep.subr.bf16.mxu0 0
    %13017 = vmatpush1.bf16.msra.mxu0 %v12835
    %13018 = vmatprep.subr.bf16.mxu0 0
    %13019 = vmatpush1.bf16.msra.mxu0 %v12836
    %13020 = vmatprep.subr.bf16.mxu0 0
    %13021 = vmatpush1.bf16.msra.mxu0 %v12837
    %13022 = vmatprep.subr.bf16.mxu0 0
    %13023 = vmatpush1.bf16.msra.mxu0 %v12838
    %13024 = vmatprep.subr.bf16.mxu0 0
    %13025 = vmatpush1.bf16.msra.mxu0 %v12839
    %13026 = vmatprep.subr.bf16.mxu0 0
    %13027 = vmatpush1.bf16.msra.mxu0 %v12840
    %13028 = vmatprep.subr.bf16.mxu0 0
    %13029 = vmatpush1.bf16.msra.mxu0 %v12841
    %13030 = vmatprep.subr.bf16.mxu0 0
    %13031 = vmatpush1.bf16.msra.mxu0 %v12842
    %13032 = vmatprep.subr.bf16.mxu0 0
    %13033 = vmatpush1.bf16.msra.mxu0 %v12843
    %13034 = vmatprep.subr.bf16.mxu0 0
    %13035 = vmatpush1.bf16.msra.mxu0 %v12844
    %13036 = vmatprep.subr.bf16.mxu0 0
    %13037 = vmatpush1.bf16.msra.mxu0 %v12845
    %13038 = vmatprep.mubr.bf16.mxu0 %v12404
    %13039 = vmatmul.mubr.bf16.gmra.mrb[0].mxu0 %v12403
    %v13040 = vpop.f32.mrb[0].mxu0
    %v13041 = vadd.f32 %v13001, %v13040
    %v13042 = vpop.f32.mrb[0].mxu0
    %v13043 = vpop.f32.mrb[0].mxu0
    %v13044 = vpop.f32.mrb[0].mxu0
    %13045 = vdwg.mxu0
    %13046 = vmatprep.subr.bf16.mxu0 0
    %13047 = vmatpush1.bf16.msra.mxu0 %v12846
    %13048 = vmatprep.subr.bf16.mxu0 0
    %13049 = vmatpush1.bf16.msra.mxu0 %v12847
    %13050 = vmatprep.subr.bf16.mxu0 0
    %13051 = vmatpush1.bf16.msra.mxu0 %v12848
    %13052 = vmatprep.subr.bf16.mxu0 0
    %13053 = vmatpush1.bf16.msra.mxu0 %v12849
    %13054 = vmatprep.subr.bf16.mxu0 0
    %13055 = vmatpush1.bf16.msra.mxu0 %v12850
    %13056 = vmatprep.subr.bf16.mxu0 0
    %13057 = vmatpush1.bf16.msra.mxu0 %v12851
    %13058 = vmatprep.subr.bf16.mxu0 0
    %13059 = vmatpush1.bf16.msra.mxu0 %v12852
    %13060 = vmatprep.subr.bf16.mxu0 0
    %13061 = vmatpush1.bf16.msra.mxu0 %v12853
    %13062 = vmatprep.subr.bf16.mxu0 0
    %13063 = vmatpush1.bf16.msra.mxu0 %v12854
    %13064 = vmatprep.subr.bf16.mxu0 0
    %13065 = vmatpush1.bf16.msra.mxu0 %v12855
    %13066 = vmatprep.subr.bf16.mxu0 0
    %13067 = vmatpush1.bf16.msra.mxu0 %v12856
    %13068 = vmatprep.subr.bf16.mxu0 0
    %13069 = vmatpush1.bf16.msra.mxu0 %v12857
    %13070 = vmatprep.subr.bf16.mxu0 0
    %13071 = vmatpush1.bf16.msra.mxu0 %v12858
    %13072 = vmatprep.subr.bf16.mxu0 0
    %13073 = vmatpush1.bf16.msra.mxu0 %v12859
    %13074 = vmatprep.subr.bf16.mxu0 0
    %13075 = vmatpush1.bf16.msra.mxu0 %v12860
    %13076 = vmatprep.subr.bf16.mxu0 0
    %13077 = vmatpush1.bf16.msra.mxu0 %v12861
    %13078 = vmatprep.mubr.bf16.mxu0 %v12406
    %13079 = vmatmul.mubr.bf16.gmra.mrb[0].mxu0 %v12405
    %v13080 = vpop.f32.mrb[0].mxu0
    %v13081 = vadd.f32 %v13041, %v13080
    %v13082 = vpop.f32.mrb[0].mxu0
    %v13083 = vpop.f32.mrb[0].mxu0
    %v13084 = vpop.f32.mrb[0].mxu0
    %13085 = vdwg.mxu0
    %13086 = vst [vmem:[%s7] sm:$0xff] %v13081
    // Predicated region
    $region54: #{net_forward.1} parent=1 // pred_check
      _
    $region55: #{net_forward.1} parent=1 // pred_check_branch
      %13088 = sbr.rel (0) target = $region57
    $region56: #{net_forward.1} parent=1 // pred_region
      _
    $region57: #{net_forward.1} parent=1 // pred_fallthru
      _
    // Predicated region
    $region58: #{net_forward.1} parent=1 // pred_check
      _
    $region59: #{net_forward.1} parent=1 // pred_check_branch
      %13090 = sbr.rel (0) target = $region61
    $region60: #{net_forward.1} parent=1 // pred_region
      _
    $region61: #{net_forward.1} parent=1 // pred_fallthru
      _
    %13091 = vsyncpa [#allocation3], 1
    %13092 = vsyncpa [#allocation5], 1
    %13093 = vsyncpa [#allocation8], 1
    %13094 = vsyncpa [#allocation11], 1

</llo_original>
